<compile_context>
chip_gen: v7x
topology: tpu7x:2x2x1
jax: 0.10.0
libtpu: 0.0.40
codegen_flags: <defaults>
</compile_context>

<pallas_src>
import functools

import jax
import jax.numpy as jnp
from jax import lax
from jax.experimental import pallas as pl
from jax.experimental.pallas import tpu as pltpu

NEG_SLOPE = 0.01   # F.leaky_relu default
IN_EPS = 1e-5      # nn.InstanceNorm2d default (affine=False, no running stats)
LANE = 128


def _round_up(x, m):
    return (x + m - 1) // m * m


@functools.lru_cache(maxsize=None)
def _vmem_limit_bytes(frac=0.7):
    """Generation-aware VMEM budget: a fraction of physical per-core VMEM."""
    cap = 128 * 1024 * 1024
    try:
        cap = int(getattr(pltpu.get_tpu_info(), "vmem_capacity_bytes", cap)) or cap
    except Exception:
        pass
    return int(cap * frac)


def _compiler_params(n_axes):
    return pltpu.CompilerParams(
        dimension_semantics=("parallel",) * n_axes,
        vmem_limit_bytes=_vmem_limit_bytes())


# ----------------------------- Pallas kernels ------------------------------

def _instnorm_lrelu_rows(y):
    """InstanceNorm (biased var, like torch) over rows + LeakyReLU. y: (HW, C) f32."""
    mean = jnp.mean(y, axis=0, keepdims=True)
    var = jnp.mean((y - mean) ** 2, axis=0, keepdims=True)
    yn = (y - mean) * lax.rsqrt(var + IN_EPS)
    return jnp.where(yn >= 0, yn, NEG_SLOPE * yn)


def _stem_kernel(x_ref, w_ref, b_ref, o_ref):
    # x_ref: (1, HW, K) bf16 im2col patches of one sample; w_ref: (K, Ct) bf16
    # b_ref: (1, Ct) f32; o_ref: (1, HW, Ct) bf16
    y = jnp.dot(x_ref[0], w_ref[...], preferred_element_type=jnp.float32)
    y = y + b_ref[...]
    o_ref[...] = _instnorm_lrelu_rows(y)[None].astype(o_ref.dtype)


def _conv3x3_in_lrelu_kernel(x_ref, w_ref, b_ref, o_ref):
    # Shift-and-accumulate 3x3 conv + fused InstanceNorm + LeakyReLU.
    # x_ref: (1, H+2, W+2, Cin) bf16 (one padded sample)
    # w_ref: (kh, kw, Cin, Ct) bf16; b_ref: (1, Ct) f32; o_ref: (1, H, W, Ct)
    _, H, W, Ct = o_ref.shape
    kh, kw = w_ref.shape[0], w_ref.shape[1]
    x_full = x_ref[0]                                    # (Hp, Wp, Cin) bf16
    acc = jnp.zeros((H * W, Ct), jnp.float32)
    for i in range(kh):                                  # static taps
        for j in range(kw):
            xs = x_full[i:i + H, j:j + W, :].reshape(H * W, -1)
            acc = acc + jnp.dot(xs, w_ref[i, j],
                                preferred_element_type=jnp.float32)
    y = acc + b_ref[...]
    o_ref[...] = _instnorm_lrelu_rows(y).reshape(1, H, W, Ct).astype(o_ref.dtype)


def _conv3x3_cat_in_lrelu_kernel(x1_ref, w1_ref, x2_ref, w2_ref, b_ref, o_ref):
    # conv3x3 over channel-concat([x1, x2]) with the concat fused away:
    #   acc += shift(x1) @ w1[tap] + shift(x2) @ w2[tap]
    _, H, W, Ct = o_ref.shape
    kh, kw = w1_ref.shape[0], w1_ref.shape[1]
    x1_full = x1_ref[0]
    x2_full = x2_ref[0]
    acc = jnp.zeros((H * W, Ct), jnp.float32)
    for i in range(kh):
        for j in range(kw):
            xs1 = x1_full[i:i + H, j:j + W, :].reshape(H * W, -1)
            xs2 = x2_full[i:i + H, j:j + W, :].reshape(H * W, -1)
            acc = acc + jnp.dot(xs1, w1_ref[i, j],
                                preferred_element_type=jnp.float32)
            acc = acc + jnp.dot(xs2, w2_ref[i, j],
                                preferred_element_type=jnp.float32)
    y = acc + b_ref[...]
    o_ref[...] = _instnorm_lrelu_rows(y).reshape(1, H, W, Ct).astype(o_ref.dtype)


def _pointwise_residual_kernel(x_ref, w_ref, b_ref, r_ref, o_ref):
    # 1x1 conv (matmul, bf16 operands) + bias + f32 residual add.
    acc = jnp.dot(x_ref[...], w_ref[...], preferred_element_type=jnp.float32)
    o_ref[...] = (acc + b_ref[...] + r_ref[...]).astype(o_ref.dtype)


# ----------------------------- Pallas wrappers ------------------------------

def stem_conv_in_lrelu(x_nhwc, w_oihw, b, stride, pad, tile_co=LANE):
    """7x7/s2 conv + InstanceNorm + LeakyReLU, fused.

    im2col is kept for the stem only: its tiny input-channel count would waste
    the 128-wide lane axis, so folding K = kh*kw*Cin onto lanes is the
    MXU-friendly layout here. conv1/conv4 (big Cin) avoid im2col entirely.
    """
    N, H, W, Cin = x_nhwc.shape
    Cout, _, kh, kw = w_oihw.shape
    Ho = (H + 2 * pad - kh) // stride + 1
    Wo = (W + 2 * pad - kw) // stride + 1
    K = kh * kw * Cin

    xp = jnp.pad(x_nhwc, ((0, 0), (pad, pad), (pad, pad), (0, 0)))
    cols = [xp[:, i:i + stride * Ho:stride, j:j + stride * Wo:stride, :]
            for i in range(kh) for j in range(kw)]
    patches = jnp.stack(cols, axis=3)                       # (N, Ho, Wo, kh*kw, Cin)
    patches = patches.reshape(N, Ho * Wo, K).astype(jnp.bfloat16)
    w_mat = jnp.transpose(w_oihw, (2, 3, 1, 0)).reshape(K, Cout).astype(jnp.bfloat16)
    b2 = b.reshape(1, Cout).astype(jnp.float32)

    assert Cout % tile_co == 0
    out = pl.pallas_call(
        _stem_kernel,
        out_shape=jax.ShapeDtypeStruct((N, Ho * Wo, Cout), jnp.bfloat16),
        grid=(N, Cout // tile_co),
        in_specs=[
            pl.BlockSpec((1, Ho * Wo, K), lambda bi, ci: (bi, 0, 0)),
            pl.BlockSpec((K, tile_co), lambda bi, ci: (0, ci)),
            pl.BlockSpec((1, tile_co), lambda bi, ci: (0, ci)),
        ],
        out_specs=pl.BlockSpec((1, Ho * Wo, tile_co), lambda bi, ci: (bi, 0, ci)),
        compiler_params=_compiler_params(2),
    )(patches, w_mat, b2)
    return out.reshape(N, Ho, Wo, Cout)


def conv3x3_in_lrelu(x_nhwc, w_oihw, b, tile_co=LANE):
    """3x3/s1 conv + InstanceNorm + LeakyReLU (fused), shift-and-accumulate.

    Output channels are zero-padded up to a multiple of 128 (lane-dense
    stores); padded channels come out exactly 0 through IN/LReLU.
    """
    N, H, W, Cin = x_nhwc.shape
    Cout, _, kh, kw = w_oihw.shape
    pad = kh // 2
    Hp, Wp = H + 2 * pad, W + 2 * pad
    Cop = _round_up(Cout, tile_co)

    xp = jnp.pad(x_nhwc.astype(jnp.bfloat16),
                 ((0, 0), (pad, pad), (pad, pad), (0, 0)))
    w = jnp.transpose(w_oihw, (2, 3, 1, 0))                 # (kh, kw, Cin, Cout)
    if Cop != Cout:
        w = jnp.pad(w, ((0, 0), (0, 0), (0, 0), (0, Cop - Cout)))
        b = jnp.pad(b, (0, Cop - Cout))
    w = w.astype(jnp.bfloat16)
    b2 = b.reshape(1, Cop).astype(jnp.float32)

    out = pl.pallas_call(
        _conv3x3_in_lrelu_kernel,
        out_shape=jax.ShapeDtypeStruct((N, H, W, Cop), jnp.bfloat16),
        grid=(N, Cop // tile_co),
        in_specs=[
            pl.BlockSpec((1, Hp, Wp, Cin), lambda bi, ci: (bi, 0, 0, 0)),
            pl.BlockSpec((kh, kw, Cin, tile_co), lambda bi, ci: (0, 0, 0, ci)),
            pl.BlockSpec((1, tile_co), lambda bi, ci: (0, ci)),
        ],
        out_specs=pl.BlockSpec((1, H, W, tile_co), lambda bi, ci: (bi, 0, 0, ci)),
        compiler_params=_compiler_params(2),
    )(xp, w, b2)
    return out   # (N, H, W, Cop); channels [Cout:Cop] are exactly zero


def conv3x3_cat_in_lrelu(x1_nhwc, x2_nhwc, w_oihw, b, tile_co=LANE):
    """3x3/s1 conv over concat([x1, x2], channels) + IN + LeakyReLU, all fused.

    The concat is fused: the weight is split along input channels and the
    kernel accumulates both contributions, so the concatenated activation is
    never written to HBM.
    """
    N, H, W, C1 = x1_nhwc.shape
    C2 = x2_nhwc.shape[-1]
    Cout, Cin, kh, kw = w_oihw.shape
    assert Cin == C1 + C2
    pad = kh // 2
    Hp, Wp = H + 2 * pad, W + 2 * pad
    Cop = _round_up(Cout, tile_co)

    x1p = jnp.pad(x1_nhwc.astype(jnp.bfloat16),
                  ((0, 0), (pad, pad), (pad, pad), (0, 0)))
    x2p = jnp.pad(x2_nhwc.astype(jnp.bfloat16),
                  ((0, 0), (pad, pad), (pad, pad), (0, 0)))
    w = jnp.transpose(w_oihw, (2, 3, 1, 0))                 # (kh, kw, Cin, Cout)
    if Cop != Cout:
        w = jnp.pad(w, ((0, 0), (0, 0), (0, 0), (0, Cop - Cout)))
        b = jnp.pad(b, (0, Cop - Cout))
    w1 = w[:, :, :C1, :].astype(jnp.bfloat16)               # matches torch.cat order
    w2 = w[:, :, C1:, :].astype(jnp.bfloat16)
    b2 = b.reshape(1, Cop).astype(jnp.float32)

    out = pl.pallas_call(
        _conv3x3_cat_in_lrelu_kernel,
        out_shape=jax.ShapeDtypeStruct((N, H, W, Cop), jnp.bfloat16),
        grid=(N, Cop // tile_co),
        in_specs=[
            pl.BlockSpec((1, Hp, Wp, C1), lambda bi, ci: (bi, 0, 0, 0)),
            pl.BlockSpec((kh, kw, C1, tile_co), lambda bi, ci: (0, 0, 0, ci)),
            pl.BlockSpec((1, Hp, Wp, C2), lambda bi, ci: (bi, 0, 0, 0)),
            pl.BlockSpec((kh, kw, C2, tile_co), lambda bi, ci: (0, 0, 0, ci)),
            pl.BlockSpec((1, tile_co), lambda bi, ci: (0, ci)),
        ],
        out_specs=pl.BlockSpec((1, H, W, tile_co), lambda bi, ci: (bi, 0, 0, ci)),
        compiler_params=_compiler_params(2),
    )(x1p, w1, x2p, w2, b2)
    return out


def pointwise_conv_residual(x_flat, w_mat, b, residual, tile_m=512):
    """[M,K] @ [K,Cout] + bias + residual (residual kept f32), bf16 operands."""
    M, K = x_flat.shape
    Cout = w_mat.shape[1]
    tile_m = min(tile_m, _round_up(M, 8))
    Mp = _round_up(M, tile_m)
    if Mp != M:
        x_flat = jnp.pad(x_flat, ((0, Mp - M), (0, 0)))
        residual = jnp.pad(residual, ((0, Mp - M), (0, 0)))

    out = pl.pallas_call(
        _pointwise_residual_kernel,
        out_shape=jax.ShapeDtypeStruct((Mp, Cout), jnp.float32),
        grid=(Mp // tile_m,),
        in_specs=[
            pl.BlockSpec((tile_m, K), lambda i: (i, 0)),
            pl.BlockSpec((K, Cout), lambda i: (0, 0)),
            pl.BlockSpec((1, Cout), lambda i: (0, 0)),
            pl.BlockSpec((tile_m, Cout), lambda i: (i, 0)),
        ],
        out_specs=pl.BlockSpec((tile_m, Cout), lambda i: (i, 0)),
        compiler_params=_compiler_params(1),
    )(x_flat.astype(jnp.bfloat16), w_mat.astype(jnp.bfloat16),
      b.reshape(1, Cout).astype(jnp.float32), residual.astype(jnp.float32))
    return out[:M] if Mp != M else out


# -------------------------------- JAX glue ----------------------------------

def _interp_matrix(n_in, n_out):
    if n_in == 1:
        return jnp.ones((n_out, 1), jnp.float32)
    src = jnp.arange(n_out, dtype=jnp.float32) * (n_in - 1) / (n_out - 1)
    lo = jnp.clip(jnp.floor(src).astype(jnp.int32), 0, n_in - 2)
    frac = src - lo.astype(jnp.float32)
    rows = jnp.arange(n_out)
    W = jnp.zeros((n_out, n_in), jnp.float32)
    W = W.at[rows, lo].add(1.0 - frac)
    W = W.at[rows, lo + 1].add(frac)
    return W


# TODO(synk): bilinear x4 upsample (align_corners=True) kept as two tiny
# interpolation-matrix einsums in XLA rather than a Pallas kernel.
def upsample_bilinear_nhwc(x_nhwc, scale):
    N, H, W, C = x_nhwc.shape
    Ah = _interp_matrix(H, H * scale)
    Aw = _interp_matrix(W, W * scale)
    y = jnp.einsum('oh,nhwc->nowc', Ah, x_nhwc, precision=lax.Precision.HIGHEST)
    y = jnp.einsum('pw,nowc->nopc', Aw, y, precision=lax.Precision.HIGHEST)
    return y


def _upsample_ref_nchw(x, scale):
    N, C, H, W = x.shape
    Ah = _interp_matrix(H, H * scale)
    Aw = _interp_matrix(W, W * scale)
    return jnp.einsum('oh,nchw,pw->ncop', Ah, x, Aw,
                      precision=lax.Precision.HIGHEST)


# ----------------------------- Module forward -------------------------------

def difference_integrated_hg_filter_forward(params, x, netg_output_map):
    """x: NCHW [N, in_ch, H, W]; netg_output_map: NCHW [N, 256, H/8, W/8].

    NCHW only at this public boundary; the whole internal chain is NHWC/bf16.
    """
    x_nhwc = jnp.transpose(x, (0, 2, 3, 1))
    netg_nhwc = jnp.transpose(netg_output_map, (0, 2, 3, 1))

    # stem (7x7, s=2, p=3) + InstanceNorm + LeakyReLU, fused.
    y = stem_conv_in_lrelu(x_nhwc, params['stem_w'], params['stem_b'],
                           stride=2, pad=3)
    # conv1 (3x3) + InstanceNorm + LeakyReLU, fused, no im2col.
    y = conv3x3_in_lrelu(y, params['conv1_w'], params['conv1_b'])
    # bilinear x4 upsample of netG output (align_corners=True), kept in f32.
    up = upsample_bilinear_nhwc(netg_nhwc, 4)                 # (N, H/2, W/2, 256)
    # conv4 (3x3) over concat([y, up]) + IN + LReLU; concat fused in-kernel,
    # 320 output channels zero-padded to 384 for lane-dense stores.
    y4 = conv3x3_cat_in_lrelu(y, up, params['conv4_w'], params['conv4_b'])
    # conv5 (1x1) + residual add with the upsampled map, fused in one kernel.
    Nb, Ho, Wo, C4p = y4.shape
    Cout5, C5in = params['conv5_w'].shape[0], params['conv5_w'].shape[1]
    w5 = params['conv5_w'].reshape(Cout5, C5in).T             # (320, 256)
    w5 = jnp.pad(w5, ((0, C4p - C5in), (0, 0)))               # zero rows for pad chans
    out = pointwise_conv_residual(
        y4.reshape(Nb * Ho * Wo, C4p), w5, params['conv5_b'],
        up.reshape(Nb * Ho * Wo, Cout5))
    out = out.reshape(Nb, Ho, Wo, Cout5).transpose(0, 3, 1, 2)  # NCHW at boundary
    outputs = [out]
    normx = 0
    return outputs, normx


# --------------------------- params & reference -----------------------------

def init_params(key, in_ch):
    ks = jax.random.split(key, 8)

    def conv_init(kw_, kb_, cout, cin, kh, kwid):
        bound = (cin * kh * kwid) ** -0.5
        w = jax.random.uniform(kw_, (cout, cin, kh, kwid), jnp.float32, -bound, bound)
        b = jax.random.uniform(kb_, (cout,), jnp.float32, -bound, bound)
        return w, b

    p = {}
    p['stem_w'], p['stem_b'] = conv_init(ks[0], ks[1], 256, in_ch, 7, 7)
    p['conv1_w'], p['conv1_b'] = conv_init(ks[2], ks[3], 128, 256, 3, 3)
    p['conv4_w'], p['conv4_b'] = conv_init(ks[4], ks[5], 64 + 256, 128 + 256, 3, 3)
    p['conv5_w'], p['conv5_b'] = conv_init(ks[6], ks[7], 256, 64 + 256, 1, 1)
    return p


def _ref_forward(params, x, netg):
    """Pure-JAX f32 reference mirroring the PyTorch module (NCHW)."""
    def conv(x, w, b, s, p):
        y = lax.conv_general_dilated(x, w, (s, s), ((p, p), (p, p)),
                                     dimension_numbers=('NCHW', 'OIHW', 'NCHW'),
                                     precision=lax.Precision.HIGHEST)
        return y + b[None, :, None, None]

    def instnorm(x):
        m = x.mean(axis=(2, 3), keepdims=True)
        v = ((x - m) ** 2).mean(axis=(2, 3), keepdims=True)
        return (x - m) / jnp.sqrt(v + IN_EPS)

    def lrelu(x):
        return jnp.where(x >= 0, x, NEG_SLOPE * x)

    y = lrelu(instnorm(conv(x, params['stem_w'], params['stem_b'], 2, 3)))
    y = lrelu(instnorm(conv(y, params['conv1_w'], params['conv1_b'], 1, 1)))
    up = _upsample_ref_nchw(netg, 4)
    y = jnp.concatenate([y, up], axis=1)
    y = lrelu(instnorm(conv(y, params['conv4_w'], params['conv4_b'], 1, 1)))
    y = conv(y, params['conv5_w'], params['conv5_b'], 1, 0) + up
    return y


# ----------------------------------- main ------------------------------------

if __name__ == "__main__":
    key = jax.random.PRNGKey(0)
    k1, k2, k3 = jax.random.split(key, 3)

    in_ch = 4
    x = jax.random.normal(k1, (2, in_ch, 16, 16), jnp.float32)            # NCHW
    netg_output_map = jax.random.normal(k2, (2, 256, 2, 2), jnp.float32)  # NCHW
    params = init_params(k3, in_ch)

    fwd = jax.jit(difference_integrated_hg_filter_forward)
    outputs, normx = fwd(params, x, netg_output_map)
    out = outputs[0]
    jax.block_until_ready(out)

    ref = _ref_forward(params, x, netg_output_map)
    assert out.shape == ref.shape == (2, 256, 8, 8), (out.shape, ref.shape)
    err = float(jnp.max(jnp.abs(out - ref)))
    # bf16 MXU operands (f32 accumulation) through 4 stacked layers: allow a
    # bf16-level tolerance against the full-f32 reference.
    if err < 5e-2:
        print("KERNEL_OK")
    else:
        print(f"MISMATCH max_abs_err={err}")
</pallas_src>

<mosaic_0001>
module attributes {stable_mosaic.version = 11 : i64} {
  func.func @_stem_kernel(%arg0: i32, %arg1: i32, %arg2: memref<1x64x196xbf16, #tpu.memory_space<vmem>>, %arg3: memref<196x128xbf16, #tpu.memory_space<vmem>>, %arg4: memref<1x128xf32, #tpu.memory_space<vmem>>, %arg5: memref<1x64x128xbf16, #tpu.memory_space<vmem>>) attributes {dimension_semantics = [#tpu.dimension_semantics<parallel>, #tpu.dimension_semantics<parallel>], iteration_bounds = array<i64: 2, 2>, scalar_prefetch = 0 : i64, scratch_operands = 0 : i64, tpu.core_type = #tpu.core_type<tc>, window_params = [{transform_indices = @transform_0, window_bounds = array<i64: 1, 64, 196>}, {transform_indices = @transform_1, window_bounds = array<i64: 196, 128>}, {transform_indices = @transform_2, window_bounds = array<i64: 1, 128>}, {transform_indices = @transform_3, window_bounds = array<i64: 1, 64, 128>}]} {
    %c0 = arith.constant 0 : index
    %c0_0 = arith.constant 0 : index
    %c0_1 = arith.constant 0 : index
    %0 = vector.load %arg2[%c0, %c0_0, %c0_1] : memref<1x64x196xbf16, #tpu.memory_space<vmem>>, vector<1x64x196xbf16>
    %1 = vector.shape_cast %0 : vector<1x64x196xbf16> to vector<64x196xbf16>
    %c0_2 = arith.constant 0 : index
    %c0_3 = arith.constant 0 : index
    %2 = vector.load %arg3[%c0_2, %c0_3] : memref<196x128xbf16, #tpu.memory_space<vmem>>, vector<196x128xbf16>
    %cst = arith.constant dense<0.000000e+00> : vector<64x128xf32>
    %3 = tpu.matmul %1, %2, %cst {dimension_numbers = #tpu.dot_dimension_numbers<[1], [0], [0], [1], [0, 0, 1, 1], [], []>} : vector<64x196xbf16>, vector<196x128xbf16>, vector<64x128xf32> -> vector<64x128xf32>
    %c0_4 = arith.constant 0 : index
    %c0_5 = arith.constant 0 : index
    %4 = vector.load %arg4[%c0_4, %c0_5] : memref<1x128xf32, #tpu.memory_space<vmem>>, vector<1x128xf32>
    %5 = vector.broadcast %4 : vector<1x128xf32> to vector<64x128xf32>
    %6 = arith.addf %3, %5 : vector<64x128xf32>
    %cst_6 = arith.constant dense<0.000000e+00> : vector<128xf32>
    %7 = vector.multi_reduction <add>, %6, %cst_6 [0] : vector<64x128xf32> to vector<128xf32>
    %8 = vector.shape_cast %7 : vector<128xf32> to vector<1x128xf32>
    %cst_7 = arith.constant 6.400000e+01 : f32
    %9 = vector.broadcast %cst_7 : f32 to vector<1x128xf32>
    %10 = arith.divf %8, %9 : vector<1x128xf32>
    %11 = vector.broadcast %10 : vector<1x128xf32> to vector<64x128xf32>
    %12 = arith.subf %6, %11 : vector<64x128xf32>
    %13 = arith.mulf %12, %12 : vector<64x128xf32>
    %cst_8 = arith.constant dense<0.000000e+00> : vector<128xf32>
    %14 = vector.multi_reduction <add>, %13, %cst_8 [0] : vector<64x128xf32> to vector<128xf32>
    %15 = vector.shape_cast %14 : vector<128xf32> to vector<1x128xf32>
    %cst_9 = arith.constant 6.400000e+01 : f32
    %16 = vector.broadcast %cst_9 : f32 to vector<1x128xf32>
    %17 = arith.divf %15, %16 : vector<1x128xf32>
    %18 = vector.broadcast %10 : vector<1x128xf32> to vector<64x128xf32>
    %19 = arith.subf %6, %18 : vector<64x128xf32>
    %cst_10 = arith.constant 9.99999974E-6 : f32
    %20 = vector.broadcast %cst_10 : f32 to vector<1x128xf32>
    %21 = arith.addf %17, %20 : vector<1x128xf32>
    %22 = math.rsqrt %21 : vector<1x128xf32>
    %23 = vector.broadcast %22 : vector<1x128xf32> to vector<64x128xf32>
    %24 = arith.mulf %19, %23 : vector<64x128xf32>
    %cst_11 = arith.constant 0.000000e+00 : f32
    %25 = vector.broadcast %cst_11 : f32 to vector<64x128xf32>
    %26 = arith.cmpf oge, %24, %25 : vector<64x128xf32>
    %cst_12 = arith.constant 0.00999999977 : f32
    %27 = vector.broadcast %cst_12 : f32 to vector<64x128xf32>
    %28 = arith.mulf %27, %24 : vector<64x128xf32>
    %29 = arith.select %26, %24, %28 : vector<64x128xi1>, vector<64x128xf32>
    %30 = vector.shape_cast %29 : vector<64x128xf32> to vector<1x64x128xf32>
    %31 = arith.truncf %30 : vector<1x64x128xf32> to vector<1x64x128xbf16>
    %c0_13 = arith.constant 0 : index
    %c0_14 = arith.constant 0 : index
    %c0_15 = arith.constant 0 : index
    %32 = vector.load %arg5[%c0_13, %c0_14, %c0_15] : memref<1x64x128xbf16, #tpu.memory_space<vmem>>, vector<1x64x128xbf16>
    tpu.vector_store %arg5[%c0_13, %c0_14, %c0_15], %31 {strides = array<i32>} : memref<1x64x128xbf16, #tpu.memory_space<vmem>>, vector<1x64x128xbf16>,
    return
  }
  func.func @transform_0(%arg0: i32, %arg1: i32) -> (i32, i32, i32) {
    %c0_i32 = arith.constant 0 : i32
    %c0_i32_0 = arith.constant 0 : i32
    %c0_i32_1 = arith.constant 0 : i32
    return %arg0, %c0_i32, %c0_i32_0 : i32, i32, i32
  }
  func.func @transform_1(%arg0: i32, %arg1: i32) -> (i32, i32) {
    %c0_i32 = arith.constant 0 : i32
    %c0_i32_0 = arith.constant 0 : i32
    return %c0_i32, %arg1 : i32, i32
  }
  func.func @transform_2(%arg0: i32, %arg1: i32) -> (i32, i32) {
    %c0_i32 = arith.constant 0 : i32
    %c0_i32_0 = arith.constant 0 : i32
    return %c0_i32, %arg1 : i32, i32
  }
  func.func @transform_3(%arg0: i32, %arg1: i32) -> (i32, i32, i32) {
    %c0_i32 = arith.constant 0 : i32
    %c0_i32_0 = arith.constant 0 : i32
    return %arg0, %c0_i32, %arg1 : i32, i32, i32
  }
}

module attributes {stable_mosaic.version = 11 : i64} {
  func.func @_conv3x3_in_lrelu_kernel(%arg0: i32, %arg1: i32, %arg2: memref<1x10x10x256xbf16, #tpu.memory_space<vmem>>, %arg3: memref<3x3x256x128xbf16, #tpu.memory_space<vmem>>, %arg4: memref<1x128xf32, #tpu.memory_space<vmem>>, %arg5: memref<1x8x8x128xbf16, #tpu.memory_space<vmem>>) attributes {dimension_semantics = [#tpu.dimension_semantics<parallel>, #tpu.dimension_semantics<parallel>], iteration_bounds = array<i64: 2, 1>, scalar_prefetch = 0 : i64, scratch_operands = 0 : i64, tpu.core_type = #tpu.core_type<tc>, window_params = [{transform_indices = @transform_0, window_bounds = array<i64: 1, 10, 10, 256>}, {transform_indices = @transform_1, window_bounds = array<i64: 3, 3, 256, 128>}, {transform_indices = @transform_2, window_bounds = array<i64: 1, 128>}, {transform_indices = @transform_3, window_bounds = array<i64: 1, 8, 8, 128>}]} {
    %c0 = arith.constant 0 : index
    %c0_0 = arith.constant 0 : index
    %c0_1 = arith.constant 0 : index
    %c0_2 = arith.constant 0 : index
    %0 = vector.load %arg2[%c0, %c0_0, %c0_1, %c0_2] : memref<1x10x10x256xbf16, #tpu.memory_space<vmem>>, vector<1x10x10x256xbf16>
    %1 = vector.shape_cast %0 : vector<1x10x10x256xbf16> to vector<10x10x256xbf16>
    %cst = arith.constant 0.000000e+00 : f32
    %2 = vector.broadcast %cst : f32 to vector<64x128xf32>
    %3 = vector.extract_strided_slice %1 {offsets = [0, 0, 0], sizes = [8, 8, 256], strides = [1, 1, 1]} : vector<10x10x256xbf16> to vector<8x8x256xbf16>
    %4 = vector.shape_cast %3 : vector<8x8x256xbf16> to vector<64x256xbf16>
    %c0_3 = arith.constant 0 : index
    %c0_4 = arith.constant 0 : index
    %c0_5 = arith.constant 0 : index
    %c0_6 = arith.constant 0 : index
    %5 = vector.load %arg3[%c0_3, %c0_4, %c0_5, %c0_6] : memref<3x3x256x128xbf16, #tpu.memory_space<vmem>>, vector<1x1x256x128xbf16>
    %6 = vector.shape_cast %5 : vector<1x1x256x128xbf16> to vector<256x128xbf16>
    %cst_7 = arith.constant dense<0.000000e+00> : vector<64x128xf32>
    %7 = tpu.matmul %4, %6, %cst_7 {dimension_numbers = #tpu.dot_dimension_numbers<[1], [0], [0], [1], [0, 0, 1, 1], [], []>} : vector<64x256xbf16>, vector<256x128xbf16>, vector<64x128xf32> -> vector<64x128xf32>
    %8 = arith.addf %2, %7 : vector<64x128xf32>
    %9 = vector.extract_strided_slice %1 {offsets = [0, 1, 0], sizes = [8, 8, 256], strides = [1, 1, 1]} : vector<10x10x256xbf16> to vector<8x8x256xbf16>
    %10 = vector.shape_cast %9 : vector<8x8x256xbf16> to vector<64x256xbf16>
    %c0_8 = arith.constant 0 : index
    %c1 = arith.constant 1 : index
    %c0_9 = arith.constant 0 : index
    %c0_10 = arith.constant 0 : index
    %11 = vector.load %arg3[%c0_8, %c1, %c0_9, %c0_10] : memref<3x3x256x128xbf16, #tpu.memory_space<vmem>>, vector<1x1x256x128xbf16>
    %12 = vector.shape_cast %11 : vector<1x1x256x128xbf16> to vector<256x128xbf16>
    %cst_11 = arith.constant dense<0.000000e+00> : vector<64x128xf32>
    %13 = tpu.matmul %10, %12, %cst_11 {dimension_numbers = #tpu.dot_dimension_numbers<[1], [0], [0], [1], [0, 0, 1, 1], [], []>} : vector<64x256xbf16>, vector<256x128xbf16>, vector<64x128xf32> -> vector<64x128xf32>
    %14 = arith.addf %8, %13 : vector<64x128xf32>
    %15 = vector.extract_strided_slice %1 {offsets = [0, 2, 0], sizes = [8, 8, 256], strides = [1, 1, 1]} : vector<10x10x256xbf16> to vector<8x8x256xbf16>
    %16 = vector.shape_cast %15 : vector<8x8x256xbf16> to vector<64x256xbf16>
    %c0_12 = arith.constant 0 : index
    %c2 = arith.constant 2 : index
    %c0_13 = arith.constant 0 : index
    %c0_14 = arith.constant 0 : index
    %17 = vector.load %arg3[%c0_12, %c2, %c0_13, %c0_14] : memref<3x3x256x128xbf16, #tpu.memory_space<vmem>>, vector<1x1x256x128xbf16>
    %18 = vector.shape_cast %17 : vector<1x1x256x128xbf16> to vector<256x128xbf16>
    %cst_15 = arith.constant dense<0.000000e+00> : vector<64x128xf32>
    %19 = tpu.matmul %16, %18, %cst_15 {dimension_numbers = #tpu.dot_dimension_numbers<[1], [0], [0], [1], [0, 0, 1, 1], [], []>} : vector<64x256xbf16>, vector<256x128xbf16>, vector<64x128xf32> -> vector<64x128xf32>
    %20 = arith.addf %14, %19 : vector<64x128xf32>
    %21 = vector.extract_strided_slice %1 {offsets = [1, 0, 0], sizes = [8, 8, 256], strides = [1, 1, 1]} : vector<10x10x256xbf16> to vector<8x8x256xbf16>
    %22 = vector.shape_cast %21 : vector<8x8x256xbf16> to vector<64x256xbf16>
    %c1_16 = arith.constant 1 : index
    %c0_17 = arith.constant 0 : index
    %c0_18 = arith.constant 0 : index
    %c0_19 = arith.constant 0 : index
    %23 = vector.load %arg3[%c1_16, %c0_17, %c0_18, %c0_19] : memref<3x3x256x128xbf16, #tpu.memory_space<vmem>>, vector<1x1x256x128xbf16>
    %24 = vector.shape_cast %23 : vector<1x1x256x128xbf16> to vector<256x128xbf16>
    %cst_20 = arith.constant dense<0.000000e+00> : vector<64x128xf32>
    %25 = tpu.matmul %22, %24, %cst_20 {dimension_numbers = #tpu.dot_dimension_numbers<[1], [0], [0], [1], [0, 0, 1, 1], [], []>} : vector<64x256xbf16>, vector<256x128xbf16>, vector<64x128xf32> -> vector<64x128xf32>
    %26 = arith.addf %20, %25 : vector<64x128xf32>
    %27 = vector.extract_strided_slice %1 {offsets = [1, 1, 0], sizes = [8, 8, 256], strides = [1, 1, 1]} : vector<10x10x256xbf16> to vector<8x8x256xbf16>
    %28 = vector.shape_cast %27 : vector<8x8x256xbf16> to vector<64x256xbf16>
    %c1_21 = arith.constant 1 : index
    %c1_22 = arith.constant 1 : index
    %c0_23 = arith.constant 0 : index
    %c0_24 = arith.constant 0 : index
    %29 = vector.load %arg3[%c1_21, %c1_22, %c0_23, %c0_24] : memref<3x3x256x128xbf16, #tpu.memory_space<vmem>>, vector<1x1x256x128xbf16>
    %30 = vector.shape_cast %29 : vector<1x1x256x128xbf16> to vector<256x128xbf16>
    %cst_25 = arith.constant dense<0.000000e+00> : vector<64x128xf32>
    %31 = tpu.matmul %28, %30, %cst_25 {dimension_numbers = #tpu.dot_dimension_numbers<[1], [0], [0], [1], [0, 0, 1, 1], [], []>} : vector<64x256xbf16>, vector<256x128xbf16>, vector<64x128xf32> -> vector<64x128xf32>
    %32 = arith.addf %26, %31 : vector<64x128xf32>
    %33 = vector.extract_strided_slice %1 {offsets = [1, 2, 0], sizes = [8, 8, 256], strides = [1, 1, 1]} : vector<10x10x256xbf16> to vector<8x8x256xbf16>
    %34 = vector.shape_cast %33 : vector<8x8x256xbf16> to vector<64x256xbf16>
    %c1_26 = arith.constant 1 : index
    %c2_27 = arith.constant 2 : index
    %c0_28 = arith.constant 0 : index
    %c0_29 = arith.constant 0 : index
    %35 = vector.load %arg3[%c1_26, %c2_27, %c0_28, %c0_29] : memref<3x3x256x128xbf16, #tpu.memory_space<vmem>>, vector<1x1x256x128xbf16>
    %36 = vector.shape_cast %35 : vector<1x1x256x128xbf16> to vector<256x128xbf16>
    %cst_30 = arith.constant dense<0.000000e+00> : vector<64x128xf32>
    %37 = tpu.matmul %34, %36, %cst_30 {dimension_numbers = #tpu.dot_dimension_numbers<[1], [0], [0], [1], [0, 0, 1, 1], [], []>} : vector<64x256xbf16>, vector<256x128xbf16>, vector<64x128xf32> -> vector<64x128xf32>
    %38 = arith.addf %32, %37 : vector<64x128xf32>
    %39 = vector.extract_strided_slice %1 {offsets = [2, 0, 0], sizes = [8, 8, 256], strides = [1, 1, 1]} : vector<10x10x256xbf16> to vector<8x8x256xbf16>
    %40 = vector.shape_cast %39 : vector<8x8x256xbf16> to vector<64x256xbf16>
    %c2_31 = arith.constant 2 : index
    %c0_32 = arith.constant 0 : index
    %c0_33 = arith.constant 0 : index
    %c0_34 = arith.constant 0 : index
    %41 = vector.load %arg3[%c2_31, %c0_32, %c0_33, %c0_34] : memref<3x3x256x128xbf16, #tpu.memory_space<vmem>>, vector<1x1x256x128xbf16>
    %42 = vector.shape_cast %41 : vector<1x1x256x128xbf16> to vector<256x128xbf16>
    %cst_35 = arith.constant dense<0.000000e+00> : vector<64x128xf32>
    %43 = tpu.matmul %40, %42, %cst_35 {dimension_numbers = #tpu.dot_dimension_numbers<[1], [0], [0], [1], [0, 0, 1, 1], [], []>} : vector<64x256xbf16>, vector<256x128xbf16>, vector<64x128xf32> -> vector<64x128xf32>
    %44 = arith.addf %38, %43 : vector<64x128xf32>
    %45 = vector.extract_strided_slice %1 {offsets = [2, 1, 0], sizes = [8, 8, 256], strides = [1, 1, 1]} : vector<10x10x256xbf16> to vector<8x8x256xbf16>
    %46 = vector.shape_cast %45 : vector<8x8x256xbf16> to vector<64x256xbf16>
    %c2_36 = arith.constant 2 : index
    %c1_37 = arith.constant 1 : index
    %c0_38 = arith.constant 0 : index
    %c0_39 = arith.constant 0 : index
    %47 = vector.load %arg3[%c2_36, %c1_37, %c0_38, %c0_39] : memref<3x3x256x128xbf16, #tpu.memory_space<vmem>>, vector<1x1x256x128xbf16>
    %48 = vector.shape_cast %47 : vector<1x1x256x128xbf16> to vector<256x128xbf16>
    %cst_40 = arith.constant dense<0.000000e+00> : vector<64x128xf32>
    %49 = tpu.matmul %46, %48, %cst_40 {dimension_numbers = #tpu.dot_dimension_numbers<[1], [0], [0], [1], [0, 0, 1, 1], [], []>} : vector<64x256xbf16>, vector<256x128xbf16>, vector<64x128xf32> -> vector<64x128xf32>
    %50 = arith.addf %44, %49 : vector<64x128xf32>
    %51 = vector.extract_strided_slice %1 {offsets = [2, 2, 0], sizes = [8, 8, 256], strides = [1, 1, 1]} : vector<10x10x256xbf16> to vector<8x8x256xbf16>
    %52 = vector.shape_cast %51 : vector<8x8x256xbf16> to vector<64x256xbf16>
    %c2_41 = arith.constant 2 : index
    %c2_42 = arith.constant 2 : index
    %c0_43 = arith.constant 0 : index
    %c0_44 = arith.constant 0 : index
    %53 = vector.load %arg3[%c2_41, %c2_42, %c0_43, %c0_44] : memref<3x3x256x128xbf16, #tpu.memory_space<vmem>>, vector<1x1x256x128xbf16>
    %54 = vector.shape_cast %53 : vector<1x1x256x128xbf16> to vector<256x128xbf16>
    %cst_45 = arith.constant dense<0.000000e+00> : vector<64x128xf32>
    %55 = tpu.matmul %52, %54, %cst_45 {dimension_numbers = #tpu.dot_dimension_numbers<[1], [0], [0], [1], [0, 0, 1, 1], [], []>} : vector<64x256xbf16>, vector<256x128xbf16>, vector<64x128xf32> -> vector<64x128xf32>
    %56 = arith.addf %50, %55 : vector<64x128xf32>
    %c0_46 = arith.constant 0 : index
    %c0_47 = arith.constant 0 : index
    %57 = vector.load %arg4[%c0_46, %c0_47] : memref<1x128xf32, #tpu.memory_space<vmem>>, vector<1x128xf32>
    %58 = vector.broadcast %57 : vector<1x128xf32> to vector<64x128xf32>
    %59 = arith.addf %56, %58 : vector<64x128xf32>
    %cst_48 = arith.constant dense<0.000000e+00> : vector<128xf32>
    %60 = vector.multi_reduction <add>, %59, %cst_48 [0] : vector<64x128xf32> to vector<128xf32>
    %61 = vector.shape_cast %60 : vector<128xf32> to vector<1x128xf32>
    %cst_49 = arith.constant 6.400000e+01 : f32
    %62 = vector.broadcast %cst_49 : f32 to vector<1x128xf32>
    %63 = arith.divf %61, %62 : vector<1x128xf32>
    %64 = vector.broadcast %63 : vector<1x128xf32> to vector<64x128xf32>
    %65 = arith.subf %59, %64 : vector<64x128xf32>
    %66 = arith.mulf %65, %65 : vector<64x128xf32>
    %cst_50 = arith.constant dense<0.000000e+00> : vector<128xf32>
    %67 = vector.multi_reduction <add>, %66, %cst_50 [0] : vector<64x128xf32> to vector<128xf32>
    %68 = vector.shape_cast %67 : vector<128xf32> to vector<1x128xf32>
    %cst_51 = arith.constant 6.400000e+01 : f32
    %69 = vector.broadcast %cst_51 : f32 to vector<1x128xf32>
    %70 = arith.divf %68, %69 : vector<1x128xf32>
    %71 = vector.broadcast %63 : vector<1x128xf32> to vector<64x128xf32>
    %72 = arith.subf %59, %71 : vector<64x128xf32>
    %cst_52 = arith.constant 9.99999974E-6 : f32
    %73 = vector.broadcast %cst_52 : f32 to vector<1x128xf32>
    %74 = arith.addf %70, %73 : vector<1x128xf32>
    %75 = math.rsqrt %74 : vector<1x128xf32>
    %76 = vector.broadcast %75 : vector<1x128xf32> to vector<64x128xf32>
    %77 = arith.mulf %72, %76 : vector<64x128xf32>
    %cst_53 = arith.constant 0.000000e+00 : f32
    %78 = vector.broadcast %cst_53 : f32 to vector<64x128xf32>
    %79 = arith.cmpf oge, %77, %78 : vector<64x128xf32>
    %cst_54 = arith.constant 0.00999999977 : f32
    %80 = vector.broadcast %cst_54 : f32 to vector<64x128xf32>
    %81 = arith.mulf %80, %77 : vector<64x128xf32>
    %82 = arith.select %79, %77, %81 : vector<64x128xi1>, vector<64x128xf32>
    %83 = vector.shape_cast %82 : vector<64x128xf32> to vector<1x8x8x128xf32>
    %84 = arith.truncf %83 : vector<1x8x8x128xf32> to vector<1x8x8x128xbf16>
    %c0_55 = arith.constant 0 : index
    %c0_56 = arith.constant 0 : index
    %c0_57 = arith.constant 0 : index
    %c0_58 = arith.constant 0 : index
    %85 = vector.load %arg5[%c0_55, %c0_56, %c0_57, %c0_58] : memref<1x8x8x128xbf16, #tpu.memory_space<vmem>>, vector<1x8x8x128xbf16>
    tpu.vector_store %arg5[%c0_55, %c0_56, %c0_57, %c0_58], %84 {strides = array<i32>} : memref<1x8x8x128xbf16, #tpu.memory_space<vmem>>, vector<1x8x8x128xbf16>,
    return
  }
  func.func @transform_0(%arg0: i32, %arg1: i32) -> (i32, i32, i32, i32) {
    %c0_i32 = arith.constant 0 : i32
    %c0_i32_0 = arith.constant 0 : i32
    %c0_i32_1 = arith.constant 0 : i32
    %c0_i32_2 = arith.constant 0 : i32
    return %arg0, %c0_i32, %c0_i32_0, %c0_i32_1 : i32, i32, i32, i32
  }
  func.func @transform_1(%arg0: i32, %arg1: i32) -> (i32, i32, i32, i32) {
    %c0_i32 = arith.constant 0 : i32
    %c0_i32_0 = arith.constant 0 : i32
    %c0_i32_1 = arith.constant 0 : i32
    %c0_i32_2 = arith.constant 0 : i32
    return %c0_i32, %c0_i32_0, %c0_i32_1, %arg1 : i32, i32, i32, i32
  }
  func.func @transform_2(%arg0: i32, %arg1: i32) -> (i32, i32) {
    %c0_i32 = arith.constant 0 : i32
    %c0_i32_0 = arith.constant 0 : i32
    return %c0_i32, %arg1 : i32, i32
  }
  func.func @transform_3(%arg0: i32, %arg1: i32) -> (i32, i32, i32, i32) {
    %c0_i32 = arith.constant 0 : i32
    %c0_i32_0 = arith.constant 0 : i32
    %c0_i32_1 = arith.constant 0 : i32
    return %arg0, %c0_i32, %c0_i32_0, %arg1 : i32, i32, i32, i32
  }
}

module attributes {stable_mosaic.version = 11 : i64} {
  func.func @_conv3x3_cat_in_lrelu_kernel(%arg0: i32, %arg1: i32, %arg2: memref<1x10x10x128xbf16, #tpu.memory_space<vmem>>, %arg3: memref<3x3x128x128xbf16, #tpu.memory_space<vmem>>, %arg4: memref<1x10x10x256xbf16, #tpu.memory_space<vmem>>, %arg5: memref<3x3x256x128xbf16, #tpu.memory_space<vmem>>, %arg6: memref<1x128xf32, #tpu.memory_space<vmem>>, %arg7: memref<1x8x8x128xbf16, #tpu.memory_space<vmem>>) attributes {dimension_semantics = [#tpu.dimension_semantics<parallel>, #tpu.dimension_semantics<parallel>], iteration_bounds = array<i64: 2, 3>, scalar_prefetch = 0 : i64, scratch_operands = 0 : i64, tpu.core_type = #tpu.core_type<tc>, window_params = [{transform_indices = @transform_0, window_bounds = array<i64: 1, 10, 10, 128>}, {transform_indices = @transform_1, window_bounds = array<i64: 3, 3, 128, 128>}, {transform_indices = @transform_2, window_bounds = array<i64: 1, 10, 10, 256>}, {transform_indices = @transform_3, window_bounds = array<i64: 3, 3, 256, 128>}, {transform_indices = @transform_4, window_bounds = array<i64: 1, 128>}, {transform_indices = @transform_5, window_bounds = array<i64: 1, 8, 8, 128>}]} {
    %c0 = arith.constant 0 : index
    %c0_0 = arith.constant 0 : index
    %c0_1 = arith.constant 0 : index
    %c0_2 = arith.constant 0 : index
    %0 = vector.load %arg2[%c0, %c0_0, %c0_1, %c0_2] : memref<1x10x10x128xbf16, #tpu.memory_space<vmem>>, vector<1x10x10x128xbf16>
    %1 = vector.shape_cast %0 : vector<1x10x10x128xbf16> to vector<10x10x128xbf16>
    %c0_3 = arith.constant 0 : index
    %c0_4 = arith.constant 0 : index
    %c0_5 = arith.constant 0 : index
    %c0_6 = arith.constant 0 : index
    %2 = vector.load %arg4[%c0_3, %c0_4, %c0_5, %c0_6] : memref<1x10x10x256xbf16, #tpu.memory_space<vmem>>, vector<1x10x10x256xbf16>
    %3 = vector.shape_cast %2 : vector<1x10x10x256xbf16> to vector<10x10x256xbf16>
    %cst = arith.constant 0.000000e+00 : f32
    %4 = vector.broadcast %cst : f32 to vector<64x128xf32>
    %5 = vector.extract_strided_slice %1 {offsets = [0, 0, 0], sizes = [8, 8, 128], strides = [1, 1, 1]} : vector<10x10x128xbf16> to vector<8x8x128xbf16>
    %6 = vector.shape_cast %5 : vector<8x8x128xbf16> to vector<64x128xbf16>
    %7 = vector.extract_strided_slice %3 {offsets = [0, 0, 0], sizes = [8, 8, 256], strides = [1, 1, 1]} : vector<10x10x256xbf16> to vector<8x8x256xbf16>
    %8 = vector.shape_cast %7 : vector<8x8x256xbf16> to vector<64x256xbf16>
    %c0_7 = arith.constant 0 : index
    %c0_8 = arith.constant 0 : index
    %c0_9 = arith.constant 0 : index
    %c0_10 = arith.constant 0 : index
    %9 = vector.load %arg3[%c0_7, %c0_8, %c0_9, %c0_10] : memref<3x3x128x128xbf16, #tpu.memory_space<vmem>>, vector<1x1x128x128xbf16>
    %10 = vector.shape_cast %9 : vector<1x1x128x128xbf16> to vector<128x128xbf16>
    %cst_11 = arith.constant dense<0.000000e+00> : vector<64x128xf32>
    %11 = tpu.matmul %6, %10, %cst_11 {dimension_numbers = #tpu.dot_dimension_numbers<[1], [0], [0], [1], [0, 0, 1, 1], [], []>} : vector<64x128xbf16>, vector<128x128xbf16>, vector<64x128xf32> -> vector<64x128xf32>
    %12 = arith.addf %4, %11 : vector<64x128xf32>
    %c0_12 = arith.constant 0 : index
    %c0_13 = arith.constant 0 : index
    %c0_14 = arith.constant 0 : index
    %c0_15 = arith.constant 0 : index
    %13 = vector.load %arg5[%c0_12, %c0_13, %c0_14, %c0_15] : memref<3x3x256x128xbf16, #tpu.memory_space<vmem>>, vector<1x1x256x128xbf16>
    %14 = vector.shape_cast %13 : vector<1x1x256x128xbf16> to vector<256x128xbf16>
    %cst_16 = arith.constant dense<0.000000e+00> : vector<64x128xf32>
    %15 = tpu.matmul %8, %14, %cst_16 {dimension_numbers = #tpu.dot_dimension_numbers<[1], [0], [0], [1], [0, 0, 1, 1], [], []>} : vector<64x256xbf16>, vector<256x128xbf16>, vector<64x128xf32> -> vector<64x128xf32>
    %16 = arith.addf %12, %15 : vector<64x128xf32>
    %17 = vector.extract_strided_slice %1 {offsets = [0, 1, 0], sizes = [8, 8, 128], strides = [1, 1, 1]} : vector<10x10x128xbf16> to vector<8x8x128xbf16>
    %18 = vector.shape_cast %17 : vector<8x8x128xbf16> to vector<64x128xbf16>
    %19 = vector.extract_strided_slice %3 {offsets = [0, 1, 0], sizes = [8, 8, 256], strides = [1, 1, 1]} : vector<10x10x256xbf16> to vector<8x8x256xbf16>
    %20 = vector.shape_cast %19 : vector<8x8x256xbf16> to vector<64x256xbf16>
    %c0_17 = arith.constant 0 : index
    %c1 = arith.constant 1 : index
    %c0_18 = arith.constant 0 : index
    %c0_19 = arith.constant 0 : index
    %21 = vector.load %arg3[%c0_17, %c1, %c0_18, %c0_19] : memref<3x3x128x128xbf16, #tpu.memory_space<vmem>>, vector<1x1x128x128xbf16>
    %22 = vector.shape_cast %21 : vector<1x1x128x128xbf16> to vector<128x128xbf16>
    %cst_20 = arith.constant dense<0.000000e+00> : vector<64x128xf32>
    %23 = tpu.matmul %18, %22, %cst_20 {dimension_numbers = #tpu.dot_dimension_numbers<[1], [0], [0], [1], [0, 0, 1, 1], [], []>} : vector<64x128xbf16>, vector<128x128xbf16>, vector<64x128xf32> -> vector<64x128xf32>
    %24 = arith.addf %16, %23 : vector<64x128xf32>
    %c0_21 = arith.constant 0 : index
    %c1_22 = arith.constant 1 : index
    %c0_23 = arith.constant 0 : index
    %c0_24 = arith.constant 0 : index
    %25 = vector.load %arg5[%c0_21, %c1_22, %c0_23, %c0_24] : memref<3x3x256x128xbf16, #tpu.memory_space<vmem>>, vector<1x1x256x128xbf16>
    %26 = vector.shape_cast %25 : vector<1x1x256x128xbf16> to vector<256x128xbf16>
    %cst_25 = arith.constant dense<0.000000e+00> : vector<64x128xf32>
    %27 = tpu.matmul %20, %26, %cst_25 {dimension_numbers = #tpu.dot_dimension_numbers<[1], [0], [0], [1], [0, 0, 1, 1], [], []>} : vector<64x256xbf16>, vector<256x128xbf16>, vector<64x128xf32> -> vector<64x128xf32>
    %28 = arith.addf %24, %27 : vector<64x128xf32>
    %29 = vector.extract_strided_slice %1 {offsets = [0, 2, 0], sizes = [8, 8, 128], strides = [1, 1, 1]} : vector<10x10x128xbf16> to vector<8x8x128xbf16>
    %30 = vector.shape_cast %29 : vector<8x8x128xbf16> to vector<64x128xbf16>
    %31 = vector.extract_strided_slice %3 {offsets = [0, 2, 0], sizes = [8, 8, 256], strides = [1, 1, 1]} : vector<10x10x256xbf16> to vector<8x8x256xbf16>
    %32 = vector.shape_cast %31 : vector<8x8x256xbf16> to vector<64x256xbf16>
    %c0_26 = arith.constant 0 : index
    %c2 = arith.constant 2 : index
    %c0_27 = arith.constant 0 : index
    %c0_28 = arith.constant 0 : index
    %33 = vector.load %arg3[%c0_26, %c2, %c0_27, %c0_28] : memref<3x3x128x128xbf16, #tpu.memory_space<vmem>>, vector<1x1x128x128xbf16>
    %34 = vector.shape_cast %33 : vector<1x1x128x128xbf16> to vector<128x128xbf16>
    %cst_29 = arith.constant dense<0.000000e+00> : vector<64x128xf32>
    %35 = tpu.matmul %30, %34, %cst_29 {dimension_numbers = #tpu.dot_dimension_numbers<[1], [0], [0], [1], [0, 0, 1, 1], [], []>} : vector<64x128xbf16>, vector<128x128xbf16>, vector<64x128xf32> -> vector<64x128xf32>
    %36 = arith.addf %28, %35 : vector<64x128xf32>
    %c0_30 = arith.constant 0 : index
    %c2_31 = arith.constant 2 : index
    %c0_32 = arith.constant 0 : index
    %c0_33 = arith.constant 0 : index
    %37 = vector.load %arg5[%c0_30, %c2_31, %c0_32, %c0_33] : memref<3x3x256x128xbf16, #tpu.memory_space<vmem>>, vector<1x1x256x128xbf16>
    %38 = vector.shape_cast %37 : vector<1x1x256x128xbf16> to vector<256x128xbf16>
    %cst_34 = arith.constant dense<0.000000e+00> : vector<64x128xf32>
    %39 = tpu.matmul %32, %38, %cst_34 {dimension_numbers = #tpu.dot_dimension_numbers<[1], [0], [0], [1], [0, 0, 1, 1], [], []>} : vector<64x256xbf16>, vector<256x128xbf16>, vector<64x128xf32> -> vector<64x128xf32>
    %40 = arith.addf %36, %39 : vector<64x128xf32>
    %41 = vector.extract_strided_slice %1 {offsets = [1, 0, 0], sizes = [8, 8, 128], strides = [1, 1, 1]} : vector<10x10x128xbf16> to vector<8x8x128xbf16>
    %42 = vector.shape_cast %41 : vector<8x8x128xbf16> to vector<64x128xbf16>
    %43 = vector.extract_strided_slice %3 {offsets = [1, 0, 0], sizes = [8, 8, 256], strides = [1, 1, 1]} : vector<10x10x256xbf16> to vector<8x8x256xbf16>
    %44 = vector.shape_cast %43 : vector<8x8x256xbf16> to vector<64x256xbf16>
    %c1_35 = arith.constant 1 : index
    %c0_36 = arith.constant 0 : index
    %c0_37 = arith.constant 0 : index
    %c0_38 = arith.constant 0 : index
    %45 = vector.load %arg3[%c1_35, %c0_36, %c0_37, %c0_38] : memref<3x3x128x128xbf16, #tpu.memory_space<vmem>>, vector<1x1x128x128xbf16>
    %46 = vector.shape_cast %45 : vector<1x1x128x128xbf16> to vector<128x128xbf16>
    %cst_39 = arith.constant dense<0.000000e+00> : vector<64x128xf32>
    %47 = tpu.matmul %42, %46, %cst_39 {dimension_numbers = #tpu.dot_dimension_numbers<[1], [0], [0], [1], [0, 0, 1, 1], [], []>} : vector<64x128xbf16>, vector<128x128xbf16>, vector<64x128xf32> -> vector<64x128xf32>
    %48 = arith.addf %40, %47 : vector<64x128xf32>
    %c1_40 = arith.constant 1 : index
    %c0_41 = arith.constant 0 : index
    %c0_42 = arith.constant 0 : index
    %c0_43 = arith.constant 0 : index
    %49 = vector.load %arg5[%c1_40, %c0_41, %c0_42, %c0_43] : memref<3x3x256x128xbf16, #tpu.memory_space<vmem>>, vector<1x1x256x128xbf16>
    %50 = vector.shape_cast %49 : vector<1x1x256x128xbf16> to vector<256x128xbf16>
    %cst_44 = arith.constant dense<0.000000e+00> : vector<64x128xf32>
    %51 = tpu.matmul %44, %50, %cst_44 {dimension_numbers = #tpu.dot_dimension_numbers<[1], [0], [0], [1], [0, 0, 1, 1], [], []>} : vector<64x256xbf16>, vector<256x128xbf16>, vector<64x128xf32> -> vector<64x128xf32>
    %52 = arith.addf %48, %51 : vector<64x128xf32>
    %53 = vector.extract_strided_slice %1 {offsets = [1, 1, 0], sizes = [8, 8, 128], strides = [1, 1, 1]} : vector<10x10x128xbf16> to vector<8x8x128xbf16>
    %54 = vector.shape_cast %53 : vector<8x8x128xbf16> to vector<64x128xbf16>
    %55 = vector.extract_strided_slice %3 {offsets = [1, 1, 0], sizes = [8, 8, 256], strides = [1, 1, 1]} : vector<10x10x256xbf16> to vector<8x8x256xbf16>
    %56 = vector.shape_cast %55 : vector<8x8x256xbf16> to vector<64x256xbf16>
    %c1_45 = arith.constant 1 : index
    %c1_46 = arith.constant 1 : index
    %c0_47 = arith.constant 0 : index
    %c0_48 = arith.constant 0 : index
    %57 = vector.load %arg3[%c1_45, %c1_46, %c0_47, %c0_48] : memref<3x3x128x128xbf16, #tpu.memory_space<vmem>>, vector<1x1x128x128xbf16>
    %58 = vector.shape_cast %57 : vector<1x1x128x128xbf16> to vector<128x128xbf16>
    %cst_49 = arith.constant dense<0.000000e+00> : vector<64x128xf32>
    %59 = tpu.matmul %54, %58, %cst_49 {dimension_numbers = #tpu.dot_dimension_numbers<[1], [0], [0], [1], [0, 0, 1, 1], [], []>} : vector<64x128xbf16>, vector<128x128xbf16>, vector<64x128xf32> -> vector<64x128xf32>
    %60 = arith.addf %52, %59 : vector<64x128xf32>
    %c1_50 = arith.constant 1 : index
    %c1_51 = arith.constant 1 : index
    %c0_52 = arith.constant 0 : index
    %c0_53 = arith.constant 0 : index
    %61 = vector.load %arg5[%c1_50, %c1_51, %c0_52, %c0_53] : memref<3x3x256x128xbf16, #tpu.memory_space<vmem>>, vector<1x1x256x128xbf16>
    %62 = vector.shape_cast %61 : vector<1x1x256x128xbf16> to vector<256x128xbf16>
    %cst_54 = arith.constant dense<0.000000e+00> : vector<64x128xf32>
    %63 = tpu.matmul %56, %62, %cst_54 {dimension_numbers = #tpu.dot_dimension_numbers<[1], [0], [0], [1], [0, 0, 1, 1], [], []>} : vector<64x256xbf16>, vector<256x128xbf16>, vector<64x128xf32> -> vector<64x128xf32>
    %64 = arith.addf %60, %63 : vector<64x128xf32>
    %65 = vector.extract_strided_slice %1 {offsets = [1, 2, 0], sizes = [8, 8, 128], strides = [1, 1, 1]} : vector<10x10x128xbf16> to vector<8x8x128xbf16>
    %66 = vector.shape_cast %65 : vector<8x8x128xbf16> to vector<64x128xbf16>
    %67 = vector.extract_strided_slice %3 {offsets = [1, 2, 0], sizes = [8, 8, 256], strides = [1, 1, 1]} : vector<10x10x256xbf16> to vector<8x8x256xbf16>
    %68 = vector.shape_cast %67 : vector<8x8x256xbf16> to vector<64x256xbf16>
    %c1_55 = arith.constant 1 : index
    %c2_56 = arith.constant 2 : index
    %c0_57 = arith.constant 0 : index
    %c0_58 = arith.constant 0 : index
    %69 = vector.load %arg3[%c1_55, %c2_56, %c0_57, %c0_58] : memref<3x3x128x128xbf16, #tpu.memory_space<vmem>>, vector<1x1x128x128xbf16>
    %70 = vector.shape_cast %69 : vector<1x1x128x128xbf16> to vector<128x128xbf16>
    %cst_59 = arith.constant dense<0.000000e+00> : vector<64x128xf32>
    %71 = tpu.matmul %66, %70, %cst_59 {dimension_numbers = #tpu.dot_dimension_numbers<[1], [0], [0], [1], [0, 0, 1, 1], [], []>} : vector<64x128xbf16>, vector<128x128xbf16>, vector<64x128xf32> -> vector<64x128xf32>
    %72 = arith.addf %64, %71 : vector<64x128xf32>
    %c1_60 = arith.constant 1 : index
    %c2_61 = arith.constant 2 : index
    %c0_62 = arith.constant 0 : index
    %c0_63 = arith.constant 0 : index
    %73 = vector.load %arg5[%c1_60, %c2_61, %c0_62, %c0_63] : memref<3x3x256x128xbf16, #tpu.memory_space<vmem>>, vector<1x1x256x128xbf16>
    %74 = vector.shape_cast %73 : vector<1x1x256x128xbf16> to vector<256x128xbf16>
    %cst_64 = arith.constant dense<0.000000e+00> : vector<64x128xf32>
    %75 = tpu.matmul %68, %74, %cst_64 {dimension_numbers = #tpu.dot_dimension_numbers<[1], [0], [0], [1], [0, 0, 1, 1], [], []>} : vector<64x256xbf16>, vector<256x128xbf16>, vector<64x128xf32> -> vector<64x128xf32>
    %76 = arith.addf %72, %75 : vector<64x128xf32>
    %77 = vector.extract_strided_slice %1 {offsets = [2, 0, 0], sizes = [8, 8, 128], strides = [1, 1, 1]} : vector<10x10x128xbf16> to vector<8x8x128xbf16>
    %78 = vector.shape_cast %77 : vector<8x8x128xbf16> to vector<64x128xbf16>
    %79 = vector.extract_strided_slice %3 {offsets = [2, 0, 0], sizes = [8, 8, 256], strides = [1, 1, 1]} : vector<10x10x256xbf16> to vector<8x8x256xbf16>
    %80 = vector.shape_cast %79 : vector<8x8x256xbf16> to vector<64x256xbf16>
    %c2_65 = arith.constant 2 : index
    %c0_66 = arith.constant 0 : index
    %c0_67 = arith.constant 0 : index
    %c0_68 = arith.constant 0 : index
    %81 = vector.load %arg3[%c2_65, %c0_66, %c0_67, %c0_68] : memref<3x3x128x128xbf16, #tpu.memory_space<vmem>>, vector<1x1x128x128xbf16>
    %82 = vector.shape_cast %81 : vector<1x1x128x128xbf16> to vector<128x128xbf16>
    %cst_69 = arith.constant dense<0.000000e+00> : vector<64x128xf32>
    %83 = tpu.matmul %78, %82, %cst_69 {dimension_numbers = #tpu.dot_dimension_numbers<[1], [0], [0], [1], [0, 0, 1, 1], [], []>} : vector<64x128xbf16>, vector<128x128xbf16>, vector<64x128xf32> -> vector<64x128xf32>
    %84 = arith.addf %76, %83 : vector<64x128xf32>
    %c2_70 = arith.constant 2 : index
    %c0_71 = arith.constant 0 : index
    %c0_72 = arith.constant 0 : index
    %c0_73 = arith.constant 0 : index
    %85 = vector.load %arg5[%c2_70, %c0_71, %c0_72, %c0_73] : memref<3x3x256x128xbf16, #tpu.memory_space<vmem>>, vector<1x1x256x128xbf16>
    %86 = vector.shape_cast %85 : vector<1x1x256x128xbf16> to vector<256x128xbf16>
    %cst_74 = arith.constant dense<0.000000e+00> : vector<64x128xf32>
    %87 = tpu.matmul %80, %86, %cst_74 {dimension_numbers = #tpu.dot_dimension_numbers<[1], [0], [0], [1], [0, 0, 1, 1], [], []>} : vector<64x256xbf16>, vector<256x128xbf16>, vector<64x128xf32> -> vector<64x128xf32>
    %88 = arith.addf %84, %87 : vector<64x128xf32>
    %89 = vector.extract_strided_slice %1 {offsets = [2, 1, 0], sizes = [8, 8, 128], strides = [1, 1, 1]} : vector<10x10x128xbf16> to vector<8x8x128xbf16>
    %90 = vector.shape_cast %89 : vector<8x8x128xbf16> to vector<64x128xbf16>
    %91 = vector.extract_strided_slice %3 {offsets = [2, 1, 0], sizes = [8, 8, 256], strides = [1, 1, 1]} : vector<10x10x256xbf16> to vector<8x8x256xbf16>
    %92 = vector.shape_cast %91 : vector<8x8x256xbf16> to vector<64x256xbf16>
    %c2_75 = arith.constant 2 : index
    %c1_76 = arith.constant 1 : index
    %c0_77 = arith.constant 0 : index
    %c0_78 = arith.constant 0 : index
    %93 = vector.load %arg3[%c2_75, %c1_76, %c0_77, %c0_78] : memref<3x3x128x128xbf16, #tpu.memory_space<vmem>>, vector<1x1x128x128xbf16>
    %94 = vector.shape_cast %93 : vector<1x1x128x128xbf16> to vector<128x128xbf16>
    %cst_79 = arith.constant dense<0.000000e+00> : vector<64x128xf32>
    %95 = tpu.matmul %90, %94, %cst_79 {dimension_numbers = #tpu.dot_dimension_numbers<[1], [0], [0], [1], [0, 0, 1, 1], [], []>} : vector<64x128xbf16>, vector<128x128xbf16>, vector<64x128xf32> -> vector<64x128xf32>
    %96 = arith.addf %88, %95 : vector<64x128xf32>
    %c2_80 = arith.constant 2 : index
    %c1_81 = arith.constant 1 : index
    %c0_82 = arith.constant 0 : index
    %c0_83 = arith.constant 0 : index
    %97 = vector.load %arg5[%c2_80, %c1_81, %c0_82, %c0_83] : memref<3x3x256x128xbf16, #tpu.memory_space<vmem>>, vector<1x1x256x128xbf16>
    %98 = vector.shape_cast %97 : vector<1x1x256x128xbf16> to vector<256x128xbf16>
    %cst_84 = arith.constant dense<0.000000e+00> : vector<64x128xf32>
    %99 = tpu.matmul %92, %98, %cst_84 {dimension_numbers = #tpu.dot_dimension_numbers<[1], [0], [0], [1], [0, 0, 1, 1], [], []>} : vector<64x256xbf16>, vector<256x128xbf16>, vector<64x128xf32> -> vector<64x128xf32>
    %100 = arith.addf %96, %99 : vector<64x128xf32>
    %101 = vector.extract_strided_slice %1 {offsets = [2, 2, 0], sizes = [8, 8, 128], strides = [1, 1, 1]} : vector<10x10x128xbf16> to vector<8x8x128xbf16>
    %102 = vector.shape_cast %101 : vector<8x8x128xbf16> to vector<64x128xbf16>
    %103 = vector.extract_strided_slice %3 {offsets = [2, 2, 0], sizes = [8, 8, 256], strides = [1, 1, 1]} : vector<10x10x256xbf16> to vector<8x8x256xbf16>
    %104 = vector.shape_cast %103 : vector<8x8x256xbf16> to vector<64x256xbf16>
    %c2_85 = arith.constant 2 : index
    %c2_86 = arith.constant 2 : index
    %c0_87 = arith.constant 0 : index
    %c0_88 = arith.constant 0 : index
    %105 = vector.load %arg3[%c2_85, %c2_86, %c0_87, %c0_88] : memref<3x3x128x128xbf16, #tpu.memory_space<vmem>>, vector<1x1x128x128xbf16>
    %106 = vector.shape_cast %105 : vector<1x1x128x128xbf16> to vector<128x128xbf16>
    %cst_89 = arith.constant dense<0.000000e+00> : vector<64x128xf32>
    %107 = tpu.matmul %102, %106, %cst_89 {dimension_numbers = #tpu.dot_dimension_numbers<[1], [0], [0], [1], [0, 0, 1, 1], [], []>} : vector<64x128xbf16>, vector<128x128xbf16>, vector<64x128xf32> -> vector<64x128xf32>
    %108 = arith.addf %100, %107 : vector<64x128xf32>
    %c2_90 = arith.constant 2 : index
    %c2_91 = arith.constant 2 : index
    %c0_92 = arith.constant 0 : index
    %c0_93 = arith.constant 0 : index
    %109 = vector.load %arg5[%c2_90, %c2_91, %c0_92, %c0_93] : memref<3x3x256x128xbf16, #tpu.memory_space<vmem>>, vector<1x1x256x128xbf16>
    %110 = vector.shape_cast %109 : vector<1x1x256x128xbf16> to vector<256x128xbf16>
    %cst_94 = arith.constant dense<0.000000e+00> : vector<64x128xf32>
    %111 = tpu.matmul %104, %110, %cst_94 {dimension_numbers = #tpu.dot_dimension_numbers<[1], [0], [0], [1], [0, 0, 1, 1], [], []>} : vector<64x256xbf16>, vector<256x128xbf16>, vector<64x128xf32> -> vector<64x128xf32>
    %112 = arith.addf %108, %111 : vector<64x128xf32>
    %c0_95 = arith.constant 0 : index
    %c0_96 = arith.constant 0 : index
    %113 = vector.load %arg6[%c0_95, %c0_96] : memref<1x128xf32, #tpu.memory_space<vmem>>, vector<1x128xf32>
    %114 = vector.broadcast %113 : vector<1x128xf32> to vector<64x128xf32>
    %115 = arith.addf %112, %114 : vector<64x128xf32>
    %cst_97 = arith.constant dense<0.000000e+00> : vector<128xf32>
    %116 = vector.multi_reduction <add>, %115, %cst_97 [0] : vector<64x128xf32> to vector<128xf32>
    %117 = vector.shape_cast %116 : vector<128xf32> to vector<1x128xf32>
    %cst_98 = arith.constant 6.400000e+01 : f32
    %118 = vector.broadcast %cst_98 : f32 to vector<1x128xf32>
    %119 = arith.divf %117, %118 : vector<1x128xf32>
    %120 = vector.broadcast %119 : vector<1x128xf32> to vector<64x128xf32>
    %121 = arith.subf %115, %120 : vector<64x128xf32>
    %122 = arith.mulf %121, %121 : vector<64x128xf32>
    %cst_99 = arith.constant dense<0.000000e+00> : vector<128xf32>
    %123 = vector.multi_reduction <add>, %122, %cst_99 [0] : vector<64x128xf32> to vector<128xf32>
    %124 = vector.shape_cast %123 : vector<128xf32> to vector<1x128xf32>
    %cst_100 = arith.constant 6.400000e+01 : f32
    %125 = vector.broadcast %cst_100 : f32 to vector<1x128xf32>
    %126 = arith.divf %124, %125 : vector<1x128xf32>
    %127 = vector.broadcast %119 : vector<1x128xf32> to vector<64x128xf32>
    %128 = arith.subf %115, %127 : vector<64x128xf32>
    %cst_101 = arith.constant 9.99999974E-6 : f32
    %129 = vector.broadcast %cst_101 : f32 to vector<1x128xf32>
    %130 = arith.addf %126, %129 : vector<1x128xf32>
    %131 = math.rsqrt %130 : vector<1x128xf32>
    %132 = vector.broadcast %131 : vector<1x128xf32> to vector<64x128xf32>
    %133 = arith.mulf %128, %132 : vector<64x128xf32>
    %cst_102 = arith.constant 0.000000e+00 : f32
    %134 = vector.broadcast %cst_102 : f32 to vector<64x128xf32>
    %135 = arith.cmpf oge, %133, %134 : vector<64x128xf32>
    %cst_103 = arith.constant 0.00999999977 : f32
    %136 = vector.broadcast %cst_103 : f32 to vector<64x128xf32>
    %137 = arith.mulf %136, %133 : vector<64x128xf32>
    %138 = arith.select %135, %133, %137 : vector<64x128xi1>, vector<64x128xf32>
    %139 = vector.shape_cast %138 : vector<64x128xf32> to vector<1x8x8x128xf32>
    %140 = arith.truncf %139 : vector<1x8x8x128xf32> to vector<1x8x8x128xbf16>
    %c0_104 = arith.constant 0 : index
    %c0_105 = arith.constant 0 : index
    %c0_106 = arith.constant 0 : index
    %c0_107 = arith.constant 0 : index
    %141 = vector.load %arg7[%c0_104, %c0_105, %c0_106, %c0_107] : memref<1x8x8x128xbf16, #tpu.memory_space<vmem>>, vector<1x8x8x128xbf16>
    tpu.vector_store %arg7[%c0_104, %c0_105, %c0_106, %c0_107], %140 {strides = array<i32>} : memref<1x8x8x128xbf16, #tpu.memory_space<vmem>>, vector<1x8x8x128xbf16>,
    return
  }
  func.func @transform_0(%arg0: i32, %arg1: i32) -> (i32, i32, i32, i32) {
    %c0_i32 = arith.constant 0 : i32
    %c0_i32_0 = arith.constant 0 : i32
    %c0_i32_1 = arith.constant 0 : i32
    %c0_i32_2 = arith.constant 0 : i32
    return %arg0, %c0_i32, %c0_i32_0, %c0_i32_1 : i32, i32, i32, i32
  }
  func.func @transform_1(%arg0: i32, %arg1: i32) -> (i32, i32, i32, i32) {
    %c0_i32 = arith.constant 0 : i32
    %c0_i32_0 = arith.constant 0 : i32
    %c0_i32_1 = arith.constant 0 : i32
    %c0_i32_2 = arith.constant 0 : i32
    return %c0_i32, %c0_i32_0, %c0_i32_1, %arg1 : i32, i32, i32, i32
  }
  func.func @transform_2(%arg0: i32, %arg1: i32) -> (i32, i32, i32, i32) {
    %c0_i32 = arith.constant 0 : i32
    %c0_i32_0 = arith.constant 0 : i32
    %c0_i32_1 = arith.constant 0 : i32
    %c0_i32_2 = arith.constant 0 : i32
    return %arg0, %c0_i32, %c0_i32_0, %c0_i32_1 : i32, i32, i32, i32
  }
  func.func @transform_3(%arg0: i32, %arg1: i32) -> (i32, i32, i32, i32) {
    %c0_i32 = arith.constant 0 : i32
    %c0_i32_0 = arith.constant 0 : i32
    %c0_i32_1 = arith.constant 0 : i32
    %c0_i32_2 = arith.constant 0 : i32
    return %c0_i32, %c0_i32_0, %c0_i32_1, %arg1 : i32, i32, i32, i32
  }
  func.func @transform_4(%arg0: i32, %arg1: i32) -> (i32, i32) {
    %c0_i32 = arith.constant 0 : i32
    %c0_i32_0 = arith.constant 0 : i32
    return %c0_i32, %arg1 : i32, i32
  }
  func.func @transform_5(%arg0: i32, %arg1: i32) -> (i32, i32, i32, i32) {
    %c0_i32 = arith.constant 0 : i32
    %c0_i32_0 = arith.constant 0 : i32
    %c0_i32_1 = arith.constant 0 : i32
    return %arg0, %c0_i32, %c0_i32_0, %arg1 : i32, i32, i32, i32
  }
}

module attributes {stable_mosaic.version = 11 : i64} {
  func.func @_pointwise_residual_kernel(%arg0: i32, %arg1: memref<128x384xbf16, #tpu.memory_space<vmem>>, %arg2: memref<384x256xbf16, #tpu.memory_space<vmem>>, %arg3: memref<1x256xf32, #tpu.memory_space<vmem>>, %arg4: memref<128x256xf32, #tpu.memory_space<vmem>>, %arg5: memref<128x256xf32, #tpu.memory_space<vmem>>) attributes {dimension_semantics = [#tpu.dimension_semantics<parallel>], iteration_bounds = array<i64: 1>, scalar_prefetch = 0 : i64, scratch_operands = 0 : i64, tpu.core_type = #tpu.core_type<tc>, window_params = [{transform_indices = @transform_0, window_bounds = array<i64: 128, 384>}, {pipeline_mode = #tpu.pipeline_mode<synchronous>, transform_indices = @transform_1, window_bounds = array<i64: 384, 256>}, {pipeline_mode = #tpu.pipeline_mode<synchronous>, transform_indices = @transform_2, window_bounds = array<i64: 1, 256>}, {transform_indices = @transform_3, window_bounds = array<i64: 128, 256>}, {transform_indices = @transform_4, window_bounds = array<i64: 128, 256>}]} {
    %c0 = arith.constant 0 : index
    %c0_0 = arith.constant 0 : index
    %0 = vector.load %arg1[%c0, %c0_0] : memref<128x384xbf16, #tpu.memory_space<vmem>>, vector<128x384xbf16>
    %c0_1 = arith.constant 0 : index
    %c0_2 = arith.constant 0 : index
    %1 = vector.load %arg2[%c0_1, %c0_2] : memref<384x256xbf16, #tpu.memory_space<vmem>>, vector<384x256xbf16>
    %cst = arith.constant dense<0.000000e+00> : vector<128x256xf32>
    %2 = tpu.matmul %0, %1, %cst {dimension_numbers = #tpu.dot_dimension_numbers<[1], [0], [0], [1], [0, 0, 1, 1], [], []>} : vector<128x384xbf16>, vector<384x256xbf16>, vector<128x256xf32> -> vector<128x256xf32>
    %c0_3 = arith.constant 0 : index
    %c0_4 = arith.constant 0 : index
    %3 = vector.load %arg3[%c0_3, %c0_4] : memref<1x256xf32, #tpu.memory_space<vmem>>, vector<1x256xf32>
    %4 = vector.broadcast %3 : vector<1x256xf32> to vector<128x256xf32>
    %5 = arith.addf %2, %4 : vector<128x256xf32>
    %c0_5 = arith.constant 0 : index
    %c0_6 = arith.constant 0 : index
    %6 = vector.load %arg4[%c0_5, %c0_6] : memref<128x256xf32, #tpu.memory_space<vmem>>, vector<128x256xf32>
    %7 = arith.addf %5, %6 : vector<128x256xf32>
    %c0_7 = arith.constant 0 : index
    %c0_8 = arith.constant 0 : index
    %8 = vector.load %arg5[%c0_7, %c0_8] : memref<128x256xf32, #tpu.memory_space<vmem>>, vector<128x256xf32>
    tpu.vector_store %arg5[%c0_7, %c0_8], %7 {strides = array<i32>} : memref<128x256xf32, #tpu.memory_space<vmem>>, vector<128x256xf32>,
    return
  }
  func.func @transform_0(%arg0: i32) -> (i32, i32) {
    %c0_i32 = arith.constant 0 : i32
    %c0_i32_0 = arith.constant 0 : i32
    return %arg0, %c0_i32 : i32, i32
  }
  func.func @transform_1(%arg0: i32) -> (i32, i32) {
    %c0_i32 = arith.constant 0 : i32
    %c0_i32_0 = arith.constant 0 : i32
    %c0_i32_1 = arith.constant 0 : i32
    return %c0_i32, %c0_i32_0 : i32, i32
  }
  func.func @transform_2(%arg0: i32) -> (i32, i32) {
    %c0_i32 = arith.constant 0 : i32
    %c0_i32_0 = arith.constant 0 : i32
    %c0_i32_1 = arith.constant 0 : i32
    return %c0_i32, %c0_i32_0 : i32, i32
  }
  func.func @transform_3(%arg0: i32) -> (i32, i32) {
    %c0_i32 = arith.constant 0 : i32
    %c0_i32_0 = arith.constant 0 : i32
    return %arg0, %c0_i32 : i32, i32
  }
  func.func @transform_4(%arg0: i32) -> (i32, i32) {
    %c0_i32 = arith.constant 0 : i32
    %c0_i32_0 = arith.constant 0 : i32
    return %arg0, %c0_i32 : i32, i32
  }
}

</mosaic_0001>

<llo_original>
// kernel: difference_integrated_hg_filter_forward.4
$region0: #{difference_integrated_hg_filter_forward.4}
  #allocation0 [shape = 'u32[]', space=smem, size = 0x4, offset = 0x4, fixed_abs, tag = 'smem constant byte address 0x4 - core index']
  #allocation1 [shape = 'u32[144,128]{1,0:T(1,128)}', space=vmem, size = 0x12000, scoped, tag = 'internal scratch']
  %s0 = inlined_call_operand.hbm [shape: bf16[2,64,196], index: 0, kind: input, shape index: {}]
  %s1 = inlined_call_operand.hbm [shape: bf16[196,256], index: 1, kind: input, shape index: {}]
  %s2 = inlined_call_operand.hbm [shape: f32[1,256], index: 2, kind: input, shape index: {}]
  %s3 = inlined_call_operand.hbm [shape: bf16[2,64,256], index: 3, kind: output, shape index: {}]
  %s4 = sld [smem:[#allocation0]]
  $region57: #{difference_integrated_hg_filter_forward.4} parent=0
    _
  %s6 = ssub.s32 1, %s4
  %s7 = scalar_select 0, %s6, %s4
  $region1: #{difference_integrated_hg_filter_forward.4} parent=0
    #allocation2 [shape = 'u8[65536]{0}', space=vmem, size = 0x10000, scoped, tag = 'input window, operand 0']
    #allocation3 [shape = 's32[2]{0}', space=sflag, size = 0x8, scoped, tag = 'scoped memory for difference_integrated_hg_filter_forward.4']
    #allocation4 [shape = 's32[2]{0}', space=sflag, size = 0x8, scoped, tag = 'scoped memory for difference_integrated_hg_filter_forward.4']
    #allocation5 [shape = 'u8[102400]{0}', space=vmem, size = 0x19000, scoped, tag = 'input window, operand 1']
    #allocation6 [shape = 's32[2]{0}', space=sflag, size = 0x8, scoped, tag = 'scoped memory for difference_integrated_hg_filter_forward.4']
    #allocation7 [shape = 'u8[1024]{0}', space=vmem, size = 0x400, scoped, tag = 'input window, operand 2']
    #allocation8 [shape = 'u8[32768]{0}', space=vmem, size = 0x8000, scoped, tag = 'output window, operand 0']
    %8 = vsyncpa [#allocation3], 0
    %s9 = scalar_lea.sflag [#allocation3], 1
    %10 = vsyncpa %s9, 0
    %11 = vsyncpa [#allocation6], 0
    %s12 = scalar_lea.sflag [#allocation6], 1
    %13 = vsyncpa %s12, 0
    %14 = vsyncpa [#allocation4], 0
    %s15 = scalar_lea.sflag [#allocation4], 1
    %16 = vsyncpa %s15, 0
    loop: start=0, step=1, limit=6
    $region2: #{difference_integrated_hg_filter_forward.4} parent=1 // loop_pre_header
      _
    $region3: #{difference_integrated_hg_filter_forward.4} parent=1 // loop_header
      %s18 = sphi 0, %s22
      %p19 = scmp.ge.s32.totalorder %s18, 6
      %s25 = sphi 0, %s37
      %s26 = sphi 0, %s33
      %s27 = sphi 0, %s25
      %s28 = sphi 0, %s26
      %s29 = sphi 0, %s27
      %s30 = sphi 0, %s28
      %s40 = sphi 0, %s42
      %s43 = sphi 0, %s40
      %s44 = sphi 0, %s43
      %s60 = sphi 0, %s44
      %s66 = sphi 0, %s68
      %s69 = sphi 0, %s66
      %s70 = sphi 0, %s69
      %s86 = sphi 0, %s70
      %s92 = sphi 0, %s94
      %s95 = sphi 0, %s92
      %s96 = sphi 0, %s95
      %s112 = sphi 0, %s96
      %s120 = sphi 0, %s122
      %s123 = sphi 0, %s120
      %s124 = sphi 0, %s123
      %s140 = sphi 0, %s124
    $region4: #{difference_integrated_hg_filter_forward.4} parent=1 // loop_header_branch
      %21 = sbr.rel (%p19) target = $region8
    $region5: #{difference_integrated_hg_filter_forward.4} parent=1 // loop_body
      %s23 = ssub.s32 %s18, 1
      %s24 = ssub.s32 %s18, 2
      %s31 = sadd.s32 1, %s26
      %p32 = scmp.ge.s32.totalorder %s31, 2
      %s33 = scalar_select %p32, 0, %s31
      %s34 = sadd.s32 1, %s25
      %s35 = scalar_select %p32, %s34, %s25
      %p36 = scmp.ge.s32.totalorder %s35, 2
      %s37 = scalar_select %p36, 0, %s35
      %s38 = ssub.s32 %s25, %s37
      %p39 = scmp.eq.s32.totalorder %s38, 0
      %s41 = sadd.s32 %s40, 1
      %s42 = scalar_select %p39, %s40, %s41
      %p45 = pneg %p39
      %p46 = scmp.eq.s32.totalorder %s18, 3
      %p47 = por %p45, %p46
      %p48 = scmp.ne.s32.totalorder %s40, %s43
      %p49 = scmp.eq.s32.totalorder %s18, 0
      %p50 = por %p48, %p49
      %p51 = scmp.ne.s32.totalorder %s40, %s43
      %p52 = scmp.eq.s32.totalorder %s23, 3
      %p53 = por %p51, %p52
      %p54 = scmp.ne.s32.totalorder %s43, %s44
      %p55 = scmp.eq.s32.totalorder %s23, 0
      %p56 = por %p54, %p55
      %p57 = scmp.ne.s32.totalorder %s43, %s44
      %p58 = scmp.eq.s32.totalorder %s24, 3
      %p59 = por %p57, %p58
      %p61 = scmp.ne.s32.totalorder %s44, %s60
      %p62 = scmp.eq.s32.totalorder %s24, 0
      %p63 = por %p61, %p62
      %s64 = ssub.s32 %s26, %s33
      %p65 = scmp.eq.s32.totalorder %s64, 0
      %s67 = sadd.s32 %s66, 1
      %s68 = scalar_select %p65, %s66, %s67
      %p71 = pneg %p65
      %p72 = scmp.eq.s32.totalorder %s18, 3
      %p73 = por %p71, %p72
      %p74 = scmp.ne.s32.totalorder %s66, %s69
      %p75 = scmp.eq.s32.totalorder %s18, 0
      %p76 = por %p74, %p75
      %p77 = scmp.ne.s32.totalorder %s66, %s69
      %p78 = scmp.eq.s32.totalorder %s23, 3
      %p79 = por %p77, %p78
      %p80 = scmp.ne.s32.totalorder %s69, %s70
      %p81 = scmp.eq.s32.totalorder %s23, 0
      %p82 = por %p80, %p81
      %p83 = scmp.ne.s32.totalorder %s69, %s70
      %p84 = scmp.eq.s32.totalorder %s24, 3
      %p85 = por %p83, %p84
      %p87 = scmp.ne.s32.totalorder %s70, %s86
      %p88 = scmp.eq.s32.totalorder %s24, 0
      %p89 = por %p87, %p88
      %s90 = ssub.s32 %s26, %s33
      %p91 = scmp.eq.s32.totalorder %s90, 0
      %s93 = sadd.s32 %s92, 1
      %s94 = scalar_select %p91, %s92, %s93
      %p97 = pneg %p91
      %p98 = scmp.eq.s32.totalorder %s18, 3
      %p99 = por %p97, %p98
      %p100 = scmp.ne.s32.totalorder %s92, %s95
      %p101 = scmp.eq.s32.totalorder %s18, 0
      %p102 = por %p100, %p101
      %p103 = scmp.ne.s32.totalorder %s92, %s95
      %p104 = scmp.eq.s32.totalorder %s23, 3
      %p105 = por %p103, %p104
      %p106 = scmp.ne.s32.totalorder %s95, %s96
      %p107 = scmp.eq.s32.totalorder %s23, 0
      %p108 = por %p106, %p107
      %p109 = scmp.ne.s32.totalorder %s95, %s96
      %p110 = scmp.eq.s32.totalorder %s24, 3
      %p111 = por %p109, %p110
      %p113 = scmp.ne.s32.totalorder %s96, %s112
      %p114 = scmp.eq.s32.totalorder %s24, 0
      %p115 = por %p113, %p114
      %s116 = ssub.s32 %s25, %s37
      %s117 = ssub.s32 %s26, %s33
      %s118 = sor.u32 %s116, %s117
      %p119 = scmp.eq.s32.totalorder %s118, 0
      %s121 = sadd.s32 %s120, 1
      %s122 = scalar_select %p119, %s120, %s121
      %p125 = pneg %p119
      %p126 = scmp.eq.s32.totalorder %s18, 3
      %p127 = por %p125, %p126
      %p128 = scmp.ne.s32.totalorder %s120, %s123
      %p129 = scmp.eq.s32.totalorder %s18, 0
      %p130 = por %p128, %p129
      %p131 = scmp.ne.s32.totalorder %s120, %s123
      %p132 = scmp.eq.s32.totalorder %s23, 3
      %p133 = por %p131, %p132
      %p134 = scmp.ne.s32.totalorder %s123, %s124
      %p135 = scmp.eq.s32.totalorder %s23, 0
      %p136 = por %p134, %p135
      %p137 = scmp.ne.s32.totalorder %s123, %s124
      %p138 = scmp.eq.s32.totalorder %s24, 3
      %p139 = por %p137, %p138
      %p141 = scmp.ne.s32.totalorder %s124, %s140
      %p142 = scmp.eq.s32.totalorder %s24, 0
      %p143 = por %p141, %p142
      %p144 = scmp.le.s32.totalorder 1, %s18
      %p145 = scmp.lt.s32.totalorder %s18, 5
      %p146 = pnand %p144, %p145
      %p147 = pneg %p146
      // Predicated region
      $region9: #{difference_integrated_hg_filter_forward.4} parent=5 // pred_check
        _
      $region10: #{difference_integrated_hg_filter_forward.4} parent=5 // pred_check_branch
        %149 = sbr.rel (%p146) target = $region12
      $region11: #{difference_integrated_hg_filter_forward.4} parent=5 // pred_region
        %s150 = ssub.s32 %s18, 1
      $region12: #{difference_integrated_hg_filter_forward.4} parent=5 // pred_fallthru
        _
      %p151 = scmp.lt.s32.totalorder %s18, 4
      // Predicated region
      $region13: #{difference_integrated_hg_filter_forward.4} parent=5 // pred_check
        %p152 = pneg %p151
      $region14: #{difference_integrated_hg_filter_forward.4} parent=5 // pred_check_branch
        %154 = sbr.rel (%p152) target = $region16
      $region15: #{difference_integrated_hg_filter_forward.4} parent=5 // pred_region
        // Predicated region
        $region17: #{difference_integrated_hg_filter_forward.4} parent=15 // pred_check
          %p155 = pneg %p50
        $region18: #{difference_integrated_hg_filter_forward.4} parent=15 // pred_check_branch
          %157 = sbr.rel (%p155) target = $region20
        $region19: #{difference_integrated_hg_filter_forward.4} parent=15 // pred_region
          %s158 = sand.u32 %s40, 1
          %s159 = scalar_lea.sflag [#allocation3], %s158
          %s160 = sand.u32 %s40, 1
          %s161 = smul.addr %s160, 64
          %s162 = scalar_lea.vmem [#allocation2], %s161
          %s164 = ssub.s32 1024, 1024
          %165 = vsyncadd %s159, %s164
          %s166 = smul.addr %s25, 16
          %s167 = smul.addr %s166, 64
          %s168 = scalar_lea.hbm %s0, %s167
          %s169 = sshll.u32 %s162, 4
          %s170 = int_to_ptr.vmem [resolvable:$true] %s169
          %175 = dma.hbm_to_vmem [thread:$0]  %s168, 1024, %s170, %s159, 128, 128, 8
        $region20: #{difference_integrated_hg_filter_forward.4} parent=15 // pred_fallthru
          _
        // Predicated region
        $region21: #{difference_integrated_hg_filter_forward.4} parent=15 // pred_check
          %p176 = pneg %p76
        $region22: #{difference_integrated_hg_filter_forward.4} parent=15 // pred_check_branch
          %178 = sbr.rel (%p176) target = $region24
        $region23: #{difference_integrated_hg_filter_forward.4} parent=15 // pred_region
          %s179 = sand.u32 %s18, 1
          %s180 = scalar_lea.sflag [#allocation6], %s179
          %s181 = sand.u32 %s66, 1
          %s182 = smul.addr %s181, 100
          %s183 = scalar_lea.vmem [#allocation5], %s182
          %s185 = ssub.s32 1600, 1600
          %186 = vsyncadd %s180, %s185
          %s187 = smul.addr %s26, 64
          %s188 = scalar_lea.hbm %s1, %s187
          %s189 = sshll.u32 %s183, 4
          %s190 = int_to_ptr.vmem [resolvable:$true] %s189
          %195 = dma.hbm_to_vmem [thread:$0]  %s188, 1600, %s190, %s180, 128, 64, 4
        $region24: #{difference_integrated_hg_filter_forward.4} parent=15 // pred_fallthru
          _
        // Predicated region
        $region25: #{difference_integrated_hg_filter_forward.4} parent=15 // pred_check
          %p196 = pneg %p102
        $region26: #{difference_integrated_hg_filter_forward.4} parent=15 // pred_check_branch
          %198 = sbr.rel (%p196) target = $region28
        $region27: #{difference_integrated_hg_filter_forward.4} parent=15 // pred_region
          %s199 = sand.u32 %s18, 1
          %s200 = scalar_lea.sflag [#allocation6], %s199
          %s201 = sand.u32 %s92, 1
          %s202 = scalar_lea.vmem [#allocation7], %s201
          %s204 = ssub.s32 16, 16
          %205 = vsyncadd %s200, %s204
          %s206 = smul.addr %s26, 16
          %s207 = scalar_lea.hbm %s2, %s206
          %s209 = sshll.u32 %s202, 4
          %s210 = int_to_ptr.vmem [resolvable:$true] %s209
          %212 = dma.hbm_to_vmem [thread:$0]  %s207, 16, %s210, %s200
        $region28: #{difference_integrated_hg_filter_forward.4} parent=15 // pred_fallthru
          _
      $region16: #{difference_integrated_hg_filter_forward.4} parent=5 // pred_fallthru
        _
      %p213 = scmp.le.s32.totalorder 1, %s18
      %p214 = scmp.lt.s32.totalorder %s18, 5
      %p215 = pnand %p213, %p214
      %p216 = pneg %p215
      // Predicated region
      $region29: #{difference_integrated_hg_filter_forward.4} parent=5 // pred_check
        _
      $region30: #{difference_integrated_hg_filter_forward.4} parent=5 // pred_check_branch
        %218 = sbr.rel (%p215) target = $region32
      $region31: #{difference_integrated_hg_filter_forward.4} parent=5 // pred_region
        %s219 = ssub.s32 %s18, 1
        %s220 = sand.u32 %s43, 1
        %s221 = scalar_lea.sflag [#allocation3], %s220
        %s222 = sand.u32 %s43, 1
        %s223 = smul.addr %s222, 64
        %s224 = scalar_lea.vmem [#allocation2], %s223
        // Predicated region
        $region33: #{difference_integrated_hg_filter_forward.4} parent=31 // pred_check
          %p225 = pneg %p56
        $region34: #{difference_integrated_hg_filter_forward.4} parent=31 // pred_check_branch
          %227 = sbr.rel (%p225) target = $region36
        $region35: #{difference_integrated_hg_filter_forward.4} parent=31 // pred_region
          %228 = dma.done %s221, 1024
        $region36: #{difference_integrated_hg_filter_forward.4} parent=31 // pred_fallthru
          _
        %s229 = sand.u32 %s23, 1
        %s230 = scalar_lea.sflag [#allocation6], %s229
        %s231 = sand.u32 %s69, 1
        %s232 = smul.addr %s231, 100
        %s233 = scalar_lea.vmem [#allocation5], %s232
        // Predicated region
        $region37: #{difference_integrated_hg_filter_forward.4} parent=31 // pred_check
          %p234 = pneg %p82
        $region38: #{difference_integrated_hg_filter_forward.4} parent=31 // pred_check_branch
          %236 = sbr.rel (%p234) target = $region40
        $region39: #{difference_integrated_hg_filter_forward.4} parent=31 // pred_region
          %237 = dma.done %s230, 1600
        $region40: #{difference_integrated_hg_filter_forward.4} parent=31 // pred_fallthru
          _
        %s238 = sand.u32 %s23, 1
        %s239 = scalar_lea.sflag [#allocation6], %s238
        %s240 = sand.u32 %s95, 1
        %s241 = scalar_lea.vmem [#allocation7], %s240
        // Predicated region
        $region41: #{difference_integrated_hg_filter_forward.4} parent=31 // pred_check
          %p242 = pneg %p108
        $region42: #{difference_integrated_hg_filter_forward.4} parent=31 // pred_check_branch
          %244 = sbr.rel (%p242) target = $region44
        $region43: #{difference_integrated_hg_filter_forward.4} parent=31 // pred_region
          %245 = dma.done %s239, 16
        $region44: #{difference_integrated_hg_filter_forward.4} parent=31 // pred_fallthru
          _
        %s246 = sand.u32 %s43, 1
        %s247 = scalar_lea.sflag [#allocation3], %s246
        %s248 = sand.u32 %s43, 1
        %s249 = smul.addr %s248, 64
        %s250 = scalar_lea.vmem [#allocation2], %s249
        %p251 = pneg %p56
        %p252 = pneg %p53
        %s253 = sand.u32 %s23, 1
        %s254 = scalar_lea.sflag [#allocation6], %s253
        %s255 = sand.u32 %s69, 1
        %s256 = smul.addr %s255, 100
        %s257 = scalar_lea.vmem [#allocation5], %s256
        %p258 = pneg %p82
        %p259 = pneg %p79
        %s260 = sand.u32 %s23, 1
        %s261 = scalar_lea.sflag [#allocation6], %s260
        %s262 = sand.u32 %s95, 1
        %s263 = scalar_lea.vmem [#allocation7], %s262
        %p264 = pneg %p108
        %p265 = pneg %p105
        %p266 = pneg %p136
        %p267 = pneg %p133
        %s268 = sand.u32 %s123, 1
        %s269 = scalar_lea.sflag [#allocation4], %s268
        %s270 = sand.u32 %s123, 1
        %s271 = smul.addr %s270, 32
        %s272 = scalar_lea.vmem [#allocation8], %s271
        %v274 = vld [vmem:[%s224] sm:$0xff]
        %v275 = vld [vmem:[%s224 + $0x8] sm:$0xff]
        %v276 = vld [vmem:[%s224 + $0x10] sm:$0xff]
        %v277 = vld [vmem:[%s224 + $0x18] sm:$0xff]
        %v278 = vld [vmem:[%s224 + $0x20] sm:$0xff]
        %v279 = vld [vmem:[%s224 + $0x28] sm:$0xff]
        %v280 = vld [vmem:[%s224 + $0x30] sm:$0xff]
        %v281 = vld [vmem:[%s224 + $0x38] sm:$0xff]
        %v282 = vld [vmem:[%s233] sm:$0xf]
        %v283 = vld [vmem:[%s233 + $0x4] sm:$0xf]
        %v284 = vld [vmem:[%s233 + $0x8] sm:$0xf]
        %v285 = vld [vmem:[%s233 + $0xc] sm:$0xf]
        %v286 = vld [vmem:[%s233 + $0x10] sm:$0xf]
        %v287 = vld [vmem:[%s233 + $0x14] sm:$0xf]
        %v288 = vld [vmem:[%s233 + $0x18] sm:$0xf]
        %v289 = vld [vmem:[%s233 + $0x1c] sm:$0xf]
        %v290 = vld [vmem:[%s233 + $0x20] sm:$0xf]
        %v291 = vld [vmem:[%s233 + $0x24] sm:$0xf]
        %v292 = vld [vmem:[%s233 + $0x28] sm:$0xf]
        %v293 = vld [vmem:[%s233 + $0x2c] sm:$0xf]
        %v294 = vld [vmem:[%s233 + $0x30] sm:$0xf]
        %v295 = vld [vmem:[%s233 + $0x34] sm:$0xf]
        %v296 = vld [vmem:[%s233 + $0x38] sm:$0xf]
        %v297 = vld [vmem:[%s233 + $0x3c] sm:$0xf]
        %v298 = vld [vmem:[%s233 + $0x40] sm:$0xf]
        %v299 = vld [vmem:[%s233 + $0x44] sm:$0xf]
        %v300 = vld [vmem:[%s233 + $0x48] sm:$0xf]
        %v301 = vld [vmem:[%s233 + $0x4c] sm:$0xf]
        %v302 = vld [vmem:[%s233 + $0x50] sm:$0xf]
        %v303 = vld [vmem:[%s233 + $0x54] sm:$0xf]
        %v304 = vld [vmem:[%s233 + $0x58] sm:$0xf]
        %v305 = vld [vmem:[%s233 + $0x5c] sm:$0xf]
        %v306 = vld [vmem:[%s233 + $0x60] sm:$0x3]
        %v307 = vld [vmem:[%s241] sm:$0x1]
        %v309 = vlaneseq
        %v310 = vshrl.u32 %v309, 7
        %v311 = vsub.s32 0, %v310
        %v312 = vrot.slane %v307, %v311
        %v322 = vunpack.c.l.b16 %v274
        %v323 = vunpack.c.h.b16 %v274
        %v324 = vunpack.c.l.b16 %v275
        %v325 = vunpack.c.h.b16 %v275
        %v326 = vunpack.c.l.b16 %v276
        %v327 = vunpack.c.h.b16 %v276
        %v328 = vunpack.c.l.b16 %v277
        %v329 = vunpack.c.h.b16 %v277
        %v330 = vunpack.c.l.b16 %v278
        %v331 = vunpack.c.h.b16 %v278
        %v332 = vunpack.c.l.b16 %v279
        %v333 = vunpack.c.h.b16 %v279
        %v334 = vunpack.c.l.b16 %v280
        %v335 = vunpack.c.h.b16 %v280
        %v336 = vunpack.c.l.b16 %v281
        %v337 = vunpack.c.h.b16 %v281
        %v338 = vpack.c.b16 %v324, %v322
        %v339 = vpack.c.b16 %v325, %v323
        %v340 = vpack.c.b16 %v328, %v326
        %v341 = vpack.c.b16 %v329, %v327
        %v342 = vpack.c.b16 %v332, %v330
        %v343 = vpack.c.b16 %v333, %v331
        %v344 = vpack.c.b16 %v336, %v334
        %v345 = vpack.c.b16 %v337, %v335
        %v375 = vunpack.c.l.b16 %v282
        %v376 = vunpack.c.l.b16 %v283
        %v377 = vunpack.c.l.b16 %v284
        %v378 = vunpack.c.l.b16 %v285
        %v379 = vunpack.c.l.b16 %v286
        %v380 = vunpack.c.l.b16 %v287
        %v381 = vunpack.c.l.b16 %v288
        %v382 = vunpack.c.l.b16 %v289
        %v383 = vunpack.c.l.b16 %v290
        %v384 = vunpack.c.l.b16 %v291
        %v385 = vunpack.c.l.b16 %v292
        %v386 = vunpack.c.l.b16 %v293
        %v387 = vunpack.c.l.b16 %v294
        %v388 = vunpack.c.l.b16 %v295
        %v389 = vunpack.c.l.b16 %v296
        %v390 = vunpack.c.l.b16 %v297
        %v391 = vunpack.c.l.b16 %v298
        %v392 = vunpack.c.l.b16 %v299
        %v393 = vunpack.c.l.b16 %v300
        %v394 = vunpack.c.l.b16 %v301
        %v395 = vunpack.c.l.b16 %v302
        %v396 = vunpack.c.l.b16 %v303
        %v397 = vunpack.c.l.b16 %v304
        %v398 = vunpack.c.l.b16 %v305
        %v399 = vunpack.c.l.b16 %v306
        %v400 = vpack.c.b16 %v376, %v375
        %v401 = vpack.c.b16 %v378, %v377
        %v402 = vpack.c.b16 %v380, %v379
        %v403 = vpack.c.b16 %v382, %v381
        %v404 = vpack.c.b16 %v384, %v383
        %v405 = vpack.c.b16 %v386, %v385
        %v406 = vpack.c.b16 %v388, %v387
        %v407 = vpack.c.b16 %v390, %v389
        %v408 = vpack.c.b16 %v392, %v391
        %v409 = vpack.c.b16 %v394, %v393
        %v410 = vpack.c.b16 %v396, %v395
        %v411 = vpack.c.b16 %v398, %v397
        %v412 = vpack.c.b16 %v399, %v399
        %vm425 = vcmask 556032
        %v427 = vsel %vm425, %v339, 0
        %v430 = vsel %vm425, %v341, 0
        %v433 = vsel %vm425, %v343, 0
        %v436 = vsel %vm425, %v345, 0
        %vm438 = vcmask 1041408
        %v440 = vsel %vm438, %v412, 0
        %442 = vmatprep.subr.bf16.mxu0 0
        %443 = vmatpush1.bf16.msra.mxu0 %v400
        %444 = vmatprep.subr.bf16.mxu0 0
        %445 = vmatpush1.bf16.msra.mxu0 %v401
        %446 = vmatprep.subr.bf16.mxu0 0
        %447 = vmatpush1.bf16.msra.mxu0 %v402
        %448 = vmatprep.subr.bf16.mxu0 0
        %449 = vmatpush1.bf16.msra.mxu0 %v403
        %450 = vmatprep.subr.bf16.mxu0 0
        %451 = vmatpush1.bf16.msra.mxu0 %v404
        %452 = vmatprep.subr.bf16.mxu0 0
        %453 = vmatpush1.bf16.msra.mxu0 %v405
        %454 = vmatprep.subr.bf16.mxu0 0
        %455 = vmatpush1.bf16.msra.mxu0 %v406
        %456 = vmatprep.subr.bf16.mxu0 0
        %457 = vmatpush1.bf16.msra.mxu0 %v407
        %458 = vmatprep.subr.bf16.mxu0 0
        %459 = vmatpush1.bf16.msra.mxu0 %v408
        %460 = vmatprep.subr.bf16.mxu0 0
        %461 = vmatpush1.bf16.msra.mxu0 %v409
        %462 = vmatprep.subr.bf16.mxu0 0
        %463 = vmatpush1.bf16.msra.mxu0 %v410
        %464 = vmatprep.subr.bf16.mxu0 0
        %465 = vmatpush1.bf16.msra.mxu0 %v411
        %466 = vmatprep.subr.bf16.mxu0 0
        %467 = vmatpush1.bf16.msra.mxu0 %v440
        %468 = vmatprep.subr.bf16.mxu0 0
        %469 = vmatpush1.bf16.msra.mxu0 0
        %470 = vmatprep.subr.bf16.mxu0 0
        %471 = vmatpush1.bf16.msra.mxu0 0
        %472 = vmatprep.subr.bf16.mxu0 0
        %473 = vmatpush1.bf16.msra.mxu0 0
        %474 = vmatprep.mubr.bf16.mxu0 %v427
        %475 = vmatmul.mubr.bf16.gmra.mrb[0].mxu0 %v338
        %v476 = vpop.f32.mrb[0].mxu0
        %v477 = vadd.f32 %v312, %v476
        %v478 = vpop.f32.mrb[0].mxu0
        %v479 = vpop.f32.mrb[0].mxu0
        %v480 = vadd.f32 %v312, %v479
        %v481 = vpop.f32.mrb[0].mxu0
        %482 = vmatprep.mubr.bf16.mxu0 %v430
        %483 = vmatmul.mubr.bf16.gmra.mrb[0].mxu0 %v340
        %v484 = vpop.f32.mrb[0].mxu0
        %v485 = vadd.f32 %v312, %v484
        %v486 = vpop.f32.mrb[0].mxu0
        %v487 = vpop.f32.mrb[0].mxu0
        %v488 = vadd.f32 %v312, %v487
        %v489 = vpop.f32.mrb[0].mxu0
        %490 = vmatprep.mubr.bf16.mxu0 %v433
        %491 = vmatmul.mubr.bf16.gmra.mrb[0].mxu0 %v342
        %v492 = vpop.f32.mrb[0].mxu0
        %v493 = vadd.f32 %v312, %v492
        %v494 = vpop.f32.mrb[0].mxu0
        %v495 = vpop.f32.mrb[0].mxu0
        %v496 = vadd.f32 %v312, %v495
        %v497 = vpop.f32.mrb[0].mxu0
        %498 = vmatprep.mubr.bf16.mxu0 %v436
        %499 = vmatmul.mubr.bf16.gmra.mrb[0].mxu0 %v344
        %v500 = vpop.f32.mrb[0].mxu0
        %v501 = vadd.f32 %v312, %v500
        %v502 = vpop.f32.mrb[0].mxu0
        %v503 = vpop.f32.mrb[0].mxu0
        %v504 = vadd.f32 %v312, %v503
        %v505 = vpop.f32.mrb[0].mxu0
        %506 = vdwg.mxu0
        %v507 = vadd.f32 %v477, %v480
        %v508 = vadd.f32 %v507, %v485
        %v509 = vadd.f32 %v508, %v488
        %v510 = vadd.f32 %v509, %v493
        %v511 = vadd.f32 %v510, %v496
        %v512 = vadd.f32 %v511, %v501
        %v513 = vadd.f32 %v512, %v504
        %v514 = vrot.slane %v513, 4
        %v515 = vadd.f32 %v513, %v514
        %v516 = vrot.slane %v515, 2
        %v517 = vadd.f32 %v515, %v516
        %v518 = vrot.slane %v517, 1
        %v519 = vadd.f32 %v517, %v518
        %v520 = vrcp.pop 64.0
        %v521 = vmul.f32 %v519, %v520
        %v522 = vsub.f32 %v477, %v521
        %v523 = vsub.f32 %v480, %v521
        %v524 = vsub.f32 %v485, %v521
        %v525 = vsub.f32 %v488, %v521
        %v526 = vsub.f32 %v493, %v521
        %v527 = vsub.f32 %v496, %v521
        %v528 = vsub.f32 %v501, %v521
        %v529 = vsub.f32 %v504, %v521
        %v530 = vmul.f32 %v522, %v522
        %v531 = vmul.f32 %v523, %v523
        %v532 = vmul.f32 %v524, %v524
        %v533 = vmul.f32 %v525, %v525
        %v534 = vmul.f32 %v526, %v526
        %v535 = vmul.f32 %v527, %v527
        %v536 = vmul.f32 %v528, %v528
        %v537 = vmul.f32 %v529, %v529
        %v538 = vadd.f32 %v530, %v531
        %v539 = vadd.f32 %v538, %v532
        %v540 = vadd.f32 %v539, %v533
        %v541 = vadd.f32 %v540, %v534
        %v542 = vadd.f32 %v541, %v535
        %v543 = vadd.f32 %v542, %v536
        %v544 = vadd.f32 %v543, %v537
        %v545 = vrot.slane %v544, 4
        %v546 = vadd.f32 %v544, %v545
        %v547 = vrot.slane %v546, 2
        %v548 = vadd.f32 %v546, %v547
        %v549 = vrot.slane %v548, 1
        %v550 = vadd.f32 %v548, %v549
        %v551 = vmul.f32 %v550, %v520
        %v552 = vadd.f32 %v551, 1e-05
        %v553 = vrsqrt.pop %v552
        %v554 = vmul.f32 %v522, %v553
        %v555 = vmul.f32 %v523, %v553
        %v556 = vmul.f32 %v524, %v553
        %v557 = vmul.f32 %v525, %v553
        %v558 = vmul.f32 %v526, %v553
        %v559 = vmul.f32 %v527, %v553
        %v560 = vmul.f32 %v528, %v553
        %v561 = vmul.f32 %v529, %v553
        %vm562 = vcmp.ge.f32.partialorder %v554, 0.0
        %vm563 = vcmp.ge.f32.partialorder %v555, 0.0
        %vm564 = vcmp.ge.f32.partialorder %v556, 0.0
        %vm565 = vcmp.ge.f32.partialorder %v557, 0.0
        %vm566 = vcmp.ge.f32.partialorder %v558, 0.0
        %vm567 = vcmp.ge.f32.partialorder %v559, 0.0
        %vm568 = vcmp.ge.f32.partialorder %v560, 0.0
        %vm569 = vcmp.ge.f32.partialorder %v561, 0.0
        %v570 = vmul.f32 %v554, 0.01
        %v571 = vmul.f32 %v555, 0.01
        %v572 = vmul.f32 %v556, 0.01
        %v573 = vmul.f32 %v557, 0.01
        %v574 = vmul.f32 %v558, 0.01
        %v575 = vmul.f32 %v559, 0.01
        %v576 = vmul.f32 %v560, 0.01
        %v577 = vmul.f32 %v561, 0.01
        %v578 = vsel %vm562, %v554, %v570
        %v579 = vsel %vm563, %v555, %v571
        %v580 = vsel %vm564, %v556, %v572
        %v581 = vsel %vm565, %v557, %v573
        %v582 = vsel %vm566, %v558, %v574
        %v583 = vsel %vm567, %v559, %v575
        %v584 = vsel %vm568, %v560, %v576
        %v585 = vsel %vm569, %v561, %v577
        %v586 = vpack.c.bf16 %v579, %v578
        %v587 = vpack.c.bf16 %v581, %v580
        %v588 = vpack.c.bf16 %v583, %v582
        %v589 = vpack.c.bf16 %v585, %v584
        %v594 = vunpack.c.l.b16 %v586
        %v595 = vunpack.c.h.b16 %v586
        %v596 = vunpack.c.l.b16 %v587
        %v597 = vunpack.c.h.b16 %v587
        %v598 = vunpack.c.l.b16 %v588
        %v599 = vunpack.c.h.b16 %v588
        %v600 = vunpack.c.l.b16 %v589
        %v601 = vunpack.c.h.b16 %v589
        %v602 = vpack.c.b16 %v594, %v594
        %v603 = vpack.c.b16 %v595, %v595
        %v604 = vpack.c.b16 %v596, %v596
        %v605 = vpack.c.b16 %v597, %v597
        %v606 = vpack.c.b16 %v598, %v598
        %v607 = vpack.c.b16 %v599, %v599
        %v608 = vpack.c.b16 %v600, %v600
        %v609 = vpack.c.b16 %v601, %v601
        %618 = vst [vmem:[%s272] sm:$0xf] %v602
        %619 = vst [vmem:[%s272 + $0x4] sm:$0xf] %v603
        %620 = vst [vmem:[%s272 + $0x8] sm:$0xf] %v604
        %621 = vst [vmem:[%s272 + $0xc] sm:$0xf] %v605
        %622 = vst [vmem:[%s272 + $0x10] sm:$0xf] %v606
        %623 = vst [vmem:[%s272 + $0x14] sm:$0xf] %v607
        %624 = vst [vmem:[%s272 + $0x18] sm:$0xf] %v608
        %625 = vst [vmem:[%s272 + $0x1c] sm:$0xf] %v609
        %s626 = sand.u32 %s123, 1
        %s627 = scalar_lea.sflag [#allocation4], %s626
        %s628 = sand.u32 %s123, 1
        %s629 = smul.addr %s628, 32
        %s630 = scalar_lea.vmem [#allocation8], %s629
        // Predicated region
        $region45: #{difference_integrated_hg_filter_forward.4} parent=31 // pred_check
          %p631 = pneg %p133
        $region46: #{difference_integrated_hg_filter_forward.4} parent=31 // pred_check_branch
          %633 = sbr.rel (%p631) target = $region48
        $region47: #{difference_integrated_hg_filter_forward.4} parent=31 // pred_region
          %s635 = ssub.s32 512, 512
          %636 = vsyncadd %s627, %s635
          %s637 = smul.addr %s27, 16
          %s638 = sadd.s32 %s28, %s637
          %s639 = smul.addr %s638, 64
          %s640 = scalar_lea.hbm %s3, %s639
          %s641 = sshll.u32 %s630, 4
          %s642 = int_to_ptr.vmem [resolvable:$true] %s641
          %647 = dma.vmem_to_hbm [thread:$0]  %s642, 512, %s640, %s627, 64, 128, 4
        $region48: #{difference_integrated_hg_filter_forward.4} parent=31 // pred_fallthru
          _
      $region32: #{difference_integrated_hg_filter_forward.4} parent=5 // pred_fallthru
        _
      %p648 = scmp.le.s32.totalorder 2, %s18
      // Predicated region
      $region49: #{difference_integrated_hg_filter_forward.4} parent=5 // pred_check
        %p649 = pneg %p648
      $region50: #{difference_integrated_hg_filter_forward.4} parent=5 // pred_check_branch
        %651 = sbr.rel (%p649) target = $region52
      $region51: #{difference_integrated_hg_filter_forward.4} parent=5 // pred_region
        %s652 = ssub.s32 %s18, 2
        // Predicated region
        $region53: #{difference_integrated_hg_filter_forward.4} parent=51 // pred_check
          %p653 = pneg %p139
        $region54: #{difference_integrated_hg_filter_forward.4} parent=51 // pred_check_branch
          %655 = sbr.rel (%p653) target = $region56
        $region55: #{difference_integrated_hg_filter_forward.4} parent=51 // pred_region
          %s656 = sand.u32 %s124, 1
          %s657 = scalar_lea.sflag [#allocation4], %s656
          %s658 = sand.u32 %s124, 1
          %s659 = smul.addr %s658, 32
          %s660 = scalar_lea.vmem [#allocation8], %s659
          %661 = dma.done %s657, 512
        $region56: #{difference_integrated_hg_filter_forward.4} parent=51 // pred_fallthru
          _
      $region52: #{difference_integrated_hg_filter_forward.4} parent=5 // pred_fallthru
        _
    $region6: #{difference_integrated_hg_filter_forward.4} parent=1 // loop_footer
      %s22 = sadd.s32 1, %s18
    $region7: #{difference_integrated_hg_filter_forward.4} parent=1 // loop_footer_branch
      %17 = sbr.rel target = $region3
    $region8: #{difference_integrated_hg_filter_forward.4} parent=1 // loop_exit
      _
    %662 = vsyncpa [#allocation3], 1
    %s663 = scalar_lea.sflag [#allocation3], 1
    %664 = vsyncpa %s663, 1
    %665 = vsyncpa [#allocation6], 1
    %s666 = scalar_lea.sflag [#allocation6], 1
    %667 = vsyncpa %s666, 1
    %668 = vsyncpa [#allocation4], 1
    %s669 = scalar_lea.sflag [#allocation4], 1
    %670 = vsyncpa %s669, 1

// kernel: difference_integrated_hg_filter_forward.5
$region0: #{difference_integrated_hg_filter_forward.5}
  #allocation0 [shape = 'u32[]', space=smem, size = 0x4, offset = 0x4, fixed_abs, tag = 'smem constant byte address 0x4 - core index']
  #allocation1 [shape = 'u32[144,128]{1,0:T(1,128)}', space=vmem, size = 0x12000, scoped, tag = 'internal scratch']
  %s0 = inlined_call_operand.hbm [shape: bf16[2,10,10,256], index: 0, kind: input, shape index: {}]
  %s1 = inlined_call_operand.hbm [shape: bf16[3,3,256,128], index: 1, kind: input, shape index: {}]
  %s2 = inlined_call_operand.hbm [shape: f32[1,128], index: 2, kind: input, shape index: {}]
  %s3 = inlined_call_operand.hbm [shape: bf16[2,8,8,128], index: 3, kind: output, shape index: {}]
  %s4 = sld [smem:[#allocation0]]
  $region57: #{difference_integrated_hg_filter_forward.5} parent=0
    _
  %s6 = ssub.s32 1, %s4
  %s7 = scalar_select 0, %s6, %s4
  $region1: #{difference_integrated_hg_filter_forward.5} parent=0
    #allocation2 [shape = 'u8[163840]{0}', space=vmem, size = 0x28000, scoped, tag = 'input window, operand 0']
    #allocation3 [shape = 's32[2]{0}', space=sflag, size = 0x8, scoped, tag = 'scoped memory for difference_integrated_hg_filter_forward.5']
    #allocation4 [shape = 's32[2]{0}', space=sflag, size = 0x8, scoped, tag = 'scoped memory for difference_integrated_hg_filter_forward.5']
    #allocation5 [shape = 'u8[589824]{0}', space=vmem, size = 0x90000, scoped, tag = 'input window, operand 1, single buffered']
    #allocation6 [shape = 's32[1]{0}', space=sflag, size = 0x4, scoped, tag = 'scoped memory for difference_integrated_hg_filter_forward.5']
    #allocation7 [shape = 'u8[512]{0}', space=vmem, size = 0x400, scoped, tag = 'input window, operand 2, single buffered']
    #allocation8 [shape = 'u8[32768]{0}', space=vmem, size = 0x8000, scoped, tag = 'output window, operand 0']
    %8 = vsyncpa [#allocation3], 0
    %s9 = scalar_lea.sflag [#allocation3], 1
    %10 = vsyncpa %s9, 0
    %11 = vsyncpa [#allocation6], 0
    %12 = vsyncpa [#allocation4], 0
    %s13 = scalar_lea.sflag [#allocation4], 1
    %14 = vsyncpa %s13, 0
    loop: start=0, step=1, limit=4
    $region2: #{difference_integrated_hg_filter_forward.5} parent=1 // loop_pre_header
      _
    $region3: #{difference_integrated_hg_filter_forward.5} parent=1 // loop_header
      %s16 = sphi 0, %s20
      %p17 = scmp.ge.s32.totalorder %s16, 4
      %s23 = sphi 0, %s35
      %s24 = sphi 0, %s31
      %s25 = sphi 0, %s23
      %s26 = sphi 0, %s24
      %s27 = sphi 0, %s25
      %s28 = sphi 0, %s26
      %s38 = sphi 0, %s40
      %s41 = sphi 0, %s38
      %s42 = sphi 0, %s41
      %s58 = sphi 0, %s42
      %s64 = sphi 0, %s66
      %s67 = sphi 0, %s64
      %s68 = sphi 0, %s67
      %s84 = sphi 0, %s68
      %s90 = sphi 0, %s92
      %s93 = sphi 0, %s90
      %s94 = sphi 0, %s93
      %s110 = sphi 0, %s94
      %s118 = sphi 0, %s120
      %s121 = sphi 0, %s118
      %s122 = sphi 0, %s121
      %s138 = sphi 0, %s122
    $region4: #{difference_integrated_hg_filter_forward.5} parent=1 // loop_header_branch
      %19 = sbr.rel (%p17) target = $region8
    $region5: #{difference_integrated_hg_filter_forward.5} parent=1 // loop_body
      %s21 = ssub.s32 %s16, 1
      %s22 = ssub.s32 %s16, 2
      %s29 = sadd.s32 1, %s24
      %p30 = scmp.ge.s32.totalorder %s29, 1
      %s31 = scalar_select %p30, 0, %s29
      %s32 = sadd.s32 1, %s23
      %s33 = scalar_select %p30, %s32, %s23
      %p34 = scmp.ge.s32.totalorder %s33, 2
      %s35 = scalar_select %p34, 0, %s33
      %s36 = ssub.s32 %s23, %s35
      %p37 = scmp.eq.s32.totalorder %s36, 0
      %s39 = sadd.s32 %s38, 1
      %s40 = scalar_select %p37, %s38, %s39
      %p43 = pneg %p37
      %p44 = scmp.eq.s32.totalorder %s16, 1
      %p45 = por %p43, %p44
      %p46 = scmp.ne.s32.totalorder %s38, %s41
      %p47 = scmp.eq.s32.totalorder %s16, 0
      %p48 = por %p46, %p47
      %p49 = scmp.ne.s32.totalorder %s38, %s41
      %p50 = scmp.eq.s32.totalorder %s21, 1
      %p51 = por %p49, %p50
      %p52 = scmp.ne.s32.totalorder %s41, %s42
      %p53 = scmp.eq.s32.totalorder %s21, 0
      %p54 = por %p52, %p53
      %p55 = scmp.ne.s32.totalorder %s41, %s42
      %p56 = scmp.eq.s32.totalorder %s22, 1
      %p57 = por %p55, %p56
      %p59 = scmp.ne.s32.totalorder %s42, %s58
      %p60 = scmp.eq.s32.totalorder %s22, 0
      %p61 = por %p59, %p60
      %s62 = ssub.s32 %s24, %s31
      %p63 = scmp.eq.s32.totalorder %s62, 0
      %s65 = sadd.s32 %s64, 1
      %s66 = scalar_select %p63, %s64, %s65
      %p69 = pneg %p63
      %p70 = scmp.eq.s32.totalorder %s16, 1
      %p71 = por %p69, %p70
      %p72 = scmp.ne.s32.totalorder %s64, %s67
      %p73 = scmp.eq.s32.totalorder %s16, 0
      %p74 = por %p72, %p73
      %p75 = scmp.ne.s32.totalorder %s64, %s67
      %p76 = scmp.eq.s32.totalorder %s21, 1
      %p77 = por %p75, %p76
      %p78 = scmp.ne.s32.totalorder %s67, %s68
      %p79 = scmp.eq.s32.totalorder %s21, 0
      %p80 = por %p78, %p79
      %p81 = scmp.ne.s32.totalorder %s67, %s68
      %p82 = scmp.eq.s32.totalorder %s22, 1
      %p83 = por %p81, %p82
      %p85 = scmp.ne.s32.totalorder %s68, %s84
      %p86 = scmp.eq.s32.totalorder %s22, 0
      %p87 = por %p85, %p86
      %s88 = ssub.s32 %s24, %s31
      %p89 = scmp.eq.s32.totalorder %s88, 0
      %s91 = sadd.s32 %s90, 1
      %s92 = scalar_select %p89, %s90, %s91
      %p95 = pneg %p89
      %p96 = scmp.eq.s32.totalorder %s16, 1
      %p97 = por %p95, %p96
      %p98 = scmp.ne.s32.totalorder %s90, %s93
      %p99 = scmp.eq.s32.totalorder %s16, 0
      %p100 = por %p98, %p99
      %p101 = scmp.ne.s32.totalorder %s90, %s93
      %p102 = scmp.eq.s32.totalorder %s21, 1
      %p103 = por %p101, %p102
      %p104 = scmp.ne.s32.totalorder %s93, %s94
      %p105 = scmp.eq.s32.totalorder %s21, 0
      %p106 = por %p104, %p105
      %p107 = scmp.ne.s32.totalorder %s93, %s94
      %p108 = scmp.eq.s32.totalorder %s22, 1
      %p109 = por %p107, %p108
      %p111 = scmp.ne.s32.totalorder %s94, %s110
      %p112 = scmp.eq.s32.totalorder %s22, 0
      %p113 = por %p111, %p112
      %s114 = ssub.s32 %s23, %s35
      %s115 = ssub.s32 %s24, %s31
      %s116 = sor.u32 %s114, %s115
      %p117 = scmp.eq.s32.totalorder %s116, 0
      %s119 = sadd.s32 %s118, 1
      %s120 = scalar_select %p117, %s118, %s119
      %p123 = pneg %p117
      %p124 = scmp.eq.s32.totalorder %s16, 1
      %p125 = por %p123, %p124
      %p126 = scmp.ne.s32.totalorder %s118, %s121
      %p127 = scmp.eq.s32.totalorder %s16, 0
      %p128 = por %p126, %p127
      %p129 = scmp.ne.s32.totalorder %s118, %s121
      %p130 = scmp.eq.s32.totalorder %s21, 1
      %p131 = por %p129, %p130
      %p132 = scmp.ne.s32.totalorder %s121, %s122
      %p133 = scmp.eq.s32.totalorder %s21, 0
      %p134 = por %p132, %p133
      %p135 = scmp.ne.s32.totalorder %s121, %s122
      %p136 = scmp.eq.s32.totalorder %s22, 1
      %p137 = por %p135, %p136
      %p139 = scmp.ne.s32.totalorder %s122, %s138
      %p140 = scmp.eq.s32.totalorder %s22, 0
      %p141 = por %p139, %p140
      %p142 = scmp.le.s32.totalorder 1, %s16
      %p143 = scmp.lt.s32.totalorder %s16, 3
      %p144 = pnand %p142, %p143
      %p145 = pneg %p144
      // Predicated region
      $region9: #{difference_integrated_hg_filter_forward.5} parent=5 // pred_check
        _
      $region10: #{difference_integrated_hg_filter_forward.5} parent=5 // pred_check_branch
        %147 = sbr.rel (%p144) target = $region12
      $region11: #{difference_integrated_hg_filter_forward.5} parent=5 // pred_region
        %s148 = ssub.s32 %s16, 1
        // Predicated region
        $region13: #{difference_integrated_hg_filter_forward.5} parent=11 // pred_check
          %p149 = pneg %p80
        $region14: #{difference_integrated_hg_filter_forward.5} parent=11 // pred_check_branch
          %151 = sbr.rel (%p149) target = $region16
        $region15: #{difference_integrated_hg_filter_forward.5} parent=11 // pred_region
          %s153 = ssub.s32 18432, 18432
          %154 = vsyncadd [#allocation6], %s153
          %s155 = smul.addr %s26, 64
          %s156 = scalar_lea.hbm %s1, %s155
          %s157 = sshll.u32 [#allocation5], 4
          %s158 = int_to_ptr.vmem [resolvable:$true] %s157
          %163 = dma.hbm_to_vmem [thread:$0]  %s156, 18432, %s158, [#allocation6], 64, 64, 4
        $region16: #{difference_integrated_hg_filter_forward.5} parent=11 // pred_fallthru
          _
        // Predicated region
        $region17: #{difference_integrated_hg_filter_forward.5} parent=11 // pred_check
          %p164 = pneg %p106
        $region18: #{difference_integrated_hg_filter_forward.5} parent=11 // pred_check_branch
          %166 = sbr.rel (%p164) target = $region20
        $region19: #{difference_integrated_hg_filter_forward.5} parent=11 // pred_region
          %s168 = ssub.s32 16, 16
          %169 = vsyncadd [#allocation6], %s168
          %s170 = smul.addr %s26, 16
          %s171 = scalar_lea.hbm %s2, %s170
          %s173 = sshll.u32 [#allocation7], 4
          %s174 = int_to_ptr.vmem [resolvable:$true] %s173
          %176 = dma.hbm_to_vmem [thread:$0]  %s171, 16, %s174, [#allocation6]
        $region20: #{difference_integrated_hg_filter_forward.5} parent=11 // pred_fallthru
          _
      $region12: #{difference_integrated_hg_filter_forward.5} parent=5 // pred_fallthru
        _
      %p177 = scmp.lt.s32.totalorder %s16, 2
      // Predicated region
      $region21: #{difference_integrated_hg_filter_forward.5} parent=5 // pred_check
        %p178 = pneg %p177
      $region22: #{difference_integrated_hg_filter_forward.5} parent=5 // pred_check_branch
        %180 = sbr.rel (%p178) target = $region24
      $region23: #{difference_integrated_hg_filter_forward.5} parent=5 // pred_region
        // Predicated region
        $region25: #{difference_integrated_hg_filter_forward.5} parent=23 // pred_check
          %p181 = pneg %p48
        $region26: #{difference_integrated_hg_filter_forward.5} parent=23 // pred_check_branch
          %183 = sbr.rel (%p181) target = $region28
        $region27: #{difference_integrated_hg_filter_forward.5} parent=23 // pred_region
          %s184 = sand.u32 %s38, 1
          %s185 = scalar_lea.sflag [#allocation3], %s184
          %s186 = sand.u32 %s38, 1
          %s187 = smul.addr %s186, 160
          %s188 = scalar_lea.vmem [#allocation2], %s187
          %s190 = ssub.s32 2560, 2560
          %191 = vsyncadd %s185, %s190
          %s192 = smul.addr %s23, 40
          %s193 = smul.addr %s192, 64
          %s194 = scalar_lea.hbm %s0, %s193
          %s195 = sshll.u32 %s188, 4
          %s196 = int_to_ptr.vmem [resolvable:$true] %s195
          %201 = dma.hbm_to_vmem [thread:$0]  %s194, 2560, %s196, %s185, 128, 128, 8
        $region28: #{difference_integrated_hg_filter_forward.5} parent=23 // pred_fallthru
          _
      $region24: #{difference_integrated_hg_filter_forward.5} parent=5 // pred_fallthru
        _
      %p202 = scmp.le.s32.totalorder 1, %s16
      %p203 = scmp.lt.s32.totalorder %s16, 3
      %p204 = pnand %p202, %p203
      %p205 = pneg %p204
      // Predicated region
      $region29: #{difference_integrated_hg_filter_forward.5} parent=5 // pred_check
        _
      $region30: #{difference_integrated_hg_filter_forward.5} parent=5 // pred_check_branch
        %207 = sbr.rel (%p204) target = $region32
      $region31: #{difference_integrated_hg_filter_forward.5} parent=5 // pred_region
        %s208 = ssub.s32 %s16, 1
        %s209 = sand.u32 %s41, 1
        %s210 = scalar_lea.sflag [#allocation3], %s209
        %s211 = sand.u32 %s41, 1
        %s212 = smul.addr %s211, 160
        %s213 = scalar_lea.vmem [#allocation2], %s212
        // Predicated region
        $region33: #{difference_integrated_hg_filter_forward.5} parent=31 // pred_check
          %p214 = pneg %p54
        $region34: #{difference_integrated_hg_filter_forward.5} parent=31 // pred_check_branch
          %216 = sbr.rel (%p214) target = $region36
        $region35: #{difference_integrated_hg_filter_forward.5} parent=31 // pred_region
          %217 = dma.done %s210, 2560
        $region36: #{difference_integrated_hg_filter_forward.5} parent=31 // pred_fallthru
          _
        // Predicated region
        $region37: #{difference_integrated_hg_filter_forward.5} parent=31 // pred_check
          %p218 = pneg %p80
        $region38: #{difference_integrated_hg_filter_forward.5} parent=31 // pred_check_branch
          %220 = sbr.rel (%p218) target = $region40
        $region39: #{difference_integrated_hg_filter_forward.5} parent=31 // pred_region
          %221 = dma.done [#allocation6], 18432
        $region40: #{difference_integrated_hg_filter_forward.5} parent=31 // pred_fallthru
          _
        // Predicated region
        $region41: #{difference_integrated_hg_filter_forward.5} parent=31 // pred_check
          %p222 = pneg %p106
        $region42: #{difference_integrated_hg_filter_forward.5} parent=31 // pred_check_branch
          %224 = sbr.rel (%p222) target = $region44
        $region43: #{difference_integrated_hg_filter_forward.5} parent=31 // pred_region
          %225 = dma.done [#allocation6], 16
        $region44: #{difference_integrated_hg_filter_forward.5} parent=31 // pred_fallthru
          _
        %s226 = sand.u32 %s41, 1
        %s227 = scalar_lea.sflag [#allocation3], %s226
        %s228 = sand.u32 %s41, 1
        %s229 = smul.addr %s228, 160
        %s230 = scalar_lea.vmem [#allocation2], %s229
        %p231 = pneg %p54
        %p232 = pneg %p51
        %p233 = pneg %p80
        %p234 = pneg %p77
        %p235 = pneg %p106
        %p236 = pneg %p103
        %p237 = pneg %p134
        %p238 = pneg %p131
        %s239 = sand.u32 %s121, 1
        %s240 = scalar_lea.sflag [#allocation4], %s239
        %s241 = sand.u32 %s121, 1
        %s242 = smul.addr %s241, 32
        %s243 = scalar_lea.vmem [#allocation8], %s242
        %v245 = vld [vmem:[%s213] sm:$0xff]
        %v246 = vld [vmem:[%s213 + $0x8] sm:$0x11]
        %v247 = vld [vmem:[%s213 + $0x10] sm:$0xff]
        %v248 = vld [vmem:[%s213 + $0x18] sm:$0x11]
        %v249 = vld [vmem:[%s213 + $0x20] sm:$0xff]
        %v250 = vld [vmem:[%s213 + $0x28] sm:$0x11]
        %v251 = vld [vmem:[%s213 + $0x30] sm:$0xff]
        %v252 = vld [vmem:[%s213 + $0x38] sm:$0x11]
        %v253 = vld [vmem:[%s213 + $0x40] sm:$0xff]
        %v254 = vld [vmem:[%s213 + $0x48] sm:$0x11]
        %v255 = vld [vmem:[%s213 + $0x50] sm:$0xff]
        %v256 = vld [vmem:[%s213 + $0x58] sm:$0x11]
        %v257 = vld [vmem:[%s213 + $0x60] sm:$0xff]
        %v258 = vld [vmem:[%s213 + $0x68] sm:$0x11]
        %v259 = vld [vmem:[%s213 + $0x70] sm:$0xff]
        %v260 = vld [vmem:[%s213 + $0x78] sm:$0x11]
        %v261 = vld [vmem:[%s213 + $0x80] sm:$0xff]
        %v262 = vld [vmem:[%s213 + $0x88] sm:$0x11]
        %v263 = vld [vmem:[%s213 + $0x90] sm:$0xff]
        %v264 = vld [vmem:[%s213 + $0x98] sm:$0x11]
        %v265 = vld [vmem:[#allocation5] sm:$0xf]
        %v266 = vld [vmem:[#allocation5 + $0x4] sm:$0xf]
        %v267 = vld [vmem:[#allocation5 + $0x8] sm:$0xf]
        %v268 = vld [vmem:[#allocation5 + $0xc] sm:$0xf]
        %v269 = vld [vmem:[#allocation5 + $0x10] sm:$0xf]
        %v270 = vld [vmem:[#allocation5 + $0x14] sm:$0xf]
        %v271 = vld [vmem:[#allocation5 + $0x18] sm:$0xf]
        %v272 = vld [vmem:[#allocation5 + $0x1c] sm:$0xf]
        %v273 = vld [vmem:[#allocation5 + $0x20] sm:$0xf]
        %v274 = vld [vmem:[#allocation5 + $0x24] sm:$0xf]
        %v275 = vld [vmem:[#allocation5 + $0x28] sm:$0xf]
        %v276 = vld [vmem:[#allocation5 + $0x2c] sm:$0xf]
        %v277 = vld [vmem:[#allocation5 + $0x30] sm:$0xf]
        %v278 = vld [vmem:[#allocation5 + $0x34] sm:$0xf]
        %v279 = vld [vmem:[#allocation5 + $0x38] sm:$0xf]
        %v280 = vld [vmem:[#allocation5 + $0x3c] sm:$0xf]
        %v281 = vld [vmem:[#allocation5 + $0x40] sm:$0xf]
        %v282 = vld [vmem:[#allocation5 + $0x44] sm:$0xf]
        %v283 = vld [vmem:[#allocation5 + $0x48] sm:$0xf]
        %v284 = vld [vmem:[#allocation5 + $0x4c] sm:$0xf]
        %v285 = vld [vmem:[#allocation5 + $0x50] sm:$0xf]
        %v286 = vld [vmem:[#allocation5 + $0x54] sm:$0xf]
        %v287 = vld [vmem:[#allocation5 + $0x58] sm:$0xf]
        %v288 = vld [vmem:[#allocation5 + $0x5c] sm:$0xf]
        %v289 = vld [vmem:[#allocation5 + $0x60] sm:$0xf]
        %v290 = vld [vmem:[#allocation5 + $0x64] sm:$0xf]
        %v291 = vld [vmem:[#allocation5 + $0x68] sm:$0xf]
        %v292 = vld [vmem:[#allocation5 + $0x6c] sm:$0xf]
        %v293 = vld [vmem:[#allocation5 + $0x70] sm:$0xf]
        %v294 = vld [vmem:[#allocation5 + $0x74] sm:$0xf]
        %v295 = vld [vmem:[#allocation5 + $0x78] sm:$0xf]
        %v296 = vld [vmem:[#allocation5 + $0x7c] sm:$0xf]
        %vm297 = vsmask.f32 3328
        %vm298 = vsmask.f32 7440
        %vm299 = vmor %vm297, %vm298
        %v301 = vshrl.u32 %v245, 16
        %v303 = vrot.slane %v301, 4
        %v304 = vshll.u32 %v245, 16
        %v306 = vrot.slane %v304, 5
        %v307 = vor.u32 %v303, %v306
        %v308 = vrot.slane %v307, 4
        %v310 = vshll.u32 %v246, 16
        %v312 = vrot.slane %v310, 5
        %v313 = vsel %vm299, %v308, %v312
        %v315 = vshrl.u32 %v247, 16
        %v317 = vrot.slane %v315, 4
        %v318 = vshll.u32 %v247, 16
        %v320 = vrot.slane %v318, 5
        %v321 = vor.u32 %v317, %v320
        %v322 = vrot.slane %v321, 4
        %v324 = vshll.u32 %v248, 16
        %v326 = vrot.slane %v324, 5
        %v327 = vsel %vm299, %v322, %v326
        %v329 = vshrl.u32 %v249, 16
        %v331 = vrot.slane %v329, 4
        %v332 = vshll.u32 %v249, 16
        %v334 = vrot.slane %v332, 5
        %v335 = vor.u32 %v331, %v334
        %v336 = vrot.slane %v335, 4
        %v338 = vshll.u32 %v250, 16
        %v340 = vrot.slane %v338, 5
        %v341 = vsel %vm299, %v336, %v340
        %v343 = vshrl.u32 %v251, 16
        %v345 = vrot.slane %v343, 4
        %v346 = vshll.u32 %v251, 16
        %v348 = vrot.slane %v346, 5
        %v349 = vor.u32 %v345, %v348
        %v350 = vrot.slane %v349, 4
        %v352 = vshll.u32 %v252, 16
        %v354 = vrot.slane %v352, 5
        %v355 = vsel %vm299, %v350, %v354
        %v357 = vshrl.u32 %v253, 16
        %v359 = vrot.slane %v357, 4
        %v360 = vshll.u32 %v253, 16
        %v362 = vrot.slane %v360, 5
        %v363 = vor.u32 %v359, %v362
        %v364 = vrot.slane %v363, 4
        %v366 = vshll.u32 %v254, 16
        %v368 = vrot.slane %v366, 5
        %v369 = vsel %vm299, %v364, %v368
        %v371 = vshrl.u32 %v255, 16
        %v373 = vrot.slane %v371, 4
        %v374 = vshll.u32 %v255, 16
        %v376 = vrot.slane %v374, 5
        %v377 = vor.u32 %v373, %v376
        %v378 = vrot.slane %v377, 4
        %v380 = vshll.u32 %v256, 16
        %v382 = vrot.slane %v380, 5
        %v383 = vsel %vm299, %v378, %v382
        %v385 = vshrl.u32 %v257, 16
        %v387 = vrot.slane %v385, 4
        %v388 = vshll.u32 %v257, 16
        %v390 = vrot.slane %v388, 5
        %v391 = vor.u32 %v387, %v390
        %v392 = vrot.slane %v391, 4
        %v394 = vshll.u32 %v258, 16
        %v396 = vrot.slane %v394, 5
        %v397 = vsel %vm299, %v392, %v396
        %v399 = vshrl.u32 %v259, 16
        %v401 = vrot.slane %v399, 4
        %v402 = vshll.u32 %v259, 16
        %v404 = vrot.slane %v402, 5
        %v405 = vor.u32 %v401, %v404
        %v406 = vrot.slane %v405, 4
        %v408 = vshll.u32 %v260, 16
        %v410 = vrot.slane %v408, 5
        %v411 = vsel %vm299, %v406, %v410
        %s412 = scalar_lea.vmem [#allocation5], 128
        %v413 = vld [vmem:[%s412] sm:$0xf]
        %v414 = vld [vmem:[%s412 + $0x4] sm:$0xf]
        %v415 = vld [vmem:[%s412 + $0x8] sm:$0xf]
        %v416 = vld [vmem:[%s412 + $0xc] sm:$0xf]
        %v417 = vld [vmem:[%s412 + $0x10] sm:$0xf]
        %v418 = vld [vmem:[%s412 + $0x14] sm:$0xf]
        %v419 = vld [vmem:[%s412 + $0x18] sm:$0xf]
        %v420 = vld [vmem:[%s412 + $0x1c] sm:$0xf]
        %v421 = vld [vmem:[%s412 + $0x20] sm:$0xf]
        %v422 = vld [vmem:[%s412 + $0x24] sm:$0xf]
        %v423 = vld [vmem:[%s412 + $0x28] sm:$0xf]
        %v424 = vld [vmem:[%s412 + $0x2c] sm:$0xf]
        %v425 = vld [vmem:[%s412 + $0x30] sm:$0xf]
        %v426 = vld [vmem:[%s412 + $0x34] sm:$0xf]
        %v427 = vld [vmem:[%s412 + $0x38] sm:$0xf]
        %v428 = vld [vmem:[%s412 + $0x3c] sm:$0xf]
        %v429 = vld [vmem:[%s412 + $0x40] sm:$0xf]
        %v430 = vld [vmem:[%s412 + $0x44] sm:$0xf]
        %v431 = vld [vmem:[%s412 + $0x48] sm:$0xf]
        %v432 = vld [vmem:[%s412 + $0x4c] sm:$0xf]
        %v433 = vld [vmem:[%s412 + $0x50] sm:$0xf]
        %v434 = vld [vmem:[%s412 + $0x54] sm:$0xf]
        %v435 = vld [vmem:[%s412 + $0x58] sm:$0xf]
        %v436 = vld [vmem:[%s412 + $0x5c] sm:$0xf]
        %v437 = vld [vmem:[%s412 + $0x60] sm:$0xf]
        %v438 = vld [vmem:[%s412 + $0x64] sm:$0xf]
        %v439 = vld [vmem:[%s412 + $0x68] sm:$0xf]
        %v440 = vld [vmem:[%s412 + $0x6c] sm:$0xf]
        %v441 = vld [vmem:[%s412 + $0x70] sm:$0xf]
        %v442 = vld [vmem:[%s412 + $0x74] sm:$0xf]
        %v443 = vld [vmem:[%s412 + $0x78] sm:$0xf]
        %v444 = vld [vmem:[%s412 + $0x7c] sm:$0xf]
        %v445 = vunpack.c.l.b16 %v313
        %v446 = vunpack.c.h.b16 %v313
        %v447 = vunpack.c.l.b16 %v327
        %v448 = vunpack.c.h.b16 %v327
        %v449 = vunpack.c.l.b16 %v341
        %v450 = vunpack.c.h.b16 %v341
        %v451 = vunpack.c.l.b16 %v355
        %v452 = vunpack.c.h.b16 %v355
        %v453 = vunpack.c.l.b16 %v369
        %v454 = vunpack.c.h.b16 %v369
        %v455 = vunpack.c.l.b16 %v383
        %v456 = vunpack.c.h.b16 %v383
        %v457 = vunpack.c.l.b16 %v397
        %v458 = vunpack.c.h.b16 %v397
        %v459 = vunpack.c.l.b16 %v411
        %v460 = vunpack.c.h.b16 %v411
        %v461 = vpack.c.b16 %v447, %v445
        %v462 = vpack.c.b16 %v448, %v446
        %v463 = vpack.c.b16 %v451, %v449
        %v464 = vpack.c.b16 %v452, %v450
        %v465 = vpack.c.b16 %v455, %v453
        %v466 = vpack.c.b16 %v456, %v454
        %v467 = vpack.c.b16 %v459, %v457
        %v468 = vpack.c.b16 %v460, %v458
        %v509 = vunpack.c.l.b16 %v413
        %v510 = vunpack.c.l.b16 %v414
        %v511 = vunpack.c.l.b16 %v415
        %v512 = vunpack.c.l.b16 %v416
        %v513 = vunpack.c.l.b16 %v417
        %v514 = vunpack.c.l.b16 %v418
        %v515 = vunpack.c.l.b16 %v419
        %v516 = vunpack.c.l.b16 %v420
        %v517 = vunpack.c.l.b16 %v421
        %v518 = vunpack.c.l.b16 %v422
        %v519 = vunpack.c.l.b16 %v423
        %v520 = vunpack.c.l.b16 %v424
        %v521 = vunpack.c.l.b16 %v425
        %v522 = vunpack.c.l.b16 %v426
        %v523 = vunpack.c.l.b16 %v427
        %v524 = vunpack.c.l.b16 %v428
        %v525 = vunpack.c.l.b16 %v429
        %v526 = vunpack.c.l.b16 %v430
        %v527 = vunpack.c.l.b16 %v431
        %v528 = vunpack.c.l.b16 %v432
        %v529 = vunpack.c.l.b16 %v433
        %v530 = vunpack.c.l.b16 %v434
        %v531 = vunpack.c.l.b16 %v435
        %v532 = vunpack.c.l.b16 %v436
        %v533 = vunpack.c.l.b16 %v437
        %v534 = vunpack.c.l.b16 %v438
        %v535 = vunpack.c.l.b16 %v439
        %v536 = vunpack.c.l.b16 %v440
        %v537 = vunpack.c.l.b16 %v441
        %v538 = vunpack.c.l.b16 %v442
        %v539 = vunpack.c.l.b16 %v443
        %v540 = vunpack.c.l.b16 %v444
        %v541 = vpack.c.b16 %v510, %v509
        %v542 = vpack.c.b16 %v512, %v511
        %v543 = vpack.c.b16 %v514, %v513
        %v544 = vpack.c.b16 %v516, %v515
        %v545 = vpack.c.b16 %v518, %v517
        %v546 = vpack.c.b16 %v520, %v519
        %v547 = vpack.c.b16 %v522, %v521
        %v548 = vpack.c.b16 %v524, %v523
        %v549 = vpack.c.b16 %v526, %v525
        %v550 = vpack.c.b16 %v528, %v527
        %v551 = vpack.c.b16 %v530, %v529
        %v552 = vpack.c.b16 %v532, %v531
        %v553 = vpack.c.b16 %v534, %v533
        %v554 = vpack.c.b16 %v536, %v535
        %v555 = vpack.c.b16 %v538, %v537
        %v556 = vpack.c.b16 %v540, %v539
        %573 = vmatprep.subr.bf16.mxu0 0
        %574 = vmatpush1.bf16.msra.mxu0 %v541
        %575 = vmatprep.subr.bf16.mxu0 0
        %576 = vmatpush1.bf16.msra.mxu0 %v542
        %577 = vmatprep.subr.bf16.mxu0 0
        %578 = vmatpush1.bf16.msra.mxu0 %v543
        %579 = vmatprep.subr.bf16.mxu0 0
        %580 = vmatpush1.bf16.msra.mxu0 %v544
        %581 = vmatprep.subr.bf16.mxu0 0
        %582 = vmatpush1.bf16.msra.mxu0 %v545
        %583 = vmatprep.subr.bf16.mxu0 0
        %584 = vmatpush1.bf16.msra.mxu0 %v546
        %585 = vmatprep.subr.bf16.mxu0 0
        %586 = vmatpush1.bf16.msra.mxu0 %v547
        %587 = vmatprep.subr.bf16.mxu0 0
        %588 = vmatpush1.bf16.msra.mxu0 %v548
        %589 = vmatprep.subr.bf16.mxu0 0
        %590 = vmatpush1.bf16.msra.mxu0 %v549
        %591 = vmatprep.subr.bf16.mxu0 0
        %592 = vmatpush1.bf16.msra.mxu0 %v550
        %593 = vmatprep.subr.bf16.mxu0 0
        %594 = vmatpush1.bf16.msra.mxu0 %v551
        %595 = vmatprep.subr.bf16.mxu0 0
        %596 = vmatpush1.bf16.msra.mxu0 %v552
        %597 = vmatprep.subr.bf16.mxu0 0
        %598 = vmatpush1.bf16.msra.mxu0 %v553
        %599 = vmatprep.subr.bf16.mxu0 0
        %600 = vmatpush1.bf16.msra.mxu0 %v554
        %601 = vmatprep.subr.bf16.mxu0 0
        %602 = vmatpush1.bf16.msra.mxu0 %v555
        %603 = vmatprep.subr.bf16.mxu0 0
        %604 = vmatpush1.bf16.msra.mxu0 %v556
        %605 = vmatprep.mubr.bf16.mxu0 %v462
        %606 = vmatmul.mubr.bf16.gmra.mrb[0].mxu0 %v461
        %v607 = vpop.f32.mrb[0].mxu0
        %v608 = vadd.f32 0.0, %v607
        %v609 = vpop.f32.mrb[0].mxu0
        %v610 = vpop.f32.mrb[0].mxu0
        %v611 = vadd.f32 0.0, %v610
        %v612 = vpop.f32.mrb[0].mxu0
        %613 = vmatprep.mubr.bf16.mxu0 %v464
        %614 = vmatmul.mubr.bf16.gmra.mrb[0].mxu0 %v463
        %v615 = vpop.f32.mrb[0].mxu0
        %v616 = vadd.f32 0.0, %v615
        %v617 = vpop.f32.mrb[0].mxu0
        %v618 = vpop.f32.mrb[0].mxu0
        %v619 = vadd.f32 0.0, %v618
        %v620 = vpop.f32.mrb[0].mxu0
        %621 = vmatprep.mubr.bf16.mxu0 %v466
        %622 = vmatmul.mubr.bf16.gmra.mrb[0].mxu0 %v465
        %v623 = vpop.f32.mrb[0].mxu0
        %v624 = vadd.f32 0.0, %v623
        %v625 = vpop.f32.mrb[0].mxu0
        %v626 = vpop.f32.mrb[0].mxu0
        %v627 = vadd.f32 0.0, %v626
        %v628 = vpop.f32.mrb[0].mxu0
        %629 = vmatprep.mubr.bf16.mxu0 %v468
        %630 = vmatmul.mubr.bf16.gmra.mrb[0].mxu0 %v467
        %v631 = vpop.f32.mrb[0].mxu0
        %v632 = vadd.f32 0.0, %v631
        %v633 = vpop.f32.mrb[0].mxu0
        %v634 = vpop.f32.mrb[0].mxu0
        %v635 = vadd.f32 0.0, %v634
        %v636 = vpop.f32.mrb[0].mxu0
        %637 = vdwg.mxu0
        %v646 = vunpack.c.l.b16 %v245
        %v647 = vunpack.c.h.b16 %v245
        %v648 = vunpack.c.l.b16 %v247
        %v649 = vunpack.c.h.b16 %v247
        %v650 = vunpack.c.l.b16 %v249
        %v651 = vunpack.c.h.b16 %v249
        %v652 = vunpack.c.l.b16 %v251
        %v653 = vunpack.c.h.b16 %v251
        %v654 = vunpack.c.l.b16 %v253
        %v655 = vunpack.c.h.b16 %v253
        %v656 = vunpack.c.l.b16 %v255
        %v657 = vunpack.c.h.b16 %v255
        %v658 = vunpack.c.l.b16 %v257
        %v659 = vunpack.c.h.b16 %v257
        %v660 = vunpack.c.l.b16 %v259
        %v661 = vunpack.c.h.b16 %v259
        %v662 = vpack.c.b16 %v648, %v646
        %v663 = vpack.c.b16 %v649, %v647
        %v664 = vpack.c.b16 %v652, %v650
        %v665 = vpack.c.b16 %v653, %v651
        %v666 = vpack.c.b16 %v656, %v654
        %v667 = vpack.c.b16 %v657, %v655
        %v668 = vpack.c.b16 %v660, %v658
        %v669 = vpack.c.b16 %v661, %v659
        %v710 = vunpack.c.l.b16 %v265
        %v711 = vunpack.c.l.b16 %v266
        %v712 = vunpack.c.l.b16 %v267
        %v713 = vunpack.c.l.b16 %v268
        %v714 = vunpack.c.l.b16 %v269
        %v715 = vunpack.c.l.b16 %v270
        %v716 = vunpack.c.l.b16 %v271
        %v717 = vunpack.c.l.b16 %v272
        %v718 = vunpack.c.l.b16 %v273
        %v719 = vunpack.c.l.b16 %v274
        %v720 = vunpack.c.l.b16 %v275
        %v721 = vunpack.c.l.b16 %v276
        %v722 = vunpack.c.l.b16 %v277
        %v723 = vunpack.c.l.b16 %v278
        %v724 = vunpack.c.l.b16 %v279
        %v725 = vunpack.c.l.b16 %v280
        %v726 = vunpack.c.l.b16 %v281
        %v727 = vunpack.c.l.b16 %v282
        %v728 = vunpack.c.l.b16 %v283
        %v729 = vunpack.c.l.b16 %v284
        %v730 = vunpack.c.l.b16 %v285
        %v731 = vunpack.c.l.b16 %v286
        %v732 = vunpack.c.l.b16 %v287
        %v733 = vunpack.c.l.b16 %v288
        %v734 = vunpack.c.l.b16 %v289
        %v735 = vunpack.c.l.b16 %v290
        %v736 = vunpack.c.l.b16 %v291
        %v737 = vunpack.c.l.b16 %v292
        %v738 = vunpack.c.l.b16 %v293
        %v739 = vunpack.c.l.b16 %v294
        %v740 = vunpack.c.l.b16 %v295
        %v741 = vunpack.c.l.b16 %v296
        %v742 = vpack.c.b16 %v711, %v710
        %v743 = vpack.c.b16 %v713, %v712
        %v744 = vpack.c.b16 %v715, %v714
        %v745 = vpack.c.b16 %v717, %v716
        %v746 = vpack.c.b16 %v719, %v718
        %v747 = vpack.c.b16 %v721, %v720
        %v748 = vpack.c.b16 %v723, %v722
        %v749 = vpack.c.b16 %v725, %v724
        %v750 = vpack.c.b16 %v727, %v726
        %v751 = vpack.c.b16 %v729, %v728
        %v752 = vpack.c.b16 %v731, %v730
        %v753 = vpack.c.b16 %v733, %v732
        %v754 = vpack.c.b16 %v735, %v734
        %v755 = vpack.c.b16 %v737, %v736
        %v756 = vpack.c.b16 %v739, %v738
        %v757 = vpack.c.b16 %v741, %v740
        %774 = vmatprep.subr.bf16.mxu0 0
        %775 = vmatpush1.bf16.msra.mxu0 %v742
        %776 = vmatprep.subr.bf16.mxu0 0
        %777 = vmatpush1.bf16.msra.mxu0 %v743
        %778 = vmatprep.subr.bf16.mxu0 0
        %779 = vmatpush1.bf16.msra.mxu0 %v744
        %780 = vmatprep.subr.bf16.mxu0 0
        %781 = vmatpush1.bf16.msra.mxu0 %v745
        %782 = vmatprep.subr.bf16.mxu0 0
        %783 = vmatpush1.bf16.msra.mxu0 %v746
        %784 = vmatprep.subr.bf16.mxu0 0
        %785 = vmatpush1.bf16.msra.mxu0 %v747
        %786 = vmatprep.subr.bf16.mxu0 0
        %787 = vmatpush1.bf16.msra.mxu0 %v748
        %788 = vmatprep.subr.bf16.mxu0 0
        %789 = vmatpush1.bf16.msra.mxu0 %v749
        %790 = vmatprep.subr.bf16.mxu0 0
        %791 = vmatpush1.bf16.msra.mxu0 %v750
        %792 = vmatprep.subr.bf16.mxu0 0
        %793 = vmatpush1.bf16.msra.mxu0 %v751
        %794 = vmatprep.subr.bf16.mxu0 0
        %795 = vmatpush1.bf16.msra.mxu0 %v752
        %796 = vmatprep.subr.bf16.mxu0 0
        %797 = vmatpush1.bf16.msra.mxu0 %v753
        %798 = vmatprep.subr.bf16.mxu0 0
        %799 = vmatpush1.bf16.msra.mxu0 %v754
        %800 = vmatprep.subr.bf16.mxu0 0
        %801 = vmatpush1.bf16.msra.mxu0 %v755
        %802 = vmatprep.subr.bf16.mxu0 0
        %803 = vmatpush1.bf16.msra.mxu0 %v756
        %804 = vmatprep.subr.bf16.mxu0 0
        %805 = vmatpush1.bf16.msra.mxu0 %v757
        %806 = vmatprep.mubr.bf16.mxu0 %v663
        %807 = vmatmul.mubr.bf16.gmra.mrb[0].mxu0 %v662
        %v808 = vpop.f32.mrb[0].mxu0
        %v809 = vadd.f32 %v608, %v808
        %v810 = vpop.f32.mrb[0].mxu0
        %v811 = vpop.f32.mrb[0].mxu0
        %v812 = vadd.f32 %v611, %v811
        %v813 = vpop.f32.mrb[0].mxu0
        %814 = vmatprep.mubr.bf16.mxu0 %v665
        %815 = vmatmul.mubr.bf16.gmra.mrb[0].mxu0 %v664
        %v816 = vpop.f32.mrb[0].mxu0
        %v817 = vadd.f32 %v616, %v816
        %v818 = vpop.f32.mrb[0].mxu0
        %v819 = vpop.f32.mrb[0].mxu0
        %v820 = vadd.f32 %v619, %v819
        %v821 = vpop.f32.mrb[0].mxu0
        %822 = vmatprep.mubr.bf16.mxu0 %v667
        %823 = vmatmul.mubr.bf16.gmra.mrb[0].mxu0 %v666
        %v824 = vpop.f32.mrb[0].mxu0
        %v825 = vadd.f32 %v624, %v824
        %v826 = vpop.f32.mrb[0].mxu0
        %v827 = vpop.f32.mrb[0].mxu0
        %v828 = vadd.f32 %v627, %v827
        %v829 = vpop.f32.mrb[0].mxu0
        %830 = vmatprep.mubr.bf16.mxu0 %v669
        %831 = vmatmul.mubr.bf16.gmra.mrb[0].mxu0 %v668
        %v832 = vpop.f32.mrb[0].mxu0
        %v833 = vadd.f32 %v632, %v832
        %v834 = vpop.f32.mrb[0].mxu0
        %v835 = vpop.f32.mrb[0].mxu0
        %v836 = vadd.f32 %v635, %v835
        %v837 = vpop.f32.mrb[0].mxu0
        %838 = vdwg.mxu0
        %vm847 = vcmask 1042432
        %vm848 = vcmask 1046532
        %vm849 = vmor %vm847, %vm848
        %v850 = vrot.slane %v245, 5
        %v851 = vrot.slane %v850, 4
        %v852 = vrot.slane %v246, 5
        %v853 = vsel %vm849, %v851, %v852
        %v854 = vrot.slane %v247, 5
        %v855 = vrot.slane %v854, 4
        %v856 = vrot.slane %v248, 5
        %v857 = vsel %vm849, %v855, %v856
        %v858 = vrot.slane %v249, 5
        %v859 = vrot.slane %v858, 4
        %v860 = vrot.slane %v250, 5
        %v861 = vsel %vm849, %v859, %v860
        %v862 = vrot.slane %v251, 5
        %v863 = vrot.slane %v862, 4
        %v864 = vrot.slane %v252, 5
        %v865 = vsel %vm849, %v863, %v864
        %v866 = vrot.slane %v253, 5
        %v867 = vrot.slane %v866, 4
        %v868 = vrot.slane %v254, 5
        %v869 = vsel %vm849, %v867, %v868
        %v870 = vrot.slane %v255, 5
        %v871 = vrot.slane %v870, 4
        %v872 = vrot.slane %v256, 5
        %v873 = vsel %vm849, %v871, %v872
        %v874 = vrot.slane %v257, 5
        %v875 = vrot.slane %v874, 4
        %v876 = vrot.slane %v258, 5
        %v877 = vsel %vm849, %v875, %v876
        %v878 = vrot.slane %v259, 5
        %v879 = vrot.slane %v878, 4
        %v880 = vrot.slane %v260, 5
        %v881 = vsel %vm849, %v879, %v880
        %s882 = scalar_lea.vmem [#allocation5], 256
        %v883 = vld [vmem:[%s882] sm:$0xf]
        %v884 = vld [vmem:[%s882 + $0x4] sm:$0xf]
        %v885 = vld [vmem:[%s882 + $0x8] sm:$0xf]
        %v886 = vld [vmem:[%s882 + $0xc] sm:$0xf]
        %v887 = vld [vmem:[%s882 + $0x10] sm:$0xf]
        %v888 = vld [vmem:[%s882 + $0x14] sm:$0xf]
        %v889 = vld [vmem:[%s882 + $0x18] sm:$0xf]
        %v890 = vld [vmem:[%s882 + $0x1c] sm:$0xf]
        %v891 = vld [vmem:[%s882 + $0x20] sm:$0xf]
        %v892 = vld [vmem:[%s882 + $0x24] sm:$0xf]
        %v893 = vld [vmem:[%s882 + $0x28] sm:$0xf]
        %v894 = vld [vmem:[%s882 + $0x2c] sm:$0xf]
        %v895 = vld [vmem:[%s882 + $0x30] sm:$0xf]
        %v896 = vld [vmem:[%s882 + $0x34] sm:$0xf]
        %v897 = vld [vmem:[%s882 + $0x38] sm:$0xf]
        %v898 = vld [vmem:[%s882 + $0x3c] sm:$0xf]
        %v899 = vld [vmem:[%s882 + $0x40] sm:$0xf]
        %v900 = vld [vmem:[%s882 + $0x44] sm:$0xf]
        %v901 = vld [vmem:[%s882 + $0x48] sm:$0xf]
        %v902 = vld [vmem:[%s882 + $0x4c] sm:$0xf]
        %v903 = vld [vmem:[%s882 + $0x50] sm:$0xf]
        %v904 = vld [vmem:[%s882 + $0x54] sm:$0xf]
        %v905 = vld [vmem:[%s882 + $0x58] sm:$0xf]
        %v906 = vld [vmem:[%s882 + $0x5c] sm:$0xf]
        %v907 = vld [vmem:[%s882 + $0x60] sm:$0xf]
        %v908 = vld [vmem:[%s882 + $0x64] sm:$0xf]
        %v909 = vld [vmem:[%s882 + $0x68] sm:$0xf]
        %v910 = vld [vmem:[%s882 + $0x6c] sm:$0xf]
        %v911 = vld [vmem:[%s882 + $0x70] sm:$0xf]
        %v912 = vld [vmem:[%s882 + $0x74] sm:$0xf]
        %v913 = vld [vmem:[%s882 + $0x78] sm:$0xf]
        %v914 = vld [vmem:[%s882 + $0x7c] sm:$0xf]
        %v915 = vunpack.c.l.b16 %v853
        %v916 = vunpack.c.h.b16 %v853
        %v917 = vunpack.c.l.b16 %v857
        %v918 = vunpack.c.h.b16 %v857
        %v919 = vunpack.c.l.b16 %v861
        %v920 = vunpack.c.h.b16 %v861
        %v921 = vunpack.c.l.b16 %v865
        %v922 = vunpack.c.h.b16 %v865
        %v923 = vunpack.c.l.b16 %v869
        %v924 = vunpack.c.h.b16 %v869
        %v925 = vunpack.c.l.b16 %v873
        %v926 = vunpack.c.h.b16 %v873
        %v927 = vunpack.c.l.b16 %v877
        %v928 = vunpack.c.h.b16 %v877
        %v929 = vunpack.c.l.b16 %v881
        %v930 = vunpack.c.h.b16 %v881
        %v931 = vpack.c.b16 %v917, %v915
        %v932 = vpack.c.b16 %v918, %v916
        %v933 = vpack.c.b16 %v921, %v919
        %v934 = vpack.c.b16 %v922, %v920
        %v935 = vpack.c.b16 %v925, %v923
        %v936 = vpack.c.b16 %v926, %v924
        %v937 = vpack.c.b16 %v929, %v927
        %v938 = vpack.c.b16 %v930, %v928
        %v979 = vunpack.c.l.b16 %v883
        %v980 = vunpack.c.l.b16 %v884
        %v981 = vunpack.c.l.b16 %v885
        %v982 = vunpack.c.l.b16 %v886
        %v983 = vunpack.c.l.b16 %v887
        %v984 = vunpack.c.l.b16 %v888
        %v985 = vunpack.c.l.b16 %v889
        %v986 = vunpack.c.l.b16 %v890
        %v987 = vunpack.c.l.b16 %v891
        %v988 = vunpack.c.l.b16 %v892
        %v989 = vunpack.c.l.b16 %v893
        %v990 = vunpack.c.l.b16 %v894
        %v991 = vunpack.c.l.b16 %v895
        %v992 = vunpack.c.l.b16 %v896
        %v993 = vunpack.c.l.b16 %v897
        %v994 = vunpack.c.l.b16 %v898
        %v995 = vunpack.c.l.b16 %v899
        %v996 = vunpack.c.l.b16 %v900
        %v997 = vunpack.c.l.b16 %v901
        %v998 = vunpack.c.l.b16 %v902
        %v999 = vunpack.c.l.b16 %v903
        %v1000 = vunpack.c.l.b16 %v904
        %v1001 = vunpack.c.l.b16 %v905
        %v1002 = vunpack.c.l.b16 %v906
        %v1003 = vunpack.c.l.b16 %v907
        %v1004 = vunpack.c.l.b16 %v908
        %v1005 = vunpack.c.l.b16 %v909
        %v1006 = vunpack.c.l.b16 %v910
        %v1007 = vunpack.c.l.b16 %v911
        %v1008 = vunpack.c.l.b16 %v912
        %v1009 = vunpack.c.l.b16 %v913
        %v1010 = vunpack.c.l.b16 %v914
        %v1011 = vpack.c.b16 %v980, %v979
        %v1012 = vpack.c.b16 %v982, %v981
        %v1013 = vpack.c.b16 %v984, %v983
        %v1014 = vpack.c.b16 %v986, %v985
        %v1015 = vpack.c.b16 %v988, %v987
        %v1016 = vpack.c.b16 %v990, %v989
        %v1017 = vpack.c.b16 %v992, %v991
        %v1018 = vpack.c.b16 %v994, %v993
        %v1019 = vpack.c.b16 %v996, %v995
        %v1020 = vpack.c.b16 %v998, %v997
        %v1021 = vpack.c.b16 %v1000, %v999
        %v1022 = vpack.c.b16 %v1002, %v1001
        %v1023 = vpack.c.b16 %v1004, %v1003
        %v1024 = vpack.c.b16 %v1006, %v1005
        %v1025 = vpack.c.b16 %v1008, %v1007
        %v1026 = vpack.c.b16 %v1010, %v1009
        %1043 = vmatprep.subr.bf16.mxu0 0
        %1044 = vmatpush1.bf16.msra.mxu0 %v1011
        %1045 = vmatprep.subr.bf16.mxu0 0
        %1046 = vmatpush1.bf16.msra.mxu0 %v1012
        %1047 = vmatprep.subr.bf16.mxu0 0
        %1048 = vmatpush1.bf16.msra.mxu0 %v1013
        %1049 = vmatprep.subr.bf16.mxu0 0
        %1050 = vmatpush1.bf16.msra.mxu0 %v1014
        %1051 = vmatprep.subr.bf16.mxu0 0
        %1052 = vmatpush1.bf16.msra.mxu0 %v1015
        %1053 = vmatprep.subr.bf16.mxu0 0
        %1054 = vmatpush1.bf16.msra.mxu0 %v1016
        %1055 = vmatprep.subr.bf16.mxu0 0
        %1056 = vmatpush1.bf16.msra.mxu0 %v1017
        %1057 = vmatprep.subr.bf16.mxu0 0
        %1058 = vmatpush1.bf16.msra.mxu0 %v1018
        %1059 = vmatprep.subr.bf16.mxu0 0
        %1060 = vmatpush1.bf16.msra.mxu0 %v1019
        %1061 = vmatprep.subr.bf16.mxu0 0
        %1062 = vmatpush1.bf16.msra.mxu0 %v1020
        %1063 = vmatprep.subr.bf16.mxu0 0
        %1064 = vmatpush1.bf16.msra.mxu0 %v1021
        %1065 = vmatprep.subr.bf16.mxu0 0
        %1066 = vmatpush1.bf16.msra.mxu0 %v1022
        %1067 = vmatprep.subr.bf16.mxu0 0
        %1068 = vmatpush1.bf16.msra.mxu0 %v1023
        %1069 = vmatprep.subr.bf16.mxu0 0
        %1070 = vmatpush1.bf16.msra.mxu0 %v1024
        %1071 = vmatprep.subr.bf16.mxu0 0
        %1072 = vmatpush1.bf16.msra.mxu0 %v1025
        %1073 = vmatprep.subr.bf16.mxu0 0
        %1074 = vmatpush1.bf16.msra.mxu0 %v1026
        %1075 = vmatprep.mubr.bf16.mxu0 %v932
        %1076 = vmatmul.mubr.bf16.gmra.mrb[0].mxu0 %v931
        %v1077 = vpop.f32.mrb[0].mxu0
        %v1078 = vadd.f32 0.0, %v1077
        %v1079 = vpop.f32.mrb[0].mxu0
        %v1080 = vpop.f32.mrb[0].mxu0
        %v1081 = vadd.f32 0.0, %v1080
        %v1082 = vpop.f32.mrb[0].mxu0
        %1083 = vmatprep.mubr.bf16.mxu0 %v934
        %1084 = vmatmul.mubr.bf16.gmra.mrb[0].mxu0 %v933
        %v1085 = vpop.f32.mrb[0].mxu0
        %v1086 = vadd.f32 0.0, %v1085
        %v1087 = vpop.f32.mrb[0].mxu0
        %v1088 = vpop.f32.mrb[0].mxu0
        %v1089 = vadd.f32 0.0, %v1088
        %v1090 = vpop.f32.mrb[0].mxu0
        %1091 = vmatprep.mubr.bf16.mxu0 %v936
        %1092 = vmatmul.mubr.bf16.gmra.mrb[0].mxu0 %v935
        %v1093 = vpop.f32.mrb[0].mxu0
        %v1094 = vadd.f32 0.0, %v1093
        %v1095 = vpop.f32.mrb[0].mxu0
        %v1096 = vpop.f32.mrb[0].mxu0
        %v1097 = vadd.f32 0.0, %v1096
        %v1098 = vpop.f32.mrb[0].mxu0
        %1099 = vmatprep.mubr.bf16.mxu0 %v938
        %1100 = vmatmul.mubr.bf16.gmra.mrb[0].mxu0 %v937
        %v1101 = vpop.f32.mrb[0].mxu0
        %v1102 = vadd.f32 0.0, %v1101
        %v1103 = vpop.f32.mrb[0].mxu0
        %v1104 = vpop.f32.mrb[0].mxu0
        %v1105 = vadd.f32 0.0, %v1104
        %v1106 = vpop.f32.mrb[0].mxu0
        %1107 = vdwg.mxu0
        %v1108 = vadd.f32 %v809, %v1078
        %v1109 = vadd.f32 %v812, %v1081
        %v1110 = vadd.f32 %v817, %v1086
        %v1111 = vadd.f32 %v820, %v1089
        %v1112 = vadd.f32 %v825, %v1094
        %v1113 = vadd.f32 %v828, %v1097
        %v1114 = vadd.f32 %v833, %v1102
        %v1115 = vadd.f32 %v836, %v1105
        %s1116 = scalar_lea.vmem [#allocation5], 384
        %v1117 = vld [vmem:[%s1116] sm:$0xf]
        %v1118 = vld [vmem:[%s1116 + $0x4] sm:$0xf]
        %v1119 = vld [vmem:[%s1116 + $0x8] sm:$0xf]
        %v1120 = vld [vmem:[%s1116 + $0xc] sm:$0xf]
        %v1121 = vld [vmem:[%s1116 + $0x10] sm:$0xf]
        %v1122 = vld [vmem:[%s1116 + $0x14] sm:$0xf]
        %v1123 = vld [vmem:[%s1116 + $0x18] sm:$0xf]
        %v1124 = vld [vmem:[%s1116 + $0x1c] sm:$0xf]
        %v1125 = vld [vmem:[%s1116 + $0x20] sm:$0xf]
        %v1126 = vld [vmem:[%s1116 + $0x24] sm:$0xf]
        %v1127 = vld [vmem:[%s1116 + $0x28] sm:$0xf]
        %v1128 = vld [vmem:[%s1116 + $0x2c] sm:$0xf]
        %v1129 = vld [vmem:[%s1116 + $0x30] sm:$0xf]
        %v1130 = vld [vmem:[%s1116 + $0x34] sm:$0xf]
        %v1131 = vld [vmem:[%s1116 + $0x38] sm:$0xf]
        %v1132 = vld [vmem:[%s1116 + $0x3c] sm:$0xf]
        %v1133 = vld [vmem:[%s1116 + $0x40] sm:$0xf]
        %v1134 = vld [vmem:[%s1116 + $0x44] sm:$0xf]
        %v1135 = vld [vmem:[%s1116 + $0x48] sm:$0xf]
        %v1136 = vld [vmem:[%s1116 + $0x4c] sm:$0xf]
        %v1137 = vld [vmem:[%s1116 + $0x50] sm:$0xf]
        %v1138 = vld [vmem:[%s1116 + $0x54] sm:$0xf]
        %v1139 = vld [vmem:[%s1116 + $0x58] sm:$0xf]
        %v1140 = vld [vmem:[%s1116 + $0x5c] sm:$0xf]
        %v1141 = vld [vmem:[%s1116 + $0x60] sm:$0xf]
        %v1142 = vld [vmem:[%s1116 + $0x64] sm:$0xf]
        %v1143 = vld [vmem:[%s1116 + $0x68] sm:$0xf]
        %v1144 = vld [vmem:[%s1116 + $0x6c] sm:$0xf]
        %v1145 = vld [vmem:[%s1116 + $0x70] sm:$0xf]
        %v1146 = vld [vmem:[%s1116 + $0x74] sm:$0xf]
        %v1147 = vld [vmem:[%s1116 + $0x78] sm:$0xf]
        %v1148 = vld [vmem:[%s1116 + $0x7c] sm:$0xf]
        %v1150 = vunpack.c.l.b16 %v261
        %v1151 = vunpack.c.h.b16 %v261
        %v1152 = vpack.c.b16 %v650, %v648
        %v1153 = vpack.c.b16 %v651, %v649
        %v1154 = vpack.c.b16 %v654, %v652
        %v1155 = vpack.c.b16 %v655, %v653
        %v1156 = vpack.c.b16 %v658, %v656
        %v1157 = vpack.c.b16 %v659, %v657
        %v1158 = vpack.c.b16 %v1150, %v660
        %v1159 = vpack.c.b16 %v1151, %v661
        %v1200 = vunpack.c.l.b16 %v1117
        %v1201 = vunpack.c.l.b16 %v1118
        %v1202 = vunpack.c.l.b16 %v1119
        %v1203 = vunpack.c.l.b16 %v1120
        %v1204 = vunpack.c.l.b16 %v1121
        %v1205 = vunpack.c.l.b16 %v1122
        %v1206 = vunpack.c.l.b16 %v1123
        %v1207 = vunpack.c.l.b16 %v1124
        %v1208 = vunpack.c.l.b16 %v1125
        %v1209 = vunpack.c.l.b16 %v1126
        %v1210 = vunpack.c.l.b16 %v1127
        %v1211 = vunpack.c.l.b16 %v1128
        %v1212 = vunpack.c.l.b16 %v1129
        %v1213 = vunpack.c.l.b16 %v1130
        %v1214 = vunpack.c.l.b16 %v1131
        %v1215 = vunpack.c.l.b16 %v1132
        %v1216 = vunpack.c.l.b16 %v1133
        %v1217 = vunpack.c.l.b16 %v1134
        %v1218 = vunpack.c.l.b16 %v1135
        %v1219 = vunpack.c.l.b16 %v1136
        %v1220 = vunpack.c.l.b16 %v1137
        %v1221 = vunpack.c.l.b16 %v1138
        %v1222 = vunpack.c.l.b16 %v1139
        %v1223 = vunpack.c.l.b16 %v1140
        %v1224 = vunpack.c.l.b16 %v1141
        %v1225 = vunpack.c.l.b16 %v1142
        %v1226 = vunpack.c.l.b16 %v1143
        %v1227 = vunpack.c.l.b16 %v1144
        %v1228 = vunpack.c.l.b16 %v1145
        %v1229 = vunpack.c.l.b16 %v1146
        %v1230 = vunpack.c.l.b16 %v1147
        %v1231 = vunpack.c.l.b16 %v1148
        %v1232 = vpack.c.b16 %v1201, %v1200
        %v1233 = vpack.c.b16 %v1203, %v1202
        %v1234 = vpack.c.b16 %v1205, %v1204
        %v1235 = vpack.c.b16 %v1207, %v1206
        %v1236 = vpack.c.b16 %v1209, %v1208
        %v1237 = vpack.c.b16 %v1211, %v1210
        %v1238 = vpack.c.b16 %v1213, %v1212
        %v1239 = vpack.c.b16 %v1215, %v1214
        %v1240 = vpack.c.b16 %v1217, %v1216
        %v1241 = vpack.c.b16 %v1219, %v1218
        %v1242 = vpack.c.b16 %v1221, %v1220
        %v1243 = vpack.c.b16 %v1223, %v1222
        %v1244 = vpack.c.b16 %v1225, %v1224
        %v1245 = vpack.c.b16 %v1227, %v1226
        %v1246 = vpack.c.b16 %v1229, %v1228
        %v1247 = vpack.c.b16 %v1231, %v1230
        %1264 = vmatprep.subr.bf16.mxu0 0
        %1265 = vmatpush1.bf16.msra.mxu0 %v1232
        %1266 = vmatprep.subr.bf16.mxu0 0
        %1267 = vmatpush1.bf16.msra.mxu0 %v1233
        %1268 = vmatprep.subr.bf16.mxu0 0
        %1269 = vmatpush1.bf16.msra.mxu0 %v1234
        %1270 = vmatprep.subr.bf16.mxu0 0
        %1271 = vmatpush1.bf16.msra.mxu0 %v1235
        %1272 = vmatprep.subr.bf16.mxu0 0
        %1273 = vmatpush1.bf16.msra.mxu0 %v1236
        %1274 = vmatprep.subr.bf16.mxu0 0
        %1275 = vmatpush1.bf16.msra.mxu0 %v1237
        %1276 = vmatprep.subr.bf16.mxu0 0
        %1277 = vmatpush1.bf16.msra.mxu0 %v1238
        %1278 = vmatprep.subr.bf16.mxu0 0
        %1279 = vmatpush1.bf16.msra.mxu0 %v1239
        %1280 = vmatprep.subr.bf16.mxu0 0
        %1281 = vmatpush1.bf16.msra.mxu0 %v1240
        %1282 = vmatprep.subr.bf16.mxu0 0
        %1283 = vmatpush1.bf16.msra.mxu0 %v1241
        %1284 = vmatprep.subr.bf16.mxu0 0
        %1285 = vmatpush1.bf16.msra.mxu0 %v1242
        %1286 = vmatprep.subr.bf16.mxu0 0
        %1287 = vmatpush1.bf16.msra.mxu0 %v1243
        %1288 = vmatprep.subr.bf16.mxu0 0
        %1289 = vmatpush1.bf16.msra.mxu0 %v1244
        %1290 = vmatprep.subr.bf16.mxu0 0
        %1291 = vmatpush1.bf16.msra.mxu0 %v1245
        %1292 = vmatprep.subr.bf16.mxu0 0
        %1293 = vmatpush1.bf16.msra.mxu0 %v1246
        %1294 = vmatprep.subr.bf16.mxu0 0
        %1295 = vmatpush1.bf16.msra.mxu0 %v1247
        %1296 = vmatprep.mubr.bf16.mxu0 %v1153
        %1297 = vmatmul.mubr.bf16.gmra.mrb[0].mxu0 %v1152
        %v1298 = vpop.f32.mrb[0].mxu0
        %v1299 = vadd.f32 0.0, %v1298
        %v1300 = vpop.f32.mrb[0].mxu0
        %v1301 = vpop.f32.mrb[0].mxu0
        %v1302 = vadd.f32 0.0, %v1301
        %v1303 = vpop.f32.mrb[0].mxu0
        %1304 = vmatprep.mubr.bf16.mxu0 %v1155
        %1305 = vmatmul.mubr.bf16.gmra.mrb[0].mxu0 %v1154
        %v1306 = vpop.f32.mrb[0].mxu0
        %v1307 = vadd.f32 0.0, %v1306
        %v1308 = vpop.f32.mrb[0].mxu0
        %v1309 = vpop.f32.mrb[0].mxu0
        %v1310 = vadd.f32 0.0, %v1309
        %v1311 = vpop.f32.mrb[0].mxu0
        %1312 = vmatprep.mubr.bf16.mxu0 %v1157
        %1313 = vmatmul.mubr.bf16.gmra.mrb[0].mxu0 %v1156
        %v1314 = vpop.f32.mrb[0].mxu0
        %v1315 = vadd.f32 0.0, %v1314
        %v1316 = vpop.f32.mrb[0].mxu0
        %v1317 = vpop.f32.mrb[0].mxu0
        %v1318 = vadd.f32 0.0, %v1317
        %v1319 = vpop.f32.mrb[0].mxu0
        %1320 = vmatprep.mubr.bf16.mxu0 %v1159
        %1321 = vmatmul.mubr.bf16.gmra.mrb[0].mxu0 %v1158
        %v1322 = vpop.f32.mrb[0].mxu0
        %v1323 = vadd.f32 0.0, %v1322
        %v1324 = vpop.f32.mrb[0].mxu0
        %v1325 = vpop.f32.mrb[0].mxu0
        %v1326 = vadd.f32 0.0, %v1325
        %v1327 = vpop.f32.mrb[0].mxu0
        %1328 = vdwg.mxu0
        %v1329 = vadd.f32 %v1108, %v1299
        %v1330 = vadd.f32 %v1109, %v1302
        %v1331 = vadd.f32 %v1110, %v1307
        %v1332 = vadd.f32 %v1111, %v1310
        %v1333 = vadd.f32 %v1112, %v1315
        %v1334 = vadd.f32 %v1113, %v1318
        %v1335 = vadd.f32 %v1114, %v1323
        %v1336 = vadd.f32 %v1115, %v1326
        %v1338 = vshrl.u32 %v261, 16
        %v1340 = vrot.slane %v1338, 4
        %v1341 = vshll.u32 %v261, 16
        %v1343 = vrot.slane %v1341, 5
        %v1344 = vor.u32 %v1340, %v1343
        %v1345 = vrot.slane %v1344, 4
        %v1347 = vshll.u32 %v262, 16
        %v1349 = vrot.slane %v1347, 5
        %v1350 = vsel %vm299, %v1345, %v1349
        %s1351 = scalar_lea.vmem [#allocation5], 512
        %v1352 = vld [vmem:[%s1351] sm:$0xf]
        %v1353 = vld [vmem:[%s1351 + $0x4] sm:$0xf]
        %v1354 = vld [vmem:[%s1351 + $0x8] sm:$0xf]
        %v1355 = vld [vmem:[%s1351 + $0xc] sm:$0xf]
        %v1356 = vld [vmem:[%s1351 + $0x10] sm:$0xf]
        %v1357 = vld [vmem:[%s1351 + $0x14] sm:$0xf]
        %v1358 = vld [vmem:[%s1351 + $0x18] sm:$0xf]
        %v1359 = vld [vmem:[%s1351 + $0x1c] sm:$0xf]
        %v1360 = vld [vmem:[%s1351 + $0x20] sm:$0xf]
        %v1361 = vld [vmem:[%s1351 + $0x24] sm:$0xf]
        %v1362 = vld [vmem:[%s1351 + $0x28] sm:$0xf]
        %v1363 = vld [vmem:[%s1351 + $0x2c] sm:$0xf]
        %v1364 = vld [vmem:[%s1351 + $0x30] sm:$0xf]
        %v1365 = vld [vmem:[%s1351 + $0x34] sm:$0xf]
        %v1366 = vld [vmem:[%s1351 + $0x38] sm:$0xf]
        %v1367 = vld [vmem:[%s1351 + $0x3c] sm:$0xf]
        %v1368 = vld [vmem:[%s1351 + $0x40] sm:$0xf]
        %v1369 = vld [vmem:[%s1351 + $0x44] sm:$0xf]
        %v1370 = vld [vmem:[%s1351 + $0x48] sm:$0xf]
        %v1371 = vld [vmem:[%s1351 + $0x4c] sm:$0xf]
        %v1372 = vld [vmem:[%s1351 + $0x50] sm:$0xf]
        %v1373 = vld [vmem:[%s1351 + $0x54] sm:$0xf]
        %v1374 = vld [vmem:[%s1351 + $0x58] sm:$0xf]
        %v1375 = vld [vmem:[%s1351 + $0x5c] sm:$0xf]
        %v1376 = vld [vmem:[%s1351 + $0x60] sm:$0xf]
        %v1377 = vld [vmem:[%s1351 + $0x64] sm:$0xf]
        %v1378 = vld [vmem:[%s1351 + $0x68] sm:$0xf]
        %v1379 = vld [vmem:[%s1351 + $0x6c] sm:$0xf]
        %v1380 = vld [vmem:[%s1351 + $0x70] sm:$0xf]
        %v1381 = vld [vmem:[%s1351 + $0x74] sm:$0xf]
        %v1382 = vld [vmem:[%s1351 + $0x78] sm:$0xf]
        %v1383 = vld [vmem:[%s1351 + $0x7c] sm:$0xf]
        %v1384 = vunpack.c.l.b16 %v1350
        %v1385 = vunpack.c.h.b16 %v1350
        %v1386 = vpack.c.b16 %v449, %v447
        %v1387 = vpack.c.b16 %v450, %v448
        %v1388 = vpack.c.b16 %v453, %v451
        %v1389 = vpack.c.b16 %v454, %v452
        %v1390 = vpack.c.b16 %v457, %v455
        %v1391 = vpack.c.b16 %v458, %v456
        %v1392 = vpack.c.b16 %v1384, %v459
        %v1393 = vpack.c.b16 %v1385, %v460
        %v1434 = vunpack.c.l.b16 %v1352
        %v1435 = vunpack.c.l.b16 %v1353
        %v1436 = vunpack.c.l.b16 %v1354
        %v1437 = vunpack.c.l.b16 %v1355
        %v1438 = vunpack.c.l.b16 %v1356
        %v1439 = vunpack.c.l.b16 %v1357
        %v1440 = vunpack.c.l.b16 %v1358
        %v1441 = vunpack.c.l.b16 %v1359
        %v1442 = vunpack.c.l.b16 %v1360
        %v1443 = vunpack.c.l.b16 %v1361
        %v1444 = vunpack.c.l.b16 %v1362
        %v1445 = vunpack.c.l.b16 %v1363
        %v1446 = vunpack.c.l.b16 %v1364
        %v1447 = vunpack.c.l.b16 %v1365
        %v1448 = vunpack.c.l.b16 %v1366
        %v1449 = vunpack.c.l.b16 %v1367
        %v1450 = vunpack.c.l.b16 %v1368
        %v1451 = vunpack.c.l.b16 %v1369
        %v1452 = vunpack.c.l.b16 %v1370
        %v1453 = vunpack.c.l.b16 %v1371
        %v1454 = vunpack.c.l.b16 %v1372
        %v1455 = vunpack.c.l.b16 %v1373
        %v1456 = vunpack.c.l.b16 %v1374
        %v1457 = vunpack.c.l.b16 %v1375
        %v1458 = vunpack.c.l.b16 %v1376
        %v1459 = vunpack.c.l.b16 %v1377
        %v1460 = vunpack.c.l.b16 %v1378
        %v1461 = vunpack.c.l.b16 %v1379
        %v1462 = vunpack.c.l.b16 %v1380
        %v1463 = vunpack.c.l.b16 %v1381
        %v1464 = vunpack.c.l.b16 %v1382
        %v1465 = vunpack.c.l.b16 %v1383
        %v1466 = vpack.c.b16 %v1435, %v1434
        %v1467 = vpack.c.b16 %v1437, %v1436
        %v1468 = vpack.c.b16 %v1439, %v1438
        %v1469 = vpack.c.b16 %v1441, %v1440
        %v1470 = vpack.c.b16 %v1443, %v1442
        %v1471 = vpack.c.b16 %v1445, %v1444
        %v1472 = vpack.c.b16 %v1447, %v1446
        %v1473 = vpack.c.b16 %v1449, %v1448
        %v1474 = vpack.c.b16 %v1451, %v1450
        %v1475 = vpack.c.b16 %v1453, %v1452
        %v1476 = vpack.c.b16 %v1455, %v1454
        %v1477 = vpack.c.b16 %v1457, %v1456
        %v1478 = vpack.c.b16 %v1459, %v1458
        %v1479 = vpack.c.b16 %v1461, %v1460
        %v1480 = vpack.c.b16 %v1463, %v1462
        %v1481 = vpack.c.b16 %v1465, %v1464
        %1498 = vmatprep.subr.bf16.mxu0 0
        %1499 = vmatpush1.bf16.msra.mxu0 %v1466
        %1500 = vmatprep.subr.bf16.mxu0 0
        %1501 = vmatpush1.bf16.msra.mxu0 %v1467
        %1502 = vmatprep.subr.bf16.mxu0 0
        %1503 = vmatpush1.bf16.msra.mxu0 %v1468
        %1504 = vmatprep.subr.bf16.mxu0 0
        %1505 = vmatpush1.bf16.msra.mxu0 %v1469
        %1506 = vmatprep.subr.bf16.mxu0 0
        %1507 = vmatpush1.bf16.msra.mxu0 %v1470
        %1508 = vmatprep.subr.bf16.mxu0 0
        %1509 = vmatpush1.bf16.msra.mxu0 %v1471
        %1510 = vmatprep.subr.bf16.mxu0 0
        %1511 = vmatpush1.bf16.msra.mxu0 %v1472
        %1512 = vmatprep.subr.bf16.mxu0 0
        %1513 = vmatpush1.bf16.msra.mxu0 %v1473
        %1514 = vmatprep.subr.bf16.mxu0 0
        %1515 = vmatpush1.bf16.msra.mxu0 %v1474
        %1516 = vmatprep.subr.bf16.mxu0 0
        %1517 = vmatpush1.bf16.msra.mxu0 %v1475
        %1518 = vmatprep.subr.bf16.mxu0 0
        %1519 = vmatpush1.bf16.msra.mxu0 %v1476
        %1520 = vmatprep.subr.bf16.mxu0 0
        %1521 = vmatpush1.bf16.msra.mxu0 %v1477
        %1522 = vmatprep.subr.bf16.mxu0 0
        %1523 = vmatpush1.bf16.msra.mxu0 %v1478
        %1524 = vmatprep.subr.bf16.mxu0 0
        %1525 = vmatpush1.bf16.msra.mxu0 %v1479
        %1526 = vmatprep.subr.bf16.mxu0 0
        %1527 = vmatpush1.bf16.msra.mxu0 %v1480
        %1528 = vmatprep.subr.bf16.mxu0 0
        %1529 = vmatpush1.bf16.msra.mxu0 %v1481
        %1530 = vmatprep.mubr.bf16.mxu0 %v1387
        %1531 = vmatmul.mubr.bf16.gmra.mrb[0].mxu0 %v1386
        %v1532 = vpop.f32.mrb[0].mxu0
        %v1533 = vadd.f32 0.0, %v1532
        %v1534 = vpop.f32.mrb[0].mxu0
        %v1535 = vpop.f32.mrb[0].mxu0
        %v1536 = vadd.f32 0.0, %v1535
        %v1537 = vpop.f32.mrb[0].mxu0
        %1538 = vmatprep.mubr.bf16.mxu0 %v1389
        %1539 = vmatmul.mubr.bf16.gmra.mrb[0].mxu0 %v1388
        %v1540 = vpop.f32.mrb[0].mxu0
        %v1541 = vadd.f32 0.0, %v1540
        %v1542 = vpop.f32.mrb[0].mxu0
        %v1543 = vpop.f32.mrb[0].mxu0
        %v1544 = vadd.f32 0.0, %v1543
        %v1545 = vpop.f32.mrb[0].mxu0
        %1546 = vmatprep.mubr.bf16.mxu0 %v1391
        %1547 = vmatmul.mubr.bf16.gmra.mrb[0].mxu0 %v1390
        %v1548 = vpop.f32.mrb[0].mxu0
        %v1549 = vadd.f32 0.0, %v1548
        %v1550 = vpop.f32.mrb[0].mxu0
        %v1551 = vpop.f32.mrb[0].mxu0
        %v1552 = vadd.f32 0.0, %v1551
        %v1553 = vpop.f32.mrb[0].mxu0
        %1554 = vmatprep.mubr.bf16.mxu0 %v1393
        %1555 = vmatmul.mubr.bf16.gmra.mrb[0].mxu0 %v1392
        %v1556 = vpop.f32.mrb[0].mxu0
        %v1557 = vadd.f32 0.0, %v1556
        %v1558 = vpop.f32.mrb[0].mxu0
        %v1559 = vpop.f32.mrb[0].mxu0
        %v1560 = vadd.f32 0.0, %v1559
        %v1561 = vpop.f32.mrb[0].mxu0
        %1562 = vdwg.mxu0
        %v1563 = vadd.f32 %v1329, %v1533
        %v1564 = vadd.f32 %v1330, %v1536
        %v1565 = vadd.f32 %v1331, %v1541
        %v1566 = vadd.f32 %v1332, %v1544
        %v1567 = vadd.f32 %v1333, %v1549
        %v1568 = vadd.f32 %v1334, %v1552
        %v1569 = vadd.f32 %v1335, %v1557
        %v1570 = vadd.f32 %v1336, %v1560
        %v1572 = vrot.slane %v261, 5
        %v1573 = vrot.slane %v1572, 4
        %v1574 = vrot.slane %v262, 5
        %v1575 = vsel %vm849, %v1573, %v1574
        %s1576 = scalar_lea.vmem [#allocation5], 640
        %v1577 = vld [vmem:[%s1576] sm:$0xf]
        %v1578 = vld [vmem:[%s1576 + $0x4] sm:$0xf]
        %v1579 = vld [vmem:[%s1576 + $0x8] sm:$0xf]
        %v1580 = vld [vmem:[%s1576 + $0xc] sm:$0xf]
        %v1581 = vld [vmem:[%s1576 + $0x10] sm:$0xf]
        %v1582 = vld [vmem:[%s1576 + $0x14] sm:$0xf]
        %v1583 = vld [vmem:[%s1576 + $0x18] sm:$0xf]
        %v1584 = vld [vmem:[%s1576 + $0x1c] sm:$0xf]
        %v1585 = vld [vmem:[%s1576 + $0x20] sm:$0xf]
        %v1586 = vld [vmem:[%s1576 + $0x24] sm:$0xf]
        %v1587 = vld [vmem:[%s1576 + $0x28] sm:$0xf]
        %v1588 = vld [vmem:[%s1576 + $0x2c] sm:$0xf]
        %v1589 = vld [vmem:[%s1576 + $0x30] sm:$0xf]
        %v1590 = vld [vmem:[%s1576 + $0x34] sm:$0xf]
        %v1591 = vld [vmem:[%s1576 + $0x38] sm:$0xf]
        %v1592 = vld [vmem:[%s1576 + $0x3c] sm:$0xf]
        %v1593 = vld [vmem:[%s1576 + $0x40] sm:$0xf]
        %v1594 = vld [vmem:[%s1576 + $0x44] sm:$0xf]
        %v1595 = vld [vmem:[%s1576 + $0x48] sm:$0xf]
        %v1596 = vld [vmem:[%s1576 + $0x4c] sm:$0xf]
        %v1597 = vld [vmem:[%s1576 + $0x50] sm:$0xf]
        %v1598 = vld [vmem:[%s1576 + $0x54] sm:$0xf]
        %v1599 = vld [vmem:[%s1576 + $0x58] sm:$0xf]
        %v1600 = vld [vmem:[%s1576 + $0x5c] sm:$0xf]
        %v1601 = vld [vmem:[%s1576 + $0x60] sm:$0xf]
        %v1602 = vld [vmem:[%s1576 + $0x64] sm:$0xf]
        %v1603 = vld [vmem:[%s1576 + $0x68] sm:$0xf]
        %v1604 = vld [vmem:[%s1576 + $0x6c] sm:$0xf]
        %v1605 = vld [vmem:[%s1576 + $0x70] sm:$0xf]
        %v1606 = vld [vmem:[%s1576 + $0x74] sm:$0xf]
        %v1607 = vld [vmem:[%s1576 + $0x78] sm:$0xf]
        %v1608 = vld [vmem:[%s1576 + $0x7c] sm:$0xf]
        %v1609 = vunpack.c.l.b16 %v1575
        %v1610 = vunpack.c.h.b16 %v1575
        %v1611 = vpack.c.b16 %v919, %v917
        %v1612 = vpack.c.b16 %v920, %v918
        %v1613 = vpack.c.b16 %v923, %v921
        %v1614 = vpack.c.b16 %v924, %v922
        %v1615 = vpack.c.b16 %v927, %v925
        %v1616 = vpack.c.b16 %v928, %v926
        %v1617 = vpack.c.b16 %v1609, %v929
        %v1618 = vpack.c.b16 %v1610, %v930
        %v1659 = vunpack.c.l.b16 %v1577
        %v1660 = vunpack.c.l.b16 %v1578
        %v1661 = vunpack.c.l.b16 %v1579
        %v1662 = vunpack.c.l.b16 %v1580
        %v1663 = vunpack.c.l.b16 %v1581
        %v1664 = vunpack.c.l.b16 %v1582
        %v1665 = vunpack.c.l.b16 %v1583
        %v1666 = vunpack.c.l.b16 %v1584
        %v1667 = vunpack.c.l.b16 %v1585
        %v1668 = vunpack.c.l.b16 %v1586
        %v1669 = vunpack.c.l.b16 %v1587
        %v1670 = vunpack.c.l.b16 %v1588
        %v1671 = vunpack.c.l.b16 %v1589
        %v1672 = vunpack.c.l.b16 %v1590
        %v1673 = vunpack.c.l.b16 %v1591
        %v1674 = vunpack.c.l.b16 %v1592
        %v1675 = vunpack.c.l.b16 %v1593
        %v1676 = vunpack.c.l.b16 %v1594
        %v1677 = vunpack.c.l.b16 %v1595
        %v1678 = vunpack.c.l.b16 %v1596
        %v1679 = vunpack.c.l.b16 %v1597
        %v1680 = vunpack.c.l.b16 %v1598
        %v1681 = vunpack.c.l.b16 %v1599
        %v1682 = vunpack.c.l.b16 %v1600
        %v1683 = vunpack.c.l.b16 %v1601
        %v1684 = vunpack.c.l.b16 %v1602
        %v1685 = vunpack.c.l.b16 %v1603
        %v1686 = vunpack.c.l.b16 %v1604
        %v1687 = vunpack.c.l.b16 %v1605
        %v1688 = vunpack.c.l.b16 %v1606
        %v1689 = vunpack.c.l.b16 %v1607
        %v1690 = vunpack.c.l.b16 %v1608
        %v1691 = vpack.c.b16 %v1660, %v1659
        %v1692 = vpack.c.b16 %v1662, %v1661
        %v1693 = vpack.c.b16 %v1664, %v1663
        %v1694 = vpack.c.b16 %v1666, %v1665
        %v1695 = vpack.c.b16 %v1668, %v1667
        %v1696 = vpack.c.b16 %v1670, %v1669
        %v1697 = vpack.c.b16 %v1672, %v1671
        %v1698 = vpack.c.b16 %v1674, %v1673
        %v1699 = vpack.c.b16 %v1676, %v1675
        %v1700 = vpack.c.b16 %v1678, %v1677
        %v1701 = vpack.c.b16 %v1680, %v1679
        %v1702 = vpack.c.b16 %v1682, %v1681
        %v1703 = vpack.c.b16 %v1684, %v1683
        %v1704 = vpack.c.b16 %v1686, %v1685
        %v1705 = vpack.c.b16 %v1688, %v1687
        %v1706 = vpack.c.b16 %v1690, %v1689
        %1723 = vmatprep.subr.bf16.mxu0 0
        %1724 = vmatpush1.bf16.msra.mxu0 %v1691
        %1725 = vmatprep.subr.bf16.mxu0 0
        %1726 = vmatpush1.bf16.msra.mxu0 %v1692
        %1727 = vmatprep.subr.bf16.mxu0 0
        %1728 = vmatpush1.bf16.msra.mxu0 %v1693
        %1729 = vmatprep.subr.bf16.mxu0 0
        %1730 = vmatpush1.bf16.msra.mxu0 %v1694
        %1731 = vmatprep.subr.bf16.mxu0 0
        %1732 = vmatpush1.bf16.msra.mxu0 %v1695
        %1733 = vmatprep.subr.bf16.mxu0 0
        %1734 = vmatpush1.bf16.msra.mxu0 %v1696
        %1735 = vmatprep.subr.bf16.mxu0 0
        %1736 = vmatpush1.bf16.msra.mxu0 %v1697
        %1737 = vmatprep.subr.bf16.mxu0 0
        %1738 = vmatpush1.bf16.msra.mxu0 %v1698
        %1739 = vmatprep.subr.bf16.mxu0 0
        %1740 = vmatpush1.bf16.msra.mxu0 %v1699
        %1741 = vmatprep.subr.bf16.mxu0 0
        %1742 = vmatpush1.bf16.msra.mxu0 %v1700
        %1743 = vmatprep.subr.bf16.mxu0 0
        %1744 = vmatpush1.bf16.msra.mxu0 %v1701
        %1745 = vmatprep.subr.bf16.mxu0 0
        %1746 = vmatpush1.bf16.msra.mxu0 %v1702
        %1747 = vmatprep.subr.bf16.mxu0 0
        %1748 = vmatpush1.bf16.msra.mxu0 %v1703
        %1749 = vmatprep.subr.bf16.mxu0 0
        %1750 = vmatpush1.bf16.msra.mxu0 %v1704
        %1751 = vmatprep.subr.bf16.mxu0 0
        %1752 = vmatpush1.bf16.msra.mxu0 %v1705
        %1753 = vmatprep.subr.bf16.mxu0 0
        %1754 = vmatpush1.bf16.msra.mxu0 %v1706
        %1755 = vmatprep.mubr.bf16.mxu0 %v1612
        %1756 = vmatmul.mubr.bf16.gmra.mrb[0].mxu0 %v1611
        %v1757 = vpop.f32.mrb[0].mxu0
        %v1758 = vadd.f32 0.0, %v1757
        %v1759 = vpop.f32.mrb[0].mxu0
        %v1760 = vpop.f32.mrb[0].mxu0
        %v1761 = vadd.f32 0.0, %v1760
        %v1762 = vpop.f32.mrb[0].mxu0
        %1763 = vmatprep.mubr.bf16.mxu0 %v1614
        %1764 = vmatmul.mubr.bf16.gmra.mrb[0].mxu0 %v1613
        %v1765 = vpop.f32.mrb[0].mxu0
        %v1766 = vadd.f32 0.0, %v1765
        %v1767 = vpop.f32.mrb[0].mxu0
        %v1768 = vpop.f32.mrb[0].mxu0
        %v1769 = vadd.f32 0.0, %v1768
        %v1770 = vpop.f32.mrb[0].mxu0
        %1771 = vmatprep.mubr.bf16.mxu0 %v1616
        %1772 = vmatmul.mubr.bf16.gmra.mrb[0].mxu0 %v1615
        %v1773 = vpop.f32.mrb[0].mxu0
        %v1774 = vadd.f32 0.0, %v1773
        %v1775 = vpop.f32.mrb[0].mxu0
        %v1776 = vpop.f32.mrb[0].mxu0
        %v1777 = vadd.f32 0.0, %v1776
        %v1778 = vpop.f32.mrb[0].mxu0
        %1779 = vmatprep.mubr.bf16.mxu0 %v1618
        %1780 = vmatmul.mubr.bf16.gmra.mrb[0].mxu0 %v1617
        %v1781 = vpop.f32.mrb[0].mxu0
        %v1782 = vadd.f32 0.0, %v1781
        %v1783 = vpop.f32.mrb[0].mxu0
        %v1784 = vpop.f32.mrb[0].mxu0
        %v1785 = vadd.f32 0.0, %v1784
        %v1786 = vpop.f32.mrb[0].mxu0
        %1787 = vdwg.mxu0
        %v1788 = vadd.f32 %v1563, %v1758
        %v1789 = vadd.f32 %v1564, %v1761
        %v1790 = vadd.f32 %v1565, %v1766
        %v1791 = vadd.f32 %v1566, %v1769
        %v1792 = vadd.f32 %v1567, %v1774
        %v1793 = vadd.f32 %v1568, %v1777
        %v1794 = vadd.f32 %v1569, %v1782
        %v1795 = vadd.f32 %v1570, %v1785
        %s1796 = scalar_lea.vmem [#allocation5], 768
        %v1797 = vld [vmem:[%s1796] sm:$0xf]
        %v1798 = vld [vmem:[%s1796 + $0x4] sm:$0xf]
        %v1799 = vld [vmem:[%s1796 + $0x8] sm:$0xf]
        %v1800 = vld [vmem:[%s1796 + $0xc] sm:$0xf]
        %v1801 = vld [vmem:[%s1796 + $0x10] sm:$0xf]
        %v1802 = vld [vmem:[%s1796 + $0x14] sm:$0xf]
        %v1803 = vld [vmem:[%s1796 + $0x18] sm:$0xf]
        %v1804 = vld [vmem:[%s1796 + $0x1c] sm:$0xf]
        %v1805 = vld [vmem:[%s1796 + $0x20] sm:$0xf]
        %v1806 = vld [vmem:[%s1796 + $0x24] sm:$0xf]
        %v1807 = vld [vmem:[%s1796 + $0x28] sm:$0xf]
        %v1808 = vld [vmem:[%s1796 + $0x2c] sm:$0xf]
        %v1809 = vld [vmem:[%s1796 + $0x30] sm:$0xf]
        %v1810 = vld [vmem:[%s1796 + $0x34] sm:$0xf]
        %v1811 = vld [vmem:[%s1796 + $0x38] sm:$0xf]
        %v1812 = vld [vmem:[%s1796 + $0x3c] sm:$0xf]
        %v1813 = vld [vmem:[%s1796 + $0x40] sm:$0xf]
        %v1814 = vld [vmem:[%s1796 + $0x44] sm:$0xf]
        %v1815 = vld [vmem:[%s1796 + $0x48] sm:$0xf]
        %v1816 = vld [vmem:[%s1796 + $0x4c] sm:$0xf]
        %v1817 = vld [vmem:[%s1796 + $0x50] sm:$0xf]
        %v1818 = vld [vmem:[%s1796 + $0x54] sm:$0xf]
        %v1819 = vld [vmem:[%s1796 + $0x58] sm:$0xf]
        %v1820 = vld [vmem:[%s1796 + $0x5c] sm:$0xf]
        %v1821 = vld [vmem:[%s1796 + $0x60] sm:$0xf]
        %v1822 = vld [vmem:[%s1796 + $0x64] sm:$0xf]
        %v1823 = vld [vmem:[%s1796 + $0x68] sm:$0xf]
        %v1824 = vld [vmem:[%s1796 + $0x6c] sm:$0xf]
        %v1825 = vld [vmem:[%s1796 + $0x70] sm:$0xf]
        %v1826 = vld [vmem:[%s1796 + $0x74] sm:$0xf]
        %v1827 = vld [vmem:[%s1796 + $0x78] sm:$0xf]
        %v1828 = vld [vmem:[%s1796 + $0x7c] sm:$0xf]
        %v1830 = vunpack.c.l.b16 %v263
        %v1831 = vunpack.c.h.b16 %v263
        %v1832 = vpack.c.b16 %v1830, %v1150
        %v1833 = vpack.c.b16 %v1831, %v1151
        %v1868 = vunpack.c.l.b16 %v1797
        %v1869 = vunpack.c.l.b16 %v1798
        %v1870 = vunpack.c.l.b16 %v1799
        %v1871 = vunpack.c.l.b16 %v1800
        %v1872 = vunpack.c.l.b16 %v1801
        %v1873 = vunpack.c.l.b16 %v1802
        %v1874 = vunpack.c.l.b16 %v1803
        %v1875 = vunpack.c.l.b16 %v1804
        %v1876 = vunpack.c.l.b16 %v1805
        %v1877 = vunpack.c.l.b16 %v1806
        %v1878 = vunpack.c.l.b16 %v1807
        %v1879 = vunpack.c.l.b16 %v1808
        %v1880 = vunpack.c.l.b16 %v1809
        %v1881 = vunpack.c.l.b16 %v1810
        %v1882 = vunpack.c.l.b16 %v1811
        %v1883 = vunpack.c.l.b16 %v1812
        %v1884 = vunpack.c.l.b16 %v1813
        %v1885 = vunpack.c.l.b16 %v1814
        %v1886 = vunpack.c.l.b16 %v1815
        %v1887 = vunpack.c.l.b16 %v1816
        %v1888 = vunpack.c.l.b16 %v1817
        %v1889 = vunpack.c.l.b16 %v1818
        %v1890 = vunpack.c.l.b16 %v1819
        %v1891 = vunpack.c.l.b16 %v1820
        %v1892 = vunpack.c.l.b16 %v1821
        %v1893 = vunpack.c.l.b16 %v1822
        %v1894 = vunpack.c.l.b16 %v1823
        %v1895 = vunpack.c.l.b16 %v1824
        %v1896 = vunpack.c.l.b16 %v1825
        %v1897 = vunpack.c.l.b16 %v1826
        %v1898 = vunpack.c.l.b16 %v1827
        %v1899 = vunpack.c.l.b16 %v1828
        %v1900 = vpack.c.b16 %v1869, %v1868
        %v1901 = vpack.c.b16 %v1871, %v1870
        %v1902 = vpack.c.b16 %v1873, %v1872
        %v1903 = vpack.c.b16 %v1875, %v1874
        %v1904 = vpack.c.b16 %v1877, %v1876
        %v1905 = vpack.c.b16 %v1879, %v1878
        %v1906 = vpack.c.b16 %v1881, %v1880
        %v1907 = vpack.c.b16 %v1883, %v1882
        %v1908 = vpack.c.b16 %v1885, %v1884
        %v1909 = vpack.c.b16 %v1887, %v1886
        %v1910 = vpack.c.b16 %v1889, %v1888
        %v1911 = vpack.c.b16 %v1891, %v1890
        %v1912 = vpack.c.b16 %v1893, %v1892
        %v1913 = vpack.c.b16 %v1895, %v1894
        %v1914 = vpack.c.b16 %v1897, %v1896
        %v1915 = vpack.c.b16 %v1899, %v1898
        %1932 = vmatprep.subr.bf16.mxu0 0
        %1933 = vmatpush1.bf16.msra.mxu0 %v1900
        %1934 = vmatprep.subr.bf16.mxu0 0
        %1935 = vmatpush1.bf16.msra.mxu0 %v1901
        %1936 = vmatprep.subr.bf16.mxu0 0
        %1937 = vmatpush1.bf16.msra.mxu0 %v1902
        %1938 = vmatprep.subr.bf16.mxu0 0
        %1939 = vmatpush1.bf16.msra.mxu0 %v1903
        %1940 = vmatprep.subr.bf16.mxu0 0
        %1941 = vmatpush1.bf16.msra.mxu0 %v1904
        %1942 = vmatprep.subr.bf16.mxu0 0
        %1943 = vmatpush1.bf16.msra.mxu0 %v1905
        %1944 = vmatprep.subr.bf16.mxu0 0
        %1945 = vmatpush1.bf16.msra.mxu0 %v1906
        %1946 = vmatprep.subr.bf16.mxu0 0
        %1947 = vmatpush1.bf16.msra.mxu0 %v1907
        %1948 = vmatprep.subr.bf16.mxu0 0
        %1949 = vmatpush1.bf16.msra.mxu0 %v1908
        %1950 = vmatprep.subr.bf16.mxu0 0
        %1951 = vmatpush1.bf16.msra.mxu0 %v1909
        %1952 = vmatprep.subr.bf16.mxu0 0
        %1953 = vmatpush1.bf16.msra.mxu0 %v1910
        %1954 = vmatprep.subr.bf16.mxu0 0
        %1955 = vmatpush1.bf16.msra.mxu0 %v1911
        %1956 = vmatprep.subr.bf16.mxu0 0
        %1957 = vmatpush1.bf16.msra.mxu0 %v1912
        %1958 = vmatprep.subr.bf16.mxu0 0
        %1959 = vmatpush1.bf16.msra.mxu0 %v1913
        %1960 = vmatprep.subr.bf16.mxu0 0
        %1961 = vmatpush1.bf16.msra.mxu0 %v1914
        %1962 = vmatprep.subr.bf16.mxu0 0
        %1963 = vmatpush1.bf16.msra.mxu0 %v1915
        %1964 = vmatprep.mubr.bf16.mxu0 %v665
        %1965 = vmatmul.mubr.bf16.gmra.mrb[0].mxu0 %v664
        %v1966 = vpop.f32.mrb[0].mxu0
        %v1967 = vadd.f32 0.0, %v1966
        %v1968 = vpop.f32.mrb[0].mxu0
        %v1969 = vpop.f32.mrb[0].mxu0
        %v1970 = vadd.f32 0.0, %v1969
        %v1971 = vpop.f32.mrb[0].mxu0
        %1972 = vmatprep.mubr.bf16.mxu0 %v667
        %1973 = vmatmul.mubr.bf16.gmra.mrb[0].mxu0 %v666
        %v1974 = vpop.f32.mrb[0].mxu0
        %v1975 = vadd.f32 0.0, %v1974
        %v1976 = vpop.f32.mrb[0].mxu0
        %v1977 = vpop.f32.mrb[0].mxu0
        %v1978 = vadd.f32 0.0, %v1977
        %v1979 = vpop.f32.mrb[0].mxu0
        %1980 = vmatprep.mubr.bf16.mxu0 %v669
        %1981 = vmatmul.mubr.bf16.gmra.mrb[0].mxu0 %v668
        %v1982 = vpop.f32.mrb[0].mxu0
        %v1983 = vadd.f32 0.0, %v1982
        %v1984 = vpop.f32.mrb[0].mxu0
        %v1985 = vpop.f32.mrb[0].mxu0
        %v1986 = vadd.f32 0.0, %v1985
        %v1987 = vpop.f32.mrb[0].mxu0
        %1988 = vmatprep.mubr.bf16.mxu0 %v1833
        %1989 = vmatmul.mubr.bf16.gmra.mrb[0].mxu0 %v1832
        %v1990 = vpop.f32.mrb[0].mxu0
        %v1991 = vadd.f32 0.0, %v1990
        %v1992 = vpop.f32.mrb[0].mxu0
        %v1993 = vpop.f32.mrb[0].mxu0
        %v1994 = vadd.f32 0.0, %v1993
        %v1995 = vpop.f32.mrb[0].mxu0
        %1996 = vdwg.mxu0
        %v1997 = vadd.f32 %v1788, %v1967
        %v1998 = vadd.f32 %v1789, %v1970
        %v1999 = vadd.f32 %v1790, %v1975
        %v2000 = vadd.f32 %v1791, %v1978
        %v2001 = vadd.f32 %v1792, %v1983
        %v2002 = vadd.f32 %v1793, %v1986
        %v2003 = vadd.f32 %v1794, %v1991
        %v2004 = vadd.f32 %v1795, %v1994
        %v2006 = vshrl.u32 %v263, 16
        %v2008 = vrot.slane %v2006, 4
        %v2009 = vshll.u32 %v263, 16
        %v2011 = vrot.slane %v2009, 5
        %v2012 = vor.u32 %v2008, %v2011
        %v2013 = vrot.slane %v2012, 4
        %v2015 = vshll.u32 %v264, 16
        %v2017 = vrot.slane %v2015, 5
        %v2018 = vsel %vm299, %v2013, %v2017
        %s2019 = scalar_lea.vmem [#allocation5], 896
        %v2020 = vld [vmem:[%s2019] sm:$0xf]
        %v2021 = vld [vmem:[%s2019 + $0x4] sm:$0xf]
        %v2022 = vld [vmem:[%s2019 + $0x8] sm:$0xf]
        %v2023 = vld [vmem:[%s2019 + $0xc] sm:$0xf]
        %v2024 = vld [vmem:[%s2019 + $0x10] sm:$0xf]
        %v2025 = vld [vmem:[%s2019 + $0x14] sm:$0xf]
        %v2026 = vld [vmem:[%s2019 + $0x18] sm:$0xf]
        %v2027 = vld [vmem:[%s2019 + $0x1c] sm:$0xf]
        %v2028 = vld [vmem:[%s2019 + $0x20] sm:$0xf]
        %v2029 = vld [vmem:[%s2019 + $0x24] sm:$0xf]
        %v2030 = vld [vmem:[%s2019 + $0x28] sm:$0xf]
        %v2031 = vld [vmem:[%s2019 + $0x2c] sm:$0xf]
        %v2032 = vld [vmem:[%s2019 + $0x30] sm:$0xf]
        %v2033 = vld [vmem:[%s2019 + $0x34] sm:$0xf]
        %v2034 = vld [vmem:[%s2019 + $0x38] sm:$0xf]
        %v2035 = vld [vmem:[%s2019 + $0x3c] sm:$0xf]
        %v2036 = vld [vmem:[%s2019 + $0x40] sm:$0xf]
        %v2037 = vld [vmem:[%s2019 + $0x44] sm:$0xf]
        %v2038 = vld [vmem:[%s2019 + $0x48] sm:$0xf]
        %v2039 = vld [vmem:[%s2019 + $0x4c] sm:$0xf]
        %v2040 = vld [vmem:[%s2019 + $0x50] sm:$0xf]
        %v2041 = vld [vmem:[%s2019 + $0x54] sm:$0xf]
        %v2042 = vld [vmem:[%s2019 + $0x58] sm:$0xf]
        %v2043 = vld [vmem:[%s2019 + $0x5c] sm:$0xf]
        %v2044 = vld [vmem:[%s2019 + $0x60] sm:$0xf]
        %v2045 = vld [vmem:[%s2019 + $0x64] sm:$0xf]
        %v2046 = vld [vmem:[%s2019 + $0x68] sm:$0xf]
        %v2047 = vld [vmem:[%s2019 + $0x6c] sm:$0xf]
        %v2048 = vld [vmem:[%s2019 + $0x70] sm:$0xf]
        %v2049 = vld [vmem:[%s2019 + $0x74] sm:$0xf]
        %v2050 = vld [vmem:[%s2019 + $0x78] sm:$0xf]
        %v2051 = vld [vmem:[%s2019 + $0x7c] sm:$0xf]
        %v2052 = vunpack.c.l.b16 %v2018
        %v2053 = vunpack.c.h.b16 %v2018
        %v2054 = vpack.c.b16 %v2052, %v1384
        %v2055 = vpack.c.b16 %v2053, %v1385
        %v2090 = vunpack.c.l.b16 %v2020
        %v2091 = vunpack.c.l.b16 %v2021
        %v2092 = vunpack.c.l.b16 %v2022
        %v2093 = vunpack.c.l.b16 %v2023
        %v2094 = vunpack.c.l.b16 %v2024
        %v2095 = vunpack.c.l.b16 %v2025
        %v2096 = vunpack.c.l.b16 %v2026
        %v2097 = vunpack.c.l.b16 %v2027
        %v2098 = vunpack.c.l.b16 %v2028
        %v2099 = vunpack.c.l.b16 %v2029
        %v2100 = vunpack.c.l.b16 %v2030
        %v2101 = vunpack.c.l.b16 %v2031
        %v2102 = vunpack.c.l.b16 %v2032
        %v2103 = vunpack.c.l.b16 %v2033
        %v2104 = vunpack.c.l.b16 %v2034
        %v2105 = vunpack.c.l.b16 %v2035
        %v2106 = vunpack.c.l.b16 %v2036
        %v2107 = vunpack.c.l.b16 %v2037
        %v2108 = vunpack.c.l.b16 %v2038
        %v2109 = vunpack.c.l.b16 %v2039
        %v2110 = vunpack.c.l.b16 %v2040
        %v2111 = vunpack.c.l.b16 %v2041
        %v2112 = vunpack.c.l.b16 %v2042
        %v2113 = vunpack.c.l.b16 %v2043
        %v2114 = vunpack.c.l.b16 %v2044
        %v2115 = vunpack.c.l.b16 %v2045
        %v2116 = vunpack.c.l.b16 %v2046
        %v2117 = vunpack.c.l.b16 %v2047
        %v2118 = vunpack.c.l.b16 %v2048
        %v2119 = vunpack.c.l.b16 %v2049
        %v2120 = vunpack.c.l.b16 %v2050
        %v2121 = vunpack.c.l.b16 %v2051
        %v2122 = vpack.c.b16 %v2091, %v2090
        %v2123 = vpack.c.b16 %v2093, %v2092
        %v2124 = vpack.c.b16 %v2095, %v2094
        %v2125 = vpack.c.b16 %v2097, %v2096
        %v2126 = vpack.c.b16 %v2099, %v2098
        %v2127 = vpack.c.b16 %v2101, %v2100
        %v2128 = vpack.c.b16 %v2103, %v2102
        %v2129 = vpack.c.b16 %v2105, %v2104
        %v2130 = vpack.c.b16 %v2107, %v2106
        %v2131 = vpack.c.b16 %v2109, %v2108
        %v2132 = vpack.c.b16 %v2111, %v2110
        %v2133 = vpack.c.b16 %v2113, %v2112
        %v2134 = vpack.c.b16 %v2115, %v2114
        %v2135 = vpack.c.b16 %v2117, %v2116
        %v2136 = vpack.c.b16 %v2119, %v2118
        %v2137 = vpack.c.b16 %v2121, %v2120
        %2154 = vmatprep.subr.bf16.mxu0 0
        %2155 = vmatpush1.bf16.msra.mxu0 %v2122
        %2156 = vmatprep.subr.bf16.mxu0 0
        %2157 = vmatpush1.bf16.msra.mxu0 %v2123
        %2158 = vmatprep.subr.bf16.mxu0 0
        %2159 = vmatpush1.bf16.msra.mxu0 %v2124
        %2160 = vmatprep.subr.bf16.mxu0 0
        %2161 = vmatpush1.bf16.msra.mxu0 %v2125
        %2162 = vmatprep.subr.bf16.mxu0 0
        %2163 = vmatpush1.bf16.msra.mxu0 %v2126
        %2164 = vmatprep.subr.bf16.mxu0 0
        %2165 = vmatpush1.bf16.msra.mxu0 %v2127
        %2166 = vmatprep.subr.bf16.mxu0 0
        %2167 = vmatpush1.bf16.msra.mxu0 %v2128
        %2168 = vmatprep.subr.bf16.mxu0 0
        %2169 = vmatpush1.bf16.msra.mxu0 %v2129
        %2170 = vmatprep.subr.bf16.mxu0 0
        %2171 = vmatpush1.bf16.msra.mxu0 %v2130
        %2172 = vmatprep.subr.bf16.mxu0 0
        %2173 = vmatpush1.bf16.msra.mxu0 %v2131
        %2174 = vmatprep.subr.bf16.mxu0 0
        %2175 = vmatpush1.bf16.msra.mxu0 %v2132
        %2176 = vmatprep.subr.bf16.mxu0 0
        %2177 = vmatpush1.bf16.msra.mxu0 %v2133
        %2178 = vmatprep.subr.bf16.mxu0 0
        %2179 = vmatpush1.bf16.msra.mxu0 %v2134
        %2180 = vmatprep.subr.bf16.mxu0 0
        %2181 = vmatpush1.bf16.msra.mxu0 %v2135
        %2182 = vmatprep.subr.bf16.mxu0 0
        %2183 = vmatpush1.bf16.msra.mxu0 %v2136
        %2184 = vmatprep.subr.bf16.mxu0 0
        %2185 = vmatpush1.bf16.msra.mxu0 %v2137
        %2186 = vmatprep.mubr.bf16.mxu0 %v464
        %2187 = vmatmul.mubr.bf16.gmra.mrb[0].mxu0 %v463
        %v2188 = vpop.f32.mrb[0].mxu0
        %v2189 = vadd.f32 0.0, %v2188
        %v2190 = vpop.f32.mrb[0].mxu0
        %v2191 = vpop.f32.mrb[0].mxu0
        %v2192 = vadd.f32 0.0, %v2191
        %v2193 = vpop.f32.mrb[0].mxu0
        %2194 = vmatprep.mubr.bf16.mxu0 %v466
        %2195 = vmatmul.mubr.bf16.gmra.mrb[0].mxu0 %v465
        %v2196 = vpop.f32.mrb[0].mxu0
        %v2197 = vadd.f32 0.0, %v2196
        %v2198 = vpop.f32.mrb[0].mxu0
        %v2199 = vpop.f32.mrb[0].mxu0
        %v2200 = vadd.f32 0.0, %v2199
        %v2201 = vpop.f32.mrb[0].mxu0
        %2202 = vmatprep.mubr.bf16.mxu0 %v468
        %2203 = vmatmul.mubr.bf16.gmra.mrb[0].mxu0 %v467
        %v2204 = vpop.f32.mrb[0].mxu0
        %v2205 = vadd.f32 0.0, %v2204
        %v2206 = vpop.f32.mrb[0].mxu0
        %v2207 = vpop.f32.mrb[0].mxu0
        %v2208 = vadd.f32 0.0, %v2207
        %v2209 = vpop.f32.mrb[0].mxu0
        %2210 = vmatprep.mubr.bf16.mxu0 %v2055
        %2211 = vmatmul.mubr.bf16.gmra.mrb[0].mxu0 %v2054
        %v2212 = vpop.f32.mrb[0].mxu0
        %v2213 = vadd.f32 0.0, %v2212
        %v2214 = vpop.f32.mrb[0].mxu0
        %v2215 = vpop.f32.mrb[0].mxu0
        %v2216 = vadd.f32 0.0, %v2215
        %v2217 = vpop.f32.mrb[0].mxu0
        %2218 = vdwg.mxu0
        %v2219 = vadd.f32 %v1997, %v2189
        %v2220 = vadd.f32 %v1998, %v2192
        %v2221 = vadd.f32 %v1999, %v2197
        %v2222 = vadd.f32 %v2000, %v2200
        %v2223 = vadd.f32 %v2001, %v2205
        %v2224 = vadd.f32 %v2002, %v2208
        %v2225 = vadd.f32 %v2003, %v2213
        %v2226 = vadd.f32 %v2004, %v2216
        %v2228 = vrot.slane %v263, 5
        %v2229 = vrot.slane %v2228, 4
        %v2230 = vrot.slane %v264, 5
        %v2231 = vsel %vm849, %v2229, %v2230
        %s2232 = scalar_lea.vmem [#allocation5], 1024
        %v2233 = vld [vmem:[%s2232] sm:$0xf]
        %v2234 = vld [vmem:[%s2232 + $0x4] sm:$0xf]
        %v2235 = vld [vmem:[%s2232 + $0x8] sm:$0xf]
        %v2236 = vld [vmem:[%s2232 + $0xc] sm:$0xf]
        %v2237 = vld [vmem:[%s2232 + $0x10] sm:$0xf]
        %v2238 = vld [vmem:[%s2232 + $0x14] sm:$0xf]
        %v2239 = vld [vmem:[%s2232 + $0x18] sm:$0xf]
        %v2240 = vld [vmem:[%s2232 + $0x1c] sm:$0xf]
        %v2241 = vld [vmem:[%s2232 + $0x20] sm:$0xf]
        %v2242 = vld [vmem:[%s2232 + $0x24] sm:$0xf]
        %v2243 = vld [vmem:[%s2232 + $0x28] sm:$0xf]
        %v2244 = vld [vmem:[%s2232 + $0x2c] sm:$0xf]
        %v2245 = vld [vmem:[%s2232 + $0x30] sm:$0xf]
        %v2246 = vld [vmem:[%s2232 + $0x34] sm:$0xf]
        %v2247 = vld [vmem:[%s2232 + $0x38] sm:$0xf]
        %v2248 = vld [vmem:[%s2232 + $0x3c] sm:$0xf]
        %v2249 = vld [vmem:[%s2232 + $0x40] sm:$0xf]
        %v2250 = vld [vmem:[%s2232 + $0x44] sm:$0xf]
        %v2251 = vld [vmem:[%s2232 + $0x48] sm:$0xf]
        %v2252 = vld [vmem:[%s2232 + $0x4c] sm:$0xf]
        %v2253 = vld [vmem:[%s2232 + $0x50] sm:$0xf]
        %v2254 = vld [vmem:[%s2232 + $0x54] sm:$0xf]
        %v2255 = vld [vmem:[%s2232 + $0x58] sm:$0xf]
        %v2256 = vld [vmem:[%s2232 + $0x5c] sm:$0xf]
        %v2257 = vld [vmem:[%s2232 + $0x60] sm:$0xf]
        %v2258 = vld [vmem:[%s2232 + $0x64] sm:$0xf]
        %v2259 = vld [vmem:[%s2232 + $0x68] sm:$0xf]
        %v2260 = vld [vmem:[%s2232 + $0x6c] sm:$0xf]
        %v2261 = vld [vmem:[%s2232 + $0x70] sm:$0xf]
        %v2262 = vld [vmem:[%s2232 + $0x74] sm:$0xf]
        %v2263 = vld [vmem:[%s2232 + $0x78] sm:$0xf]
        %v2264 = vld [vmem:[%s2232 + $0x7c] sm:$0xf]
        %v2265 = vunpack.c.l.b16 %v2231
        %v2266 = vunpack.c.h.b16 %v2231
        %v2267 = vpack.c.b16 %v2265, %v1609
        %v2268 = vpack.c.b16 %v2266, %v1610
        %v2303 = vunpack.c.l.b16 %v2233
        %v2304 = vunpack.c.l.b16 %v2234
        %v2305 = vunpack.c.l.b16 %v2235
        %v2306 = vunpack.c.l.b16 %v2236
        %v2307 = vunpack.c.l.b16 %v2237
        %v2308 = vunpack.c.l.b16 %v2238
        %v2309 = vunpack.c.l.b16 %v2239
        %v2310 = vunpack.c.l.b16 %v2240
        %v2311 = vunpack.c.l.b16 %v2241
        %v2312 = vunpack.c.l.b16 %v2242
        %v2313 = vunpack.c.l.b16 %v2243
        %v2314 = vunpack.c.l.b16 %v2244
        %v2315 = vunpack.c.l.b16 %v2245
        %v2316 = vunpack.c.l.b16 %v2246
        %v2317 = vunpack.c.l.b16 %v2247
        %v2318 = vunpack.c.l.b16 %v2248
        %v2319 = vunpack.c.l.b16 %v2249
        %v2320 = vunpack.c.l.b16 %v2250
        %v2321 = vunpack.c.l.b16 %v2251
        %v2322 = vunpack.c.l.b16 %v2252
        %v2323 = vunpack.c.l.b16 %v2253
        %v2324 = vunpack.c.l.b16 %v2254
        %v2325 = vunpack.c.l.b16 %v2255
        %v2326 = vunpack.c.l.b16 %v2256
        %v2327 = vunpack.c.l.b16 %v2257
        %v2328 = vunpack.c.l.b16 %v2258
        %v2329 = vunpack.c.l.b16 %v2259
        %v2330 = vunpack.c.l.b16 %v2260
        %v2331 = vunpack.c.l.b16 %v2261
        %v2332 = vunpack.c.l.b16 %v2262
        %v2333 = vunpack.c.l.b16 %v2263
        %v2334 = vunpack.c.l.b16 %v2264
        %v2335 = vpack.c.b16 %v2304, %v2303
        %v2336 = vpack.c.b16 %v2306, %v2305
        %v2337 = vpack.c.b16 %v2308, %v2307
        %v2338 = vpack.c.b16 %v2310, %v2309
        %v2339 = vpack.c.b16 %v2312, %v2311
        %v2340 = vpack.c.b16 %v2314, %v2313
        %v2341 = vpack.c.b16 %v2316, %v2315
        %v2342 = vpack.c.b16 %v2318, %v2317
        %v2343 = vpack.c.b16 %v2320, %v2319
        %v2344 = vpack.c.b16 %v2322, %v2321
        %v2345 = vpack.c.b16 %v2324, %v2323
        %v2346 = vpack.c.b16 %v2326, %v2325
        %v2347 = vpack.c.b16 %v2328, %v2327
        %v2348 = vpack.c.b16 %v2330, %v2329
        %v2349 = vpack.c.b16 %v2332, %v2331
        %v2350 = vpack.c.b16 %v2334, %v2333
        %2367 = vmatprep.subr.bf16.mxu0 0
        %2368 = vmatpush1.bf16.msra.mxu0 %v2335
        %2369 = vmatprep.subr.bf16.mxu0 0
        %2370 = vmatpush1.bf16.msra.mxu0 %v2336
        %2371 = vmatprep.subr.bf16.mxu0 0
        %2372 = vmatpush1.bf16.msra.mxu0 %v2337
        %2373 = vmatprep.subr.bf16.mxu0 0
        %2374 = vmatpush1.bf16.msra.mxu0 %v2338
        %2375 = vmatprep.subr.bf16.mxu0 0
        %2376 = vmatpush1.bf16.msra.mxu0 %v2339
        %2377 = vmatprep.subr.bf16.mxu0 0
        %2378 = vmatpush1.bf16.msra.mxu0 %v2340
        %2379 = vmatprep.subr.bf16.mxu0 0
        %2380 = vmatpush1.bf16.msra.mxu0 %v2341
        %2381 = vmatprep.subr.bf16.mxu0 0
        %2382 = vmatpush1.bf16.msra.mxu0 %v2342
        %2383 = vmatprep.subr.bf16.mxu0 0
        %2384 = vmatpush1.bf16.msra.mxu0 %v2343
        %2385 = vmatprep.subr.bf16.mxu0 0
        %2386 = vmatpush1.bf16.msra.mxu0 %v2344
        %2387 = vmatprep.subr.bf16.mxu0 0
        %2388 = vmatpush1.bf16.msra.mxu0 %v2345
        %2389 = vmatprep.subr.bf16.mxu0 0
        %2390 = vmatpush1.bf16.msra.mxu0 %v2346
        %2391 = vmatprep.subr.bf16.mxu0 0
        %2392 = vmatpush1.bf16.msra.mxu0 %v2347
        %2393 = vmatprep.subr.bf16.mxu0 0
        %2394 = vmatpush1.bf16.msra.mxu0 %v2348
        %2395 = vmatprep.subr.bf16.mxu0 0
        %2396 = vmatpush1.bf16.msra.mxu0 %v2349
        %2397 = vmatprep.subr.bf16.mxu0 0
        %2398 = vmatpush1.bf16.msra.mxu0 %v2350
        %2399 = vmatprep.mubr.bf16.mxu0 %v934
        %2400 = vmatmul.mubr.bf16.gmra.mrb[0].mxu0 %v933
        %v2401 = vpop.f32.mrb[0].mxu0
        %v2402 = vadd.f32 0.0, %v2401
        %v2403 = vpop.f32.mrb[0].mxu0
        %v2404 = vpop.f32.mrb[0].mxu0
        %v2405 = vadd.f32 0.0, %v2404
        %v2406 = vpop.f32.mrb[0].mxu0
        %2407 = vmatprep.mubr.bf16.mxu0 %v936
        %2408 = vmatmul.mubr.bf16.gmra.mrb[0].mxu0 %v935
        %v2409 = vpop.f32.mrb[0].mxu0
        %v2410 = vadd.f32 0.0, %v2409
        %v2411 = vpop.f32.mrb[0].mxu0
        %v2412 = vpop.f32.mrb[0].mxu0
        %v2413 = vadd.f32 0.0, %v2412
        %v2414 = vpop.f32.mrb[0].mxu0
        %2415 = vmatprep.mubr.bf16.mxu0 %v938
        %2416 = vmatmul.mubr.bf16.gmra.mrb[0].mxu0 %v937
        %v2417 = vpop.f32.mrb[0].mxu0
        %v2418 = vadd.f32 0.0, %v2417
        %v2419 = vpop.f32.mrb[0].mxu0
        %v2420 = vpop.f32.mrb[0].mxu0
        %v2421 = vadd.f32 0.0, %v2420
        %v2422 = vpop.f32.mrb[0].mxu0
        %2423 = vmatprep.mubr.bf16.mxu0 %v2268
        %2424 = vmatmul.mubr.bf16.gmra.mrb[0].mxu0 %v2267
        %v2425 = vpop.f32.mrb[0].mxu0
        %v2426 = vadd.f32 0.0, %v2425
        %v2427 = vpop.f32.mrb[0].mxu0
        %v2428 = vpop.f32.mrb[0].mxu0
        %v2429 = vadd.f32 0.0, %v2428
        %v2430 = vpop.f32.mrb[0].mxu0
        %2431 = vdwg.mxu0
        %v2432 = vadd.f32 %v2219, %v2402
        %v2433 = vadd.f32 %v2220, %v2405
        %v2434 = vadd.f32 %v2221, %v2410
        %v2435 = vadd.f32 %v2222, %v2413
        %v2436 = vadd.f32 %v2223, %v2418
        %v2437 = vadd.f32 %v2224, %v2421
        %v2438 = vadd.f32 %v2225, %v2426
        %v2439 = vadd.f32 %v2226, %v2429
        %v2440 = vld [vmem:[#allocation7] sm:$0x1]
        %v2442 = vlaneseq
        %v2443 = vshrl.u32 %v2442, 7
        %v2444 = vsub.s32 0, %v2443
        %v2445 = vrot.slane %v2440, %v2444
        %v2447 = vadd.f32 %v2432, %v2445
        %v2448 = vadd.f32 %v2433, %v2445
        %v2449 = vadd.f32 %v2434, %v2445
        %v2450 = vadd.f32 %v2435, %v2445
        %v2451 = vadd.f32 %v2436, %v2445
        %v2452 = vadd.f32 %v2437, %v2445
        %v2453 = vadd.f32 %v2438, %v2445
        %v2454 = vadd.f32 %v2439, %v2445
        %v2455 = vadd.f32 %v2447, %v2448
        %v2456 = vadd.f32 %v2455, %v2449
        %v2457 = vadd.f32 %v2456, %v2450
        %v2458 = vadd.f32 %v2457, %v2451
        %v2459 = vadd.f32 %v2458, %v2452
        %v2460 = vadd.f32 %v2459, %v2453
        %v2461 = vadd.f32 %v2460, %v2454
        %v2462 = vrot.slane %v2461, 4
        %v2463 = vadd.f32 %v2461, %v2462
        %v2464 = vrot.slane %v2463, 2
        %v2465 = vadd.f32 %v2463, %v2464
        %v2466 = vrot.slane %v2465, 1
        %v2467 = vadd.f32 %v2465, %v2466
        %v2468 = vrcp.pop 64.0
        %v2469 = vmul.f32 %v2467, %v2468
        %v2470 = vsub.f32 %v2447, %v2469
        %v2471 = vsub.f32 %v2448, %v2469
        %v2472 = vsub.f32 %v2449, %v2469
        %v2473 = vsub.f32 %v2450, %v2469
        %v2474 = vsub.f32 %v2451, %v2469
        %v2475 = vsub.f32 %v2452, %v2469
        %v2476 = vsub.f32 %v2453, %v2469
        %v2477 = vsub.f32 %v2454, %v2469
        %v2478 = vmul.f32 %v2470, %v2470
        %v2479 = vmul.f32 %v2471, %v2471
        %v2480 = vmul.f32 %v2472, %v2472
        %v2481 = vmul.f32 %v2473, %v2473
        %v2482 = vmul.f32 %v2474, %v2474
        %v2483 = vmul.f32 %v2475, %v2475
        %v2484 = vmul.f32 %v2476, %v2476
        %v2485 = vmul.f32 %v2477, %v2477
        %v2486 = vadd.f32 %v2478, %v2479
        %v2487 = vadd.f32 %v2486, %v2480
        %v2488 = vadd.f32 %v2487, %v2481
        %v2489 = vadd.f32 %v2488, %v2482
        %v2490 = vadd.f32 %v2489, %v2483
        %v2491 = vadd.f32 %v2490, %v2484
        %v2492 = vadd.f32 %v2491, %v2485
        %v2493 = vrot.slane %v2492, 4
        %v2494 = vadd.f32 %v2492, %v2493
        %v2495 = vrot.slane %v2494, 2
        %v2496 = vadd.f32 %v2494, %v2495
        %v2497 = vrot.slane %v2496, 1
        %v2498 = vadd.f32 %v2496, %v2497
        %v2499 = vmul.f32 %v2498, %v2468
        %v2500 = vadd.f32 %v2499, 1e-05
        %v2501 = vrsqrt.pop %v2500
        %v2502 = vmul.f32 %v2470, %v2501
        %v2503 = vmul.f32 %v2471, %v2501
        %v2504 = vmul.f32 %v2472, %v2501
        %v2505 = vmul.f32 %v2473, %v2501
        %v2506 = vmul.f32 %v2474, %v2501
        %v2507 = vmul.f32 %v2475, %v2501
        %v2508 = vmul.f32 %v2476, %v2501
        %v2509 = vmul.f32 %v2477, %v2501
        %vm2510 = vcmp.ge.f32.partialorder %v2502, 0.0
        %vm2511 = vcmp.ge.f32.partialorder %v2503, 0.0
        %vm2512 = vcmp.ge.f32.partialorder %v2504, 0.0
        %vm2513 = vcmp.ge.f32.partialorder %v2505, 0.0
        %vm2514 = vcmp.ge.f32.partialorder %v2506, 0.0
        %vm2515 = vcmp.ge.f32.partialorder %v2507, 0.0
        %vm2516 = vcmp.ge.f32.partialorder %v2508, 0.0
        %vm2517 = vcmp.ge.f32.partialorder %v2509, 0.0
        %v2518 = vmul.f32 %v2502, 0.01
        %v2519 = vmul.f32 %v2503, 0.01
        %v2520 = vmul.f32 %v2504, 0.01
        %v2521 = vmul.f32 %v2505, 0.01
        %v2522 = vmul.f32 %v2506, 0.01
        %v2523 = vmul.f32 %v2507, 0.01
        %v2524 = vmul.f32 %v2508, 0.01
        %v2525 = vmul.f32 %v2509, 0.01
        %v2526 = vsel %vm2510, %v2502, %v2518
        %v2527 = vsel %vm2511, %v2503, %v2519
        %v2528 = vsel %vm2512, %v2504, %v2520
        %v2529 = vsel %vm2513, %v2505, %v2521
        %v2530 = vsel %vm2514, %v2506, %v2522
        %v2531 = vsel %vm2515, %v2507, %v2523
        %v2532 = vsel %vm2516, %v2508, %v2524
        %v2533 = vsel %vm2517, %v2509, %v2525
        %v2534 = vpack.c.bf16 %v2526, %v2526
        %v2535 = vpack.c.bf16 %v2527, %v2527
        %v2536 = vpack.c.bf16 %v2528, %v2528
        %v2537 = vpack.c.bf16 %v2529, %v2529
        %v2538 = vpack.c.bf16 %v2530, %v2530
        %v2539 = vpack.c.bf16 %v2531, %v2531
        %v2540 = vpack.c.bf16 %v2532, %v2532
        %v2541 = vpack.c.bf16 %v2533, %v2533
        %2542 = vst [vmem:[%s243] sm:$0xf] %v2534
        %2543 = vst [vmem:[%s243 + $0x4] sm:$0xf] %v2535
        %2544 = vst [vmem:[%s243 + $0x8] sm:$0xf] %v2536
        %2545 = vst [vmem:[%s243 + $0xc] sm:$0xf] %v2537
        %2546 = vst [vmem:[%s243 + $0x10] sm:$0xf] %v2538
        %2547 = vst [vmem:[%s243 + $0x14] sm:$0xf] %v2539
        %2548 = vst [vmem:[%s243 + $0x18] sm:$0xf] %v2540
        %2549 = vst [vmem:[%s243 + $0x1c] sm:$0xf] %v2541
        %s2550 = sand.u32 %s121, 1
        %s2551 = scalar_lea.sflag [#allocation4], %s2550
        %s2552 = sand.u32 %s121, 1
        %s2553 = smul.addr %s2552, 32
        %s2554 = scalar_lea.vmem [#allocation8], %s2553
        // Predicated region
        $region45: #{difference_integrated_hg_filter_forward.5} parent=31 // pred_check
          %p2555 = pneg %p131
        $region46: #{difference_integrated_hg_filter_forward.5} parent=31 // pred_check_branch
          %2557 = sbr.rel (%p2555) target = $region48
        $region47: #{difference_integrated_hg_filter_forward.5} parent=31 // pred_region
          %s2559 = ssub.s32 512, 512
          %2560 = vsyncadd %s2551, %s2559
          %s2561 = smul.addr %s25, 8
          %s2562 = sadd.s32 %s26, %s2561
          %s2563 = smul.addr %s2562, 64
          %s2564 = scalar_lea.hbm %s3, %s2563
          %s2565 = sshll.u32 %s2554, 4
          %s2566 = int_to_ptr.vmem [resolvable:$true] %s2565
          %2571 = dma.vmem_to_hbm [thread:$0]  %s2566, 512, %s2564, %s2551, 64, 64, 4
        $region48: #{difference_integrated_hg_filter_forward.5} parent=31 // pred_fallthru
          _
      $region32: #{difference_integrated_hg_filter_forward.5} parent=5 // pred_fallthru
        _
      %p2572 = scmp.le.s32.totalorder 2, %s16
      // Predicated region
      $region49: #{difference_integrated_hg_filter_forward.5} parent=5 // pred_check
        %p2573 = pneg %p2572
      $region50: #{difference_integrated_hg_filter_forward.5} parent=5 // pred_check_branch
        %2575 = sbr.rel (%p2573) target = $region52
      $region51: #{difference_integrated_hg_filter_forward.5} parent=5 // pred_region
        %s2576 = ssub.s32 %s16, 2
        // Predicated region
        $region53: #{difference_integrated_hg_filter_forward.5} parent=51 // pred_check
          %p2577 = pneg %p137
        $region54: #{difference_integrated_hg_filter_forward.5} parent=51 // pred_check_branch
          %2579 = sbr.rel (%p2577) target = $region56
        $region55: #{difference_integrated_hg_filter_forward.5} parent=51 // pred_region
          %s2580 = sand.u32 %s122, 1
          %s2581 = scalar_lea.sflag [#allocation4], %s2580
          %s2582 = sand.u32 %s122, 1
          %s2583 = smul.addr %s2582, 32
          %s2584 = scalar_lea.vmem [#allocation8], %s2583
          %2585 = dma.done %s2581, 512
        $region56: #{difference_integrated_hg_filter_forward.5} parent=51 // pred_fallthru
          _
      $region52: #{difference_integrated_hg_filter_forward.5} parent=5 // pred_fallthru
        _
    $region6: #{difference_integrated_hg_filter_forward.5} parent=1 // loop_footer
      %s20 = sadd.s32 1, %s16
    $region7: #{difference_integrated_hg_filter_forward.5} parent=1 // loop_footer_branch
      %15 = sbr.rel target = $region3
    $region8: #{difference_integrated_hg_filter_forward.5} parent=1 // loop_exit
      _
    %2586 = vsyncpa [#allocation3], 1
    %s2587 = scalar_lea.sflag [#allocation3], 1
    %2588 = vsyncpa %s2587, 1
    %2589 = vsyncpa [#allocation6], 1
    %2590 = vsyncpa [#allocation4], 1
    %s2591 = scalar_lea.sflag [#allocation4], 1
    %2592 = vsyncpa %s2591, 1

// kernel: difference_integrated_hg_filter_forward.7
$region0: #{difference_integrated_hg_filter_forward.7}
  #allocation0 [shape = 'u32[]', space=smem, size = 0x4, offset = 0x4, fixed_abs, tag = 'smem constant byte address 0x4 - core index']
  #allocation1 [shape = 'u32[144,128]{1,0:T(1,128)}', space=vmem, size = 0x12000, scoped, tag = 'internal scratch']
  %s0 = inlined_call_operand.hbm [shape: bf16[128,384], index: 0, kind: input, shape index: {}]
  %s1 = inlined_call_operand.hbm [shape: bf16[384,256], index: 1, kind: input, shape index: {}]
  %s2 = inlined_call_operand.hbm [shape: f32[1,256], index: 2, kind: input, shape index: {}]
  %s3 = inlined_call_operand.hbm [shape: f32[128,256], index: 3, kind: input, shape index: {}]
  %s4 = inlined_call_operand.hbm [shape: f32[128,256], index: 4, kind: output, shape index: {}]
  %s5 = sld [smem:[#allocation0]]
  $region42: #{difference_integrated_hg_filter_forward.7} parent=0
    _
  %s7 = ssub.s32 1, %s5
  %s8 = scalar_select 0, %s7, %s5
  $region1: #{difference_integrated_hg_filter_forward.7} parent=0
    #allocation2 [shape = 'u8[98304]{0}', space=vmem, size = 0x18000, scoped, tag = 'input window, operand 0, single buffered']
    #allocation3 [shape = 's32[1]{0}', space=sflag, size = 0x4, scoped, tag = 'scoped memory for difference_integrated_hg_filter_forward.7']
    #allocation4 [shape = 's32[1]{0}', space=sflag, size = 0x4, scoped, tag = 'scoped memory for difference_integrated_hg_filter_forward.7']
    #allocation5 [shape = 'u8[196608]{0}', space=vmem, size = 0x30000, scoped, tag = 'input window, operand 1, single buffered']
    #allocation6 [shape = 's32[1]{0}', space=sflag, size = 0x4, scoped, tag = 'scoped memory for difference_integrated_hg_filter_forward.7']
    #allocation7 [shape = 'u8[1024]{0}', space=vmem, size = 0x400, scoped, tag = 'input window, operand 2, single buffered']
    #allocation8 [shape = 'u8[131072]{0}', space=vmem, size = 0x20000, scoped, tag = 'input window, operand 3, single buffered']
    #allocation9 [shape = 's32[1]{0}', space=sflag, size = 0x4, scoped, tag = 'scoped memory for difference_integrated_hg_filter_forward.7']
    #allocation10 [shape = 'u8[131072]{0}', space=vmem, size = 0x20000, scoped, tag = 'output window, operand 0, single buffered']
    %9 = vsyncpa [#allocation3], 0
    %10 = vsyncpa [#allocation6], 0
    %11 = vsyncpa [#allocation9], 0
    %12 = vsyncpa [#allocation4], 0
    // Predicated region
    $region2: #{difference_integrated_hg_filter_forward.7} parent=1 // pred_check
      _
    $region3: #{difference_integrated_hg_filter_forward.7} parent=1 // pred_check_branch
      %14 = sbr.rel (0) target = $region5
    $region4: #{difference_integrated_hg_filter_forward.7} parent=1 // pred_region
      %s16 = ssub.s32 3072, 3072
      %17 = vsyncadd [#allocation3], %s16
      %s18 = sshll.u32 [#allocation2], 4
      %s19 = int_to_ptr.vmem [resolvable:$true] %s18
      %24 = dma.hbm_to_vmem [thread:$0]  %s0, 3072, %s19, [#allocation3], 192, 192, 12
    $region5: #{difference_integrated_hg_filter_forward.7} parent=1 // pred_fallthru
      _
    // Predicated region
    $region6: #{difference_integrated_hg_filter_forward.7} parent=1 // pred_check
      _
    $region7: #{difference_integrated_hg_filter_forward.7} parent=1 // pred_check_branch
      %26 = sbr.rel (0) target = $region9
    $region8: #{difference_integrated_hg_filter_forward.7} parent=1 // pred_region
      %s28 = ssub.s32 6144, 6144
      %29 = vsyncadd [#allocation6], %s28
      %s30 = sshll.u32 [#allocation5], 4
      %s31 = int_to_ptr.vmem [resolvable:$true] %s30
      %36 = dma.hbm_to_vmem [thread:$0]  %s1, 6144, %s31, [#allocation6], 128, 128, 8
    $region9: #{difference_integrated_hg_filter_forward.7} parent=1 // pred_fallthru
      _
    // Predicated region
    $region10: #{difference_integrated_hg_filter_forward.7} parent=1 // pred_check
      _
    $region11: #{difference_integrated_hg_filter_forward.7} parent=1 // pred_check_branch
      %38 = sbr.rel (0) target = $region13
    $region12: #{difference_integrated_hg_filter_forward.7} parent=1 // pred_region
      %s40 = ssub.s32 32, 32
      %41 = vsyncadd [#allocation6], %s40
      %s43 = sshll.u32 [#allocation7], 4
      %s44 = int_to_ptr.vmem [resolvable:$true] %s43
      %46 = dma.hbm_to_vmem [thread:$0]  %s2, 32, %s44, [#allocation6]
    $region13: #{difference_integrated_hg_filter_forward.7} parent=1 // pred_fallthru
      _
    // Predicated region
    $region14: #{difference_integrated_hg_filter_forward.7} parent=1 // pred_check
      _
    $region15: #{difference_integrated_hg_filter_forward.7} parent=1 // pred_check_branch
      %48 = sbr.rel (0) target = $region17
    $region16: #{difference_integrated_hg_filter_forward.7} parent=1 // pred_region
      %s50 = ssub.s32 4096, 4096
      %51 = vsyncadd [#allocation9], %s50
      %s52 = sshll.u32 [#allocation8], 4
      %s53 = int_to_ptr.vmem [resolvable:$true] %s52
      %58 = dma.hbm_to_vmem [thread:$0]  %s3, 4096, %s53, [#allocation9], 256, 256, 16
    $region17: #{difference_integrated_hg_filter_forward.7} parent=1 // pred_fallthru
      _
    // Predicated region
    $region18: #{difference_integrated_hg_filter_forward.7} parent=1 // pred_check
      _
    $region19: #{difference_integrated_hg_filter_forward.7} parent=1 // pred_check_branch
      %60 = sbr.rel (0) target = $region21
    $region20: #{difference_integrated_hg_filter_forward.7} parent=1 // pred_region
      %61 = dma.done [#allocation3], 3072
    $region21: #{difference_integrated_hg_filter_forward.7} parent=1 // pred_fallthru
      _
    // Predicated region
    $region22: #{difference_integrated_hg_filter_forward.7} parent=1 // pred_check
      _
    $region23: #{difference_integrated_hg_filter_forward.7} parent=1 // pred_check_branch
      %63 = sbr.rel (0) target = $region25
    $region24: #{difference_integrated_hg_filter_forward.7} parent=1 // pred_region
      %64 = dma.done [#allocation6], 6144
    $region25: #{difference_integrated_hg_filter_forward.7} parent=1 // pred_fallthru
      _
    // Predicated region
    $region26: #{difference_integrated_hg_filter_forward.7} parent=1 // pred_check
      _
    $region27: #{difference_integrated_hg_filter_forward.7} parent=1 // pred_check_branch
      %66 = sbr.rel (0) target = $region29
    $region28: #{difference_integrated_hg_filter_forward.7} parent=1 // pred_region
      %67 = dma.done [#allocation6], 32
    $region29: #{difference_integrated_hg_filter_forward.7} parent=1 // pred_fallthru
      _
    // Predicated region
    $region30: #{difference_integrated_hg_filter_forward.7} parent=1 // pred_check
      _
    $region31: #{difference_integrated_hg_filter_forward.7} parent=1 // pred_check_branch
      %69 = sbr.rel (0) target = $region33
    $region32: #{difference_integrated_hg_filter_forward.7} parent=1 // pred_region
      %70 = dma.done [#allocation9], 4096
    $region33: #{difference_integrated_hg_filter_forward.7} parent=1 // pred_fallthru
      _
    %v72 = vld [vmem:[#allocation2] sm:$0xff]
    %v73 = vld [vmem:[#allocation2 + $0x8] sm:$0xf]
    %v74 = vld [vmem:[#allocation2 + $0xc] sm:$0xff]
    %v75 = vld [vmem:[#allocation2 + $0x14] sm:$0xf]
    %v76 = vld [vmem:[#allocation2 + $0x18] sm:$0xff]
    %v77 = vld [vmem:[#allocation2 + $0x20] sm:$0xf]
    %v78 = vld [vmem:[#allocation2 + $0x24] sm:$0xff]
    %v79 = vld [vmem:[#allocation2 + $0x2c] sm:$0xf]
    %v80 = vld [vmem:[#allocation2 + $0x30] sm:$0xff]
    %v81 = vld [vmem:[#allocation2 + $0x38] sm:$0xf]
    %v82 = vld [vmem:[#allocation2 + $0x3c] sm:$0xff]
    %v83 = vld [vmem:[#allocation2 + $0x44] sm:$0xf]
    %v84 = vld [vmem:[#allocation2 + $0x48] sm:$0xff]
    %v85 = vld [vmem:[#allocation2 + $0x50] sm:$0xf]
    %v86 = vld [vmem:[#allocation2 + $0x54] sm:$0xff]
    %v87 = vld [vmem:[#allocation2 + $0x5c] sm:$0xf]
    %v88 = vld [vmem:[#allocation2 + $0x60] sm:$0xff]
    %v89 = vld [vmem:[#allocation2 + $0x68] sm:$0xf]
    %v90 = vld [vmem:[#allocation2 + $0x6c] sm:$0xff]
    %v91 = vld [vmem:[#allocation2 + $0x74] sm:$0xf]
    %v92 = vld [vmem:[#allocation2 + $0x78] sm:$0xff]
    %v93 = vld [vmem:[#allocation2 + $0x80] sm:$0xf]
    %v94 = vld [vmem:[#allocation2 + $0x84] sm:$0xff]
    %v95 = vld [vmem:[#allocation2 + $0x8c] sm:$0xf]
    %v96 = vld [vmem:[#allocation2 + $0x90] sm:$0xff]
    %v97 = vld [vmem:[#allocation2 + $0x98] sm:$0xf]
    %v98 = vld [vmem:[#allocation2 + $0x9c] sm:$0xff]
    %v99 = vld [vmem:[#allocation2 + $0xa4] sm:$0xf]
    %v100 = vld [vmem:[#allocation2 + $0xa8] sm:$0xff]
    %v101 = vld [vmem:[#allocation2 + $0xb0] sm:$0xf]
    %v102 = vld [vmem:[#allocation2 + $0xb4] sm:$0xff]
    %v103 = vld [vmem:[#allocation2 + $0xbc] sm:$0xf]
    %v104 = vld [vmem:[#allocation5] sm:$0xff]
    %v105 = vld [vmem:[#allocation5 + $0x8] sm:$0xff]
    %v106 = vld [vmem:[#allocation5 + $0x10] sm:$0xff]
    %v107 = vld [vmem:[#allocation5 + $0x18] sm:$0xff]
    %v108 = vld [vmem:[#allocation5 + $0x20] sm:$0xff]
    %v109 = vld [vmem:[#allocation5 + $0x28] sm:$0xff]
    %v110 = vld [vmem:[#allocation5 + $0x30] sm:$0xff]
    %v111 = vld [vmem:[#allocation5 + $0x38] sm:$0xff]
    %v112 = vld [vmem:[#allocation5 + $0x40] sm:$0xff]
    %v113 = vld [vmem:[#allocation5 + $0x48] sm:$0xff]
    %v114 = vld [vmem:[#allocation5 + $0x50] sm:$0xff]
    %v115 = vld [vmem:[#allocation5 + $0x58] sm:$0xff]
    %v116 = vld [vmem:[#allocation5 + $0x60] sm:$0xff]
    %v117 = vld [vmem:[#allocation5 + $0x68] sm:$0xff]
    %v118 = vld [vmem:[#allocation5 + $0x70] sm:$0xff]
    %v119 = vld [vmem:[#allocation5 + $0x78] sm:$0xff]
    %v120 = vld [vmem:[#allocation5 + $0x80] sm:$0xff]
    %v121 = vld [vmem:[#allocation5 + $0x88] sm:$0xff]
    %v122 = vld [vmem:[#allocation5 + $0x90] sm:$0xff]
    %v123 = vld [vmem:[#allocation5 + $0x98] sm:$0xff]
    %v124 = vld [vmem:[#allocation5 + $0xa0] sm:$0xff]
    %v125 = vld [vmem:[#allocation5 + $0xa8] sm:$0xff]
    %v126 = vld [vmem:[#allocation5 + $0xb0] sm:$0xff]
    %v127 = vld [vmem:[#allocation5 + $0xb8] sm:$0xff]
    %v128 = vld [vmem:[#allocation5 + $0xc0] sm:$0xff]
    %v129 = vld [vmem:[#allocation5 + $0xc8] sm:$0xff]
    %v130 = vld [vmem:[#allocation5 + $0xd0] sm:$0xff]
    %v131 = vld [vmem:[#allocation5 + $0xd8] sm:$0xff]
    %v132 = vld [vmem:[#allocation5 + $0xe0] sm:$0xff]
    %v133 = vld [vmem:[#allocation5 + $0xe8] sm:$0xff]
    %v134 = vld [vmem:[#allocation5 + $0xf0] sm:$0xff]
    %v135 = vld [vmem:[#allocation5 + $0xf8] sm:$0xff]
    %v136 = vld [vmem:[#allocation5 + $0x100] sm:$0xff]
    %v137 = vld [vmem:[#allocation5 + $0x108] sm:$0xff]
    %v138 = vld [vmem:[#allocation5 + $0x110] sm:$0xff]
    %v139 = vld [vmem:[#allocation5 + $0x118] sm:$0xff]
    %v140 = vld [vmem:[#allocation5 + $0x120] sm:$0xff]
    %v141 = vld [vmem:[#allocation5 + $0x128] sm:$0xff]
    %v142 = vld [vmem:[#allocation5 + $0x130] sm:$0xff]
    %v143 = vld [vmem:[#allocation5 + $0x138] sm:$0xff]
    %v144 = vld [vmem:[#allocation5 + $0x140] sm:$0xff]
    %v145 = vld [vmem:[#allocation5 + $0x148] sm:$0xff]
    %v146 = vld [vmem:[#allocation5 + $0x150] sm:$0xff]
    %v147 = vld [vmem:[#allocation5 + $0x158] sm:$0xff]
    %v148 = vld [vmem:[#allocation5 + $0x160] sm:$0xff]
    %v149 = vld [vmem:[#allocation5 + $0x168] sm:$0xff]
    %v150 = vld [vmem:[#allocation5 + $0x170] sm:$0xff]
    %v151 = vld [vmem:[#allocation5 + $0x178] sm:$0xff]
    %v152 = vld [vmem:[#allocation7] sm:$0x3]
    %v154 = vlaneseq
    %v155 = vshrl.u32 %v154, 7
    %v156 = vsub.s32 0, %v155
    %v157 = vrot.slane %v152, %v156
    %v158 = vlaneseq
    %v159 = vshrl.u32 %v158, 7
    %v160 = vsub.s32 1, %v159
    %v161 = vrot.slane %v152, %v160
    %v196 = vunpack.c.l.b16 %v72
    %v197 = vunpack.c.h.b16 %v72
    %v198 = vunpack.c.l.b16 %v73
    %v199 = vunpack.c.l.b16 %v74
    %v200 = vunpack.c.h.b16 %v74
    %v201 = vunpack.c.l.b16 %v75
    %v202 = vunpack.c.l.b16 %v76
    %v203 = vunpack.c.h.b16 %v76
    %v204 = vunpack.c.l.b16 %v77
    %v205 = vunpack.c.l.b16 %v78
    %v206 = vunpack.c.h.b16 %v78
    %v207 = vunpack.c.l.b16 %v79
    %v208 = vunpack.c.l.b16 %v80
    %v209 = vunpack.c.h.b16 %v80
    %v210 = vunpack.c.l.b16 %v81
    %v211 = vunpack.c.l.b16 %v82
    %v212 = vunpack.c.h.b16 %v82
    %v213 = vunpack.c.l.b16 %v83
    %v214 = vunpack.c.l.b16 %v84
    %v215 = vunpack.c.h.b16 %v84
    %v216 = vunpack.c.l.b16 %v85
    %v217 = vunpack.c.l.b16 %v86
    %v218 = vunpack.c.h.b16 %v86
    %v219 = vunpack.c.l.b16 %v87
    %v220 = vunpack.c.l.b16 %v88
    %v221 = vunpack.c.h.b16 %v88
    %v222 = vunpack.c.l.b16 %v89
    %v223 = vunpack.c.l.b16 %v90
    %v224 = vunpack.c.h.b16 %v90
    %v225 = vunpack.c.l.b16 %v91
    %v226 = vunpack.c.l.b16 %v92
    %v227 = vunpack.c.h.b16 %v92
    %v228 = vunpack.c.l.b16 %v93
    %v229 = vunpack.c.l.b16 %v94
    %v230 = vunpack.c.h.b16 %v94
    %v231 = vunpack.c.l.b16 %v95
    %v232 = vunpack.c.l.b16 %v96
    %v233 = vunpack.c.h.b16 %v96
    %v234 = vunpack.c.l.b16 %v97
    %v235 = vunpack.c.l.b16 %v98
    %v236 = vunpack.c.h.b16 %v98
    %v237 = vunpack.c.l.b16 %v99
    %v238 = vunpack.c.l.b16 %v100
    %v239 = vunpack.c.h.b16 %v100
    %v240 = vunpack.c.l.b16 %v101
    %v241 = vunpack.c.l.b16 %v102
    %v242 = vunpack.c.h.b16 %v102
    %v243 = vunpack.c.l.b16 %v103
    %v244 = vpack.c.b16 %v199, %v196
    %v245 = vpack.c.b16 %v200, %v197
    %v246 = vpack.c.b16 %v201, %v198
    %v247 = vpack.c.b16 %v205, %v202
    %v248 = vpack.c.b16 %v206, %v203
    %v249 = vpack.c.b16 %v207, %v204
    %v250 = vpack.c.b16 %v211, %v208
    %v251 = vpack.c.b16 %v212, %v209
    %v252 = vpack.c.b16 %v213, %v210
    %v253 = vpack.c.b16 %v217, %v214
    %v254 = vpack.c.b16 %v218, %v215
    %v255 = vpack.c.b16 %v219, %v216
    %v256 = vpack.c.b16 %v223, %v220
    %v257 = vpack.c.b16 %v224, %v221
    %v258 = vpack.c.b16 %v225, %v222
    %v259 = vpack.c.b16 %v229, %v226
    %v260 = vpack.c.b16 %v230, %v227
    %v261 = vpack.c.b16 %v231, %v228
    %v262 = vpack.c.b16 %v235, %v232
    %v263 = vpack.c.b16 %v236, %v233
    %v264 = vpack.c.b16 %v237, %v234
    %v265 = vpack.c.b16 %v241, %v238
    %v266 = vpack.c.b16 %v242, %v239
    %v267 = vpack.c.b16 %v243, %v240
    %v340 = vunpack.c.l.b16 %v104
    %v341 = vunpack.c.h.b16 %v104
    %v342 = vunpack.c.l.b16 %v105
    %v343 = vunpack.c.h.b16 %v105
    %v344 = vunpack.c.l.b16 %v106
    %v345 = vunpack.c.h.b16 %v106
    %v346 = vunpack.c.l.b16 %v107
    %v347 = vunpack.c.h.b16 %v107
    %v348 = vunpack.c.l.b16 %v108
    %v349 = vunpack.c.h.b16 %v108
    %v350 = vunpack.c.l.b16 %v109
    %v351 = vunpack.c.h.b16 %v109
    %v352 = vunpack.c.l.b16 %v110
    %v353 = vunpack.c.h.b16 %v110
    %v354 = vunpack.c.l.b16 %v111
    %v355 = vunpack.c.h.b16 %v111
    %v356 = vunpack.c.l.b16 %v112
    %v357 = vunpack.c.h.b16 %v112
    %v358 = vunpack.c.l.b16 %v113
    %v359 = vunpack.c.h.b16 %v113
    %v360 = vunpack.c.l.b16 %v114
    %v361 = vunpack.c.h.b16 %v114
    %v362 = vunpack.c.l.b16 %v115
    %v363 = vunpack.c.h.b16 %v115
    %v364 = vunpack.c.l.b16 %v116
    %v365 = vunpack.c.h.b16 %v116
    %v366 = vunpack.c.l.b16 %v117
    %v367 = vunpack.c.h.b16 %v117
    %v368 = vunpack.c.l.b16 %v118
    %v369 = vunpack.c.h.b16 %v118
    %v370 = vunpack.c.l.b16 %v119
    %v371 = vunpack.c.h.b16 %v119
    %v372 = vunpack.c.l.b16 %v120
    %v373 = vunpack.c.h.b16 %v120
    %v374 = vunpack.c.l.b16 %v121
    %v375 = vunpack.c.h.b16 %v121
    %v376 = vunpack.c.l.b16 %v122
    %v377 = vunpack.c.h.b16 %v122
    %v378 = vunpack.c.l.b16 %v123
    %v379 = vunpack.c.h.b16 %v123
    %v380 = vunpack.c.l.b16 %v124
    %v381 = vunpack.c.h.b16 %v124
    %v382 = vunpack.c.l.b16 %v125
    %v383 = vunpack.c.h.b16 %v125
    %v384 = vunpack.c.l.b16 %v126
    %v385 = vunpack.c.h.b16 %v126
    %v386 = vunpack.c.l.b16 %v127
    %v387 = vunpack.c.h.b16 %v127
    %v388 = vunpack.c.l.b16 %v128
    %v389 = vunpack.c.h.b16 %v128
    %v390 = vunpack.c.l.b16 %v129
    %v391 = vunpack.c.h.b16 %v129
    %v392 = vunpack.c.l.b16 %v130
    %v393 = vunpack.c.h.b16 %v130
    %v394 = vunpack.c.l.b16 %v131
    %v395 = vunpack.c.h.b16 %v131
    %v396 = vunpack.c.l.b16 %v132
    %v397 = vunpack.c.h.b16 %v132
    %v398 = vunpack.c.l.b16 %v133
    %v399 = vunpack.c.h.b16 %v133
    %v400 = vunpack.c.l.b16 %v134
    %v401 = vunpack.c.h.b16 %v134
    %v402 = vunpack.c.l.b16 %v135
    %v403 = vunpack.c.h.b16 %v135
    %v404 = vunpack.c.l.b16 %v136
    %v405 = vunpack.c.h.b16 %v136
    %v406 = vunpack.c.l.b16 %v137
    %v407 = vunpack.c.h.b16 %v137
    %v408 = vunpack.c.l.b16 %v138
    %v409 = vunpack.c.h.b16 %v138
    %v410 = vunpack.c.l.b16 %v139
    %v411 = vunpack.c.h.b16 %v139
    %v412 = vunpack.c.l.b16 %v140
    %v413 = vunpack.c.h.b16 %v140
    %v414 = vunpack.c.l.b16 %v141
    %v415 = vunpack.c.h.b16 %v141
    %v416 = vunpack.c.l.b16 %v142
    %v417 = vunpack.c.h.b16 %v142
    %v418 = vunpack.c.l.b16 %v143
    %v419 = vunpack.c.h.b16 %v143
    %v420 = vunpack.c.l.b16 %v144
    %v421 = vunpack.c.h.b16 %v144
    %v422 = vunpack.c.l.b16 %v145
    %v423 = vunpack.c.h.b16 %v145
    %v424 = vunpack.c.l.b16 %v146
    %v425 = vunpack.c.h.b16 %v146
    %v426 = vunpack.c.l.b16 %v147
    %v427 = vunpack.c.h.b16 %v147
    %v428 = vunpack.c.l.b16 %v148
    %v429 = vunpack.c.h.b16 %v148
    %v430 = vunpack.c.l.b16 %v149
    %v431 = vunpack.c.h.b16 %v149
    %v432 = vunpack.c.l.b16 %v150
    %v433 = vunpack.c.h.b16 %v150
    %v434 = vunpack.c.l.b16 %v151
    %v435 = vunpack.c.h.b16 %v151
    %v436 = vpack.c.b16 %v342, %v340
    %v437 = vpack.c.b16 %v343, %v341
    %v438 = vpack.c.b16 %v346, %v344
    %v439 = vpack.c.b16 %v347, %v345
    %v440 = vpack.c.b16 %v350, %v348
    %v441 = vpack.c.b16 %v351, %v349
    %v442 = vpack.c.b16 %v354, %v352
    %v443 = vpack.c.b16 %v355, %v353
    %v444 = vpack.c.b16 %v358, %v356
    %v445 = vpack.c.b16 %v359, %v357
    %v446 = vpack.c.b16 %v362, %v360
    %v447 = vpack.c.b16 %v363, %v361
    %v448 = vpack.c.b16 %v366, %v364
    %v449 = vpack.c.b16 %v367, %v365
    %v450 = vpack.c.b16 %v370, %v368
    %v451 = vpack.c.b16 %v371, %v369
    %v452 = vpack.c.b16 %v374, %v372
    %v453 = vpack.c.b16 %v375, %v373
    %v454 = vpack.c.b16 %v378, %v376
    %v455 = vpack.c.b16 %v379, %v377
    %v456 = vpack.c.b16 %v382, %v380
    %v457 = vpack.c.b16 %v383, %v381
    %v458 = vpack.c.b16 %v386, %v384
    %v459 = vpack.c.b16 %v387, %v385
    %v460 = vpack.c.b16 %v390, %v388
    %v461 = vpack.c.b16 %v391, %v389
    %v462 = vpack.c.b16 %v394, %v392
    %v463 = vpack.c.b16 %v395, %v393
    %v464 = vpack.c.b16 %v398, %v396
    %v465 = vpack.c.b16 %v399, %v397
    %v466 = vpack.c.b16 %v402, %v400
    %v467 = vpack.c.b16 %v403, %v401
    %v468 = vpack.c.b16 %v406, %v404
    %v469 = vpack.c.b16 %v407, %v405
    %v470 = vpack.c.b16 %v410, %v408
    %v471 = vpack.c.b16 %v411, %v409
    %v472 = vpack.c.b16 %v414, %v412
    %v473 = vpack.c.b16 %v415, %v413
    %v474 = vpack.c.b16 %v418, %v416
    %v475 = vpack.c.b16 %v419, %v417
    %v476 = vpack.c.b16 %v422, %v420
    %v477 = vpack.c.b16 %v423, %v421
    %v478 = vpack.c.b16 %v426, %v424
    %v479 = vpack.c.b16 %v427, %v425
    %v480 = vpack.c.b16 %v430, %v428
    %v481 = vpack.c.b16 %v431, %v429
    %v482 = vpack.c.b16 %v434, %v432
    %v483 = vpack.c.b16 %v435, %v433
    %532 = vmatprep.subr.bf16.mxu0 %v437
    %533 = vmatpush1.bf16.msra.mxu0 %v436
    %534 = vmatprep.subr.bf16.mxu0 %v439
    %535 = vmatpush1.bf16.msra.mxu0 %v438
    %536 = vmatprep.subr.bf16.mxu0 %v441
    %537 = vmatpush1.bf16.msra.mxu0 %v440
    %538 = vmatprep.subr.bf16.mxu0 %v443
    %539 = vmatpush1.bf16.msra.mxu0 %v442
    %540 = vmatprep.subr.bf16.mxu0 %v445
    %541 = vmatpush1.bf16.msra.mxu0 %v444
    %542 = vmatprep.subr.bf16.mxu0 %v447
    %543 = vmatpush1.bf16.msra.mxu0 %v446
    %544 = vmatprep.subr.bf16.mxu0 %v449
    %545 = vmatpush1.bf16.msra.mxu0 %v448
    %546 = vmatprep.subr.bf16.mxu0 %v451
    %547 = vmatpush1.bf16.msra.mxu0 %v450
    %548 = vmatprep.subr.bf16.mxu0 %v453
    %549 = vmatpush1.bf16.msra.mxu0 %v452
    %550 = vmatprep.subr.bf16.mxu0 %v455
    %551 = vmatpush1.bf16.msra.mxu0 %v454
    %552 = vmatprep.subr.bf16.mxu0 %v457
    %553 = vmatpush1.bf16.msra.mxu0 %v456
    %554 = vmatprep.subr.bf16.mxu0 %v459
    %555 = vmatpush1.bf16.msra.mxu0 %v458
    %556 = vmatprep.subr.bf16.mxu0 %v461
    %557 = vmatpush1.bf16.msra.mxu0 %v460
    %558 = vmatprep.subr.bf16.mxu0 %v463
    %559 = vmatpush1.bf16.msra.mxu0 %v462
    %560 = vmatprep.subr.bf16.mxu0 %v465
    %561 = vmatpush1.bf16.msra.mxu0 %v464
    %562 = vmatprep.subr.bf16.mxu0 %v467
    %563 = vmatpush1.bf16.msra.mxu0 %v466
    %564 = vmatprep.mubr.bf16.mxu0 %v245
    %565 = vmatmul.mubr.bf16.gmra.mrb[0].mxu0 %v244
    %v566 = vpop.f32.mrb[0].mxu0
    %v567 = vadd.f32 %v157, %v566
    %v568 = vpop.f32.mrb[0].mxu0
    %v569 = vadd.f32 %v161, %v568
    %v570 = vpop.f32.mrb[0].mxu0
    %v571 = vadd.f32 %v157, %v570
    %v572 = vpop.f32.mrb[0].mxu0
    %v573 = vadd.f32 %v161, %v572
    %574 = vmatprep.mubr.bf16.mxu0 %v248
    %575 = vmatmul.mubr.bf16.gmra.mrb[0].mxu0 %v247
    %v576 = vpop.f32.mrb[0].mxu0
    %v577 = vadd.f32 %v157, %v576
    %v578 = vpop.f32.mrb[0].mxu0
    %v579 = vadd.f32 %v161, %v578
    %v580 = vpop.f32.mrb[0].mxu0
    %v581 = vadd.f32 %v157, %v580
    %v582 = vpop.f32.mrb[0].mxu0
    %v583 = vadd.f32 %v161, %v582
    %584 = vmatprep.mubr.bf16.mxu0 %v251
    %585 = vmatmul.mubr.bf16.gmra.mrb[0].mxu0 %v250
    %v586 = vpop.f32.mrb[0].mxu0
    %v587 = vadd.f32 %v157, %v586
    %v588 = vpop.f32.mrb[0].mxu0
    %v589 = vadd.f32 %v161, %v588
    %v590 = vpop.f32.mrb[0].mxu0
    %v591 = vadd.f32 %v157, %v590
    %v592 = vpop.f32.mrb[0].mxu0
    %v593 = vadd.f32 %v161, %v592
    %594 = vmatprep.mubr.bf16.mxu0 %v254
    %595 = vmatmul.mubr.bf16.gmra.mrb[0].mxu0 %v253
    %v596 = vpop.f32.mrb[0].mxu0
    %v597 = vadd.f32 %v157, %v596
    %v598 = vpop.f32.mrb[0].mxu0
    %v599 = vadd.f32 %v161, %v598
    %v600 = vpop.f32.mrb[0].mxu0
    %v601 = vadd.f32 %v157, %v600
    %v602 = vpop.f32.mrb[0].mxu0
    %v603 = vadd.f32 %v161, %v602
    %604 = vmatprep.mubr.bf16.mxu0 %v257
    %605 = vmatmul.mubr.bf16.gmra.mrb[0].mxu0 %v256
    %v606 = vpop.f32.mrb[0].mxu0
    %v607 = vadd.f32 %v157, %v606
    %v608 = vpop.f32.mrb[0].mxu0
    %v609 = vadd.f32 %v161, %v608
    %v610 = vpop.f32.mrb[0].mxu0
    %v611 = vadd.f32 %v157, %v610
    %v612 = vpop.f32.mrb[0].mxu0
    %v613 = vadd.f32 %v161, %v612
    %614 = vmatprep.mubr.bf16.mxu0 %v260
    %615 = vmatmul.mubr.bf16.gmra.mrb[0].mxu0 %v259
    %v616 = vpop.f32.mrb[0].mxu0
    %v617 = vadd.f32 %v157, %v616
    %v618 = vpop.f32.mrb[0].mxu0
    %v619 = vadd.f32 %v161, %v618
    %v620 = vpop.f32.mrb[0].mxu0
    %v621 = vadd.f32 %v157, %v620
    %v622 = vpop.f32.mrb[0].mxu0
    %v623 = vadd.f32 %v161, %v622
    %624 = vmatprep.mubr.bf16.mxu0 %v263
    %625 = vmatmul.mubr.bf16.gmra.mrb[0].mxu0 %v262
    %v626 = vpop.f32.mrb[0].mxu0
    %v627 = vadd.f32 %v157, %v626
    %v628 = vpop.f32.mrb[0].mxu0
    %v629 = vadd.f32 %v161, %v628
    %v630 = vpop.f32.mrb[0].mxu0
    %v631 = vadd.f32 %v157, %v630
    %v632 = vpop.f32.mrb[0].mxu0
    %v633 = vadd.f32 %v161, %v632
    %634 = vmatprep.mubr.bf16.mxu0 %v266
    %635 = vmatmul.mubr.bf16.gmra.mrb[0].mxu0 %v265
    %v636 = vpop.f32.mrb[0].mxu0
    %v637 = vadd.f32 %v157, %v636
    %v638 = vpop.f32.mrb[0].mxu0
    %v639 = vadd.f32 %v161, %v638
    %v640 = vpop.f32.mrb[0].mxu0
    %v641 = vadd.f32 %v157, %v640
    %v642 = vpop.f32.mrb[0].mxu0
    %v643 = vadd.f32 %v161, %v642
    %644 = vdwg.mxu0
    %645 = vmatprep.subr.bf16.mxu0 %v469
    %646 = vmatpush1.bf16.msra.mxu0 %v468
    %647 = vmatprep.subr.bf16.mxu0 %v471
    %648 = vmatpush1.bf16.msra.mxu0 %v470
    %649 = vmatprep.subr.bf16.mxu0 %v473
    %650 = vmatpush1.bf16.msra.mxu0 %v472
    %651 = vmatprep.subr.bf16.mxu0 %v475
    %652 = vmatpush1.bf16.msra.mxu0 %v474
    %653 = vmatprep.subr.bf16.mxu0 %v477
    %654 = vmatpush1.bf16.msra.mxu0 %v476
    %655 = vmatprep.subr.bf16.mxu0 %v479
    %656 = vmatpush1.bf16.msra.mxu0 %v478
    %657 = vmatprep.subr.bf16.mxu0 %v481
    %658 = vmatpush1.bf16.msra.mxu0 %v480
    %659 = vmatprep.subr.bf16.mxu0 %v483
    %660 = vmatpush1.bf16.msra.mxu0 %v482
    %661 = vmatprep.subr.bf16.mxu0 0
    %662 = vmatpush1.bf16.msra.mxu0 0
    %663 = vmatprep.subr.bf16.mxu0 0
    %664 = vmatpush1.bf16.msra.mxu0 0
    %665 = vmatprep.subr.bf16.mxu0 0
    %666 = vmatpush1.bf16.msra.mxu0 0
    %667 = vmatprep.subr.bf16.mxu0 0
    %668 = vmatpush1.bf16.msra.mxu0 0
    %669 = vmatprep.subr.bf16.mxu0 0
    %670 = vmatpush1.bf16.msra.mxu0 0
    %671 = vmatprep.subr.bf16.mxu0 0
    %672 = vmatpush1.bf16.msra.mxu0 0
    %673 = vmatprep.subr.bf16.mxu0 0
    %674 = vmatpush1.bf16.msra.mxu0 0
    %675 = vmatprep.subr.bf16.mxu0 0
    %676 = vmatpush1.bf16.msra.mxu0 0
    %677 = vmatprep.mubr.bf16.mxu0 0
    %678 = vmatmul.mubr.bf16.gmra.mrb[0].mxu0 %v246
    %v679 = vpop.f32.mrb[0].mxu0
    %v680 = vadd.f32 %v567, %v679
    %v681 = vpop.f32.mrb[0].mxu0
    %v682 = vadd.f32 %v569, %v681
    %v683 = vpop.f32.mrb[0].mxu0
    %v684 = vadd.f32 %v571, %v683
    %v685 = vpop.f32.mrb[0].mxu0
    %v686 = vadd.f32 %v573, %v685
    %687 = vmatprep.mubr.bf16.mxu0 0
    %688 = vmatmul.mubr.bf16.gmra.mrb[0].mxu0 %v249
    %v689 = vpop.f32.mrb[0].mxu0
    %v690 = vadd.f32 %v577, %v689
    %v691 = vpop.f32.mrb[0].mxu0
    %v692 = vadd.f32 %v579, %v691
    %v693 = vpop.f32.mrb[0].mxu0
    %v694 = vadd.f32 %v581, %v693
    %v695 = vpop.f32.mrb[0].mxu0
    %v696 = vadd.f32 %v583, %v695
    %697 = vmatprep.mubr.bf16.mxu0 0
    %698 = vmatmul.mubr.bf16.gmra.mrb[0].mxu0 %v252
    %v699 = vpop.f32.mrb[0].mxu0
    %v700 = vadd.f32 %v587, %v699
    %v701 = vpop.f32.mrb[0].mxu0
    %v702 = vadd.f32 %v589, %v701
    %v703 = vpop.f32.mrb[0].mxu0
    %v704 = vadd.f32 %v591, %v703
    %v705 = vpop.f32.mrb[0].mxu0
    %v706 = vadd.f32 %v593, %v705
    %707 = vmatprep.mubr.bf16.mxu0 0
    %708 = vmatmul.mubr.bf16.gmra.mrb[0].mxu0 %v255
    %v709 = vpop.f32.mrb[0].mxu0
    %v710 = vadd.f32 %v597, %v709
    %v711 = vpop.f32.mrb[0].mxu0
    %v712 = vadd.f32 %v599, %v711
    %v713 = vpop.f32.mrb[0].mxu0
    %v714 = vadd.f32 %v601, %v713
    %v715 = vpop.f32.mrb[0].mxu0
    %v716 = vadd.f32 %v603, %v715
    %717 = vmatprep.mubr.bf16.mxu0 0
    %718 = vmatmul.mubr.bf16.gmra.mrb[0].mxu0 %v258
    %v719 = vpop.f32.mrb[0].mxu0
    %v720 = vadd.f32 %v607, %v719
    %v721 = vpop.f32.mrb[0].mxu0
    %v722 = vadd.f32 %v609, %v721
    %v723 = vpop.f32.mrb[0].mxu0
    %v724 = vadd.f32 %v611, %v723
    %v725 = vpop.f32.mrb[0].mxu0
    %v726 = vadd.f32 %v613, %v725
    %727 = vmatprep.mubr.bf16.mxu0 0
    %728 = vmatmul.mubr.bf16.gmra.mrb[0].mxu0 %v261
    %v729 = vpop.f32.mrb[0].mxu0
    %v730 = vadd.f32 %v617, %v729
    %v731 = vpop.f32.mrb[0].mxu0
    %v732 = vadd.f32 %v619, %v731
    %v733 = vpop.f32.mrb[0].mxu0
    %v734 = vadd.f32 %v621, %v733
    %v735 = vpop.f32.mrb[0].mxu0
    %v736 = vadd.f32 %v623, %v735
    %737 = vmatprep.mubr.bf16.mxu0 0
    %738 = vmatmul.mubr.bf16.gmra.mrb[0].mxu0 %v264
    %v739 = vpop.f32.mrb[0].mxu0
    %v740 = vadd.f32 %v627, %v739
    %v741 = vpop.f32.mrb[0].mxu0
    %v742 = vadd.f32 %v629, %v741
    %v743 = vpop.f32.mrb[0].mxu0
    %v744 = vadd.f32 %v631, %v743
    %v745 = vpop.f32.mrb[0].mxu0
    %v746 = vadd.f32 %v633, %v745
    %747 = vmatprep.mubr.bf16.mxu0 0
    %748 = vmatmul.mubr.bf16.gmra.mrb[0].mxu0 %v267
    %v749 = vpop.f32.mrb[0].mxu0
    %v750 = vadd.f32 %v637, %v749
    %v751 = vpop.f32.mrb[0].mxu0
    %v752 = vadd.f32 %v639, %v751
    %v753 = vpop.f32.mrb[0].mxu0
    %v754 = vadd.f32 %v641, %v753
    %v755 = vpop.f32.mrb[0].mxu0
    %v756 = vadd.f32 %v643, %v755
    %757 = vdwg.mxu0
    %v758 = vld [vmem:[#allocation8] sm:$0xff]
    %v759 = vld [vmem:[#allocation8 + $0x8] sm:$0xff]
    %v760 = vld [vmem:[#allocation8 + $0x10] sm:$0xff]
    %v761 = vld [vmem:[#allocation8 + $0x18] sm:$0xff]
    %v762 = vld [vmem:[#allocation8 + $0x20] sm:$0xff]
    %v763 = vld [vmem:[#allocation8 + $0x28] sm:$0xff]
    %v764 = vld [vmem:[#allocation8 + $0x30] sm:$0xff]
    %v765 = vld [vmem:[#allocation8 + $0x38] sm:$0xff]
    %v766 = vld [vmem:[#allocation8 + $0x40] sm:$0xff]
    %v767 = vld [vmem:[#allocation8 + $0x48] sm:$0xff]
    %v768 = vld [vmem:[#allocation8 + $0x50] sm:$0xff]
    %v769 = vld [vmem:[#allocation8 + $0x58] sm:$0xff]
    %v770 = vld [vmem:[#allocation8 + $0x60] sm:$0xff]
    %v771 = vld [vmem:[#allocation8 + $0x68] sm:$0xff]
    %v772 = vld [vmem:[#allocation8 + $0x70] sm:$0xff]
    %v773 = vld [vmem:[#allocation8 + $0x78] sm:$0xff]
    %v774 = vld [vmem:[#allocation8 + $0x80] sm:$0xff]
    %v775 = vld [vmem:[#allocation8 + $0x88] sm:$0xff]
    %v776 = vld [vmem:[#allocation8 + $0x90] sm:$0xff]
    %v777 = vld [vmem:[#allocation8 + $0x98] sm:$0xff]
    %v778 = vld [vmem:[#allocation8 + $0xa0] sm:$0xff]
    %v779 = vld [vmem:[#allocation8 + $0xa8] sm:$0xff]
    %v780 = vld [vmem:[#allocation8 + $0xb0] sm:$0xff]
    %v781 = vld [vmem:[#allocation8 + $0xb8] sm:$0xff]
    %v782 = vld [vmem:[#allocation8 + $0xc0] sm:$0xff]
    %v783 = vld [vmem:[#allocation8 + $0xc8] sm:$0xff]
    %v784 = vld [vmem:[#allocation8 + $0xd0] sm:$0xff]
    %v785 = vld [vmem:[#allocation8 + $0xd8] sm:$0xff]
    %v786 = vld [vmem:[#allocation8 + $0xe0] sm:$0xff]
    %v787 = vld [vmem:[#allocation8 + $0xe8] sm:$0xff]
    %v788 = vld [vmem:[#allocation8 + $0xf0] sm:$0xff]
    %v789 = vld [vmem:[#allocation8 + $0xf8] sm:$0xff]
    %v790 = vadd.f32 %v680, %v758
    %v791 = vadd.f32 %v682, %v759
    %v792 = vadd.f32 %v684, %v760
    %v793 = vadd.f32 %v686, %v761
    %v794 = vadd.f32 %v690, %v762
    %v795 = vadd.f32 %v692, %v763
    %v796 = vadd.f32 %v694, %v764
    %v797 = vadd.f32 %v696, %v765
    %v798 = vadd.f32 %v700, %v766
    %v799 = vadd.f32 %v702, %v767
    %v800 = vadd.f32 %v704, %v768
    %v801 = vadd.f32 %v706, %v769
    %v802 = vadd.f32 %v710, %v770
    %v803 = vadd.f32 %v712, %v771
    %v804 = vadd.f32 %v714, %v772
    %v805 = vadd.f32 %v716, %v773
    %v806 = vadd.f32 %v720, %v774
    %v807 = vadd.f32 %v722, %v775
    %v808 = vadd.f32 %v724, %v776
    %v809 = vadd.f32 %v726, %v777
    %v810 = vadd.f32 %v730, %v778
    %v811 = vadd.f32 %v732, %v779
    %v812 = vadd.f32 %v734, %v780
    %v813 = vadd.f32 %v736, %v781
    %v814 = vadd.f32 %v740, %v782
    %v815 = vadd.f32 %v742, %v783
    %v816 = vadd.f32 %v744, %v784
    %v817 = vadd.f32 %v746, %v785
    %v818 = vadd.f32 %v750, %v786
    %v819 = vadd.f32 %v752, %v787
    %v820 = vadd.f32 %v754, %v788
    %v821 = vadd.f32 %v756, %v789
    %822 = vst [vmem:[#allocation10] sm:$0xff] %v790
    %823 = vst [vmem:[#allocation10 + $0x8] sm:$0xff] %v791
    %824 = vst [vmem:[#allocation10 + $0x10] sm:$0xff] %v792
    %825 = vst [vmem:[#allocation10 + $0x18] sm:$0xff] %v793
    %826 = vst [vmem:[#allocation10 + $0x20] sm:$0xff] %v794
    %827 = vst [vmem:[#allocation10 + $0x28] sm:$0xff] %v795
    %828 = vst [vmem:[#allocation10 + $0x30] sm:$0xff] %v796
    %829 = vst [vmem:[#allocation10 + $0x38] sm:$0xff] %v797
    %830 = vst [vmem:[#allocation10 + $0x40] sm:$0xff] %v798
    %831 = vst [vmem:[#allocation10 + $0x48] sm:$0xff] %v799
    %832 = vst [vmem:[#allocation10 + $0x50] sm:$0xff] %v800
    %833 = vst [vmem:[#allocation10 + $0x58] sm:$0xff] %v801
    %834 = vst [vmem:[#allocation10 + $0x60] sm:$0xff] %v802
    %835 = vst [vmem:[#allocation10 + $0x68] sm:$0xff] %v803
    %836 = vst [vmem:[#allocation10 + $0x70] sm:$0xff] %v804
    %837 = vst [vmem:[#allocation10 + $0x78] sm:$0xff] %v805
    %838 = vst [vmem:[#allocation10 + $0x80] sm:$0xff] %v806
    %839 = vst [vmem:[#allocation10 + $0x88] sm:$0xff] %v807
    %840 = vst [vmem:[#allocation10 + $0x90] sm:$0xff] %v808
    %841 = vst [vmem:[#allocation10 + $0x98] sm:$0xff] %v809
    %842 = vst [vmem:[#allocation10 + $0xa0] sm:$0xff] %v810
    %843 = vst [vmem:[#allocation10 + $0xa8] sm:$0xff] %v811
    %844 = vst [vmem:[#allocation10 + $0xb0] sm:$0xff] %v812
    %845 = vst [vmem:[#allocation10 + $0xb8] sm:$0xff] %v813
    %846 = vst [vmem:[#allocation10 + $0xc0] sm:$0xff] %v814
    %847 = vst [vmem:[#allocation10 + $0xc8] sm:$0xff] %v815
    %848 = vst [vmem:[#allocation10 + $0xd0] sm:$0xff] %v816
    %849 = vst [vmem:[#allocation10 + $0xd8] sm:$0xff] %v817
    %850 = vst [vmem:[#allocation10 + $0xe0] sm:$0xff] %v818
    %851 = vst [vmem:[#allocation10 + $0xe8] sm:$0xff] %v819
    %852 = vst [vmem:[#allocation10 + $0xf0] sm:$0xff] %v820
    %853 = vst [vmem:[#allocation10 + $0xf8] sm:$0xff] %v821
    // Predicated region
    $region34: #{difference_integrated_hg_filter_forward.7} parent=1 // pred_check
      _
    $region35: #{difference_integrated_hg_filter_forward.7} parent=1 // pred_check_branch
      %855 = sbr.rel (0) target = $region37
    $region36: #{difference_integrated_hg_filter_forward.7} parent=1 // pred_region
      %s857 = ssub.s32 4096, 4096
      %858 = vsyncadd [#allocation4], %s857
      %s859 = sshll.u32 [#allocation10], 4
      %s860 = int_to_ptr.vmem [resolvable:$true] %s859
      %865 = dma.vmem_to_hbm [thread:$0]  %s860, 4096, %s4, [#allocation4], 256, 256, 16
    $region37: #{difference_integrated_hg_filter_forward.7} parent=1 // pred_fallthru
      _
    // Predicated region
    $region38: #{difference_integrated_hg_filter_forward.7} parent=1 // pred_check
      _
    $region39: #{difference_integrated_hg_filter_forward.7} parent=1 // pred_check_branch
      %867 = sbr.rel (0) target = $region41
    $region40: #{difference_integrated_hg_filter_forward.7} parent=1 // pred_region
      %868 = dma.done [#allocation4], 4096
    $region41: #{difference_integrated_hg_filter_forward.7} parent=1 // pred_fallthru
      _
    %869 = vsyncpa [#allocation3], 1
    %870 = vsyncpa [#allocation6], 1
    %871 = vsyncpa [#allocation9], 1
    %872 = vsyncpa [#allocation4], 1

// kernel: difference_integrated_hg_filter_forward.6
$region0: #{difference_integrated_hg_filter_forward.6}
  #allocation0 [shape = 'u32[]', space=smem, size = 0x4, offset = 0x4, fixed_abs, tag = 'smem constant byte address 0x4 - core index']
  #allocation1 [shape = 'u32[144,128]{1,0:T(1,128)}', space=vmem, size = 0x12000, scoped, tag = 'internal scratch']
  %s0 = inlined_call_operand.hbm [shape: bf16[2,10,10,128], index: 0, kind: input, shape index: {}]
  %s1 = inlined_call_operand.hbm [shape: bf16[3,3,128,384], index: 1, kind: input, shape index: {}]
  %s2 = inlined_call_operand.hbm [shape: bf16[2,10,10,256], index: 2, kind: input, shape index: {}]
  %s3 = inlined_call_operand.hbm [shape: bf16[3,3,256,384], index: 3, kind: input, shape index: {}]
  %s4 = inlined_call_operand.hbm [shape: f32[1,384], index: 4, kind: input, shape index: {}]
  %s5 = inlined_call_operand.hbm [shape: bf16[2,8,8,384], index: 5, kind: output, shape index: {}]
  %s6 = sld [smem:[#allocation0]]
  $region73: #{difference_integrated_hg_filter_forward.6} parent=0
    _
  %s8 = ssub.s32 1, %s6
  %s9 = scalar_select 0, %s8, %s6
  $region1: #{difference_integrated_hg_filter_forward.6} parent=0
    #allocation2 [shape = 'u8[81920]{0}', space=vmem, size = 0x14000, scoped, tag = 'input window, operand 0']
    #allocation3 [shape = 's32[2]{0}', space=sflag, size = 0x8, scoped, tag = 'scoped memory for difference_integrated_hg_filter_forward.6']
    #allocation4 [shape = 's32[2]{0}', space=sflag, size = 0x8, scoped, tag = 'scoped memory for difference_integrated_hg_filter_forward.6']
    #allocation5 [shape = 'u8[589824]{0}', space=vmem, size = 0x90000, scoped, tag = 'input window, operand 1']
    #allocation6 [shape = 's32[2]{0}', space=sflag, size = 0x8, scoped, tag = 'scoped memory for difference_integrated_hg_filter_forward.6']
    #allocation7 [shape = 'u8[163840]{0}', space=vmem, size = 0x28000, scoped, tag = 'input window, operand 2']
    #allocation8 [shape = 'u8[1179648]{0}', space=vmem, size = 0x120000, scoped, tag = 'input window, operand 3']
    #allocation9 [shape = 's32[2]{0}', space=sflag, size = 0x8, scoped, tag = 'scoped memory for difference_integrated_hg_filter_forward.6']
    #allocation10 [shape = 'u8[1024]{0}', space=vmem, size = 0x400, scoped, tag = 'input window, operand 4']
    #allocation11 [shape = 'u8[32768]{0}', space=vmem, size = 0x8000, scoped, tag = 'output window, operand 0']
    %10 = vsyncpa [#allocation3], 0
    %s11 = scalar_lea.sflag [#allocation3], 1
    %12 = vsyncpa %s11, 0
    %13 = vsyncpa [#allocation6], 0
    %s14 = scalar_lea.sflag [#allocation6], 1
    %15 = vsyncpa %s14, 0
    %16 = vsyncpa [#allocation9], 0
    %s17 = scalar_lea.sflag [#allocation9], 1
    %18 = vsyncpa %s17, 0
    %19 = vsyncpa [#allocation4], 0
    %s20 = scalar_lea.sflag [#allocation4], 1
    %21 = vsyncpa %s20, 0
    loop: start=0, step=1, limit=8
    $region2: #{difference_integrated_hg_filter_forward.6} parent=1 // loop_pre_header
      _
    $region3: #{difference_integrated_hg_filter_forward.6} parent=1 // loop_header
      %s23 = sphi 0, %s27
      %p24 = scmp.ge.s32.totalorder %s23, 8
      %s30 = sphi 0, %s42
      %s31 = sphi 0, %s38
      %s32 = sphi 0, %s30
      %s33 = sphi 0, %s31
      %s34 = sphi 0, %s32
      %s35 = sphi 0, %s33
      %s45 = sphi 0, %s47
      %s48 = sphi 0, %s45
      %s49 = sphi 0, %s48
      %s65 = sphi 0, %s49
      %s71 = sphi 0, %s73
      %s74 = sphi 0, %s71
      %s75 = sphi 0, %s74
      %s91 = sphi 0, %s75
      %s97 = sphi 0, %s99
      %s100 = sphi 0, %s97
      %s101 = sphi 0, %s100
      %s117 = sphi 0, %s101
      %s123 = sphi 0, %s125
      %s126 = sphi 0, %s123
      %s127 = sphi 0, %s126
      %s143 = sphi 0, %s127
      %s149 = sphi 0, %s151
      %s152 = sphi 0, %s149
      %s153 = sphi 0, %s152
      %s169 = sphi 0, %s153
      %s177 = sphi 0, %s179
      %s180 = sphi 0, %s177
      %s181 = sphi 0, %s180
      %s197 = sphi 0, %s181
    $region4: #{difference_integrated_hg_filter_forward.6} parent=1 // loop_header_branch
      %26 = sbr.rel (%p24) target = $region8
    $region5: #{difference_integrated_hg_filter_forward.6} parent=1 // loop_body
      %s28 = ssub.s32 %s23, 1
      %s29 = ssub.s32 %s23, 2
      %s36 = sadd.s32 1, %s31
      %p37 = scmp.ge.s32.totalorder %s36, 3
      %s38 = scalar_select %p37, 0, %s36
      %s39 = sadd.s32 1, %s30
      %s40 = scalar_select %p37, %s39, %s30
      %p41 = scmp.ge.s32.totalorder %s40, 2
      %s42 = scalar_select %p41, 0, %s40
      %s43 = ssub.s32 %s30, %s42
      %p44 = scmp.eq.s32.totalorder %s43, 0
      %s46 = sadd.s32 %s45, 1
      %s47 = scalar_select %p44, %s45, %s46
      %p50 = pneg %p44
      %p51 = scmp.eq.s32.totalorder %s23, 5
      %p52 = por %p50, %p51
      %p53 = scmp.ne.s32.totalorder %s45, %s48
      %p54 = scmp.eq.s32.totalorder %s23, 0
      %p55 = por %p53, %p54
      %p56 = scmp.ne.s32.totalorder %s45, %s48
      %p57 = scmp.eq.s32.totalorder %s28, 5
      %p58 = por %p56, %p57
      %p59 = scmp.ne.s32.totalorder %s48, %s49
      %p60 = scmp.eq.s32.totalorder %s28, 0
      %p61 = por %p59, %p60
      %p62 = scmp.ne.s32.totalorder %s48, %s49
      %p63 = scmp.eq.s32.totalorder %s29, 5
      %p64 = por %p62, %p63
      %p66 = scmp.ne.s32.totalorder %s49, %s65
      %p67 = scmp.eq.s32.totalorder %s29, 0
      %p68 = por %p66, %p67
      %s69 = ssub.s32 %s31, %s38
      %p70 = scmp.eq.s32.totalorder %s69, 0
      %s72 = sadd.s32 %s71, 1
      %s73 = scalar_select %p70, %s71, %s72
      %p76 = pneg %p70
      %p77 = scmp.eq.s32.totalorder %s23, 5
      %p78 = por %p76, %p77
      %p79 = scmp.ne.s32.totalorder %s71, %s74
      %p80 = scmp.eq.s32.totalorder %s23, 0
      %p81 = por %p79, %p80
      %p82 = scmp.ne.s32.totalorder %s71, %s74
      %p83 = scmp.eq.s32.totalorder %s28, 5
      %p84 = por %p82, %p83
      %p85 = scmp.ne.s32.totalorder %s74, %s75
      %p86 = scmp.eq.s32.totalorder %s28, 0
      %p87 = por %p85, %p86
      %p88 = scmp.ne.s32.totalorder %s74, %s75
      %p89 = scmp.eq.s32.totalorder %s29, 5
      %p90 = por %p88, %p89
      %p92 = scmp.ne.s32.totalorder %s75, %s91
      %p93 = scmp.eq.s32.totalorder %s29, 0
      %p94 = por %p92, %p93
      %s95 = ssub.s32 %s30, %s42
      %p96 = scmp.eq.s32.totalorder %s95, 0
      %s98 = sadd.s32 %s97, 1
      %s99 = scalar_select %p96, %s97, %s98
      %p102 = pneg %p96
      %p103 = scmp.eq.s32.totalorder %s23, 5
      %p104 = por %p102, %p103
      %p105 = scmp.ne.s32.totalorder %s97, %s100
      %p106 = scmp.eq.s32.totalorder %s23, 0
      %p107 = por %p105, %p106
      %p108 = scmp.ne.s32.totalorder %s97, %s100
      %p109 = scmp.eq.s32.totalorder %s28, 5
      %p110 = por %p108, %p109
      %p111 = scmp.ne.s32.totalorder %s100, %s101
      %p112 = scmp.eq.s32.totalorder %s28, 0
      %p113 = por %p111, %p112
      %p114 = scmp.ne.s32.totalorder %s100, %s101
      %p115 = scmp.eq.s32.totalorder %s29, 5
      %p116 = por %p114, %p115
      %p118 = scmp.ne.s32.totalorder %s101, %s117
      %p119 = scmp.eq.s32.totalorder %s29, 0
      %p120 = por %p118, %p119
      %s121 = ssub.s32 %s31, %s38
      %p122 = scmp.eq.s32.totalorder %s121, 0
      %s124 = sadd.s32 %s123, 1
      %s125 = scalar_select %p122, %s123, %s124
      %p128 = pneg %p122
      %p129 = scmp.eq.s32.totalorder %s23, 5
      %p130 = por %p128, %p129
      %p131 = scmp.ne.s32.totalorder %s123, %s126
      %p132 = scmp.eq.s32.totalorder %s23, 0
      %p133 = por %p131, %p132
      %p134 = scmp.ne.s32.totalorder %s123, %s126
      %p135 = scmp.eq.s32.totalorder %s28, 5
      %p136 = por %p134, %p135
      %p137 = scmp.ne.s32.totalorder %s126, %s127
      %p138 = scmp.eq.s32.totalorder %s28, 0
      %p139 = por %p137, %p138
      %p140 = scmp.ne.s32.totalorder %s126, %s127
      %p141 = scmp.eq.s32.totalorder %s29, 5
      %p142 = por %p140, %p141
      %p144 = scmp.ne.s32.totalorder %s127, %s143
      %p145 = scmp.eq.s32.totalorder %s29, 0
      %p146 = por %p144, %p145
      %s147 = ssub.s32 %s31, %s38
      %p148 = scmp.eq.s32.totalorder %s147, 0
      %s150 = sadd.s32 %s149, 1
      %s151 = scalar_select %p148, %s149, %s150
      %p154 = pneg %p148
      %p155 = scmp.eq.s32.totalorder %s23, 5
      %p156 = por %p154, %p155
      %p157 = scmp.ne.s32.totalorder %s149, %s152
      %p158 = scmp.eq.s32.totalorder %s23, 0
      %p159 = por %p157, %p158
      %p160 = scmp.ne.s32.totalorder %s149, %s152
      %p161 = scmp.eq.s32.totalorder %s28, 5
      %p162 = por %p160, %p161
      %p163 = scmp.ne.s32.totalorder %s152, %s153
      %p164 = scmp.eq.s32.totalorder %s28, 0
      %p165 = por %p163, %p164
      %p166 = scmp.ne.s32.totalorder %s152, %s153
      %p167 = scmp.eq.s32.totalorder %s29, 5
      %p168 = por %p166, %p167
      %p170 = scmp.ne.s32.totalorder %s153, %s169
      %p171 = scmp.eq.s32.totalorder %s29, 0
      %p172 = por %p170, %p171
      %s173 = ssub.s32 %s30, %s42
      %s174 = ssub.s32 %s31, %s38
      %s175 = sor.u32 %s173, %s174
      %p176 = scmp.eq.s32.totalorder %s175, 0
      %s178 = sadd.s32 %s177, 1
      %s179 = scalar_select %p176, %s177, %s178
      %p182 = pneg %p176
      %p183 = scmp.eq.s32.totalorder %s23, 5
      %p184 = por %p182, %p183
      %p185 = scmp.ne.s32.totalorder %s177, %s180
      %p186 = scmp.eq.s32.totalorder %s23, 0
      %p187 = por %p185, %p186
      %p188 = scmp.ne.s32.totalorder %s177, %s180
      %p189 = scmp.eq.s32.totalorder %s28, 5
      %p190 = por %p188, %p189
      %p191 = scmp.ne.s32.totalorder %s180, %s181
      %p192 = scmp.eq.s32.totalorder %s28, 0
      %p193 = por %p191, %p192
      %p194 = scmp.ne.s32.totalorder %s180, %s181
      %p195 = scmp.eq.s32.totalorder %s29, 5
      %p196 = por %p194, %p195
      %p198 = scmp.ne.s32.totalorder %s181, %s197
      %p199 = scmp.eq.s32.totalorder %s29, 0
      %p200 = por %p198, %p199
      %p201 = scmp.le.s32.totalorder 1, %s23
      %p202 = scmp.lt.s32.totalorder %s23, 7
      %p203 = pnand %p201, %p202
      %p204 = pneg %p203
      // Predicated region
      $region9: #{difference_integrated_hg_filter_forward.6} parent=5 // pred_check
        _
      $region10: #{difference_integrated_hg_filter_forward.6} parent=5 // pred_check_branch
        %206 = sbr.rel (%p203) target = $region12
      $region11: #{difference_integrated_hg_filter_forward.6} parent=5 // pred_region
        %s207 = ssub.s32 %s23, 1
      $region12: #{difference_integrated_hg_filter_forward.6} parent=5 // pred_fallthru
        _
      %p208 = scmp.lt.s32.totalorder %s23, 6
      // Predicated region
      $region13: #{difference_integrated_hg_filter_forward.6} parent=5 // pred_check
        %p209 = pneg %p208
      $region14: #{difference_integrated_hg_filter_forward.6} parent=5 // pred_check_branch
        %211 = sbr.rel (%p209) target = $region16
      $region15: #{difference_integrated_hg_filter_forward.6} parent=5 // pred_region
        // Predicated region
        $region17: #{difference_integrated_hg_filter_forward.6} parent=15 // pred_check
          %p212 = pneg %p55
        $region18: #{difference_integrated_hg_filter_forward.6} parent=15 // pred_check_branch
          %214 = sbr.rel (%p212) target = $region20
        $region19: #{difference_integrated_hg_filter_forward.6} parent=15 // pred_region
          %s215 = sand.u32 %s45, 1
          %s216 = scalar_lea.sflag [#allocation3], %s215
          %s217 = sand.u32 %s45, 1
          %s218 = smul.addr %s217, 80
          %s219 = scalar_lea.vmem [#allocation2], %s218
          %s221 = ssub.s32 1280, 1280
          %222 = vsyncadd %s216, %s221
          %s223 = smul.addr %s30, 20
          %s224 = smul.addr %s223, 64
          %s225 = scalar_lea.hbm %s0, %s224
          %s226 = sshll.u32 %s219, 4
          %s227 = int_to_ptr.vmem [resolvable:$true] %s226
          %232 = dma.hbm_to_vmem [thread:$0]  %s225, 1280, %s227, %s216, 64, 64, 4
        $region20: #{difference_integrated_hg_filter_forward.6} parent=15 // pred_fallthru
          _
        // Predicated region
        $region21: #{difference_integrated_hg_filter_forward.6} parent=15 // pred_check
          %p233 = pneg %p81
        $region22: #{difference_integrated_hg_filter_forward.6} parent=15 // pred_check_branch
          %235 = sbr.rel (%p233) target = $region24
        $region23: #{difference_integrated_hg_filter_forward.6} parent=15 // pred_region
          %s236 = sand.u32 %s23, 1
          %s237 = scalar_lea.sflag [#allocation6], %s236
          %s238 = sand.u32 %s71, 1
          %s239 = smul.addr %s238, 576
          %s240 = scalar_lea.vmem [#allocation5], %s239
          %s242 = ssub.s32 9216, 9216
          %243 = vsyncadd %s237, %s242
          %s244 = smul.addr %s31, 64
          %s245 = scalar_lea.hbm %s1, %s244
          %s246 = sshll.u32 %s240, 4
          %s247 = int_to_ptr.vmem [resolvable:$true] %s246
          %252 = dma.hbm_to_vmem [thread:$0]  %s245, 9216, %s247, %s237, 192, 64, 4
        $region24: #{difference_integrated_hg_filter_forward.6} parent=15 // pred_fallthru
          _
        // Predicated region
        $region25: #{difference_integrated_hg_filter_forward.6} parent=15 // pred_check
          %p253 = pneg %p107
        $region26: #{difference_integrated_hg_filter_forward.6} parent=15 // pred_check_branch
          %255 = sbr.rel (%p253) target = $region28
        $region27: #{difference_integrated_hg_filter_forward.6} parent=15 // pred_region
          %s256 = sand.u32 %s23, 1
          %s257 = scalar_lea.sflag [#allocation6], %s256
          %s258 = sand.u32 %s97, 1
          %s259 = smul.addr %s258, 160
          %s260 = scalar_lea.vmem [#allocation7], %s259
          %s262 = ssub.s32 2560, 2560
          %263 = vsyncadd %s257, %s262
          %s264 = smul.addr %s30, 40
          %s265 = smul.addr %s264, 64
          %s266 = scalar_lea.hbm %s2, %s265
          %s267 = sshll.u32 %s260, 4
          %s268 = int_to_ptr.vmem [resolvable:$true] %s267
          %273 = dma.hbm_to_vmem [thread:$0]  %s266, 2560, %s268, %s257, 128, 128, 8
        $region28: #{difference_integrated_hg_filter_forward.6} parent=15 // pred_fallthru
          _
        // Predicated region
        $region29: #{difference_integrated_hg_filter_forward.6} parent=15 // pred_check
          %p274 = pneg %p133
        $region30: #{difference_integrated_hg_filter_forward.6} parent=15 // pred_check_branch
          %276 = sbr.rel (%p274) target = $region32
        $region31: #{difference_integrated_hg_filter_forward.6} parent=15 // pred_region
          %s277 = sand.u32 %s23, 1
          %s278 = scalar_lea.sflag [#allocation9], %s277
          %s279 = sand.u32 %s123, 1
          %s280 = smul.addr %s279, 1152
          %s281 = scalar_lea.vmem [#allocation8], %s280
          %s283 = ssub.s32 18432, 18432
          %284 = vsyncadd %s278, %s283
          %s285 = smul.addr %s31, 64
          %s286 = scalar_lea.hbm %s3, %s285
          %s287 = sshll.u32 %s281, 4
          %s288 = int_to_ptr.vmem [resolvable:$true] %s287
          %293 = dma.hbm_to_vmem [thread:$0]  %s286, 18432, %s288, %s278, 192, 64, 4
        $region32: #{difference_integrated_hg_filter_forward.6} parent=15 // pred_fallthru
          _
        // Predicated region
        $region33: #{difference_integrated_hg_filter_forward.6} parent=15 // pred_check
          %p294 = pneg %p159
        $region34: #{difference_integrated_hg_filter_forward.6} parent=15 // pred_check_branch
          %296 = sbr.rel (%p294) target = $region36
        $region35: #{difference_integrated_hg_filter_forward.6} parent=15 // pred_region
          %s297 = sand.u32 %s23, 1
          %s298 = scalar_lea.sflag [#allocation9], %s297
          %s299 = sand.u32 %s149, 1
          %s300 = scalar_lea.vmem [#allocation10], %s299
          %s302 = ssub.s32 16, 16
          %303 = vsyncadd %s298, %s302
          %s304 = smul.addr %s31, 16
          %s305 = scalar_lea.hbm %s4, %s304
          %s307 = sshll.u32 %s300, 4
          %s308 = int_to_ptr.vmem [resolvable:$true] %s307
          %310 = dma.hbm_to_vmem [thread:$0]  %s305, 16, %s308, %s298
        $region36: #{difference_integrated_hg_filter_forward.6} parent=15 // pred_fallthru
          _
      $region16: #{difference_integrated_hg_filter_forward.6} parent=5 // pred_fallthru
        _
      %p311 = scmp.le.s32.totalorder 1, %s23
      %p312 = scmp.lt.s32.totalorder %s23, 7
      %p313 = pnand %p311, %p312
      %p314 = pneg %p313
      // Predicated region
      $region37: #{difference_integrated_hg_filter_forward.6} parent=5 // pred_check
        _
      $region38: #{difference_integrated_hg_filter_forward.6} parent=5 // pred_check_branch
        %316 = sbr.rel (%p313) target = $region40
      $region39: #{difference_integrated_hg_filter_forward.6} parent=5 // pred_region
        %s317 = ssub.s32 %s23, 1
        %s318 = sand.u32 %s48, 1
        %s319 = scalar_lea.sflag [#allocation3], %s318
        %s320 = sand.u32 %s48, 1
        %s321 = smul.addr %s320, 80
        %s322 = scalar_lea.vmem [#allocation2], %s321
        // Predicated region
        $region41: #{difference_integrated_hg_filter_forward.6} parent=39 // pred_check
          %p323 = pneg %p61
        $region42: #{difference_integrated_hg_filter_forward.6} parent=39 // pred_check_branch
          %325 = sbr.rel (%p323) target = $region44
        $region43: #{difference_integrated_hg_filter_forward.6} parent=39 // pred_region
          %326 = dma.done %s319, 1280
        $region44: #{difference_integrated_hg_filter_forward.6} parent=39 // pred_fallthru
          _
        %s327 = sand.u32 %s28, 1
        %s328 = scalar_lea.sflag [#allocation6], %s327
        %s329 = sand.u32 %s74, 1
        %s330 = smul.addr %s329, 576
        %s331 = scalar_lea.vmem [#allocation5], %s330
        // Predicated region
        $region45: #{difference_integrated_hg_filter_forward.6} parent=39 // pred_check
          %p332 = pneg %p87
        $region46: #{difference_integrated_hg_filter_forward.6} parent=39 // pred_check_branch
          %334 = sbr.rel (%p332) target = $region48
        $region47: #{difference_integrated_hg_filter_forward.6} parent=39 // pred_region
          %335 = dma.done %s328, 9216
        $region48: #{difference_integrated_hg_filter_forward.6} parent=39 // pred_fallthru
          _
        %s336 = sand.u32 %s28, 1
        %s337 = scalar_lea.sflag [#allocation6], %s336
        %s338 = sand.u32 %s100, 1
        %s339 = smul.addr %s338, 160
        %s340 = scalar_lea.vmem [#allocation7], %s339
        // Predicated region
        $region49: #{difference_integrated_hg_filter_forward.6} parent=39 // pred_check
          %p341 = pneg %p113
        $region50: #{difference_integrated_hg_filter_forward.6} parent=39 // pred_check_branch
          %343 = sbr.rel (%p341) target = $region52
        $region51: #{difference_integrated_hg_filter_forward.6} parent=39 // pred_region
          %344 = dma.done %s337, 2560
        $region52: #{difference_integrated_hg_filter_forward.6} parent=39 // pred_fallthru
          _
        %s345 = sand.u32 %s28, 1
        %s346 = scalar_lea.sflag [#allocation9], %s345
        %s347 = sand.u32 %s126, 1
        %s348 = smul.addr %s347, 1152
        %s349 = scalar_lea.vmem [#allocation8], %s348
        // Predicated region
        $region53: #{difference_integrated_hg_filter_forward.6} parent=39 // pred_check
          %p350 = pneg %p139
        $region54: #{difference_integrated_hg_filter_forward.6} parent=39 // pred_check_branch
          %352 = sbr.rel (%p350) target = $region56
        $region55: #{difference_integrated_hg_filter_forward.6} parent=39 // pred_region
          %353 = dma.done %s346, 18432
        $region56: #{difference_integrated_hg_filter_forward.6} parent=39 // pred_fallthru
          _
        %s354 = sand.u32 %s28, 1
        %s355 = scalar_lea.sflag [#allocation9], %s354
        %s356 = sand.u32 %s152, 1
        %s357 = scalar_lea.vmem [#allocation10], %s356
        // Predicated region
        $region57: #{difference_integrated_hg_filter_forward.6} parent=39 // pred_check
          %p358 = pneg %p165
        $region58: #{difference_integrated_hg_filter_forward.6} parent=39 // pred_check_branch
          %360 = sbr.rel (%p358) target = $region60
        $region59: #{difference_integrated_hg_filter_forward.6} parent=39 // pred_region
          %361 = dma.done %s355, 16
        $region60: #{difference_integrated_hg_filter_forward.6} parent=39 // pred_fallthru
          _
        %s362 = sand.u32 %s48, 1
        %s363 = scalar_lea.sflag [#allocation3], %s362
        %s364 = sand.u32 %s48, 1
        %s365 = smul.addr %s364, 80
        %s366 = scalar_lea.vmem [#allocation2], %s365
        %p367 = pneg %p61
        %p368 = pneg %p58
        %s369 = sand.u32 %s28, 1
        %s370 = scalar_lea.sflag [#allocation6], %s369
        %s371 = sand.u32 %s74, 1
        %s372 = smul.addr %s371, 576
        %s373 = scalar_lea.vmem [#allocation5], %s372
        %p374 = pneg %p87
        %p375 = pneg %p84
        %s376 = sand.u32 %s28, 1
        %s377 = scalar_lea.sflag [#allocation6], %s376
        %s378 = sand.u32 %s100, 1
        %s379 = smul.addr %s378, 160
        %s380 = scalar_lea.vmem [#allocation7], %s379
        %p381 = pneg %p113
        %p382 = pneg %p110
        %s383 = sand.u32 %s28, 1
        %s384 = scalar_lea.sflag [#allocation9], %s383
        %s385 = sand.u32 %s126, 1
        %s386 = smul.addr %s385, 1152
        %s387 = scalar_lea.vmem [#allocation8], %s386
        %p388 = pneg %p139
        %p389 = pneg %p136
        %s390 = sand.u32 %s28, 1
        %s391 = scalar_lea.sflag [#allocation9], %s390
        %s392 = sand.u32 %s152, 1
        %s393 = scalar_lea.vmem [#allocation10], %s392
        %p394 = pneg %p165
        %p395 = pneg %p162
        %p396 = pneg %p193
        %p397 = pneg %p190
        %s398 = sand.u32 %s180, 1
        %s399 = scalar_lea.sflag [#allocation4], %s398
        %s400 = sand.u32 %s180, 1
        %s401 = smul.addr %s400, 32
        %s402 = scalar_lea.vmem [#allocation11], %s401
        %v404 = vld [vmem:[%s322] sm:$0xf]
        %v405 = vld [vmem:[%s322 + $0x4] sm:$0x1]
        %v406 = vld [vmem:[%s322 + $0x8] sm:$0xf]
        %v407 = vld [vmem:[%s322 + $0xc] sm:$0x1]
        %v408 = vld [vmem:[%s322 + $0x10] sm:$0xf]
        %v409 = vld [vmem:[%s322 + $0x14] sm:$0x1]
        %v410 = vld [vmem:[%s322 + $0x18] sm:$0xf]
        %v411 = vld [vmem:[%s322 + $0x1c] sm:$0x1]
        %v412 = vld [vmem:[%s322 + $0x20] sm:$0xf]
        %v413 = vld [vmem:[%s322 + $0x24] sm:$0x1]
        %v414 = vld [vmem:[%s322 + $0x28] sm:$0xf]
        %v415 = vld [vmem:[%s322 + $0x2c] sm:$0x1]
        %v416 = vld [vmem:[%s322 + $0x30] sm:$0xf]
        %v417 = vld [vmem:[%s322 + $0x34] sm:$0x1]
        %v418 = vld [vmem:[%s322 + $0x38] sm:$0xf]
        %v419 = vld [vmem:[%s322 + $0x3c] sm:$0x1]
        %v420 = vld [vmem:[%s322 + $0x40] sm:$0xf]
        %v421 = vld [vmem:[%s322 + $0x44] sm:$0x1]
        %v422 = vld [vmem:[%s322 + $0x48] sm:$0xf]
        %v423 = vld [vmem:[%s322 + $0x4c] sm:$0x1]
        %v424 = vld [vmem:[%s340] sm:$0xff]
        %v425 = vld [vmem:[%s340 + $0x8] sm:$0x11]
        %v426 = vld [vmem:[%s340 + $0x10] sm:$0xff]
        %v427 = vld [vmem:[%s340 + $0x18] sm:$0x11]
        %v428 = vld [vmem:[%s340 + $0x20] sm:$0xff]
        %v429 = vld [vmem:[%s340 + $0x28] sm:$0x11]
        %v430 = vld [vmem:[%s340 + $0x30] sm:$0xff]
        %v431 = vld [vmem:[%s340 + $0x38] sm:$0x11]
        %v432 = vld [vmem:[%s340 + $0x40] sm:$0xff]
        %v433 = vld [vmem:[%s340 + $0x48] sm:$0x11]
        %v434 = vld [vmem:[%s340 + $0x50] sm:$0xff]
        %v435 = vld [vmem:[%s340 + $0x58] sm:$0x11]
        %v436 = vld [vmem:[%s340 + $0x60] sm:$0xff]
        %v437 = vld [vmem:[%s340 + $0x68] sm:$0x11]
        %v438 = vld [vmem:[%s340 + $0x70] sm:$0xff]
        %v439 = vld [vmem:[%s340 + $0x78] sm:$0x11]
        %v440 = vld [vmem:[%s340 + $0x80] sm:$0xff]
        %v441 = vld [vmem:[%s340 + $0x88] sm:$0x11]
        %v442 = vld [vmem:[%s340 + $0x90] sm:$0xff]
        %v443 = vld [vmem:[%s340 + $0x98] sm:$0x11]
        %v444 = vld [vmem:[%s331] sm:$0xf]
        %v445 = vld [vmem:[%s331 + $0x4] sm:$0xf]
        %v446 = vld [vmem:[%s331 + $0x8] sm:$0xf]
        %v447 = vld [vmem:[%s331 + $0xc] sm:$0xf]
        %v448 = vld [vmem:[%s331 + $0x10] sm:$0xf]
        %v449 = vld [vmem:[%s331 + $0x14] sm:$0xf]
        %v450 = vld [vmem:[%s331 + $0x18] sm:$0xf]
        %v451 = vld [vmem:[%s331 + $0x1c] sm:$0xf]
        %v452 = vld [vmem:[%s331 + $0x20] sm:$0xf]
        %v453 = vld [vmem:[%s331 + $0x24] sm:$0xf]
        %v454 = vld [vmem:[%s331 + $0x28] sm:$0xf]
        %v455 = vld [vmem:[%s331 + $0x2c] sm:$0xf]
        %v456 = vld [vmem:[%s331 + $0x30] sm:$0xf]
        %v457 = vld [vmem:[%s331 + $0x34] sm:$0xf]
        %v458 = vld [vmem:[%s331 + $0x38] sm:$0xf]
        %v459 = vld [vmem:[%s331 + $0x3c] sm:$0xf]
        %v460 = vld [vmem:[%s349] sm:$0xf]
        %v461 = vld [vmem:[%s349 + $0x4] sm:$0xf]
        %v462 = vld [vmem:[%s349 + $0x8] sm:$0xf]
        %v463 = vld [vmem:[%s349 + $0xc] sm:$0xf]
        %v464 = vld [vmem:[%s349 + $0x10] sm:$0xf]
        %v465 = vld [vmem:[%s349 + $0x14] sm:$0xf]
        %v466 = vld [vmem:[%s349 + $0x18] sm:$0xf]
        %v467 = vld [vmem:[%s349 + $0x1c] sm:$0xf]
        %v468 = vld [vmem:[%s349 + $0x20] sm:$0xf]
        %v469 = vld [vmem:[%s349 + $0x24] sm:$0xf]
        %v470 = vld [vmem:[%s349 + $0x28] sm:$0xf]
        %v471 = vld [vmem:[%s349 + $0x2c] sm:$0xf]
        %v472 = vld [vmem:[%s349 + $0x30] sm:$0xf]
        %v473 = vld [vmem:[%s349 + $0x34] sm:$0xf]
        %v474 = vld [vmem:[%s349 + $0x38] sm:$0xf]
        %v475 = vld [vmem:[%s349 + $0x3c] sm:$0xf]
        %v476 = vld [vmem:[%s349 + $0x40] sm:$0xf]
        %v477 = vld [vmem:[%s349 + $0x44] sm:$0xf]
        %v478 = vld [vmem:[%s349 + $0x48] sm:$0xf]
        %v479 = vld [vmem:[%s349 + $0x4c] sm:$0xf]
        %v480 = vld [vmem:[%s349 + $0x50] sm:$0xf]
        %v481 = vld [vmem:[%s349 + $0x54] sm:$0xf]
        %v482 = vld [vmem:[%s349 + $0x58] sm:$0xf]
        %v483 = vld [vmem:[%s349 + $0x5c] sm:$0xf]
        %v484 = vld [vmem:[%s349 + $0x60] sm:$0xf]
        %v485 = vld [vmem:[%s349 + $0x64] sm:$0xf]
        %v486 = vld [vmem:[%s349 + $0x68] sm:$0xf]
        %v487 = vld [vmem:[%s349 + $0x6c] sm:$0xf]
        %v488 = vld [vmem:[%s349 + $0x70] sm:$0xf]
        %v489 = vld [vmem:[%s349 + $0x74] sm:$0xf]
        %v490 = vld [vmem:[%s349 + $0x78] sm:$0xf]
        %v491 = vld [vmem:[%s349 + $0x7c] sm:$0xf]
        %v500 = vunpack.c.l.b16 %v424
        %v501 = vunpack.c.h.b16 %v424
        %v502 = vunpack.c.l.b16 %v426
        %v503 = vunpack.c.h.b16 %v426
        %v504 = vunpack.c.l.b16 %v428
        %v505 = vunpack.c.h.b16 %v428
        %v506 = vunpack.c.l.b16 %v430
        %v507 = vunpack.c.h.b16 %v430
        %v508 = vunpack.c.l.b16 %v432
        %v509 = vunpack.c.h.b16 %v432
        %v510 = vunpack.c.l.b16 %v434
        %v511 = vunpack.c.h.b16 %v434
        %v512 = vunpack.c.l.b16 %v436
        %v513 = vunpack.c.h.b16 %v436
        %v514 = vunpack.c.l.b16 %v438
        %v515 = vunpack.c.h.b16 %v438
        %v516 = vpack.c.b16 %v502, %v500
        %v517 = vpack.c.b16 %v503, %v501
        %v518 = vpack.c.b16 %v506, %v504
        %v519 = vpack.c.b16 %v507, %v505
        %v520 = vpack.c.b16 %v510, %v508
        %v521 = vpack.c.b16 %v511, %v509
        %v522 = vpack.c.b16 %v514, %v512
        %v523 = vpack.c.b16 %v515, %v513
        %v564 = vunpack.c.l.b16 %v460
        %v565 = vunpack.c.l.b16 %v461
        %v566 = vunpack.c.l.b16 %v462
        %v567 = vunpack.c.l.b16 %v463
        %v568 = vunpack.c.l.b16 %v464
        %v569 = vunpack.c.l.b16 %v465
        %v570 = vunpack.c.l.b16 %v466
        %v571 = vunpack.c.l.b16 %v467
        %v572 = vunpack.c.l.b16 %v468
        %v573 = vunpack.c.l.b16 %v469
        %v574 = vunpack.c.l.b16 %v470
        %v575 = vunpack.c.l.b16 %v471
        %v576 = vunpack.c.l.b16 %v472
        %v577 = vunpack.c.l.b16 %v473
        %v578 = vunpack.c.l.b16 %v474
        %v579 = vunpack.c.l.b16 %v475
        %v580 = vunpack.c.l.b16 %v476
        %v581 = vunpack.c.l.b16 %v477
        %v582 = vunpack.c.l.b16 %v478
        %v583 = vunpack.c.l.b16 %v479
        %v584 = vunpack.c.l.b16 %v480
        %v585 = vunpack.c.l.b16 %v481
        %v586 = vunpack.c.l.b16 %v482
        %v587 = vunpack.c.l.b16 %v483
        %v588 = vunpack.c.l.b16 %v484
        %v589 = vunpack.c.l.b16 %v485
        %v590 = vunpack.c.l.b16 %v486
        %v591 = vunpack.c.l.b16 %v487
        %v592 = vunpack.c.l.b16 %v488
        %v593 = vunpack.c.l.b16 %v489
        %v594 = vunpack.c.l.b16 %v490
        %v595 = vunpack.c.l.b16 %v491
        %v596 = vpack.c.b16 %v565, %v564
        %v597 = vpack.c.b16 %v567, %v566
        %v598 = vpack.c.b16 %v569, %v568
        %v599 = vpack.c.b16 %v571, %v570
        %v600 = vpack.c.b16 %v573, %v572
        %v601 = vpack.c.b16 %v575, %v574
        %v602 = vpack.c.b16 %v577, %v576
        %v603 = vpack.c.b16 %v579, %v578
        %v604 = vpack.c.b16 %v581, %v580
        %v605 = vpack.c.b16 %v583, %v582
        %v606 = vpack.c.b16 %v585, %v584
        %v607 = vpack.c.b16 %v587, %v586
        %v608 = vpack.c.b16 %v589, %v588
        %v609 = vpack.c.b16 %v591, %v590
        %v610 = vpack.c.b16 %v593, %v592
        %v611 = vpack.c.b16 %v595, %v594
        %628 = vmatprep.subr.bf16.mxu0 0
        %629 = vmatpush1.bf16.msra.mxu0 %v596
        %630 = vmatprep.subr.bf16.mxu0 0
        %631 = vmatpush1.bf16.msra.mxu0 %v597
        %632 = vmatprep.subr.bf16.mxu0 0
        %633 = vmatpush1.bf16.msra.mxu0 %v598
        %634 = vmatprep.subr.bf16.mxu0 0
        %635 = vmatpush1.bf16.msra.mxu0 %v599
        %636 = vmatprep.subr.bf16.mxu0 0
        %637 = vmatpush1.bf16.msra.mxu0 %v600
        %638 = vmatprep.subr.bf16.mxu0 0
        %639 = vmatpush1.bf16.msra.mxu0 %v601
        %640 = vmatprep.subr.bf16.mxu0 0
        %641 = vmatpush1.bf16.msra.mxu0 %v602
        %642 = vmatprep.subr.bf16.mxu0 0
        %643 = vmatpush1.bf16.msra.mxu0 %v603
        %644 = vmatprep.subr.bf16.mxu0 0
        %645 = vmatpush1.bf16.msra.mxu0 %v604
        %646 = vmatprep.subr.bf16.mxu0 0
        %647 = vmatpush1.bf16.msra.mxu0 %v605
        %648 = vmatprep.subr.bf16.mxu0 0
        %649 = vmatpush1.bf16.msra.mxu0 %v606
        %650 = vmatprep.subr.bf16.mxu0 0
        %651 = vmatpush1.bf16.msra.mxu0 %v607
        %652 = vmatprep.subr.bf16.mxu0 0
        %653 = vmatpush1.bf16.msra.mxu0 %v608
        %654 = vmatprep.subr.bf16.mxu0 0
        %655 = vmatpush1.bf16.msra.mxu0 %v609
        %656 = vmatprep.subr.bf16.mxu0 0
        %657 = vmatpush1.bf16.msra.mxu0 %v610
        %658 = vmatprep.subr.bf16.mxu0 0
        %659 = vmatpush1.bf16.msra.mxu0 %v611
        %660 = vmatprep.mubr.bf16.mxu0 %v517
        %661 = vmatmul.mubr.bf16.gmra.mrb[0].mxu0 %v516
        %v662 = vpop.f32.mrb[0].mxu0
        %v663 = vadd.f32 0.0, %v662
        %v664 = vpop.f32.mrb[0].mxu0
        %v665 = vpop.f32.mrb[0].mxu0
        %v666 = vadd.f32 0.0, %v665
        %v667 = vpop.f32.mrb[0].mxu0
        %668 = vmatprep.mubr.bf16.mxu0 %v519
        %669 = vmatmul.mubr.bf16.gmra.mrb[0].mxu0 %v518
        %v670 = vpop.f32.mrb[0].mxu0
        %v671 = vadd.f32 0.0, %v670
        %v672 = vpop.f32.mrb[0].mxu0
        %v673 = vpop.f32.mrb[0].mxu0
        %v674 = vadd.f32 0.0, %v673
        %v675 = vpop.f32.mrb[0].mxu0
        %676 = vmatprep.mubr.bf16.mxu0 %v521
        %677 = vmatmul.mubr.bf16.gmra.mrb[0].mxu0 %v520
        %v678 = vpop.f32.mrb[0].mxu0
        %v679 = vadd.f32 0.0, %v678
        %v680 = vpop.f32.mrb[0].mxu0
        %v681 = vpop.f32.mrb[0].mxu0
        %v682 = vadd.f32 0.0, %v681
        %v683 = vpop.f32.mrb[0].mxu0
        %684 = vmatprep.mubr.bf16.mxu0 %v523
        %685 = vmatmul.mubr.bf16.gmra.mrb[0].mxu0 %v522
        %v686 = vpop.f32.mrb[0].mxu0
        %v687 = vadd.f32 0.0, %v686
        %v688 = vpop.f32.mrb[0].mxu0
        %v689 = vpop.f32.mrb[0].mxu0
        %v690 = vadd.f32 0.0, %v689
        %v691 = vpop.f32.mrb[0].mxu0
        %692 = vdwg.mxu0
        %v701 = vunpack.c.l.b16 %v404
        %v702 = vunpack.c.l.b16 %v406
        %v703 = vunpack.c.l.b16 %v408
        %v704 = vunpack.c.l.b16 %v410
        %v705 = vunpack.c.l.b16 %v412
        %v706 = vunpack.c.l.b16 %v414
        %v707 = vunpack.c.l.b16 %v416
        %v708 = vunpack.c.l.b16 %v418
        %v709 = vpack.c.b16 %v702, %v701
        %v710 = vpack.c.b16 %v704, %v703
        %v711 = vpack.c.b16 %v706, %v705
        %v712 = vpack.c.b16 %v708, %v707
        %v733 = vunpack.c.l.b16 %v444
        %v734 = vunpack.c.l.b16 %v445
        %v735 = vunpack.c.l.b16 %v446
        %v736 = vunpack.c.l.b16 %v447
        %v737 = vunpack.c.l.b16 %v448
        %v738 = vunpack.c.l.b16 %v449
        %v739 = vunpack.c.l.b16 %v450
        %v740 = vunpack.c.l.b16 %v451
        %v741 = vunpack.c.l.b16 %v452
        %v742 = vunpack.c.l.b16 %v453
        %v743 = vunpack.c.l.b16 %v454
        %v744 = vunpack.c.l.b16 %v455
        %v745 = vunpack.c.l.b16 %v456
        %v746 = vunpack.c.l.b16 %v457
        %v747 = vunpack.c.l.b16 %v458
        %v748 = vunpack.c.l.b16 %v459
        %v749 = vpack.c.b16 %v734, %v733
        %v750 = vpack.c.b16 %v736, %v735
        %v751 = vpack.c.b16 %v738, %v737
        %v752 = vpack.c.b16 %v740, %v739
        %v753 = vpack.c.b16 %v742, %v741
        %v754 = vpack.c.b16 %v744, %v743
        %v755 = vpack.c.b16 %v746, %v745
        %v756 = vpack.c.b16 %v748, %v747
        %765 = vmatprep.subr.bf16.mxu0 0
        %766 = vmatpush1.bf16.msra.mxu0 %v749
        %767 = vmatprep.subr.bf16.mxu0 0
        %768 = vmatpush1.bf16.msra.mxu0 %v750
        %769 = vmatprep.subr.bf16.mxu0 0
        %770 = vmatpush1.bf16.msra.mxu0 %v751
        %771 = vmatprep.subr.bf16.mxu0 0
        %772 = vmatpush1.bf16.msra.mxu0 %v752
        %773 = vmatprep.subr.bf16.mxu0 0
        %774 = vmatpush1.bf16.msra.mxu0 %v753
        %775 = vmatprep.subr.bf16.mxu0 0
        %776 = vmatpush1.bf16.msra.mxu0 %v754
        %777 = vmatprep.subr.bf16.mxu0 0
        %778 = vmatpush1.bf16.msra.mxu0 %v755
        %779 = vmatprep.subr.bf16.mxu0 0
        %780 = vmatpush1.bf16.msra.mxu0 %v756
        %781 = vmatprep.subr.bf16.mxu0 0
        %782 = vmatpush1.bf16.msra.mxu0 0
        %783 = vmatprep.subr.bf16.mxu0 0
        %784 = vmatpush1.bf16.msra.mxu0 0
        %785 = vmatprep.subr.bf16.mxu0 0
        %786 = vmatpush1.bf16.msra.mxu0 0
        %787 = vmatprep.subr.bf16.mxu0 0
        %788 = vmatpush1.bf16.msra.mxu0 0
        %789 = vmatprep.subr.bf16.mxu0 0
        %790 = vmatpush1.bf16.msra.mxu0 0
        %791 = vmatprep.subr.bf16.mxu0 0
        %792 = vmatpush1.bf16.msra.mxu0 0
        %793 = vmatprep.subr.bf16.mxu0 0
        %794 = vmatpush1.bf16.msra.mxu0 0
        %795 = vmatprep.subr.bf16.mxu0 0
        %796 = vmatpush1.bf16.msra.mxu0 0
        %797 = vmatprep.mubr.bf16.mxu0 0
        %798 = vmatmul.mubr.bf16.gmra.mrb[0].mxu0 %v709
        %v799 = vpop.f32.mrb[0].mxu0
        %v800 = vadd.f32 %v663, %v799
        %v801 = vpop.f32.mrb[0].mxu0
        %v802 = vpop.f32.mrb[0].mxu0
        %v803 = vadd.f32 %v666, %v802
        %v804 = vpop.f32.mrb[0].mxu0
        %805 = vmatprep.mubr.bf16.mxu0 0
        %806 = vmatmul.mubr.bf16.gmra.mrb[0].mxu0 %v710
        %v807 = vpop.f32.mrb[0].mxu0
        %v808 = vadd.f32 %v671, %v807
        %v809 = vpop.f32.mrb[0].mxu0
        %v810 = vpop.f32.mrb[0].mxu0
        %v811 = vadd.f32 %v674, %v810
        %v812 = vpop.f32.mrb[0].mxu0
        %813 = vmatprep.mubr.bf16.mxu0 0
        %814 = vmatmul.mubr.bf16.gmra.mrb[0].mxu0 %v711
        %v815 = vpop.f32.mrb[0].mxu0
        %v816 = vadd.f32 %v679, %v815
        %v817 = vpop.f32.mrb[0].mxu0
        %v818 = vpop.f32.mrb[0].mxu0
        %v819 = vadd.f32 %v682, %v818
        %v820 = vpop.f32.mrb[0].mxu0
        %821 = vmatprep.mubr.bf16.mxu0 0
        %822 = vmatmul.mubr.bf16.gmra.mrb[0].mxu0 %v712
        %v823 = vpop.f32.mrb[0].mxu0
        %v824 = vadd.f32 %v687, %v823
        %v825 = vpop.f32.mrb[0].mxu0
        %v826 = vpop.f32.mrb[0].mxu0
        %v827 = vadd.f32 %v690, %v826
        %v828 = vpop.f32.mrb[0].mxu0
        %829 = vdwg.mxu0
        %vm830 = vsmask.f32 3328
        %vm831 = vsmask.f32 7440
        %vm832 = vmor %vm830, %vm831
        %v834 = vshrl.u32 %v404, 16
        %v836 = vrot.slane %v834, 4
        %v837 = vshll.u32 %v404, 16
        %v839 = vrot.slane %v837, 5
        %v840 = vor.u32 %v836, %v839
        %v841 = vrot.slane %v840, 4
        %v843 = vshll.u32 %v405, 16
        %v845 = vrot.slane %v843, 5
        %v846 = vsel %vm832, %v841, %v845
        %v848 = vshrl.u32 %v406, 16
        %v850 = vrot.slane %v848, 4
        %v851 = vshll.u32 %v406, 16
        %v853 = vrot.slane %v851, 5
        %v854 = vor.u32 %v850, %v853
        %v855 = vrot.slane %v854, 4
        %v857 = vshll.u32 %v407, 16
        %v859 = vrot.slane %v857, 5
        %v860 = vsel %vm832, %v855, %v859
        %v862 = vshrl.u32 %v408, 16
        %v864 = vrot.slane %v862, 4
        %v865 = vshll.u32 %v408, 16
        %v867 = vrot.slane %v865, 5
        %v868 = vor.u32 %v864, %v867
        %v869 = vrot.slane %v868, 4
        %v871 = vshll.u32 %v409, 16
        %v873 = vrot.slane %v871, 5
        %v874 = vsel %vm832, %v869, %v873
        %v876 = vshrl.u32 %v410, 16
        %v878 = vrot.slane %v876, 4
        %v879 = vshll.u32 %v410, 16
        %v881 = vrot.slane %v879, 5
        %v882 = vor.u32 %v878, %v881
        %v883 = vrot.slane %v882, 4
        %v885 = vshll.u32 %v411, 16
        %v887 = vrot.slane %v885, 5
        %v888 = vsel %vm832, %v883, %v887
        %v890 = vshrl.u32 %v412, 16
        %v892 = vrot.slane %v890, 4
        %v893 = vshll.u32 %v412, 16
        %v895 = vrot.slane %v893, 5
        %v896 = vor.u32 %v892, %v895
        %v897 = vrot.slane %v896, 4
        %v899 = vshll.u32 %v413, 16
        %v901 = vrot.slane %v899, 5
        %v902 = vsel %vm832, %v897, %v901
        %v904 = vshrl.u32 %v414, 16
        %v906 = vrot.slane %v904, 4
        %v907 = vshll.u32 %v414, 16
        %v909 = vrot.slane %v907, 5
        %v910 = vor.u32 %v906, %v909
        %v911 = vrot.slane %v910, 4
        %v913 = vshll.u32 %v415, 16
        %v915 = vrot.slane %v913, 5
        %v916 = vsel %vm832, %v911, %v915
        %v918 = vshrl.u32 %v416, 16
        %v920 = vrot.slane %v918, 4
        %v921 = vshll.u32 %v416, 16
        %v923 = vrot.slane %v921, 5
        %v924 = vor.u32 %v920, %v923
        %v925 = vrot.slane %v924, 4
        %v927 = vshll.u32 %v417, 16
        %v929 = vrot.slane %v927, 5
        %v930 = vsel %vm832, %v925, %v929
        %v932 = vshrl.u32 %v418, 16
        %v934 = vrot.slane %v932, 4
        %v935 = vshll.u32 %v418, 16
        %v937 = vrot.slane %v935, 5
        %v938 = vor.u32 %v934, %v937
        %v939 = vrot.slane %v938, 4
        %v941 = vshll.u32 %v419, 16
        %v943 = vrot.slane %v941, 5
        %v944 = vsel %vm832, %v939, %v943
        %v946 = vshrl.u32 %v424, 16
        %v948 = vrot.slane %v946, 4
        %v949 = vshll.u32 %v424, 16
        %v951 = vrot.slane %v949, 5
        %v952 = vor.u32 %v948, %v951
        %v953 = vrot.slane %v952, 4
        %v955 = vshll.u32 %v425, 16
        %v957 = vrot.slane %v955, 5
        %v958 = vsel %vm832, %v953, %v957
        %v960 = vshrl.u32 %v426, 16
        %v962 = vrot.slane %v960, 4
        %v963 = vshll.u32 %v426, 16
        %v965 = vrot.slane %v963, 5
        %v966 = vor.u32 %v962, %v965
        %v967 = vrot.slane %v966, 4
        %v969 = vshll.u32 %v427, 16
        %v971 = vrot.slane %v969, 5
        %v972 = vsel %vm832, %v967, %v971
        %v974 = vshrl.u32 %v428, 16
        %v976 = vrot.slane %v974, 4
        %v977 = vshll.u32 %v428, 16
        %v979 = vrot.slane %v977, 5
        %v980 = vor.u32 %v976, %v979
        %v981 = vrot.slane %v980, 4
        %v983 = vshll.u32 %v429, 16
        %v985 = vrot.slane %v983, 5
        %v986 = vsel %vm832, %v981, %v985
        %v988 = vshrl.u32 %v430, 16
        %v990 = vrot.slane %v988, 4
        %v991 = vshll.u32 %v430, 16
        %v993 = vrot.slane %v991, 5
        %v994 = vor.u32 %v990, %v993
        %v995 = vrot.slane %v994, 4
        %v997 = vshll.u32 %v431, 16
        %v999 = vrot.slane %v997, 5
        %v1000 = vsel %vm832, %v995, %v999
        %v1002 = vshrl.u32 %v432, 16
        %v1004 = vrot.slane %v1002, 4
        %v1005 = vshll.u32 %v432, 16
        %v1007 = vrot.slane %v1005, 5
        %v1008 = vor.u32 %v1004, %v1007
        %v1009 = vrot.slane %v1008, 4
        %v1011 = vshll.u32 %v433, 16
        %v1013 = vrot.slane %v1011, 5
        %v1014 = vsel %vm832, %v1009, %v1013
        %v1016 = vshrl.u32 %v434, 16
        %v1018 = vrot.slane %v1016, 4
        %v1019 = vshll.u32 %v434, 16
        %v1021 = vrot.slane %v1019, 5
        %v1022 = vor.u32 %v1018, %v1021
        %v1023 = vrot.slane %v1022, 4
        %v1025 = vshll.u32 %v435, 16
        %v1027 = vrot.slane %v1025, 5
        %v1028 = vsel %vm832, %v1023, %v1027
        %v1030 = vshrl.u32 %v436, 16
        %v1032 = vrot.slane %v1030, 4
        %v1033 = vshll.u32 %v436, 16
        %v1035 = vrot.slane %v1033, 5
        %v1036 = vor.u32 %v1032, %v1035
        %v1037 = vrot.slane %v1036, 4
        %v1039 = vshll.u32 %v437, 16
        %v1041 = vrot.slane %v1039, 5
        %v1042 = vsel %vm832, %v1037, %v1041
        %v1044 = vshrl.u32 %v438, 16
        %v1046 = vrot.slane %v1044, 4
        %v1047 = vshll.u32 %v438, 16
        %v1049 = vrot.slane %v1047, 5
        %v1050 = vor.u32 %v1046, %v1049
        %v1051 = vrot.slane %v1050, 4
        %v1053 = vshll.u32 %v439, 16
        %v1055 = vrot.slane %v1053, 5
        %v1056 = vsel %vm832, %v1051, %v1055
        %s1057 = scalar_lea.vmem %s331, 64 [#allocation5]
        %v1058 = vld [vmem:[%s1057] sm:$0xf]
        %v1059 = vld [vmem:[%s1057 + $0x4] sm:$0xf]
        %v1060 = vld [vmem:[%s1057 + $0x8] sm:$0xf]
        %v1061 = vld [vmem:[%s1057 + $0xc] sm:$0xf]
        %v1062 = vld [vmem:[%s1057 + $0x10] sm:$0xf]
        %v1063 = vld [vmem:[%s1057 + $0x14] sm:$0xf]
        %v1064 = vld [vmem:[%s1057 + $0x18] sm:$0xf]
        %v1065 = vld [vmem:[%s1057 + $0x1c] sm:$0xf]
        %v1066 = vld [vmem:[%s1057 + $0x20] sm:$0xf]
        %v1067 = vld [vmem:[%s1057 + $0x24] sm:$0xf]
        %v1068 = vld [vmem:[%s1057 + $0x28] sm:$0xf]
        %v1069 = vld [vmem:[%s1057 + $0x2c] sm:$0xf]
        %v1070 = vld [vmem:[%s1057 + $0x30] sm:$0xf]
        %v1071 = vld [vmem:[%s1057 + $0x34] sm:$0xf]
        %v1072 = vld [vmem:[%s1057 + $0x38] sm:$0xf]
        %v1073 = vld [vmem:[%s1057 + $0x3c] sm:$0xf]
        %v1074 = vunpack.c.l.b16 %v846
        %v1075 = vunpack.c.l.b16 %v860
        %v1076 = vunpack.c.l.b16 %v874
        %v1077 = vunpack.c.l.b16 %v888
        %v1078 = vunpack.c.l.b16 %v902
        %v1079 = vunpack.c.l.b16 %v916
        %v1080 = vunpack.c.l.b16 %v930
        %v1081 = vunpack.c.l.b16 %v944
        %v1082 = vpack.c.b16 %v1075, %v1074
        %v1083 = vpack.c.b16 %v1077, %v1076
        %v1084 = vpack.c.b16 %v1079, %v1078
        %v1085 = vpack.c.b16 %v1081, %v1080
        %v1106 = vunpack.c.l.b16 %v1058
        %v1107 = vunpack.c.l.b16 %v1059
        %v1108 = vunpack.c.l.b16 %v1060
        %v1109 = vunpack.c.l.b16 %v1061
        %v1110 = vunpack.c.l.b16 %v1062
        %v1111 = vunpack.c.l.b16 %v1063
        %v1112 = vunpack.c.l.b16 %v1064
        %v1113 = vunpack.c.l.b16 %v1065
        %v1114 = vunpack.c.l.b16 %v1066
        %v1115 = vunpack.c.l.b16 %v1067
        %v1116 = vunpack.c.l.b16 %v1068
        %v1117 = vunpack.c.l.b16 %v1069
        %v1118 = vunpack.c.l.b16 %v1070
        %v1119 = vunpack.c.l.b16 %v1071
        %v1120 = vunpack.c.l.b16 %v1072
        %v1121 = vunpack.c.l.b16 %v1073
        %v1122 = vpack.c.b16 %v1107, %v1106
        %v1123 = vpack.c.b16 %v1109, %v1108
        %v1124 = vpack.c.b16 %v1111, %v1110
        %v1125 = vpack.c.b16 %v1113, %v1112
        %v1126 = vpack.c.b16 %v1115, %v1114
        %v1127 = vpack.c.b16 %v1117, %v1116
        %v1128 = vpack.c.b16 %v1119, %v1118
        %v1129 = vpack.c.b16 %v1121, %v1120
        %1138 = vmatprep.subr.bf16.mxu0 0
        %1139 = vmatpush1.bf16.msra.mxu0 %v1122
        %1140 = vmatprep.subr.bf16.mxu0 0
        %1141 = vmatpush1.bf16.msra.mxu0 %v1123
        %1142 = vmatprep.subr.bf16.mxu0 0
        %1143 = vmatpush1.bf16.msra.mxu0 %v1124
        %1144 = vmatprep.subr.bf16.mxu0 0
        %1145 = vmatpush1.bf16.msra.mxu0 %v1125
        %1146 = vmatprep.subr.bf16.mxu0 0
        %1147 = vmatpush1.bf16.msra.mxu0 %v1126
        %1148 = vmatprep.subr.bf16.mxu0 0
        %1149 = vmatpush1.bf16.msra.mxu0 %v1127
        %1150 = vmatprep.subr.bf16.mxu0 0
        %1151 = vmatpush1.bf16.msra.mxu0 %v1128
        %1152 = vmatprep.subr.bf16.mxu0 0
        %1153 = vmatpush1.bf16.msra.mxu0 %v1129
        %1154 = vmatprep.subr.bf16.mxu0 0
        %1155 = vmatpush1.bf16.msra.mxu0 0
        %1156 = vmatprep.subr.bf16.mxu0 0
        %1157 = vmatpush1.bf16.msra.mxu0 0
        %1158 = vmatprep.subr.bf16.mxu0 0
        %1159 = vmatpush1.bf16.msra.mxu0 0
        %1160 = vmatprep.subr.bf16.mxu0 0
        %1161 = vmatpush1.bf16.msra.mxu0 0
        %1162 = vmatprep.subr.bf16.mxu0 0
        %1163 = vmatpush1.bf16.msra.mxu0 0
        %1164 = vmatprep.subr.bf16.mxu0 0
        %1165 = vmatpush1.bf16.msra.mxu0 0
        %1166 = vmatprep.subr.bf16.mxu0 0
        %1167 = vmatpush1.bf16.msra.mxu0 0
        %1168 = vmatprep.subr.bf16.mxu0 0
        %1169 = vmatpush1.bf16.msra.mxu0 0
        %1170 = vmatprep.mubr.bf16.mxu0 0
        %1171 = vmatmul.mubr.bf16.gmra.mrb[0].mxu0 %v1082
        %v1172 = vpop.f32.mrb[0].mxu0
        %v1173 = vadd.f32 0.0, %v1172
        %v1174 = vpop.f32.mrb[0].mxu0
        %v1175 = vpop.f32.mrb[0].mxu0
        %v1176 = vadd.f32 0.0, %v1175
        %v1177 = vpop.f32.mrb[0].mxu0
        %1178 = vmatprep.mubr.bf16.mxu0 0
        %1179 = vmatmul.mubr.bf16.gmra.mrb[0].mxu0 %v1083
        %v1180 = vpop.f32.mrb[0].mxu0
        %v1181 = vadd.f32 0.0, %v1180
        %v1182 = vpop.f32.mrb[0].mxu0
        %v1183 = vpop.f32.mrb[0].mxu0
        %v1184 = vadd.f32 0.0, %v1183
        %v1185 = vpop.f32.mrb[0].mxu0
        %1186 = vmatprep.mubr.bf16.mxu0 0
        %1187 = vmatmul.mubr.bf16.gmra.mrb[0].mxu0 %v1084
        %v1188 = vpop.f32.mrb[0].mxu0
        %v1189 = vadd.f32 0.0, %v1188
        %v1190 = vpop.f32.mrb[0].mxu0
        %v1191 = vpop.f32.mrb[0].mxu0
        %v1192 = vadd.f32 0.0, %v1191
        %v1193 = vpop.f32.mrb[0].mxu0
        %1194 = vmatprep.mubr.bf16.mxu0 0
        %1195 = vmatmul.mubr.bf16.gmra.mrb[0].mxu0 %v1085
        %v1196 = vpop.f32.mrb[0].mxu0
        %v1197 = vadd.f32 0.0, %v1196
        %v1198 = vpop.f32.mrb[0].mxu0
        %v1199 = vpop.f32.mrb[0].mxu0
        %v1200 = vadd.f32 0.0, %v1199
        %v1201 = vpop.f32.mrb[0].mxu0
        %1202 = vdwg.mxu0
        %v1203 = vadd.f32 %v800, %v1173
        %v1204 = vadd.f32 %v803, %v1176
        %v1205 = vadd.f32 %v808, %v1181
        %v1206 = vadd.f32 %v811, %v1184
        %v1207 = vadd.f32 %v816, %v1189
        %v1208 = vadd.f32 %v819, %v1192
        %v1209 = vadd.f32 %v824, %v1197
        %v1210 = vadd.f32 %v827, %v1200
        %s1211 = scalar_lea.vmem %s349, 128 [#allocation8]
        %v1212 = vld [vmem:[%s1211] sm:$0xf]
        %v1213 = vld [vmem:[%s1211 + $0x4] sm:$0xf]
        %v1214 = vld [vmem:[%s1211 + $0x8] sm:$0xf]
        %v1215 = vld [vmem:[%s1211 + $0xc] sm:$0xf]
        %v1216 = vld [vmem:[%s1211 + $0x10] sm:$0xf]
        %v1217 = vld [vmem:[%s1211 + $0x14] sm:$0xf]
        %v1218 = vld [vmem:[%s1211 + $0x18] sm:$0xf]
        %v1219 = vld [vmem:[%s1211 + $0x1c] sm:$0xf]
        %v1220 = vld [vmem:[%s1211 + $0x20] sm:$0xf]
        %v1221 = vld [vmem:[%s1211 + $0x24] sm:$0xf]
        %v1222 = vld [vmem:[%s1211 + $0x28] sm:$0xf]
        %v1223 = vld [vmem:[%s1211 + $0x2c] sm:$0xf]
        %v1224 = vld [vmem:[%s1211 + $0x30] sm:$0xf]
        %v1225 = vld [vmem:[%s1211 + $0x34] sm:$0xf]
        %v1226 = vld [vmem:[%s1211 + $0x38] sm:$0xf]
        %v1227 = vld [vmem:[%s1211 + $0x3c] sm:$0xf]
        %v1228 = vld [vmem:[%s1211 + $0x40] sm:$0xf]
        %v1229 = vld [vmem:[%s1211 + $0x44] sm:$0xf]
        %v1230 = vld [vmem:[%s1211 + $0x48] sm:$0xf]
        %v1231 = vld [vmem:[%s1211 + $0x4c] sm:$0xf]
        %v1232 = vld [vmem:[%s1211 + $0x50] sm:$0xf]
        %v1233 = vld [vmem:[%s1211 + $0x54] sm:$0xf]
        %v1234 = vld [vmem:[%s1211 + $0x58] sm:$0xf]
        %v1235 = vld [vmem:[%s1211 + $0x5c] sm:$0xf]
        %v1236 = vld [vmem:[%s1211 + $0x60] sm:$0xf]
        %v1237 = vld [vmem:[%s1211 + $0x64] sm:$0xf]
        %v1238 = vld [vmem:[%s1211 + $0x68] sm:$0xf]
        %v1239 = vld [vmem:[%s1211 + $0x6c] sm:$0xf]
        %v1240 = vld [vmem:[%s1211 + $0x70] sm:$0xf]
        %v1241 = vld [vmem:[%s1211 + $0x74] sm:$0xf]
        %v1242 = vld [vmem:[%s1211 + $0x78] sm:$0xf]
        %v1243 = vld [vmem:[%s1211 + $0x7c] sm:$0xf]
        %v1244 = vunpack.c.l.b16 %v958
        %v1245 = vunpack.c.h.b16 %v958
        %v1246 = vunpack.c.l.b16 %v972
        %v1247 = vunpack.c.h.b16 %v972
        %v1248 = vunpack.c.l.b16 %v986
        %v1249 = vunpack.c.h.b16 %v986
        %v1250 = vunpack.c.l.b16 %v1000
        %v1251 = vunpack.c.h.b16 %v1000
        %v1252 = vunpack.c.l.b16 %v1014
        %v1253 = vunpack.c.h.b16 %v1014
        %v1254 = vunpack.c.l.b16 %v1028
        %v1255 = vunpack.c.h.b16 %v1028
        %v1256 = vunpack.c.l.b16 %v1042
        %v1257 = vunpack.c.h.b16 %v1042
        %v1258 = vunpack.c.l.b16 %v1056
        %v1259 = vunpack.c.h.b16 %v1056
        %v1260 = vpack.c.b16 %v1246, %v1244
        %v1261 = vpack.c.b16 %v1247, %v1245
        %v1262 = vpack.c.b16 %v1250, %v1248
        %v1263 = vpack.c.b16 %v1251, %v1249
        %v1264 = vpack.c.b16 %v1254, %v1252
        %v1265 = vpack.c.b16 %v1255, %v1253
        %v1266 = vpack.c.b16 %v1258, %v1256
        %v1267 = vpack.c.b16 %v1259, %v1257
        %v1308 = vunpack.c.l.b16 %v1212
        %v1309 = vunpack.c.l.b16 %v1213
        %v1310 = vunpack.c.l.b16 %v1214
        %v1311 = vunpack.c.l.b16 %v1215
        %v1312 = vunpack.c.l.b16 %v1216
        %v1313 = vunpack.c.l.b16 %v1217
        %v1314 = vunpack.c.l.b16 %v1218
        %v1315 = vunpack.c.l.b16 %v1219
        %v1316 = vunpack.c.l.b16 %v1220
        %v1317 = vunpack.c.l.b16 %v1221
        %v1318 = vunpack.c.l.b16 %v1222
        %v1319 = vunpack.c.l.b16 %v1223
        %v1320 = vunpack.c.l.b16 %v1224
        %v1321 = vunpack.c.l.b16 %v1225
        %v1322 = vunpack.c.l.b16 %v1226
        %v1323 = vunpack.c.l.b16 %v1227
        %v1324 = vunpack.c.l.b16 %v1228
        %v1325 = vunpack.c.l.b16 %v1229
        %v1326 = vunpack.c.l.b16 %v1230
        %v1327 = vunpack.c.l.b16 %v1231
        %v1328 = vunpack.c.l.b16 %v1232
        %v1329 = vunpack.c.l.b16 %v1233
        %v1330 = vunpack.c.l.b16 %v1234
        %v1331 = vunpack.c.l.b16 %v1235
        %v1332 = vunpack.c.l.b16 %v1236
        %v1333 = vunpack.c.l.b16 %v1237
        %v1334 = vunpack.c.l.b16 %v1238
        %v1335 = vunpack.c.l.b16 %v1239
        %v1336 = vunpack.c.l.b16 %v1240
        %v1337 = vunpack.c.l.b16 %v1241
        %v1338 = vunpack.c.l.b16 %v1242
        %v1339 = vunpack.c.l.b16 %v1243
        %v1340 = vpack.c.b16 %v1309, %v1308
        %v1341 = vpack.c.b16 %v1311, %v1310
        %v1342 = vpack.c.b16 %v1313, %v1312
        %v1343 = vpack.c.b16 %v1315, %v1314
        %v1344 = vpack.c.b16 %v1317, %v1316
        %v1345 = vpack.c.b16 %v1319, %v1318
        %v1346 = vpack.c.b16 %v1321, %v1320
        %v1347 = vpack.c.b16 %v1323, %v1322
        %v1348 = vpack.c.b16 %v1325, %v1324
        %v1349 = vpack.c.b16 %v1327, %v1326
        %v1350 = vpack.c.b16 %v1329, %v1328
        %v1351 = vpack.c.b16 %v1331, %v1330
        %v1352 = vpack.c.b16 %v1333, %v1332
        %v1353 = vpack.c.b16 %v1335, %v1334
        %v1354 = vpack.c.b16 %v1337, %v1336
        %v1355 = vpack.c.b16 %v1339, %v1338
        %1372 = vmatprep.subr.bf16.mxu0 0
        %1373 = vmatpush1.bf16.msra.mxu0 %v1340
        %1374 = vmatprep.subr.bf16.mxu0 0
        %1375 = vmatpush1.bf16.msra.mxu0 %v1341
        %1376 = vmatprep.subr.bf16.mxu0 0
        %1377 = vmatpush1.bf16.msra.mxu0 %v1342
        %1378 = vmatprep.subr.bf16.mxu0 0
        %1379 = vmatpush1.bf16.msra.mxu0 %v1343
        %1380 = vmatprep.subr.bf16.mxu0 0
        %1381 = vmatpush1.bf16.msra.mxu0 %v1344
        %1382 = vmatprep.subr.bf16.mxu0 0
        %1383 = vmatpush1.bf16.msra.mxu0 %v1345
        %1384 = vmatprep.subr.bf16.mxu0 0
        %1385 = vmatpush1.bf16.msra.mxu0 %v1346
        %1386 = vmatprep.subr.bf16.mxu0 0
        %1387 = vmatpush1.bf16.msra.mxu0 %v1347
        %1388 = vmatprep.subr.bf16.mxu0 0
        %1389 = vmatpush1.bf16.msra.mxu0 %v1348
        %1390 = vmatprep.subr.bf16.mxu0 0
        %1391 = vmatpush1.bf16.msra.mxu0 %v1349
        %1392 = vmatprep.subr.bf16.mxu0 0
        %1393 = vmatpush1.bf16.msra.mxu0 %v1350
        %1394 = vmatprep.subr.bf16.mxu0 0
        %1395 = vmatpush1.bf16.msra.mxu0 %v1351
        %1396 = vmatprep.subr.bf16.mxu0 0
        %1397 = vmatpush1.bf16.msra.mxu0 %v1352
        %1398 = vmatprep.subr.bf16.mxu0 0
        %1399 = vmatpush1.bf16.msra.mxu0 %v1353
        %1400 = vmatprep.subr.bf16.mxu0 0
        %1401 = vmatpush1.bf16.msra.mxu0 %v1354
        %1402 = vmatprep.subr.bf16.mxu0 0
        %1403 = vmatpush1.bf16.msra.mxu0 %v1355
        %1404 = vmatprep.mubr.bf16.mxu0 %v1261
        %1405 = vmatmul.mubr.bf16.gmra.mrb[0].mxu0 %v1260
        %v1406 = vpop.f32.mrb[0].mxu0
        %v1407 = vadd.f32 0.0, %v1406
        %v1408 = vpop.f32.mrb[0].mxu0
        %v1409 = vpop.f32.mrb[0].mxu0
        %v1410 = vadd.f32 0.0, %v1409
        %v1411 = vpop.f32.mrb[0].mxu0
        %1412 = vmatprep.mubr.bf16.mxu0 %v1263
        %1413 = vmatmul.mubr.bf16.gmra.mrb[0].mxu0 %v1262
        %v1414 = vpop.f32.mrb[0].mxu0
        %v1415 = vadd.f32 0.0, %v1414
        %v1416 = vpop.f32.mrb[0].mxu0
        %v1417 = vpop.f32.mrb[0].mxu0
        %v1418 = vadd.f32 0.0, %v1417
        %v1419 = vpop.f32.mrb[0].mxu0
        %1420 = vmatprep.mubr.bf16.mxu0 %v1265
        %1421 = vmatmul.mubr.bf16.gmra.mrb[0].mxu0 %v1264
        %v1422 = vpop.f32.mrb[0].mxu0
        %v1423 = vadd.f32 0.0, %v1422
        %v1424 = vpop.f32.mrb[0].mxu0
        %v1425 = vpop.f32.mrb[0].mxu0
        %v1426 = vadd.f32 0.0, %v1425
        %v1427 = vpop.f32.mrb[0].mxu0
        %1428 = vmatprep.mubr.bf16.mxu0 %v1267
        %1429 = vmatmul.mubr.bf16.gmra.mrb[0].mxu0 %v1266
        %v1430 = vpop.f32.mrb[0].mxu0
        %v1431 = vadd.f32 0.0, %v1430
        %v1432 = vpop.f32.mrb[0].mxu0
        %v1433 = vpop.f32.mrb[0].mxu0
        %v1434 = vadd.f32 0.0, %v1433
        %v1435 = vpop.f32.mrb[0].mxu0
        %1436 = vdwg.mxu0
        %v1437 = vadd.f32 %v1203, %v1407
        %v1438 = vadd.f32 %v1204, %v1410
        %v1439 = vadd.f32 %v1205, %v1415
        %v1440 = vadd.f32 %v1206, %v1418
        %v1441 = vadd.f32 %v1207, %v1423
        %v1442 = vadd.f32 %v1208, %v1426
        %v1443 = vadd.f32 %v1209, %v1431
        %v1444 = vadd.f32 %v1210, %v1434
        %vm1453 = vcmask 1042432
        %vm1454 = vcmask 1046532
        %vm1455 = vmor %vm1453, %vm1454
        %v1456 = vrot.slane %v404, 5
        %v1457 = vrot.slane %v1456, 4
        %v1458 = vrot.slane %v405, 5
        %v1459 = vsel %vm1455, %v1457, %v1458
        %v1460 = vrot.slane %v406, 5
        %v1461 = vrot.slane %v1460, 4
        %v1462 = vrot.slane %v407, 5
        %v1463 = vsel %vm1455, %v1461, %v1462
        %v1464 = vrot.slane %v408, 5
        %v1465 = vrot.slane %v1464, 4
        %v1466 = vrot.slane %v409, 5
        %v1467 = vsel %vm1455, %v1465, %v1466
        %v1468 = vrot.slane %v410, 5
        %v1469 = vrot.slane %v1468, 4
        %v1470 = vrot.slane %v411, 5
        %v1471 = vsel %vm1455, %v1469, %v1470
        %v1472 = vrot.slane %v412, 5
        %v1473 = vrot.slane %v1472, 4
        %v1474 = vrot.slane %v413, 5
        %v1475 = vsel %vm1455, %v1473, %v1474
        %v1476 = vrot.slane %v414, 5
        %v1477 = vrot.slane %v1476, 4
        %v1478 = vrot.slane %v415, 5
        %v1479 = vsel %vm1455, %v1477, %v1478
        %v1480 = vrot.slane %v416, 5
        %v1481 = vrot.slane %v1480, 4
        %v1482 = vrot.slane %v417, 5
        %v1483 = vsel %vm1455, %v1481, %v1482
        %v1484 = vrot.slane %v418, 5
        %v1485 = vrot.slane %v1484, 4
        %v1486 = vrot.slane %v419, 5
        %v1487 = vsel %vm1455, %v1485, %v1486
        %v1496 = vrot.slane %v424, 5
        %v1497 = vrot.slane %v1496, 4
        %v1498 = vrot.slane %v425, 5
        %v1499 = vsel %vm1455, %v1497, %v1498
        %v1500 = vrot.slane %v426, 5
        %v1501 = vrot.slane %v1500, 4
        %v1502 = vrot.slane %v427, 5
        %v1503 = vsel %vm1455, %v1501, %v1502
        %v1504 = vrot.slane %v428, 5
        %v1505 = vrot.slane %v1504, 4
        %v1506 = vrot.slane %v429, 5
        %v1507 = vsel %vm1455, %v1505, %v1506
        %v1508 = vrot.slane %v430, 5
        %v1509 = vrot.slane %v1508, 4
        %v1510 = vrot.slane %v431, 5
        %v1511 = vsel %vm1455, %v1509, %v1510
        %v1512 = vrot.slane %v432, 5
        %v1513 = vrot.slane %v1512, 4
        %v1514 = vrot.slane %v433, 5
        %v1515 = vsel %vm1455, %v1513, %v1514
        %v1516 = vrot.slane %v434, 5
        %v1517 = vrot.slane %v1516, 4
        %v1518 = vrot.slane %v435, 5
        %v1519 = vsel %vm1455, %v1517, %v1518
        %v1520 = vrot.slane %v436, 5
        %v1521 = vrot.slane %v1520, 4
        %v1522 = vrot.slane %v437, 5
        %v1523 = vsel %vm1455, %v1521, %v1522
        %v1524 = vrot.slane %v438, 5
        %v1525 = vrot.slane %v1524, 4
        %v1526 = vrot.slane %v439, 5
        %v1527 = vsel %vm1455, %v1525, %v1526
        %s1528 = scalar_lea.vmem %s331, 128 [#allocation5]
        %v1529 = vld [vmem:[%s1528] sm:$0xf]
        %v1530 = vld [vmem:[%s1528 + $0x4] sm:$0xf]
        %v1531 = vld [vmem:[%s1528 + $0x8] sm:$0xf]
        %v1532 = vld [vmem:[%s1528 + $0xc] sm:$0xf]
        %v1533 = vld [vmem:[%s1528 + $0x10] sm:$0xf]
        %v1534 = vld [vmem:[%s1528 + $0x14] sm:$0xf]
        %v1535 = vld [vmem:[%s1528 + $0x18] sm:$0xf]
        %v1536 = vld [vmem:[%s1528 + $0x1c] sm:$0xf]
        %v1537 = vld [vmem:[%s1528 + $0x20] sm:$0xf]
        %v1538 = vld [vmem:[%s1528 + $0x24] sm:$0xf]
        %v1539 = vld [vmem:[%s1528 + $0x28] sm:$0xf]
        %v1540 = vld [vmem:[%s1528 + $0x2c] sm:$0xf]
        %v1541 = vld [vmem:[%s1528 + $0x30] sm:$0xf]
        %v1542 = vld [vmem:[%s1528 + $0x34] sm:$0xf]
        %v1543 = vld [vmem:[%s1528 + $0x38] sm:$0xf]
        %v1544 = vld [vmem:[%s1528 + $0x3c] sm:$0xf]
        %v1545 = vunpack.c.l.b16 %v1459
        %v1546 = vunpack.c.l.b16 %v1463
        %v1547 = vunpack.c.l.b16 %v1467
        %v1548 = vunpack.c.l.b16 %v1471
        %v1549 = vunpack.c.l.b16 %v1475
        %v1550 = vunpack.c.l.b16 %v1479
        %v1551 = vunpack.c.l.b16 %v1483
        %v1552 = vunpack.c.l.b16 %v1487
        %v1553 = vpack.c.b16 %v1546, %v1545
        %v1554 = vpack.c.b16 %v1548, %v1547
        %v1555 = vpack.c.b16 %v1550, %v1549
        %v1556 = vpack.c.b16 %v1552, %v1551
        %v1577 = vunpack.c.l.b16 %v1529
        %v1578 = vunpack.c.l.b16 %v1530
        %v1579 = vunpack.c.l.b16 %v1531
        %v1580 = vunpack.c.l.b16 %v1532
        %v1581 = vunpack.c.l.b16 %v1533
        %v1582 = vunpack.c.l.b16 %v1534
        %v1583 = vunpack.c.l.b16 %v1535
        %v1584 = vunpack.c.l.b16 %v1536
        %v1585 = vunpack.c.l.b16 %v1537
        %v1586 = vunpack.c.l.b16 %v1538
        %v1587 = vunpack.c.l.b16 %v1539
        %v1588 = vunpack.c.l.b16 %v1540
        %v1589 = vunpack.c.l.b16 %v1541
        %v1590 = vunpack.c.l.b16 %v1542
        %v1591 = vunpack.c.l.b16 %v1543
        %v1592 = vunpack.c.l.b16 %v1544
        %v1593 = vpack.c.b16 %v1578, %v1577
        %v1594 = vpack.c.b16 %v1580, %v1579
        %v1595 = vpack.c.b16 %v1582, %v1581
        %v1596 = vpack.c.b16 %v1584, %v1583
        %v1597 = vpack.c.b16 %v1586, %v1585
        %v1598 = vpack.c.b16 %v1588, %v1587
        %v1599 = vpack.c.b16 %v1590, %v1589
        %v1600 = vpack.c.b16 %v1592, %v1591
        %1609 = vmatprep.subr.bf16.mxu0 0
        %1610 = vmatpush1.bf16.msra.mxu0 %v1593
        %1611 = vmatprep.subr.bf16.mxu0 0
        %1612 = vmatpush1.bf16.msra.mxu0 %v1594
        %1613 = vmatprep.subr.bf16.mxu0 0
        %1614 = vmatpush1.bf16.msra.mxu0 %v1595
        %1615 = vmatprep.subr.bf16.mxu0 0
        %1616 = vmatpush1.bf16.msra.mxu0 %v1596
        %1617 = vmatprep.subr.bf16.mxu0 0
        %1618 = vmatpush1.bf16.msra.mxu0 %v1597
        %1619 = vmatprep.subr.bf16.mxu0 0
        %1620 = vmatpush1.bf16.msra.mxu0 %v1598
        %1621 = vmatprep.subr.bf16.mxu0 0
        %1622 = vmatpush1.bf16.msra.mxu0 %v1599
        %1623 = vmatprep.subr.bf16.mxu0 0
        %1624 = vmatpush1.bf16.msra.mxu0 %v1600
        %1625 = vmatprep.subr.bf16.mxu0 0
        %1626 = vmatpush1.bf16.msra.mxu0 0
        %1627 = vmatprep.subr.bf16.mxu0 0
        %1628 = vmatpush1.bf16.msra.mxu0 0
        %1629 = vmatprep.subr.bf16.mxu0 0
        %1630 = vmatpush1.bf16.msra.mxu0 0
        %1631 = vmatprep.subr.bf16.mxu0 0
        %1632 = vmatpush1.bf16.msra.mxu0 0
        %1633 = vmatprep.subr.bf16.mxu0 0
        %1634 = vmatpush1.bf16.msra.mxu0 0
        %1635 = vmatprep.subr.bf16.mxu0 0
        %1636 = vmatpush1.bf16.msra.mxu0 0
        %1637 = vmatprep.subr.bf16.mxu0 0
        %1638 = vmatpush1.bf16.msra.mxu0 0
        %1639 = vmatprep.subr.bf16.mxu0 0
        %1640 = vmatpush1.bf16.msra.mxu0 0
        %1641 = vmatprep.mubr.bf16.mxu0 0
        %1642 = vmatmul.mubr.bf16.gmra.mrb[0].mxu0 %v1553
        %v1643 = vpop.f32.mrb[0].mxu0
        %v1644 = vadd.f32 0.0, %v1643
        %v1645 = vpop.f32.mrb[0].mxu0
        %v1646 = vpop.f32.mrb[0].mxu0
        %v1647 = vadd.f32 0.0, %v1646
        %v1648 = vpop.f32.mrb[0].mxu0
        %1649 = vmatprep.mubr.bf16.mxu0 0
        %1650 = vmatmul.mubr.bf16.gmra.mrb[0].mxu0 %v1554
        %v1651 = vpop.f32.mrb[0].mxu0
        %v1652 = vadd.f32 0.0, %v1651
        %v1653 = vpop.f32.mrb[0].mxu0
        %v1654 = vpop.f32.mrb[0].mxu0
        %v1655 = vadd.f32 0.0, %v1654
        %v1656 = vpop.f32.mrb[0].mxu0
        %1657 = vmatprep.mubr.bf16.mxu0 0
        %1658 = vmatmul.mubr.bf16.gmra.mrb[0].mxu0 %v1555
        %v1659 = vpop.f32.mrb[0].mxu0
        %v1660 = vadd.f32 0.0, %v1659
        %v1661 = vpop.f32.mrb[0].mxu0
        %v1662 = vpop.f32.mrb[0].mxu0
        %v1663 = vadd.f32 0.0, %v1662
        %v1664 = vpop.f32.mrb[0].mxu0
        %1665 = vmatprep.mubr.bf16.mxu0 0
        %1666 = vmatmul.mubr.bf16.gmra.mrb[0].mxu0 %v1556
        %v1667 = vpop.f32.mrb[0].mxu0
        %v1668 = vadd.f32 0.0, %v1667
        %v1669 = vpop.f32.mrb[0].mxu0
        %v1670 = vpop.f32.mrb[0].mxu0
        %v1671 = vadd.f32 0.0, %v1670
        %v1672 = vpop.f32.mrb[0].mxu0
        %1673 = vdwg.mxu0
        %v1674 = vadd.f32 %v1437, %v1644
        %v1675 = vadd.f32 %v1438, %v1647
        %v1676 = vadd.f32 %v1439, %v1652
        %v1677 = vadd.f32 %v1440, %v1655
        %v1678 = vadd.f32 %v1441, %v1660
        %v1679 = vadd.f32 %v1442, %v1663
        %v1680 = vadd.f32 %v1443, %v1668
        %v1681 = vadd.f32 %v1444, %v1671
        %s1682 = scalar_lea.vmem %s349, 256 [#allocation8]
        %v1683 = vld [vmem:[%s1682] sm:$0xf]
        %v1684 = vld [vmem:[%s1682 + $0x4] sm:$0xf]
        %v1685 = vld [vmem:[%s1682 + $0x8] sm:$0xf]
        %v1686 = vld [vmem:[%s1682 + $0xc] sm:$0xf]
        %v1687 = vld [vmem:[%s1682 + $0x10] sm:$0xf]
        %v1688 = vld [vmem:[%s1682 + $0x14] sm:$0xf]
        %v1689 = vld [vmem:[%s1682 + $0x18] sm:$0xf]
        %v1690 = vld [vmem:[%s1682 + $0x1c] sm:$0xf]
        %v1691 = vld [vmem:[%s1682 + $0x20] sm:$0xf]
        %v1692 = vld [vmem:[%s1682 + $0x24] sm:$0xf]
        %v1693 = vld [vmem:[%s1682 + $0x28] sm:$0xf]
        %v1694 = vld [vmem:[%s1682 + $0x2c] sm:$0xf]
        %v1695 = vld [vmem:[%s1682 + $0x30] sm:$0xf]
        %v1696 = vld [vmem:[%s1682 + $0x34] sm:$0xf]
        %v1697 = vld [vmem:[%s1682 + $0x38] sm:$0xf]
        %v1698 = vld [vmem:[%s1682 + $0x3c] sm:$0xf]
        %v1699 = vld [vmem:[%s1682 + $0x40] sm:$0xf]
        %v1700 = vld [vmem:[%s1682 + $0x44] sm:$0xf]
        %v1701 = vld [vmem:[%s1682 + $0x48] sm:$0xf]
        %v1702 = vld [vmem:[%s1682 + $0x4c] sm:$0xf]
        %v1703 = vld [vmem:[%s1682 + $0x50] sm:$0xf]
        %v1704 = vld [vmem:[%s1682 + $0x54] sm:$0xf]
        %v1705 = vld [vmem:[%s1682 + $0x58] sm:$0xf]
        %v1706 = vld [vmem:[%s1682 + $0x5c] sm:$0xf]
        %v1707 = vld [vmem:[%s1682 + $0x60] sm:$0xf]
        %v1708 = vld [vmem:[%s1682 + $0x64] sm:$0xf]
        %v1709 = vld [vmem:[%s1682 + $0x68] sm:$0xf]
        %v1710 = vld [vmem:[%s1682 + $0x6c] sm:$0xf]
        %v1711 = vld [vmem:[%s1682 + $0x70] sm:$0xf]
        %v1712 = vld [vmem:[%s1682 + $0x74] sm:$0xf]
        %v1713 = vld [vmem:[%s1682 + $0x78] sm:$0xf]
        %v1714 = vld [vmem:[%s1682 + $0x7c] sm:$0xf]
        %v1715 = vunpack.c.l.b16 %v1499
        %v1716 = vunpack.c.h.b16 %v1499
        %v1717 = vunpack.c.l.b16 %v1503
        %v1718 = vunpack.c.h.b16 %v1503
        %v1719 = vunpack.c.l.b16 %v1507
        %v1720 = vunpack.c.h.b16 %v1507
        %v1721 = vunpack.c.l.b16 %v1511
        %v1722 = vunpack.c.h.b16 %v1511
        %v1723 = vunpack.c.l.b16 %v1515
        %v1724 = vunpack.c.h.b16 %v1515
        %v1725 = vunpack.c.l.b16 %v1519
        %v1726 = vunpack.c.h.b16 %v1519
        %v1727 = vunpack.c.l.b16 %v1523
        %v1728 = vunpack.c.h.b16 %v1523
        %v1729 = vunpack.c.l.b16 %v1527
        %v1730 = vunpack.c.h.b16 %v1527
        %v1731 = vpack.c.b16 %v1717, %v1715
        %v1732 = vpack.c.b16 %v1718, %v1716
        %v1733 = vpack.c.b16 %v1721, %v1719
        %v1734 = vpack.c.b16 %v1722, %v1720
        %v1735 = vpack.c.b16 %v1725, %v1723
        %v1736 = vpack.c.b16 %v1726, %v1724
        %v1737 = vpack.c.b16 %v1729, %v1727
        %v1738 = vpack.c.b16 %v1730, %v1728
        %v1779 = vunpack.c.l.b16 %v1683
        %v1780 = vunpack.c.l.b16 %v1684
        %v1781 = vunpack.c.l.b16 %v1685
        %v1782 = vunpack.c.l.b16 %v1686
        %v1783 = vunpack.c.l.b16 %v1687
        %v1784 = vunpack.c.l.b16 %v1688
        %v1785 = vunpack.c.l.b16 %v1689
        %v1786 = vunpack.c.l.b16 %v1690
        %v1787 = vunpack.c.l.b16 %v1691
        %v1788 = vunpack.c.l.b16 %v1692
        %v1789 = vunpack.c.l.b16 %v1693
        %v1790 = vunpack.c.l.b16 %v1694
        %v1791 = vunpack.c.l.b16 %v1695
        %v1792 = vunpack.c.l.b16 %v1696
        %v1793 = vunpack.c.l.b16 %v1697
        %v1794 = vunpack.c.l.b16 %v1698
        %v1795 = vunpack.c.l.b16 %v1699
        %v1796 = vunpack.c.l.b16 %v1700
        %v1797 = vunpack.c.l.b16 %v1701
        %v1798 = vunpack.c.l.b16 %v1702
        %v1799 = vunpack.c.l.b16 %v1703
        %v1800 = vunpack.c.l.b16 %v1704
        %v1801 = vunpack.c.l.b16 %v1705
        %v1802 = vunpack.c.l.b16 %v1706
        %v1803 = vunpack.c.l.b16 %v1707
        %v1804 = vunpack.c.l.b16 %v1708
        %v1805 = vunpack.c.l.b16 %v1709
        %v1806 = vunpack.c.l.b16 %v1710
        %v1807 = vunpack.c.l.b16 %v1711
        %v1808 = vunpack.c.l.b16 %v1712
        %v1809 = vunpack.c.l.b16 %v1713
        %v1810 = vunpack.c.l.b16 %v1714
        %v1811 = vpack.c.b16 %v1780, %v1779
        %v1812 = vpack.c.b16 %v1782, %v1781
        %v1813 = vpack.c.b16 %v1784, %v1783
        %v1814 = vpack.c.b16 %v1786, %v1785
        %v1815 = vpack.c.b16 %v1788, %v1787
        %v1816 = vpack.c.b16 %v1790, %v1789
        %v1817 = vpack.c.b16 %v1792, %v1791
        %v1818 = vpack.c.b16 %v1794, %v1793
        %v1819 = vpack.c.b16 %v1796, %v1795
        %v1820 = vpack.c.b16 %v1798, %v1797
        %v1821 = vpack.c.b16 %v1800, %v1799
        %v1822 = vpack.c.b16 %v1802, %v1801
        %v1823 = vpack.c.b16 %v1804, %v1803
        %v1824 = vpack.c.b16 %v1806, %v1805
        %v1825 = vpack.c.b16 %v1808, %v1807
        %v1826 = vpack.c.b16 %v1810, %v1809
        %1843 = vmatprep.subr.bf16.mxu0 0
        %1844 = vmatpush1.bf16.msra.mxu0 %v1811
        %1845 = vmatprep.subr.bf16.mxu0 0
        %1846 = vmatpush1.bf16.msra.mxu0 %v1812
        %1847 = vmatprep.subr.bf16.mxu0 0
        %1848 = vmatpush1.bf16.msra.mxu0 %v1813
        %1849 = vmatprep.subr.bf16.mxu0 0
        %1850 = vmatpush1.bf16.msra.mxu0 %v1814
        %1851 = vmatprep.subr.bf16.mxu0 0
        %1852 = vmatpush1.bf16.msra.mxu0 %v1815
        %1853 = vmatprep.subr.bf16.mxu0 0
        %1854 = vmatpush1.bf16.msra.mxu0 %v1816
        %1855 = vmatprep.subr.bf16.mxu0 0
        %1856 = vmatpush1.bf16.msra.mxu0 %v1817
        %1857 = vmatprep.subr.bf16.mxu0 0
        %1858 = vmatpush1.bf16.msra.mxu0 %v1818
        %1859 = vmatprep.subr.bf16.mxu0 0
        %1860 = vmatpush1.bf16.msra.mxu0 %v1819
        %1861 = vmatprep.subr.bf16.mxu0 0
        %1862 = vmatpush1.bf16.msra.mxu0 %v1820
        %1863 = vmatprep.subr.bf16.mxu0 0
        %1864 = vmatpush1.bf16.msra.mxu0 %v1821
        %1865 = vmatprep.subr.bf16.mxu0 0
        %1866 = vmatpush1.bf16.msra.mxu0 %v1822
        %1867 = vmatprep.subr.bf16.mxu0 0
        %1868 = vmatpush1.bf16.msra.mxu0 %v1823
        %1869 = vmatprep.subr.bf16.mxu0 0
        %1870 = vmatpush1.bf16.msra.mxu0 %v1824
        %1871 = vmatprep.subr.bf16.mxu0 0
        %1872 = vmatpush1.bf16.msra.mxu0 %v1825
        %1873 = vmatprep.subr.bf16.mxu0 0
        %1874 = vmatpush1.bf16.msra.mxu0 %v1826
        %1875 = vmatprep.mubr.bf16.mxu0 %v1732
        %1876 = vmatmul.mubr.bf16.gmra.mrb[0].mxu0 %v1731
        %v1877 = vpop.f32.mrb[0].mxu0
        %v1878 = vadd.f32 0.0, %v1877
        %v1879 = vpop.f32.mrb[0].mxu0
        %v1880 = vpop.f32.mrb[0].mxu0
        %v1881 = vadd.f32 0.0, %v1880
        %v1882 = vpop.f32.mrb[0].mxu0
        %1883 = vmatprep.mubr.bf16.mxu0 %v1734
        %1884 = vmatmul.mubr.bf16.gmra.mrb[0].mxu0 %v1733
        %v1885 = vpop.f32.mrb[0].mxu0
        %v1886 = vadd.f32 0.0, %v1885
        %v1887 = vpop.f32.mrb[0].mxu0
        %v1888 = vpop.f32.mrb[0].mxu0
        %v1889 = vadd.f32 0.0, %v1888
        %v1890 = vpop.f32.mrb[0].mxu0
        %1891 = vmatprep.mubr.bf16.mxu0 %v1736
        %1892 = vmatmul.mubr.bf16.gmra.mrb[0].mxu0 %v1735
        %v1893 = vpop.f32.mrb[0].mxu0
        %v1894 = vadd.f32 0.0, %v1893
        %v1895 = vpop.f32.mrb[0].mxu0
        %v1896 = vpop.f32.mrb[0].mxu0
        %v1897 = vadd.f32 0.0, %v1896
        %v1898 = vpop.f32.mrb[0].mxu0
        %1899 = vmatprep.mubr.bf16.mxu0 %v1738
        %1900 = vmatmul.mubr.bf16.gmra.mrb[0].mxu0 %v1737
        %v1901 = vpop.f32.mrb[0].mxu0
        %v1902 = vadd.f32 0.0, %v1901
        %v1903 = vpop.f32.mrb[0].mxu0
        %v1904 = vpop.f32.mrb[0].mxu0
        %v1905 = vadd.f32 0.0, %v1904
        %v1906 = vpop.f32.mrb[0].mxu0
        %1907 = vdwg.mxu0
        %v1908 = vadd.f32 %v1674, %v1878
        %v1909 = vadd.f32 %v1675, %v1881
        %v1910 = vadd.f32 %v1676, %v1886
        %v1911 = vadd.f32 %v1677, %v1889
        %v1912 = vadd.f32 %v1678, %v1894
        %v1913 = vadd.f32 %v1679, %v1897
        %v1914 = vadd.f32 %v1680, %v1902
        %v1915 = vadd.f32 %v1681, %v1905
        %s1916 = scalar_lea.vmem %s331, 192 [#allocation5]
        %v1917 = vld [vmem:[%s1916] sm:$0xf]
        %v1918 = vld [vmem:[%s1916 + $0x4] sm:$0xf]
        %v1919 = vld [vmem:[%s1916 + $0x8] sm:$0xf]
        %v1920 = vld [vmem:[%s1916 + $0xc] sm:$0xf]
        %v1921 = vld [vmem:[%s1916 + $0x10] sm:$0xf]
        %v1922 = vld [vmem:[%s1916 + $0x14] sm:$0xf]
        %v1923 = vld [vmem:[%s1916 + $0x18] sm:$0xf]
        %v1924 = vld [vmem:[%s1916 + $0x1c] sm:$0xf]
        %v1925 = vld [vmem:[%s1916 + $0x20] sm:$0xf]
        %v1926 = vld [vmem:[%s1916 + $0x24] sm:$0xf]
        %v1927 = vld [vmem:[%s1916 + $0x28] sm:$0xf]
        %v1928 = vld [vmem:[%s1916 + $0x2c] sm:$0xf]
        %v1929 = vld [vmem:[%s1916 + $0x30] sm:$0xf]
        %v1930 = vld [vmem:[%s1916 + $0x34] sm:$0xf]
        %v1931 = vld [vmem:[%s1916 + $0x38] sm:$0xf]
        %v1932 = vld [vmem:[%s1916 + $0x3c] sm:$0xf]
        %v1934 = vunpack.c.l.b16 %v420
        %v1935 = vpack.c.b16 %v703, %v702
        %v1936 = vpack.c.b16 %v705, %v704
        %v1937 = vpack.c.b16 %v707, %v706
        %v1938 = vpack.c.b16 %v1934, %v708
        %v1959 = vunpack.c.l.b16 %v1917
        %v1960 = vunpack.c.l.b16 %v1918
        %v1961 = vunpack.c.l.b16 %v1919
        %v1962 = vunpack.c.l.b16 %v1920
        %v1963 = vunpack.c.l.b16 %v1921
        %v1964 = vunpack.c.l.b16 %v1922
        %v1965 = vunpack.c.l.b16 %v1923
        %v1966 = vunpack.c.l.b16 %v1924
        %v1967 = vunpack.c.l.b16 %v1925
        %v1968 = vunpack.c.l.b16 %v1926
        %v1969 = vunpack.c.l.b16 %v1927
        %v1970 = vunpack.c.l.b16 %v1928
        %v1971 = vunpack.c.l.b16 %v1929
        %v1972 = vunpack.c.l.b16 %v1930
        %v1973 = vunpack.c.l.b16 %v1931
        %v1974 = vunpack.c.l.b16 %v1932
        %v1975 = vpack.c.b16 %v1960, %v1959
        %v1976 = vpack.c.b16 %v1962, %v1961
        %v1977 = vpack.c.b16 %v1964, %v1963
        %v1978 = vpack.c.b16 %v1966, %v1965
        %v1979 = vpack.c.b16 %v1968, %v1967
        %v1980 = vpack.c.b16 %v1970, %v1969
        %v1981 = vpack.c.b16 %v1972, %v1971
        %v1982 = vpack.c.b16 %v1974, %v1973
        %1991 = vmatprep.subr.bf16.mxu0 0
        %1992 = vmatpush1.bf16.msra.mxu0 %v1975
        %1993 = vmatprep.subr.bf16.mxu0 0
        %1994 = vmatpush1.bf16.msra.mxu0 %v1976
        %1995 = vmatprep.subr.bf16.mxu0 0
        %1996 = vmatpush1.bf16.msra.mxu0 %v1977
        %1997 = vmatprep.subr.bf16.mxu0 0
        %1998 = vmatpush1.bf16.msra.mxu0 %v1978
        %1999 = vmatprep.subr.bf16.mxu0 0
        %2000 = vmatpush1.bf16.msra.mxu0 %v1979
        %2001 = vmatprep.subr.bf16.mxu0 0
        %2002 = vmatpush1.bf16.msra.mxu0 %v1980
        %2003 = vmatprep.subr.bf16.mxu0 0
        %2004 = vmatpush1.bf16.msra.mxu0 %v1981
        %2005 = vmatprep.subr.bf16.mxu0 0
        %2006 = vmatpush1.bf16.msra.mxu0 %v1982
        %2007 = vmatprep.subr.bf16.mxu0 0
        %2008 = vmatpush1.bf16.msra.mxu0 0
        %2009 = vmatprep.subr.bf16.mxu0 0
        %2010 = vmatpush1.bf16.msra.mxu0 0
        %2011 = vmatprep.subr.bf16.mxu0 0
        %2012 = vmatpush1.bf16.msra.mxu0 0
        %2013 = vmatprep.subr.bf16.mxu0 0
        %2014 = vmatpush1.bf16.msra.mxu0 0
        %2015 = vmatprep.subr.bf16.mxu0 0
        %2016 = vmatpush1.bf16.msra.mxu0 0
        %2017 = vmatprep.subr.bf16.mxu0 0
        %2018 = vmatpush1.bf16.msra.mxu0 0
        %2019 = vmatprep.subr.bf16.mxu0 0
        %2020 = vmatpush1.bf16.msra.mxu0 0
        %2021 = vmatprep.subr.bf16.mxu0 0
        %2022 = vmatpush1.bf16.msra.mxu0 0
        %2023 = vmatprep.mubr.bf16.mxu0 0
        %2024 = vmatmul.mubr.bf16.gmra.mrb[0].mxu0 %v1935
        %v2025 = vpop.f32.mrb[0].mxu0
        %v2026 = vadd.f32 0.0, %v2025
        %v2027 = vpop.f32.mrb[0].mxu0
        %v2028 = vpop.f32.mrb[0].mxu0
        %v2029 = vadd.f32 0.0, %v2028
        %v2030 = vpop.f32.mrb[0].mxu0
        %2031 = vmatprep.mubr.bf16.mxu0 0
        %2032 = vmatmul.mubr.bf16.gmra.mrb[0].mxu0 %v1936
        %v2033 = vpop.f32.mrb[0].mxu0
        %v2034 = vadd.f32 0.0, %v2033
        %v2035 = vpop.f32.mrb[0].mxu0
        %v2036 = vpop.f32.mrb[0].mxu0
        %v2037 = vadd.f32 0.0, %v2036
        %v2038 = vpop.f32.mrb[0].mxu0
        %2039 = vmatprep.mubr.bf16.mxu0 0
        %2040 = vmatmul.mubr.bf16.gmra.mrb[0].mxu0 %v1937
        %v2041 = vpop.f32.mrb[0].mxu0
        %v2042 = vadd.f32 0.0, %v2041
        %v2043 = vpop.f32.mrb[0].mxu0
        %v2044 = vpop.f32.mrb[0].mxu0
        %v2045 = vadd.f32 0.0, %v2044
        %v2046 = vpop.f32.mrb[0].mxu0
        %2047 = vmatprep.mubr.bf16.mxu0 0
        %2048 = vmatmul.mubr.bf16.gmra.mrb[0].mxu0 %v1938
        %v2049 = vpop.f32.mrb[0].mxu0
        %v2050 = vadd.f32 0.0, %v2049
        %v2051 = vpop.f32.mrb[0].mxu0
        %v2052 = vpop.f32.mrb[0].mxu0
        %v2053 = vadd.f32 0.0, %v2052
        %v2054 = vpop.f32.mrb[0].mxu0
        %2055 = vdwg.mxu0
        %v2056 = vadd.f32 %v1908, %v2026
        %v2057 = vadd.f32 %v1909, %v2029
        %v2058 = vadd.f32 %v1910, %v2034
        %v2059 = vadd.f32 %v1911, %v2037
        %v2060 = vadd.f32 %v1912, %v2042
        %v2061 = vadd.f32 %v1913, %v2045
        %v2062 = vadd.f32 %v1914, %v2050
        %v2063 = vadd.f32 %v1915, %v2053
        %s2064 = scalar_lea.vmem %s349, 384 [#allocation8]
        %v2065 = vld [vmem:[%s2064] sm:$0xf]
        %v2066 = vld [vmem:[%s2064 + $0x4] sm:$0xf]
        %v2067 = vld [vmem:[%s2064 + $0x8] sm:$0xf]
        %v2068 = vld [vmem:[%s2064 + $0xc] sm:$0xf]
        %v2069 = vld [vmem:[%s2064 + $0x10] sm:$0xf]
        %v2070 = vld [vmem:[%s2064 + $0x14] sm:$0xf]
        %v2071 = vld [vmem:[%s2064 + $0x18] sm:$0xf]
        %v2072 = vld [vmem:[%s2064 + $0x1c] sm:$0xf]
        %v2073 = vld [vmem:[%s2064 + $0x20] sm:$0xf]
        %v2074 = vld [vmem:[%s2064 + $0x24] sm:$0xf]
        %v2075 = vld [vmem:[%s2064 + $0x28] sm:$0xf]
        %v2076 = vld [vmem:[%s2064 + $0x2c] sm:$0xf]
        %v2077 = vld [vmem:[%s2064 + $0x30] sm:$0xf]
        %v2078 = vld [vmem:[%s2064 + $0x34] sm:$0xf]
        %v2079 = vld [vmem:[%s2064 + $0x38] sm:$0xf]
        %v2080 = vld [vmem:[%s2064 + $0x3c] sm:$0xf]
        %v2081 = vld [vmem:[%s2064 + $0x40] sm:$0xf]
        %v2082 = vld [vmem:[%s2064 + $0x44] sm:$0xf]
        %v2083 = vld [vmem:[%s2064 + $0x48] sm:$0xf]
        %v2084 = vld [vmem:[%s2064 + $0x4c] sm:$0xf]
        %v2085 = vld [vmem:[%s2064 + $0x50] sm:$0xf]
        %v2086 = vld [vmem:[%s2064 + $0x54] sm:$0xf]
        %v2087 = vld [vmem:[%s2064 + $0x58] sm:$0xf]
        %v2088 = vld [vmem:[%s2064 + $0x5c] sm:$0xf]
        %v2089 = vld [vmem:[%s2064 + $0x60] sm:$0xf]
        %v2090 = vld [vmem:[%s2064 + $0x64] sm:$0xf]
        %v2091 = vld [vmem:[%s2064 + $0x68] sm:$0xf]
        %v2092 = vld [vmem:[%s2064 + $0x6c] sm:$0xf]
        %v2093 = vld [vmem:[%s2064 + $0x70] sm:$0xf]
        %v2094 = vld [vmem:[%s2064 + $0x74] sm:$0xf]
        %v2095 = vld [vmem:[%s2064 + $0x78] sm:$0xf]
        %v2096 = vld [vmem:[%s2064 + $0x7c] sm:$0xf]
        %v2098 = vunpack.c.l.b16 %v440
        %v2099 = vunpack.c.h.b16 %v440
        %v2100 = vpack.c.b16 %v504, %v502
        %v2101 = vpack.c.b16 %v505, %v503
        %v2102 = vpack.c.b16 %v508, %v506
        %v2103 = vpack.c.b16 %v509, %v507
        %v2104 = vpack.c.b16 %v512, %v510
        %v2105 = vpack.c.b16 %v513, %v511
        %v2106 = vpack.c.b16 %v2098, %v514
        %v2107 = vpack.c.b16 %v2099, %v515
        %v2148 = vunpack.c.l.b16 %v2065
        %v2149 = vunpack.c.l.b16 %v2066
        %v2150 = vunpack.c.l.b16 %v2067
        %v2151 = vunpack.c.l.b16 %v2068
        %v2152 = vunpack.c.l.b16 %v2069
        %v2153 = vunpack.c.l.b16 %v2070
        %v2154 = vunpack.c.l.b16 %v2071
        %v2155 = vunpack.c.l.b16 %v2072
        %v2156 = vunpack.c.l.b16 %v2073
        %v2157 = vunpack.c.l.b16 %v2074
        %v2158 = vunpack.c.l.b16 %v2075
        %v2159 = vunpack.c.l.b16 %v2076
        %v2160 = vunpack.c.l.b16 %v2077
        %v2161 = vunpack.c.l.b16 %v2078
        %v2162 = vunpack.c.l.b16 %v2079
        %v2163 = vunpack.c.l.b16 %v2080
        %v2164 = vunpack.c.l.b16 %v2081
        %v2165 = vunpack.c.l.b16 %v2082
        %v2166 = vunpack.c.l.b16 %v2083
        %v2167 = vunpack.c.l.b16 %v2084
        %v2168 = vunpack.c.l.b16 %v2085
        %v2169 = vunpack.c.l.b16 %v2086
        %v2170 = vunpack.c.l.b16 %v2087
        %v2171 = vunpack.c.l.b16 %v2088
        %v2172 = vunpack.c.l.b16 %v2089
        %v2173 = vunpack.c.l.b16 %v2090
        %v2174 = vunpack.c.l.b16 %v2091
        %v2175 = vunpack.c.l.b16 %v2092
        %v2176 = vunpack.c.l.b16 %v2093
        %v2177 = vunpack.c.l.b16 %v2094
        %v2178 = vunpack.c.l.b16 %v2095
        %v2179 = vunpack.c.l.b16 %v2096
        %v2180 = vpack.c.b16 %v2149, %v2148
        %v2181 = vpack.c.b16 %v2151, %v2150
        %v2182 = vpack.c.b16 %v2153, %v2152
        %v2183 = vpack.c.b16 %v2155, %v2154
        %v2184 = vpack.c.b16 %v2157, %v2156
        %v2185 = vpack.c.b16 %v2159, %v2158
        %v2186 = vpack.c.b16 %v2161, %v2160
        %v2187 = vpack.c.b16 %v2163, %v2162
        %v2188 = vpack.c.b16 %v2165, %v2164
        %v2189 = vpack.c.b16 %v2167, %v2166
        %v2190 = vpack.c.b16 %v2169, %v2168
        %v2191 = vpack.c.b16 %v2171, %v2170
        %v2192 = vpack.c.b16 %v2173, %v2172
        %v2193 = vpack.c.b16 %v2175, %v2174
        %v2194 = vpack.c.b16 %v2177, %v2176
        %v2195 = vpack.c.b16 %v2179, %v2178
        %2212 = vmatprep.subr.bf16.mxu0 0
        %2213 = vmatpush1.bf16.msra.mxu0 %v2180
        %2214 = vmatprep.subr.bf16.mxu0 0
        %2215 = vmatpush1.bf16.msra.mxu0 %v2181
        %2216 = vmatprep.subr.bf16.mxu0 0
        %2217 = vmatpush1.bf16.msra.mxu0 %v2182
        %2218 = vmatprep.subr.bf16.mxu0 0
        %2219 = vmatpush1.bf16.msra.mxu0 %v2183
        %2220 = vmatprep.subr.bf16.mxu0 0
        %2221 = vmatpush1.bf16.msra.mxu0 %v2184
        %2222 = vmatprep.subr.bf16.mxu0 0
        %2223 = vmatpush1.bf16.msra.mxu0 %v2185
        %2224 = vmatprep.subr.bf16.mxu0 0
        %2225 = vmatpush1.bf16.msra.mxu0 %v2186
        %2226 = vmatprep.subr.bf16.mxu0 0
        %2227 = vmatpush1.bf16.msra.mxu0 %v2187
        %2228 = vmatprep.subr.bf16.mxu0 0
        %2229 = vmatpush1.bf16.msra.mxu0 %v2188
        %2230 = vmatprep.subr.bf16.mxu0 0
        %2231 = vmatpush1.bf16.msra.mxu0 %v2189
        %2232 = vmatprep.subr.bf16.mxu0 0
        %2233 = vmatpush1.bf16.msra.mxu0 %v2190
        %2234 = vmatprep.subr.bf16.mxu0 0
        %2235 = vmatpush1.bf16.msra.mxu0 %v2191
        %2236 = vmatprep.subr.bf16.mxu0 0
        %2237 = vmatpush1.bf16.msra.mxu0 %v2192
        %2238 = vmatprep.subr.bf16.mxu0 0
        %2239 = vmatpush1.bf16.msra.mxu0 %v2193
        %2240 = vmatprep.subr.bf16.mxu0 0
        %2241 = vmatpush1.bf16.msra.mxu0 %v2194
        %2242 = vmatprep.subr.bf16.mxu0 0
        %2243 = vmatpush1.bf16.msra.mxu0 %v2195
        %2244 = vmatprep.mubr.bf16.mxu0 %v2101
        %2245 = vmatmul.mubr.bf16.gmra.mrb[0].mxu0 %v2100
        %v2246 = vpop.f32.mrb[0].mxu0
        %v2247 = vadd.f32 0.0, %v2246
        %v2248 = vpop.f32.mrb[0].mxu0
        %v2249 = vpop.f32.mrb[0].mxu0
        %v2250 = vadd.f32 0.0, %v2249
        %v2251 = vpop.f32.mrb[0].mxu0
        %2252 = vmatprep.mubr.bf16.mxu0 %v2103
        %2253 = vmatmul.mubr.bf16.gmra.mrb[0].mxu0 %v2102
        %v2254 = vpop.f32.mrb[0].mxu0
        %v2255 = vadd.f32 0.0, %v2254
        %v2256 = vpop.f32.mrb[0].mxu0
        %v2257 = vpop.f32.mrb[0].mxu0
        %v2258 = vadd.f32 0.0, %v2257
        %v2259 = vpop.f32.mrb[0].mxu0
        %2260 = vmatprep.mubr.bf16.mxu0 %v2105
        %2261 = vmatmul.mubr.bf16.gmra.mrb[0].mxu0 %v2104
        %v2262 = vpop.f32.mrb[0].mxu0
        %v2263 = vadd.f32 0.0, %v2262
        %v2264 = vpop.f32.mrb[0].mxu0
        %v2265 = vpop.f32.mrb[0].mxu0
        %v2266 = vadd.f32 0.0, %v2265
        %v2267 = vpop.f32.mrb[0].mxu0
        %2268 = vmatprep.mubr.bf16.mxu0 %v2107
        %2269 = vmatmul.mubr.bf16.gmra.mrb[0].mxu0 %v2106
        %v2270 = vpop.f32.mrb[0].mxu0
        %v2271 = vadd.f32 0.0, %v2270
        %v2272 = vpop.f32.mrb[0].mxu0
        %v2273 = vpop.f32.mrb[0].mxu0
        %v2274 = vadd.f32 0.0, %v2273
        %v2275 = vpop.f32.mrb[0].mxu0
        %2276 = vdwg.mxu0
        %v2277 = vadd.f32 %v2056, %v2247
        %v2278 = vadd.f32 %v2057, %v2250
        %v2279 = vadd.f32 %v2058, %v2255
        %v2280 = vadd.f32 %v2059, %v2258
        %v2281 = vadd.f32 %v2060, %v2263
        %v2282 = vadd.f32 %v2061, %v2266
        %v2283 = vadd.f32 %v2062, %v2271
        %v2284 = vadd.f32 %v2063, %v2274
        %v2286 = vshrl.u32 %v420, 16
        %v2288 = vrot.slane %v2286, 4
        %v2289 = vshll.u32 %v420, 16
        %v2291 = vrot.slane %v2289, 5
        %v2292 = vor.u32 %v2288, %v2291
        %v2293 = vrot.slane %v2292, 4
        %v2295 = vshll.u32 %v421, 16
        %v2297 = vrot.slane %v2295, 5
        %v2298 = vsel %vm832, %v2293, %v2297
        %v2300 = vshrl.u32 %v440, 16
        %v2302 = vrot.slane %v2300, 4
        %v2303 = vshll.u32 %v440, 16
        %v2305 = vrot.slane %v2303, 5
        %v2306 = vor.u32 %v2302, %v2305
        %v2307 = vrot.slane %v2306, 4
        %v2309 = vshll.u32 %v441, 16
        %v2311 = vrot.slane %v2309, 5
        %v2312 = vsel %vm832, %v2307, %v2311
        %s2313 = scalar_lea.vmem %s331, 256 [#allocation5]
        %v2314 = vld [vmem:[%s2313] sm:$0xf]
        %v2315 = vld [vmem:[%s2313 + $0x4] sm:$0xf]
        %v2316 = vld [vmem:[%s2313 + $0x8] sm:$0xf]
        %v2317 = vld [vmem:[%s2313 + $0xc] sm:$0xf]
        %v2318 = vld [vmem:[%s2313 + $0x10] sm:$0xf]
        %v2319 = vld [vmem:[%s2313 + $0x14] sm:$0xf]
        %v2320 = vld [vmem:[%s2313 + $0x18] sm:$0xf]
        %v2321 = vld [vmem:[%s2313 + $0x1c] sm:$0xf]
        %v2322 = vld [vmem:[%s2313 + $0x20] sm:$0xf]
        %v2323 = vld [vmem:[%s2313 + $0x24] sm:$0xf]
        %v2324 = vld [vmem:[%s2313 + $0x28] sm:$0xf]
        %v2325 = vld [vmem:[%s2313 + $0x2c] sm:$0xf]
        %v2326 = vld [vmem:[%s2313 + $0x30] sm:$0xf]
        %v2327 = vld [vmem:[%s2313 + $0x34] sm:$0xf]
        %v2328 = vld [vmem:[%s2313 + $0x38] sm:$0xf]
        %v2329 = vld [vmem:[%s2313 + $0x3c] sm:$0xf]
        %v2330 = vunpack.c.l.b16 %v2298
        %v2331 = vpack.c.b16 %v1076, %v1075
        %v2332 = vpack.c.b16 %v1078, %v1077
        %v2333 = vpack.c.b16 %v1080, %v1079
        %v2334 = vpack.c.b16 %v2330, %v1081
        %v2355 = vunpack.c.l.b16 %v2314
        %v2356 = vunpack.c.l.b16 %v2315
        %v2357 = vunpack.c.l.b16 %v2316
        %v2358 = vunpack.c.l.b16 %v2317
        %v2359 = vunpack.c.l.b16 %v2318
        %v2360 = vunpack.c.l.b16 %v2319
        %v2361 = vunpack.c.l.b16 %v2320
        %v2362 = vunpack.c.l.b16 %v2321
        %v2363 = vunpack.c.l.b16 %v2322
        %v2364 = vunpack.c.l.b16 %v2323
        %v2365 = vunpack.c.l.b16 %v2324
        %v2366 = vunpack.c.l.b16 %v2325
        %v2367 = vunpack.c.l.b16 %v2326
        %v2368 = vunpack.c.l.b16 %v2327
        %v2369 = vunpack.c.l.b16 %v2328
        %v2370 = vunpack.c.l.b16 %v2329
        %v2371 = vpack.c.b16 %v2356, %v2355
        %v2372 = vpack.c.b16 %v2358, %v2357
        %v2373 = vpack.c.b16 %v2360, %v2359
        %v2374 = vpack.c.b16 %v2362, %v2361
        %v2375 = vpack.c.b16 %v2364, %v2363
        %v2376 = vpack.c.b16 %v2366, %v2365
        %v2377 = vpack.c.b16 %v2368, %v2367
        %v2378 = vpack.c.b16 %v2370, %v2369
        %2387 = vmatprep.subr.bf16.mxu0 0
        %2388 = vmatpush1.bf16.msra.mxu0 %v2371
        %2389 = vmatprep.subr.bf16.mxu0 0
        %2390 = vmatpush1.bf16.msra.mxu0 %v2372
        %2391 = vmatprep.subr.bf16.mxu0 0
        %2392 = vmatpush1.bf16.msra.mxu0 %v2373
        %2393 = vmatprep.subr.bf16.mxu0 0
        %2394 = vmatpush1.bf16.msra.mxu0 %v2374
        %2395 = vmatprep.subr.bf16.mxu0 0
        %2396 = vmatpush1.bf16.msra.mxu0 %v2375
        %2397 = vmatprep.subr.bf16.mxu0 0
        %2398 = vmatpush1.bf16.msra.mxu0 %v2376
        %2399 = vmatprep.subr.bf16.mxu0 0
        %2400 = vmatpush1.bf16.msra.mxu0 %v2377
        %2401 = vmatprep.subr.bf16.mxu0 0
        %2402 = vmatpush1.bf16.msra.mxu0 %v2378
        %2403 = vmatprep.subr.bf16.mxu0 0
        %2404 = vmatpush1.bf16.msra.mxu0 0
        %2405 = vmatprep.subr.bf16.mxu0 0
        %2406 = vmatpush1.bf16.msra.mxu0 0
        %2407 = vmatprep.subr.bf16.mxu0 0
        %2408 = vmatpush1.bf16.msra.mxu0 0
        %2409 = vmatprep.subr.bf16.mxu0 0
        %2410 = vmatpush1.bf16.msra.mxu0 0
        %2411 = vmatprep.subr.bf16.mxu0 0
        %2412 = vmatpush1.bf16.msra.mxu0 0
        %2413 = vmatprep.subr.bf16.mxu0 0
        %2414 = vmatpush1.bf16.msra.mxu0 0
        %2415 = vmatprep.subr.bf16.mxu0 0
        %2416 = vmatpush1.bf16.msra.mxu0 0
        %2417 = vmatprep.subr.bf16.mxu0 0
        %2418 = vmatpush1.bf16.msra.mxu0 0
        %2419 = vmatprep.mubr.bf16.mxu0 0
        %2420 = vmatmul.mubr.bf16.gmra.mrb[0].mxu0 %v2331
        %v2421 = vpop.f32.mrb[0].mxu0
        %v2422 = vadd.f32 0.0, %v2421
        %v2423 = vpop.f32.mrb[0].mxu0
        %v2424 = vpop.f32.mrb[0].mxu0
        %v2425 = vadd.f32 0.0, %v2424
        %v2426 = vpop.f32.mrb[0].mxu0
        %2427 = vmatprep.mubr.bf16.mxu0 0
        %2428 = vmatmul.mubr.bf16.gmra.mrb[0].mxu0 %v2332
        %v2429 = vpop.f32.mrb[0].mxu0
        %v2430 = vadd.f32 0.0, %v2429
        %v2431 = vpop.f32.mrb[0].mxu0
        %v2432 = vpop.f32.mrb[0].mxu0
        %v2433 = vadd.f32 0.0, %v2432
        %v2434 = vpop.f32.mrb[0].mxu0
        %2435 = vmatprep.mubr.bf16.mxu0 0
        %2436 = vmatmul.mubr.bf16.gmra.mrb[0].mxu0 %v2333
        %v2437 = vpop.f32.mrb[0].mxu0
        %v2438 = vadd.f32 0.0, %v2437
        %v2439 = vpop.f32.mrb[0].mxu0
        %v2440 = vpop.f32.mrb[0].mxu0
        %v2441 = vadd.f32 0.0, %v2440
        %v2442 = vpop.f32.mrb[0].mxu0
        %2443 = vmatprep.mubr.bf16.mxu0 0
        %2444 = vmatmul.mubr.bf16.gmra.mrb[0].mxu0 %v2334
        %v2445 = vpop.f32.mrb[0].mxu0
        %v2446 = vadd.f32 0.0, %v2445
        %v2447 = vpop.f32.mrb[0].mxu0
        %v2448 = vpop.f32.mrb[0].mxu0
        %v2449 = vadd.f32 0.0, %v2448
        %v2450 = vpop.f32.mrb[0].mxu0
        %2451 = vdwg.mxu0
        %v2452 = vadd.f32 %v2277, %v2422
        %v2453 = vadd.f32 %v2278, %v2425
        %v2454 = vadd.f32 %v2279, %v2430
        %v2455 = vadd.f32 %v2280, %v2433
        %v2456 = vadd.f32 %v2281, %v2438
        %v2457 = vadd.f32 %v2282, %v2441
        %v2458 = vadd.f32 %v2283, %v2446
        %v2459 = vadd.f32 %v2284, %v2449
        %s2460 = scalar_lea.vmem %s349, 512 [#allocation8]
        %v2461 = vld [vmem:[%s2460] sm:$0xf]
        %v2462 = vld [vmem:[%s2460 + $0x4] sm:$0xf]
        %v2463 = vld [vmem:[%s2460 + $0x8] sm:$0xf]
        %v2464 = vld [vmem:[%s2460 + $0xc] sm:$0xf]
        %v2465 = vld [vmem:[%s2460 + $0x10] sm:$0xf]
        %v2466 = vld [vmem:[%s2460 + $0x14] sm:$0xf]
        %v2467 = vld [vmem:[%s2460 + $0x18] sm:$0xf]
        %v2468 = vld [vmem:[%s2460 + $0x1c] sm:$0xf]
        %v2469 = vld [vmem:[%s2460 + $0x20] sm:$0xf]
        %v2470 = vld [vmem:[%s2460 + $0x24] sm:$0xf]
        %v2471 = vld [vmem:[%s2460 + $0x28] sm:$0xf]
        %v2472 = vld [vmem:[%s2460 + $0x2c] sm:$0xf]
        %v2473 = vld [vmem:[%s2460 + $0x30] sm:$0xf]
        %v2474 = vld [vmem:[%s2460 + $0x34] sm:$0xf]
        %v2475 = vld [vmem:[%s2460 + $0x38] sm:$0xf]
        %v2476 = vld [vmem:[%s2460 + $0x3c] sm:$0xf]
        %v2477 = vld [vmem:[%s2460 + $0x40] sm:$0xf]
        %v2478 = vld [vmem:[%s2460 + $0x44] sm:$0xf]
        %v2479 = vld [vmem:[%s2460 + $0x48] sm:$0xf]
        %v2480 = vld [vmem:[%s2460 + $0x4c] sm:$0xf]
        %v2481 = vld [vmem:[%s2460 + $0x50] sm:$0xf]
        %v2482 = vld [vmem:[%s2460 + $0x54] sm:$0xf]
        %v2483 = vld [vmem:[%s2460 + $0x58] sm:$0xf]
        %v2484 = vld [vmem:[%s2460 + $0x5c] sm:$0xf]
        %v2485 = vld [vmem:[%s2460 + $0x60] sm:$0xf]
        %v2486 = vld [vmem:[%s2460 + $0x64] sm:$0xf]
        %v2487 = vld [vmem:[%s2460 + $0x68] sm:$0xf]
        %v2488 = vld [vmem:[%s2460 + $0x6c] sm:$0xf]
        %v2489 = vld [vmem:[%s2460 + $0x70] sm:$0xf]
        %v2490 = vld [vmem:[%s2460 + $0x74] sm:$0xf]
        %v2491 = vld [vmem:[%s2460 + $0x78] sm:$0xf]
        %v2492 = vld [vmem:[%s2460 + $0x7c] sm:$0xf]
        %v2493 = vunpack.c.l.b16 %v2312
        %v2494 = vunpack.c.h.b16 %v2312
        %v2495 = vpack.c.b16 %v1248, %v1246
        %v2496 = vpack.c.b16 %v1249, %v1247
        %v2497 = vpack.c.b16 %v1252, %v1250
        %v2498 = vpack.c.b16 %v1253, %v1251
        %v2499 = vpack.c.b16 %v1256, %v1254
        %v2500 = vpack.c.b16 %v1257, %v1255
        %v2501 = vpack.c.b16 %v2493, %v1258
        %v2502 = vpack.c.b16 %v2494, %v1259
        %v2543 = vunpack.c.l.b16 %v2461
        %v2544 = vunpack.c.l.b16 %v2462
        %v2545 = vunpack.c.l.b16 %v2463
        %v2546 = vunpack.c.l.b16 %v2464
        %v2547 = vunpack.c.l.b16 %v2465
        %v2548 = vunpack.c.l.b16 %v2466
        %v2549 = vunpack.c.l.b16 %v2467
        %v2550 = vunpack.c.l.b16 %v2468
        %v2551 = vunpack.c.l.b16 %v2469
        %v2552 = vunpack.c.l.b16 %v2470
        %v2553 = vunpack.c.l.b16 %v2471
        %v2554 = vunpack.c.l.b16 %v2472
        %v2555 = vunpack.c.l.b16 %v2473
        %v2556 = vunpack.c.l.b16 %v2474
        %v2557 = vunpack.c.l.b16 %v2475
        %v2558 = vunpack.c.l.b16 %v2476
        %v2559 = vunpack.c.l.b16 %v2477
        %v2560 = vunpack.c.l.b16 %v2478
        %v2561 = vunpack.c.l.b16 %v2479
        %v2562 = vunpack.c.l.b16 %v2480
        %v2563 = vunpack.c.l.b16 %v2481
        %v2564 = vunpack.c.l.b16 %v2482
        %v2565 = vunpack.c.l.b16 %v2483
        %v2566 = vunpack.c.l.b16 %v2484
        %v2567 = vunpack.c.l.b16 %v2485
        %v2568 = vunpack.c.l.b16 %v2486
        %v2569 = vunpack.c.l.b16 %v2487
        %v2570 = vunpack.c.l.b16 %v2488
        %v2571 = vunpack.c.l.b16 %v2489
        %v2572 = vunpack.c.l.b16 %v2490
        %v2573 = vunpack.c.l.b16 %v2491
        %v2574 = vunpack.c.l.b16 %v2492
        %v2575 = vpack.c.b16 %v2544, %v2543
        %v2576 = vpack.c.b16 %v2546, %v2545
        %v2577 = vpack.c.b16 %v2548, %v2547
        %v2578 = vpack.c.b16 %v2550, %v2549
        %v2579 = vpack.c.b16 %v2552, %v2551
        %v2580 = vpack.c.b16 %v2554, %v2553
        %v2581 = vpack.c.b16 %v2556, %v2555
        %v2582 = vpack.c.b16 %v2558, %v2557
        %v2583 = vpack.c.b16 %v2560, %v2559
        %v2584 = vpack.c.b16 %v2562, %v2561
        %v2585 = vpack.c.b16 %v2564, %v2563
        %v2586 = vpack.c.b16 %v2566, %v2565
        %v2587 = vpack.c.b16 %v2568, %v2567
        %v2588 = vpack.c.b16 %v2570, %v2569
        %v2589 = vpack.c.b16 %v2572, %v2571
        %v2590 = vpack.c.b16 %v2574, %v2573
        %2607 = vmatprep.subr.bf16.mxu0 0
        %2608 = vmatpush1.bf16.msra.mxu0 %v2575
        %2609 = vmatprep.subr.bf16.mxu0 0
        %2610 = vmatpush1.bf16.msra.mxu0 %v2576
        %2611 = vmatprep.subr.bf16.mxu0 0
        %2612 = vmatpush1.bf16.msra.mxu0 %v2577
        %2613 = vmatprep.subr.bf16.mxu0 0
        %2614 = vmatpush1.bf16.msra.mxu0 %v2578
        %2615 = vmatprep.subr.bf16.mxu0 0
        %2616 = vmatpush1.bf16.msra.mxu0 %v2579
        %2617 = vmatprep.subr.bf16.mxu0 0
        %2618 = vmatpush1.bf16.msra.mxu0 %v2580
        %2619 = vmatprep.subr.bf16.mxu0 0
        %2620 = vmatpush1.bf16.msra.mxu0 %v2581
        %2621 = vmatprep.subr.bf16.mxu0 0
        %2622 = vmatpush1.bf16.msra.mxu0 %v2582
        %2623 = vmatprep.subr.bf16.mxu0 0
        %2624 = vmatpush1.bf16.msra.mxu0 %v2583
        %2625 = vmatprep.subr.bf16.mxu0 0
        %2626 = vmatpush1.bf16.msra.mxu0 %v2584
        %2627 = vmatprep.subr.bf16.mxu0 0
        %2628 = vmatpush1.bf16.msra.mxu0 %v2585
        %2629 = vmatprep.subr.bf16.mxu0 0
        %2630 = vmatpush1.bf16.msra.mxu0 %v2586
        %2631 = vmatprep.subr.bf16.mxu0 0
        %2632 = vmatpush1.bf16.msra.mxu0 %v2587
        %2633 = vmatprep.subr.bf16.mxu0 0
        %2634 = vmatpush1.bf16.msra.mxu0 %v2588
        %2635 = vmatprep.subr.bf16.mxu0 0
        %2636 = vmatpush1.bf16.msra.mxu0 %v2589
        %2637 = vmatprep.subr.bf16.mxu0 0
        %2638 = vmatpush1.bf16.msra.mxu0 %v2590
        %2639 = vmatprep.mubr.bf16.mxu0 %v2496
        %2640 = vmatmul.mubr.bf16.gmra.mrb[0].mxu0 %v2495
        %v2641 = vpop.f32.mrb[0].mxu0
        %v2642 = vadd.f32 0.0, %v2641
        %v2643 = vpop.f32.mrb[0].mxu0
        %v2644 = vpop.f32.mrb[0].mxu0
        %v2645 = vadd.f32 0.0, %v2644
        %v2646 = vpop.f32.mrb[0].mxu0
        %2647 = vmatprep.mubr.bf16.mxu0 %v2498
        %2648 = vmatmul.mubr.bf16.gmra.mrb[0].mxu0 %v2497
        %v2649 = vpop.f32.mrb[0].mxu0
        %v2650 = vadd.f32 0.0, %v2649
        %v2651 = vpop.f32.mrb[0].mxu0
        %v2652 = vpop.f32.mrb[0].mxu0
        %v2653 = vadd.f32 0.0, %v2652
        %v2654 = vpop.f32.mrb[0].mxu0
        %2655 = vmatprep.mubr.bf16.mxu0 %v2500
        %2656 = vmatmul.mubr.bf16.gmra.mrb[0].mxu0 %v2499
        %v2657 = vpop.f32.mrb[0].mxu0
        %v2658 = vadd.f32 0.0, %v2657
        %v2659 = vpop.f32.mrb[0].mxu0
        %v2660 = vpop.f32.mrb[0].mxu0
        %v2661 = vadd.f32 0.0, %v2660
        %v2662 = vpop.f32.mrb[0].mxu0
        %2663 = vmatprep.mubr.bf16.mxu0 %v2502
        %2664 = vmatmul.mubr.bf16.gmra.mrb[0].mxu0 %v2501
        %v2665 = vpop.f32.mrb[0].mxu0
        %v2666 = vadd.f32 0.0, %v2665
        %v2667 = vpop.f32.mrb[0].mxu0
        %v2668 = vpop.f32.mrb[0].mxu0
        %v2669 = vadd.f32 0.0, %v2668
        %v2670 = vpop.f32.mrb[0].mxu0
        %2671 = vdwg.mxu0
        %v2672 = vadd.f32 %v2452, %v2642
        %v2673 = vadd.f32 %v2453, %v2645
        %v2674 = vadd.f32 %v2454, %v2650
        %v2675 = vadd.f32 %v2455, %v2653
        %v2676 = vadd.f32 %v2456, %v2658
        %v2677 = vadd.f32 %v2457, %v2661
        %v2678 = vadd.f32 %v2458, %v2666
        %v2679 = vadd.f32 %v2459, %v2669
        %v2681 = vrot.slane %v420, 5
        %v2682 = vrot.slane %v2681, 4
        %v2683 = vrot.slane %v421, 5
        %v2684 = vsel %vm1455, %v2682, %v2683
        %v2686 = vrot.slane %v440, 5
        %v2687 = vrot.slane %v2686, 4
        %v2688 = vrot.slane %v441, 5
        %v2689 = vsel %vm1455, %v2687, %v2688
        %s2690 = scalar_lea.vmem %s331, 320 [#allocation5]
        %v2691 = vld [vmem:[%s2690] sm:$0xf]
        %v2692 = vld [vmem:[%s2690 + $0x4] sm:$0xf]
        %v2693 = vld [vmem:[%s2690 + $0x8] sm:$0xf]
        %v2694 = vld [vmem:[%s2690 + $0xc] sm:$0xf]
        %v2695 = vld [vmem:[%s2690 + $0x10] sm:$0xf]
        %v2696 = vld [vmem:[%s2690 + $0x14] sm:$0xf]
        %v2697 = vld [vmem:[%s2690 + $0x18] sm:$0xf]
        %v2698 = vld [vmem:[%s2690 + $0x1c] sm:$0xf]
        %v2699 = vld [vmem:[%s2690 + $0x20] sm:$0xf]
        %v2700 = vld [vmem:[%s2690 + $0x24] sm:$0xf]
        %v2701 = vld [vmem:[%s2690 + $0x28] sm:$0xf]
        %v2702 = vld [vmem:[%s2690 + $0x2c] sm:$0xf]
        %v2703 = vld [vmem:[%s2690 + $0x30] sm:$0xf]
        %v2704 = vld [vmem:[%s2690 + $0x34] sm:$0xf]
        %v2705 = vld [vmem:[%s2690 + $0x38] sm:$0xf]
        %v2706 = vld [vmem:[%s2690 + $0x3c] sm:$0xf]
        %v2707 = vunpack.c.l.b16 %v2684
        %v2708 = vpack.c.b16 %v1547, %v1546
        %v2709 = vpack.c.b16 %v1549, %v1548
        %v2710 = vpack.c.b16 %v1551, %v1550
        %v2711 = vpack.c.b16 %v2707, %v1552
        %v2732 = vunpack.c.l.b16 %v2691
        %v2733 = vunpack.c.l.b16 %v2692
        %v2734 = vunpack.c.l.b16 %v2693
        %v2735 = vunpack.c.l.b16 %v2694
        %v2736 = vunpack.c.l.b16 %v2695
        %v2737 = vunpack.c.l.b16 %v2696
        %v2738 = vunpack.c.l.b16 %v2697
        %v2739 = vunpack.c.l.b16 %v2698
        %v2740 = vunpack.c.l.b16 %v2699
        %v2741 = vunpack.c.l.b16 %v2700
        %v2742 = vunpack.c.l.b16 %v2701
        %v2743 = vunpack.c.l.b16 %v2702
        %v2744 = vunpack.c.l.b16 %v2703
        %v2745 = vunpack.c.l.b16 %v2704
        %v2746 = vunpack.c.l.b16 %v2705
        %v2747 = vunpack.c.l.b16 %v2706
        %v2748 = vpack.c.b16 %v2733, %v2732
        %v2749 = vpack.c.b16 %v2735, %v2734
        %v2750 = vpack.c.b16 %v2737, %v2736
        %v2751 = vpack.c.b16 %v2739, %v2738
        %v2752 = vpack.c.b16 %v2741, %v2740
        %v2753 = vpack.c.b16 %v2743, %v2742
        %v2754 = vpack.c.b16 %v2745, %v2744
        %v2755 = vpack.c.b16 %v2747, %v2746
        %2764 = vmatprep.subr.bf16.mxu0 0
        %2765 = vmatpush1.bf16.msra.mxu0 %v2748
        %2766 = vmatprep.subr.bf16.mxu0 0
        %2767 = vmatpush1.bf16.msra.mxu0 %v2749
        %2768 = vmatprep.subr.bf16.mxu0 0
        %2769 = vmatpush1.bf16.msra.mxu0 %v2750
        %2770 = vmatprep.subr.bf16.mxu0 0
        %2771 = vmatpush1.bf16.msra.mxu0 %v2751
        %2772 = vmatprep.subr.bf16.mxu0 0
        %2773 = vmatpush1.bf16.msra.mxu0 %v2752
        %2774 = vmatprep.subr.bf16.mxu0 0
        %2775 = vmatpush1.bf16.msra.mxu0 %v2753
        %2776 = vmatprep.subr.bf16.mxu0 0
        %2777 = vmatpush1.bf16.msra.mxu0 %v2754
        %2778 = vmatprep.subr.bf16.mxu0 0
        %2779 = vmatpush1.bf16.msra.mxu0 %v2755
        %2780 = vmatprep.subr.bf16.mxu0 0
        %2781 = vmatpush1.bf16.msra.mxu0 0
        %2782 = vmatprep.subr.bf16.mxu0 0
        %2783 = vmatpush1.bf16.msra.mxu0 0
        %2784 = vmatprep.subr.bf16.mxu0 0
        %2785 = vmatpush1.bf16.msra.mxu0 0
        %2786 = vmatprep.subr.bf16.mxu0 0
        %2787 = vmatpush1.bf16.msra.mxu0 0
        %2788 = vmatprep.subr.bf16.mxu0 0
        %2789 = vmatpush1.bf16.msra.mxu0 0
        %2790 = vmatprep.subr.bf16.mxu0 0
        %2791 = vmatpush1.bf16.msra.mxu0 0
        %2792 = vmatprep.subr.bf16.mxu0 0
        %2793 = vmatpush1.bf16.msra.mxu0 0
        %2794 = vmatprep.subr.bf16.mxu0 0
        %2795 = vmatpush1.bf16.msra.mxu0 0
        %2796 = vmatprep.mubr.bf16.mxu0 0
        %2797 = vmatmul.mubr.bf16.gmra.mrb[0].mxu0 %v2708
        %v2798 = vpop.f32.mrb[0].mxu0
        %v2799 = vadd.f32 0.0, %v2798
        %v2800 = vpop.f32.mrb[0].mxu0
        %v2801 = vpop.f32.mrb[0].mxu0
        %v2802 = vadd.f32 0.0, %v2801
        %v2803 = vpop.f32.mrb[0].mxu0
        %2804 = vmatprep.mubr.bf16.mxu0 0
        %2805 = vmatmul.mubr.bf16.gmra.mrb[0].mxu0 %v2709
        %v2806 = vpop.f32.mrb[0].mxu0
        %v2807 = vadd.f32 0.0, %v2806
        %v2808 = vpop.f32.mrb[0].mxu0
        %v2809 = vpop.f32.mrb[0].mxu0
        %v2810 = vadd.f32 0.0, %v2809
        %v2811 = vpop.f32.mrb[0].mxu0
        %2812 = vmatprep.mubr.bf16.mxu0 0
        %2813 = vmatmul.mubr.bf16.gmra.mrb[0].mxu0 %v2710
        %v2814 = vpop.f32.mrb[0].mxu0
        %v2815 = vadd.f32 0.0, %v2814
        %v2816 = vpop.f32.mrb[0].mxu0
        %v2817 = vpop.f32.mrb[0].mxu0
        %v2818 = vadd.f32 0.0, %v2817
        %v2819 = vpop.f32.mrb[0].mxu0
        %2820 = vmatprep.mubr.bf16.mxu0 0
        %2821 = vmatmul.mubr.bf16.gmra.mrb[0].mxu0 %v2711
        %v2822 = vpop.f32.mrb[0].mxu0
        %v2823 = vadd.f32 0.0, %v2822
        %v2824 = vpop.f32.mrb[0].mxu0
        %v2825 = vpop.f32.mrb[0].mxu0
        %v2826 = vadd.f32 0.0, %v2825
        %v2827 = vpop.f32.mrb[0].mxu0
        %2828 = vdwg.mxu0
        %v2829 = vadd.f32 %v2672, %v2799
        %v2830 = vadd.f32 %v2673, %v2802
        %v2831 = vadd.f32 %v2674, %v2807
        %v2832 = vadd.f32 %v2675, %v2810
        %v2833 = vadd.f32 %v2676, %v2815
        %v2834 = vadd.f32 %v2677, %v2818
        %v2835 = vadd.f32 %v2678, %v2823
        %v2836 = vadd.f32 %v2679, %v2826
        %s2837 = scalar_lea.vmem %s349, 640 [#allocation8]
        %v2838 = vld [vmem:[%s2837] sm:$0xf]
        %v2839 = vld [vmem:[%s2837 + $0x4] sm:$0xf]
        %v2840 = vld [vmem:[%s2837 + $0x8] sm:$0xf]
        %v2841 = vld [vmem:[%s2837 + $0xc] sm:$0xf]
        %v2842 = vld [vmem:[%s2837 + $0x10] sm:$0xf]
        %v2843 = vld [vmem:[%s2837 + $0x14] sm:$0xf]
        %v2844 = vld [vmem:[%s2837 + $0x18] sm:$0xf]
        %v2845 = vld [vmem:[%s2837 + $0x1c] sm:$0xf]
        %v2846 = vld [vmem:[%s2837 + $0x20] sm:$0xf]
        %v2847 = vld [vmem:[%s2837 + $0x24] sm:$0xf]
        %v2848 = vld [vmem:[%s2837 + $0x28] sm:$0xf]
        %v2849 = vld [vmem:[%s2837 + $0x2c] sm:$0xf]
        %v2850 = vld [vmem:[%s2837 + $0x30] sm:$0xf]
        %v2851 = vld [vmem:[%s2837 + $0x34] sm:$0xf]
        %v2852 = vld [vmem:[%s2837 + $0x38] sm:$0xf]
        %v2853 = vld [vmem:[%s2837 + $0x3c] sm:$0xf]
        %v2854 = vld [vmem:[%s2837 + $0x40] sm:$0xf]
        %v2855 = vld [vmem:[%s2837 + $0x44] sm:$0xf]
        %v2856 = vld [vmem:[%s2837 + $0x48] sm:$0xf]
        %v2857 = vld [vmem:[%s2837 + $0x4c] sm:$0xf]
        %v2858 = vld [vmem:[%s2837 + $0x50] sm:$0xf]
        %v2859 = vld [vmem:[%s2837 + $0x54] sm:$0xf]
        %v2860 = vld [vmem:[%s2837 + $0x58] sm:$0xf]
        %v2861 = vld [vmem:[%s2837 + $0x5c] sm:$0xf]
        %v2862 = vld [vmem:[%s2837 + $0x60] sm:$0xf]
        %v2863 = vld [vmem:[%s2837 + $0x64] sm:$0xf]
        %v2864 = vld [vmem:[%s2837 + $0x68] sm:$0xf]
        %v2865 = vld [vmem:[%s2837 + $0x6c] sm:$0xf]
        %v2866 = vld [vmem:[%s2837 + $0x70] sm:$0xf]
        %v2867 = vld [vmem:[%s2837 + $0x74] sm:$0xf]
        %v2868 = vld [vmem:[%s2837 + $0x78] sm:$0xf]
        %v2869 = vld [vmem:[%s2837 + $0x7c] sm:$0xf]
        %v2870 = vunpack.c.l.b16 %v2689
        %v2871 = vunpack.c.h.b16 %v2689
        %v2872 = vpack.c.b16 %v1719, %v1717
        %v2873 = vpack.c.b16 %v1720, %v1718
        %v2874 = vpack.c.b16 %v1723, %v1721
        %v2875 = vpack.c.b16 %v1724, %v1722
        %v2876 = vpack.c.b16 %v1727, %v1725
        %v2877 = vpack.c.b16 %v1728, %v1726
        %v2878 = vpack.c.b16 %v2870, %v1729
        %v2879 = vpack.c.b16 %v2871, %v1730
        %v2920 = vunpack.c.l.b16 %v2838
        %v2921 = vunpack.c.l.b16 %v2839
        %v2922 = vunpack.c.l.b16 %v2840
        %v2923 = vunpack.c.l.b16 %v2841
        %v2924 = vunpack.c.l.b16 %v2842
        %v2925 = vunpack.c.l.b16 %v2843
        %v2926 = vunpack.c.l.b16 %v2844
        %v2927 = vunpack.c.l.b16 %v2845
        %v2928 = vunpack.c.l.b16 %v2846
        %v2929 = vunpack.c.l.b16 %v2847
        %v2930 = vunpack.c.l.b16 %v2848
        %v2931 = vunpack.c.l.b16 %v2849
        %v2932 = vunpack.c.l.b16 %v2850
        %v2933 = vunpack.c.l.b16 %v2851
        %v2934 = vunpack.c.l.b16 %v2852
        %v2935 = vunpack.c.l.b16 %v2853
        %v2936 = vunpack.c.l.b16 %v2854
        %v2937 = vunpack.c.l.b16 %v2855
        %v2938 = vunpack.c.l.b16 %v2856
        %v2939 = vunpack.c.l.b16 %v2857
        %v2940 = vunpack.c.l.b16 %v2858
        %v2941 = vunpack.c.l.b16 %v2859
        %v2942 = vunpack.c.l.b16 %v2860
        %v2943 = vunpack.c.l.b16 %v2861
        %v2944 = vunpack.c.l.b16 %v2862
        %v2945 = vunpack.c.l.b16 %v2863
        %v2946 = vunpack.c.l.b16 %v2864
        %v2947 = vunpack.c.l.b16 %v2865
        %v2948 = vunpack.c.l.b16 %v2866
        %v2949 = vunpack.c.l.b16 %v2867
        %v2950 = vunpack.c.l.b16 %v2868
        %v2951 = vunpack.c.l.b16 %v2869
        %v2952 = vpack.c.b16 %v2921, %v2920
        %v2953 = vpack.c.b16 %v2923, %v2922
        %v2954 = vpack.c.b16 %v2925, %v2924
        %v2955 = vpack.c.b16 %v2927, %v2926
        %v2956 = vpack.c.b16 %v2929, %v2928
        %v2957 = vpack.c.b16 %v2931, %v2930
        %v2958 = vpack.c.b16 %v2933, %v2932
        %v2959 = vpack.c.b16 %v2935, %v2934
        %v2960 = vpack.c.b16 %v2937, %v2936
        %v2961 = vpack.c.b16 %v2939, %v2938
        %v2962 = vpack.c.b16 %v2941, %v2940
        %v2963 = vpack.c.b16 %v2943, %v2942
        %v2964 = vpack.c.b16 %v2945, %v2944
        %v2965 = vpack.c.b16 %v2947, %v2946
        %v2966 = vpack.c.b16 %v2949, %v2948
        %v2967 = vpack.c.b16 %v2951, %v2950
        %2984 = vmatprep.subr.bf16.mxu0 0
        %2985 = vmatpush1.bf16.msra.mxu0 %v2952
        %2986 = vmatprep.subr.bf16.mxu0 0
        %2987 = vmatpush1.bf16.msra.mxu0 %v2953
        %2988 = vmatprep.subr.bf16.mxu0 0
        %2989 = vmatpush1.bf16.msra.mxu0 %v2954
        %2990 = vmatprep.subr.bf16.mxu0 0
        %2991 = vmatpush1.bf16.msra.mxu0 %v2955
        %2992 = vmatprep.subr.bf16.mxu0 0
        %2993 = vmatpush1.bf16.msra.mxu0 %v2956
        %2994 = vmatprep.subr.bf16.mxu0 0
        %2995 = vmatpush1.bf16.msra.mxu0 %v2957
        %2996 = vmatprep.subr.bf16.mxu0 0
        %2997 = vmatpush1.bf16.msra.mxu0 %v2958
        %2998 = vmatprep.subr.bf16.mxu0 0
        %2999 = vmatpush1.bf16.msra.mxu0 %v2959
        %3000 = vmatprep.subr.bf16.mxu0 0
        %3001 = vmatpush1.bf16.msra.mxu0 %v2960
        %3002 = vmatprep.subr.bf16.mxu0 0
        %3003 = vmatpush1.bf16.msra.mxu0 %v2961
        %3004 = vmatprep.subr.bf16.mxu0 0
        %3005 = vmatpush1.bf16.msra.mxu0 %v2962
        %3006 = vmatprep.subr.bf16.mxu0 0
        %3007 = vmatpush1.bf16.msra.mxu0 %v2963
        %3008 = vmatprep.subr.bf16.mxu0 0
        %3009 = vmatpush1.bf16.msra.mxu0 %v2964
        %3010 = vmatprep.subr.bf16.mxu0 0
        %3011 = vmatpush1.bf16.msra.mxu0 %v2965
        %3012 = vmatprep.subr.bf16.mxu0 0
        %3013 = vmatpush1.bf16.msra.mxu0 %v2966
        %3014 = vmatprep.subr.bf16.mxu0 0
        %3015 = vmatpush1.bf16.msra.mxu0 %v2967
        %3016 = vmatprep.mubr.bf16.mxu0 %v2873
        %3017 = vmatmul.mubr.bf16.gmra.mrb[0].mxu0 %v2872
        %v3018 = vpop.f32.mrb[0].mxu0
        %v3019 = vadd.f32 0.0, %v3018
        %v3020 = vpop.f32.mrb[0].mxu0
        %v3021 = vpop.f32.mrb[0].mxu0
        %v3022 = vadd.f32 0.0, %v3021
        %v3023 = vpop.f32.mrb[0].mxu0
        %3024 = vmatprep.mubr.bf16.mxu0 %v2875
        %3025 = vmatmul.mubr.bf16.gmra.mrb[0].mxu0 %v2874
        %v3026 = vpop.f32.mrb[0].mxu0
        %v3027 = vadd.f32 0.0, %v3026
        %v3028 = vpop.f32.mrb[0].mxu0
        %v3029 = vpop.f32.mrb[0].mxu0
        %v3030 = vadd.f32 0.0, %v3029
        %v3031 = vpop.f32.mrb[0].mxu0
        %3032 = vmatprep.mubr.bf16.mxu0 %v2877
        %3033 = vmatmul.mubr.bf16.gmra.mrb[0].mxu0 %v2876
        %v3034 = vpop.f32.mrb[0].mxu0
        %v3035 = vadd.f32 0.0, %v3034
        %v3036 = vpop.f32.mrb[0].mxu0
        %v3037 = vpop.f32.mrb[0].mxu0
        %v3038 = vadd.f32 0.0, %v3037
        %v3039 = vpop.f32.mrb[0].mxu0
        %3040 = vmatprep.mubr.bf16.mxu0 %v2879
        %3041 = vmatmul.mubr.bf16.gmra.mrb[0].mxu0 %v2878
        %v3042 = vpop.f32.mrb[0].mxu0
        %v3043 = vadd.f32 0.0, %v3042
        %v3044 = vpop.f32.mrb[0].mxu0
        %v3045 = vpop.f32.mrb[0].mxu0
        %v3046 = vadd.f32 0.0, %v3045
        %v3047 = vpop.f32.mrb[0].mxu0
        %3048 = vdwg.mxu0
        %v3049 = vadd.f32 %v2829, %v3019
        %v3050 = vadd.f32 %v2830, %v3022
        %v3051 = vadd.f32 %v2831, %v3027
        %v3052 = vadd.f32 %v2832, %v3030
        %v3053 = vadd.f32 %v2833, %v3035
        %v3054 = vadd.f32 %v2834, %v3038
        %v3055 = vadd.f32 %v2835, %v3043
        %v3056 = vadd.f32 %v2836, %v3046
        %s3057 = scalar_lea.vmem %s331, 384 [#allocation5]
        %v3058 = vld [vmem:[%s3057] sm:$0xf]
        %v3059 = vld [vmem:[%s3057 + $0x4] sm:$0xf]
        %v3060 = vld [vmem:[%s3057 + $0x8] sm:$0xf]
        %v3061 = vld [vmem:[%s3057 + $0xc] sm:$0xf]
        %v3062 = vld [vmem:[%s3057 + $0x10] sm:$0xf]
        %v3063 = vld [vmem:[%s3057 + $0x14] sm:$0xf]
        %v3064 = vld [vmem:[%s3057 + $0x18] sm:$0xf]
        %v3065 = vld [vmem:[%s3057 + $0x1c] sm:$0xf]
        %v3066 = vld [vmem:[%s3057 + $0x20] sm:$0xf]
        %v3067 = vld [vmem:[%s3057 + $0x24] sm:$0xf]
        %v3068 = vld [vmem:[%s3057 + $0x28] sm:$0xf]
        %v3069 = vld [vmem:[%s3057 + $0x2c] sm:$0xf]
        %v3070 = vld [vmem:[%s3057 + $0x30] sm:$0xf]
        %v3071 = vld [vmem:[%s3057 + $0x34] sm:$0xf]
        %v3072 = vld [vmem:[%s3057 + $0x38] sm:$0xf]
        %v3073 = vld [vmem:[%s3057 + $0x3c] sm:$0xf]
        %v3075 = vunpack.c.l.b16 %v422
        %v3076 = vpack.c.b16 %v3075, %v1934
        %v3094 = vunpack.c.l.b16 %v3058
        %v3095 = vunpack.c.l.b16 %v3059
        %v3096 = vunpack.c.l.b16 %v3060
        %v3097 = vunpack.c.l.b16 %v3061
        %v3098 = vunpack.c.l.b16 %v3062
        %v3099 = vunpack.c.l.b16 %v3063
        %v3100 = vunpack.c.l.b16 %v3064
        %v3101 = vunpack.c.l.b16 %v3065
        %v3102 = vunpack.c.l.b16 %v3066
        %v3103 = vunpack.c.l.b16 %v3067
        %v3104 = vunpack.c.l.b16 %v3068
        %v3105 = vunpack.c.l.b16 %v3069
        %v3106 = vunpack.c.l.b16 %v3070
        %v3107 = vunpack.c.l.b16 %v3071
        %v3108 = vunpack.c.l.b16 %v3072
        %v3109 = vunpack.c.l.b16 %v3073
        %v3110 = vpack.c.b16 %v3095, %v3094
        %v3111 = vpack.c.b16 %v3097, %v3096
        %v3112 = vpack.c.b16 %v3099, %v3098
        %v3113 = vpack.c.b16 %v3101, %v3100
        %v3114 = vpack.c.b16 %v3103, %v3102
        %v3115 = vpack.c.b16 %v3105, %v3104
        %v3116 = vpack.c.b16 %v3107, %v3106
        %v3117 = vpack.c.b16 %v3109, %v3108
        %3126 = vmatprep.subr.bf16.mxu0 0
        %3127 = vmatpush1.bf16.msra.mxu0 %v3110
        %3128 = vmatprep.subr.bf16.mxu0 0
        %3129 = vmatpush1.bf16.msra.mxu0 %v3111
        %3130 = vmatprep.subr.bf16.mxu0 0
        %3131 = vmatpush1.bf16.msra.mxu0 %v3112
        %3132 = vmatprep.subr.bf16.mxu0 0
        %3133 = vmatpush1.bf16.msra.mxu0 %v3113
        %3134 = vmatprep.subr.bf16.mxu0 0
        %3135 = vmatpush1.bf16.msra.mxu0 %v3114
        %3136 = vmatprep.subr.bf16.mxu0 0
        %3137 = vmatpush1.bf16.msra.mxu0 %v3115
        %3138 = vmatprep.subr.bf16.mxu0 0
        %3139 = vmatpush1.bf16.msra.mxu0 %v3116
        %3140 = vmatprep.subr.bf16.mxu0 0
        %3141 = vmatpush1.bf16.msra.mxu0 %v3117
        %3142 = vmatprep.subr.bf16.mxu0 0
        %3143 = vmatpush1.bf16.msra.mxu0 0
        %3144 = vmatprep.subr.bf16.mxu0 0
        %3145 = vmatpush1.bf16.msra.mxu0 0
        %3146 = vmatprep.subr.bf16.mxu0 0
        %3147 = vmatpush1.bf16.msra.mxu0 0
        %3148 = vmatprep.subr.bf16.mxu0 0
        %3149 = vmatpush1.bf16.msra.mxu0 0
        %3150 = vmatprep.subr.bf16.mxu0 0
        %3151 = vmatpush1.bf16.msra.mxu0 0
        %3152 = vmatprep.subr.bf16.mxu0 0
        %3153 = vmatpush1.bf16.msra.mxu0 0
        %3154 = vmatprep.subr.bf16.mxu0 0
        %3155 = vmatpush1.bf16.msra.mxu0 0
        %3156 = vmatprep.subr.bf16.mxu0 0
        %3157 = vmatpush1.bf16.msra.mxu0 0
        %3158 = vmatprep.mubr.bf16.mxu0 0
        %3159 = vmatmul.mubr.bf16.gmra.mrb[0].mxu0 %v710
        %v3160 = vpop.f32.mrb[0].mxu0
        %v3161 = vadd.f32 0.0, %v3160
        %v3162 = vpop.f32.mrb[0].mxu0
        %v3163 = vpop.f32.mrb[0].mxu0
        %v3164 = vadd.f32 0.0, %v3163
        %v3165 = vpop.f32.mrb[0].mxu0
        %3166 = vmatprep.mubr.bf16.mxu0 0
        %3167 = vmatmul.mubr.bf16.gmra.mrb[0].mxu0 %v711
        %v3168 = vpop.f32.mrb[0].mxu0
        %v3169 = vadd.f32 0.0, %v3168
        %v3170 = vpop.f32.mrb[0].mxu0
        %v3171 = vpop.f32.mrb[0].mxu0
        %v3172 = vadd.f32 0.0, %v3171
        %v3173 = vpop.f32.mrb[0].mxu0
        %3174 = vmatprep.mubr.bf16.mxu0 0
        %3175 = vmatmul.mubr.bf16.gmra.mrb[0].mxu0 %v712
        %v3176 = vpop.f32.mrb[0].mxu0
        %v3177 = vadd.f32 0.0, %v3176
        %v3178 = vpop.f32.mrb[0].mxu0
        %v3179 = vpop.f32.mrb[0].mxu0
        %v3180 = vadd.f32 0.0, %v3179
        %v3181 = vpop.f32.mrb[0].mxu0
        %3182 = vmatprep.mubr.bf16.mxu0 0
        %3183 = vmatmul.mubr.bf16.gmra.mrb[0].mxu0 %v3076
        %v3184 = vpop.f32.mrb[0].mxu0
        %v3185 = vadd.f32 0.0, %v3184
        %v3186 = vpop.f32.mrb[0].mxu0
        %v3187 = vpop.f32.mrb[0].mxu0
        %v3188 = vadd.f32 0.0, %v3187
        %v3189 = vpop.f32.mrb[0].mxu0
        %3190 = vdwg.mxu0
        %v3191 = vadd.f32 %v3049, %v3161
        %v3192 = vadd.f32 %v3050, %v3164
        %v3193 = vadd.f32 %v3051, %v3169
        %v3194 = vadd.f32 %v3052, %v3172
        %v3195 = vadd.f32 %v3053, %v3177
        %v3196 = vadd.f32 %v3054, %v3180
        %v3197 = vadd.f32 %v3055, %v3185
        %v3198 = vadd.f32 %v3056, %v3188
        %s3199 = scalar_lea.vmem %s349, 768 [#allocation8]
        %v3200 = vld [vmem:[%s3199] sm:$0xf]
        %v3201 = vld [vmem:[%s3199 + $0x4] sm:$0xf]
        %v3202 = vld [vmem:[%s3199 + $0x8] sm:$0xf]
        %v3203 = vld [vmem:[%s3199 + $0xc] sm:$0xf]
        %v3204 = vld [vmem:[%s3199 + $0x10] sm:$0xf]
        %v3205 = vld [vmem:[%s3199 + $0x14] sm:$0xf]
        %v3206 = vld [vmem:[%s3199 + $0x18] sm:$0xf]
        %v3207 = vld [vmem:[%s3199 + $0x1c] sm:$0xf]
        %v3208 = vld [vmem:[%s3199 + $0x20] sm:$0xf]
        %v3209 = vld [vmem:[%s3199 + $0x24] sm:$0xf]
        %v3210 = vld [vmem:[%s3199 + $0x28] sm:$0xf]
        %v3211 = vld [vmem:[%s3199 + $0x2c] sm:$0xf]
        %v3212 = vld [vmem:[%s3199 + $0x30] sm:$0xf]
        %v3213 = vld [vmem:[%s3199 + $0x34] sm:$0xf]
        %v3214 = vld [vmem:[%s3199 + $0x38] sm:$0xf]
        %v3215 = vld [vmem:[%s3199 + $0x3c] sm:$0xf]
        %v3216 = vld [vmem:[%s3199 + $0x40] sm:$0xf]
        %v3217 = vld [vmem:[%s3199 + $0x44] sm:$0xf]
        %v3218 = vld [vmem:[%s3199 + $0x48] sm:$0xf]
        %v3219 = vld [vmem:[%s3199 + $0x4c] sm:$0xf]
        %v3220 = vld [vmem:[%s3199 + $0x50] sm:$0xf]
        %v3221 = vld [vmem:[%s3199 + $0x54] sm:$0xf]
        %v3222 = vld [vmem:[%s3199 + $0x58] sm:$0xf]
        %v3223 = vld [vmem:[%s3199 + $0x5c] sm:$0xf]
        %v3224 = vld [vmem:[%s3199 + $0x60] sm:$0xf]
        %v3225 = vld [vmem:[%s3199 + $0x64] sm:$0xf]
        %v3226 = vld [vmem:[%s3199 + $0x68] sm:$0xf]
        %v3227 = vld [vmem:[%s3199 + $0x6c] sm:$0xf]
        %v3228 = vld [vmem:[%s3199 + $0x70] sm:$0xf]
        %v3229 = vld [vmem:[%s3199 + $0x74] sm:$0xf]
        %v3230 = vld [vmem:[%s3199 + $0x78] sm:$0xf]
        %v3231 = vld [vmem:[%s3199 + $0x7c] sm:$0xf]
        %v3233 = vunpack.c.l.b16 %v442
        %v3234 = vunpack.c.h.b16 %v442
        %v3235 = vpack.c.b16 %v3233, %v2098
        %v3236 = vpack.c.b16 %v3234, %v2099
        %v3271 = vunpack.c.l.b16 %v3200
        %v3272 = vunpack.c.l.b16 %v3201
        %v3273 = vunpack.c.l.b16 %v3202
        %v3274 = vunpack.c.l.b16 %v3203
        %v3275 = vunpack.c.l.b16 %v3204
        %v3276 = vunpack.c.l.b16 %v3205
        %v3277 = vunpack.c.l.b16 %v3206
        %v3278 = vunpack.c.l.b16 %v3207
        %v3279 = vunpack.c.l.b16 %v3208
        %v3280 = vunpack.c.l.b16 %v3209
        %v3281 = vunpack.c.l.b16 %v3210
        %v3282 = vunpack.c.l.b16 %v3211
        %v3283 = vunpack.c.l.b16 %v3212
        %v3284 = vunpack.c.l.b16 %v3213
        %v3285 = vunpack.c.l.b16 %v3214
        %v3286 = vunpack.c.l.b16 %v3215
        %v3287 = vunpack.c.l.b16 %v3216
        %v3288 = vunpack.c.l.b16 %v3217
        %v3289 = vunpack.c.l.b16 %v3218
        %v3290 = vunpack.c.l.b16 %v3219
        %v3291 = vunpack.c.l.b16 %v3220
        %v3292 = vunpack.c.l.b16 %v3221
        %v3293 = vunpack.c.l.b16 %v3222
        %v3294 = vunpack.c.l.b16 %v3223
        %v3295 = vunpack.c.l.b16 %v3224
        %v3296 = vunpack.c.l.b16 %v3225
        %v3297 = vunpack.c.l.b16 %v3226
        %v3298 = vunpack.c.l.b16 %v3227
        %v3299 = vunpack.c.l.b16 %v3228
        %v3300 = vunpack.c.l.b16 %v3229
        %v3301 = vunpack.c.l.b16 %v3230
        %v3302 = vunpack.c.l.b16 %v3231
        %v3303 = vpack.c.b16 %v3272, %v3271
        %v3304 = vpack.c.b16 %v3274, %v3273
        %v3305 = vpack.c.b16 %v3276, %v3275
        %v3306 = vpack.c.b16 %v3278, %v3277
        %v3307 = vpack.c.b16 %v3280, %v3279
        %v3308 = vpack.c.b16 %v3282, %v3281
        %v3309 = vpack.c.b16 %v3284, %v3283
        %v3310 = vpack.c.b16 %v3286, %v3285
        %v3311 = vpack.c.b16 %v3288, %v3287
        %v3312 = vpack.c.b16 %v3290, %v3289
        %v3313 = vpack.c.b16 %v3292, %v3291
        %v3314 = vpack.c.b16 %v3294, %v3293
        %v3315 = vpack.c.b16 %v3296, %v3295
        %v3316 = vpack.c.b16 %v3298, %v3297
        %v3317 = vpack.c.b16 %v3300, %v3299
        %v3318 = vpack.c.b16 %v3302, %v3301
        %3335 = vmatprep.subr.bf16.mxu0 0
        %3336 = vmatpush1.bf16.msra.mxu0 %v3303
        %3337 = vmatprep.subr.bf16.mxu0 0
        %3338 = vmatpush1.bf16.msra.mxu0 %v3304
        %3339 = vmatprep.subr.bf16.mxu0 0
        %3340 = vmatpush1.bf16.msra.mxu0 %v3305
        %3341 = vmatprep.subr.bf16.mxu0 0
        %3342 = vmatpush1.bf16.msra.mxu0 %v3306
        %3343 = vmatprep.subr.bf16.mxu0 0
        %3344 = vmatpush1.bf16.msra.mxu0 %v3307
        %3345 = vmatprep.subr.bf16.mxu0 0
        %3346 = vmatpush1.bf16.msra.mxu0 %v3308
        %3347 = vmatprep.subr.bf16.mxu0 0
        %3348 = vmatpush1.bf16.msra.mxu0 %v3309
        %3349 = vmatprep.subr.bf16.mxu0 0
        %3350 = vmatpush1.bf16.msra.mxu0 %v3310
        %3351 = vmatprep.subr.bf16.mxu0 0
        %3352 = vmatpush1.bf16.msra.mxu0 %v3311
        %3353 = vmatprep.subr.bf16.mxu0 0
        %3354 = vmatpush1.bf16.msra.mxu0 %v3312
        %3355 = vmatprep.subr.bf16.mxu0 0
        %3356 = vmatpush1.bf16.msra.mxu0 %v3313
        %3357 = vmatprep.subr.bf16.mxu0 0
        %3358 = vmatpush1.bf16.msra.mxu0 %v3314
        %3359 = vmatprep.subr.bf16.mxu0 0
        %3360 = vmatpush1.bf16.msra.mxu0 %v3315
        %3361 = vmatprep.subr.bf16.mxu0 0
        %3362 = vmatpush1.bf16.msra.mxu0 %v3316
        %3363 = vmatprep.subr.bf16.mxu0 0
        %3364 = vmatpush1.bf16.msra.mxu0 %v3317
        %3365 = vmatprep.subr.bf16.mxu0 0
        %3366 = vmatpush1.bf16.msra.mxu0 %v3318
        %3367 = vmatprep.mubr.bf16.mxu0 %v519
        %3368 = vmatmul.mubr.bf16.gmra.mrb[0].mxu0 %v518
        %v3369 = vpop.f32.mrb[0].mxu0
        %v3370 = vadd.f32 0.0, %v3369
        %v3371 = vpop.f32.mrb[0].mxu0
        %v3372 = vpop.f32.mrb[0].mxu0
        %v3373 = vadd.f32 0.0, %v3372
        %v3374 = vpop.f32.mrb[0].mxu0
        %3375 = vmatprep.mubr.bf16.mxu0 %v521
        %3376 = vmatmul.mubr.bf16.gmra.mrb[0].mxu0 %v520
        %v3377 = vpop.f32.mrb[0].mxu0
        %v3378 = vadd.f32 0.0, %v3377
        %v3379 = vpop.f32.mrb[0].mxu0
        %v3380 = vpop.f32.mrb[0].mxu0
        %v3381 = vadd.f32 0.0, %v3380
        %v3382 = vpop.f32.mrb[0].mxu0
        %3383 = vmatprep.mubr.bf16.mxu0 %v523
        %3384 = vmatmul.mubr.bf16.gmra.mrb[0].mxu0 %v522
        %v3385 = vpop.f32.mrb[0].mxu0
        %v3386 = vadd.f32 0.0, %v3385
        %v3387 = vpop.f32.mrb[0].mxu0
        %v3388 = vpop.f32.mrb[0].mxu0
        %v3389 = vadd.f32 0.0, %v3388
        %v3390 = vpop.f32.mrb[0].mxu0
        %3391 = vmatprep.mubr.bf16.mxu0 %v3236
        %3392 = vmatmul.mubr.bf16.gmra.mrb[0].mxu0 %v3235
        %v3393 = vpop.f32.mrb[0].mxu0
        %v3394 = vadd.f32 0.0, %v3393
        %v3395 = vpop.f32.mrb[0].mxu0
        %v3396 = vpop.f32.mrb[0].mxu0
        %v3397 = vadd.f32 0.0, %v3396
        %v3398 = vpop.f32.mrb[0].mxu0
        %3399 = vdwg.mxu0
        %v3400 = vadd.f32 %v3191, %v3370
        %v3401 = vadd.f32 %v3192, %v3373
        %v3402 = vadd.f32 %v3193, %v3378
        %v3403 = vadd.f32 %v3194, %v3381
        %v3404 = vadd.f32 %v3195, %v3386
        %v3405 = vadd.f32 %v3196, %v3389
        %v3406 = vadd.f32 %v3197, %v3394
        %v3407 = vadd.f32 %v3198, %v3397
        %v3409 = vshrl.u32 %v422, 16
        %v3411 = vrot.slane %v3409, 4
        %v3412 = vshll.u32 %v422, 16
        %v3414 = vrot.slane %v3412, 5
        %v3415 = vor.u32 %v3411, %v3414
        %v3416 = vrot.slane %v3415, 4
        %v3418 = vshll.u32 %v423, 16
        %v3420 = vrot.slane %v3418, 5
        %v3421 = vsel %vm832, %v3416, %v3420
        %v3423 = vshrl.u32 %v442, 16
        %v3425 = vrot.slane %v3423, 4
        %v3426 = vshll.u32 %v442, 16
        %v3428 = vrot.slane %v3426, 5
        %v3429 = vor.u32 %v3425, %v3428
        %v3430 = vrot.slane %v3429, 4
        %v3432 = vshll.u32 %v443, 16
        %v3434 = vrot.slane %v3432, 5
        %v3435 = vsel %vm832, %v3430, %v3434
        %s3436 = scalar_lea.vmem %s331, 448 [#allocation5]
        %v3437 = vld [vmem:[%s3436] sm:$0xf]
        %v3438 = vld [vmem:[%s3436 + $0x4] sm:$0xf]
        %v3439 = vld [vmem:[%s3436 + $0x8] sm:$0xf]
        %v3440 = vld [vmem:[%s3436 + $0xc] sm:$0xf]
        %v3441 = vld [vmem:[%s3436 + $0x10] sm:$0xf]
        %v3442 = vld [vmem:[%s3436 + $0x14] sm:$0xf]
        %v3443 = vld [vmem:[%s3436 + $0x18] sm:$0xf]
        %v3444 = vld [vmem:[%s3436 + $0x1c] sm:$0xf]
        %v3445 = vld [vmem:[%s3436 + $0x20] sm:$0xf]
        %v3446 = vld [vmem:[%s3436 + $0x24] sm:$0xf]
        %v3447 = vld [vmem:[%s3436 + $0x28] sm:$0xf]
        %v3448 = vld [vmem:[%s3436 + $0x2c] sm:$0xf]
        %v3449 = vld [vmem:[%s3436 + $0x30] sm:$0xf]
        %v3450 = vld [vmem:[%s3436 + $0x34] sm:$0xf]
        %v3451 = vld [vmem:[%s3436 + $0x38] sm:$0xf]
        %v3452 = vld [vmem:[%s3436 + $0x3c] sm:$0xf]
        %v3453 = vunpack.c.l.b16 %v3421
        %v3454 = vpack.c.b16 %v3453, %v2330
        %v3472 = vunpack.c.l.b16 %v3437
        %v3473 = vunpack.c.l.b16 %v3438
        %v3474 = vunpack.c.l.b16 %v3439
        %v3475 = vunpack.c.l.b16 %v3440
        %v3476 = vunpack.c.l.b16 %v3441
        %v3477 = vunpack.c.l.b16 %v3442
        %v3478 = vunpack.c.l.b16 %v3443
        %v3479 = vunpack.c.l.b16 %v3444
        %v3480 = vunpack.c.l.b16 %v3445
        %v3481 = vunpack.c.l.b16 %v3446
        %v3482 = vunpack.c.l.b16 %v3447
        %v3483 = vunpack.c.l.b16 %v3448
        %v3484 = vunpack.c.l.b16 %v3449
        %v3485 = vunpack.c.l.b16 %v3450
        %v3486 = vunpack.c.l.b16 %v3451
        %v3487 = vunpack.c.l.b16 %v3452
        %v3488 = vpack.c.b16 %v3473, %v3472
        %v3489 = vpack.c.b16 %v3475, %v3474
        %v3490 = vpack.c.b16 %v3477, %v3476
        %v3491 = vpack.c.b16 %v3479, %v3478
        %v3492 = vpack.c.b16 %v3481, %v3480
        %v3493 = vpack.c.b16 %v3483, %v3482
        %v3494 = vpack.c.b16 %v3485, %v3484
        %v3495 = vpack.c.b16 %v3487, %v3486
        %3504 = vmatprep.subr.bf16.mxu0 0
        %3505 = vmatpush1.bf16.msra.mxu0 %v3488
        %3506 = vmatprep.subr.bf16.mxu0 0
        %3507 = vmatpush1.bf16.msra.mxu0 %v3489
        %3508 = vmatprep.subr.bf16.mxu0 0
        %3509 = vmatpush1.bf16.msra.mxu0 %v3490
        %3510 = vmatprep.subr.bf16.mxu0 0
        %3511 = vmatpush1.bf16.msra.mxu0 %v3491
        %3512 = vmatprep.subr.bf16.mxu0 0
        %3513 = vmatpush1.bf16.msra.mxu0 %v3492
        %3514 = vmatprep.subr.bf16.mxu0 0
        %3515 = vmatpush1.bf16.msra.mxu0 %v3493
        %3516 = vmatprep.subr.bf16.mxu0 0
        %3517 = vmatpush1.bf16.msra.mxu0 %v3494
        %3518 = vmatprep.subr.bf16.mxu0 0
        %3519 = vmatpush1.bf16.msra.mxu0 %v3495
        %3520 = vmatprep.subr.bf16.mxu0 0
        %3521 = vmatpush1.bf16.msra.mxu0 0
        %3522 = vmatprep.subr.bf16.mxu0 0
        %3523 = vmatpush1.bf16.msra.mxu0 0
        %3524 = vmatprep.subr.bf16.mxu0 0
        %3525 = vmatpush1.bf16.msra.mxu0 0
        %3526 = vmatprep.subr.bf16.mxu0 0
        %3527 = vmatpush1.bf16.msra.mxu0 0
        %3528 = vmatprep.subr.bf16.mxu0 0
        %3529 = vmatpush1.bf16.msra.mxu0 0
        %3530 = vmatprep.subr.bf16.mxu0 0
        %3531 = vmatpush1.bf16.msra.mxu0 0
        %3532 = vmatprep.subr.bf16.mxu0 0
        %3533 = vmatpush1.bf16.msra.mxu0 0
        %3534 = vmatprep.subr.bf16.mxu0 0
        %3535 = vmatpush1.bf16.msra.mxu0 0
        %3536 = vmatprep.mubr.bf16.mxu0 0
        %3537 = vmatmul.mubr.bf16.gmra.mrb[0].mxu0 %v1083
        %v3538 = vpop.f32.mrb[0].mxu0
        %v3539 = vadd.f32 0.0, %v3538
        %v3540 = vpop.f32.mrb[0].mxu0
        %v3541 = vpop.f32.mrb[0].mxu0
        %v3542 = vadd.f32 0.0, %v3541
        %v3543 = vpop.f32.mrb[0].mxu0
        %3544 = vmatprep.mubr.bf16.mxu0 0
        %3545 = vmatmul.mubr.bf16.gmra.mrb[0].mxu0 %v1084
        %v3546 = vpop.f32.mrb[0].mxu0
        %v3547 = vadd.f32 0.0, %v3546
        %v3548 = vpop.f32.mrb[0].mxu0
        %v3549 = vpop.f32.mrb[0].mxu0
        %v3550 = vadd.f32 0.0, %v3549
        %v3551 = vpop.f32.mrb[0].mxu0
        %3552 = vmatprep.mubr.bf16.mxu0 0
        %3553 = vmatmul.mubr.bf16.gmra.mrb[0].mxu0 %v1085
        %v3554 = vpop.f32.mrb[0].mxu0
        %v3555 = vadd.f32 0.0, %v3554
        %v3556 = vpop.f32.mrb[0].mxu0
        %v3557 = vpop.f32.mrb[0].mxu0
        %v3558 = vadd.f32 0.0, %v3557
        %v3559 = vpop.f32.mrb[0].mxu0
        %3560 = vmatprep.mubr.bf16.mxu0 0
        %3561 = vmatmul.mubr.bf16.gmra.mrb[0].mxu0 %v3454
        %v3562 = vpop.f32.mrb[0].mxu0
        %v3563 = vadd.f32 0.0, %v3562
        %v3564 = vpop.f32.mrb[0].mxu0
        %v3565 = vpop.f32.mrb[0].mxu0
        %v3566 = vadd.f32 0.0, %v3565
        %v3567 = vpop.f32.mrb[0].mxu0
        %3568 = vdwg.mxu0
        %v3569 = vadd.f32 %v3400, %v3539
        %v3570 = vadd.f32 %v3401, %v3542
        %v3571 = vadd.f32 %v3402, %v3547
        %v3572 = vadd.f32 %v3403, %v3550
        %v3573 = vadd.f32 %v3404, %v3555
        %v3574 = vadd.f32 %v3405, %v3558
        %v3575 = vadd.f32 %v3406, %v3563
        %v3576 = vadd.f32 %v3407, %v3566
        %s3577 = scalar_lea.vmem %s349, 896 [#allocation8]
        %v3578 = vld [vmem:[%s3577] sm:$0xf]
        %v3579 = vld [vmem:[%s3577 + $0x4] sm:$0xf]
        %v3580 = vld [vmem:[%s3577 + $0x8] sm:$0xf]
        %v3581 = vld [vmem:[%s3577 + $0xc] sm:$0xf]
        %v3582 = vld [vmem:[%s3577 + $0x10] sm:$0xf]
        %v3583 = vld [vmem:[%s3577 + $0x14] sm:$0xf]
        %v3584 = vld [vmem:[%s3577 + $0x18] sm:$0xf]
        %v3585 = vld [vmem:[%s3577 + $0x1c] sm:$0xf]
        %v3586 = vld [vmem:[%s3577 + $0x20] sm:$0xf]
        %v3587 = vld [vmem:[%s3577 + $0x24] sm:$0xf]
        %v3588 = vld [vmem:[%s3577 + $0x28] sm:$0xf]
        %v3589 = vld [vmem:[%s3577 + $0x2c] sm:$0xf]
        %v3590 = vld [vmem:[%s3577 + $0x30] sm:$0xf]
        %v3591 = vld [vmem:[%s3577 + $0x34] sm:$0xf]
        %v3592 = vld [vmem:[%s3577 + $0x38] sm:$0xf]
        %v3593 = vld [vmem:[%s3577 + $0x3c] sm:$0xf]
        %v3594 = vld [vmem:[%s3577 + $0x40] sm:$0xf]
        %v3595 = vld [vmem:[%s3577 + $0x44] sm:$0xf]
        %v3596 = vld [vmem:[%s3577 + $0x48] sm:$0xf]
        %v3597 = vld [vmem:[%s3577 + $0x4c] sm:$0xf]
        %v3598 = vld [vmem:[%s3577 + $0x50] sm:$0xf]
        %v3599 = vld [vmem:[%s3577 + $0x54] sm:$0xf]
        %v3600 = vld [vmem:[%s3577 + $0x58] sm:$0xf]
        %v3601 = vld [vmem:[%s3577 + $0x5c] sm:$0xf]
        %v3602 = vld [vmem:[%s3577 + $0x60] sm:$0xf]
        %v3603 = vld [vmem:[%s3577 + $0x64] sm:$0xf]
        %v3604 = vld [vmem:[%s3577 + $0x68] sm:$0xf]
        %v3605 = vld [vmem:[%s3577 + $0x6c] sm:$0xf]
        %v3606 = vld [vmem:[%s3577 + $0x70] sm:$0xf]
        %v3607 = vld [vmem:[%s3577 + $0x74] sm:$0xf]
        %v3608 = vld [vmem:[%s3577 + $0x78] sm:$0xf]
        %v3609 = vld [vmem:[%s3577 + $0x7c] sm:$0xf]
        %v3610 = vunpack.c.l.b16 %v3435
        %v3611 = vunpack.c.h.b16 %v3435
        %v3612 = vpack.c.b16 %v3610, %v2493
        %v3613 = vpack.c.b16 %v3611, %v2494
        %v3648 = vunpack.c.l.b16 %v3578
        %v3649 = vunpack.c.l.b16 %v3579
        %v3650 = vunpack.c.l.b16 %v3580
        %v3651 = vunpack.c.l.b16 %v3581
        %v3652 = vunpack.c.l.b16 %v3582
        %v3653 = vunpack.c.l.b16 %v3583
        %v3654 = vunpack.c.l.b16 %v3584
        %v3655 = vunpack.c.l.b16 %v3585
        %v3656 = vunpack.c.l.b16 %v3586
        %v3657 = vunpack.c.l.b16 %v3587
        %v3658 = vunpack.c.l.b16 %v3588
        %v3659 = vunpack.c.l.b16 %v3589
        %v3660 = vunpack.c.l.b16 %v3590
        %v3661 = vunpack.c.l.b16 %v3591
        %v3662 = vunpack.c.l.b16 %v3592
        %v3663 = vunpack.c.l.b16 %v3593
        %v3664 = vunpack.c.l.b16 %v3594
        %v3665 = vunpack.c.l.b16 %v3595
        %v3666 = vunpack.c.l.b16 %v3596
        %v3667 = vunpack.c.l.b16 %v3597
        %v3668 = vunpack.c.l.b16 %v3598
        %v3669 = vunpack.c.l.b16 %v3599
        %v3670 = vunpack.c.l.b16 %v3600
        %v3671 = vunpack.c.l.b16 %v3601
        %v3672 = vunpack.c.l.b16 %v3602
        %v3673 = vunpack.c.l.b16 %v3603
        %v3674 = vunpack.c.l.b16 %v3604
        %v3675 = vunpack.c.l.b16 %v3605
        %v3676 = vunpack.c.l.b16 %v3606
        %v3677 = vunpack.c.l.b16 %v3607
        %v3678 = vunpack.c.l.b16 %v3608
        %v3679 = vunpack.c.l.b16 %v3609
        %v3680 = vpack.c.b16 %v3649, %v3648
        %v3681 = vpack.c.b16 %v3651, %v3650
        %v3682 = vpack.c.b16 %v3653, %v3652
        %v3683 = vpack.c.b16 %v3655, %v3654
        %v3684 = vpack.c.b16 %v3657, %v3656
        %v3685 = vpack.c.b16 %v3659, %v3658
        %v3686 = vpack.c.b16 %v3661, %v3660
        %v3687 = vpack.c.b16 %v3663, %v3662
        %v3688 = vpack.c.b16 %v3665, %v3664
        %v3689 = vpack.c.b16 %v3667, %v3666
        %v3690 = vpack.c.b16 %v3669, %v3668
        %v3691 = vpack.c.b16 %v3671, %v3670
        %v3692 = vpack.c.b16 %v3673, %v3672
        %v3693 = vpack.c.b16 %v3675, %v3674
        %v3694 = vpack.c.b16 %v3677, %v3676
        %v3695 = vpack.c.b16 %v3679, %v3678
        %3712 = vmatprep.subr.bf16.mxu0 0
        %3713 = vmatpush1.bf16.msra.mxu0 %v3680
        %3714 = vmatprep.subr.bf16.mxu0 0
        %3715 = vmatpush1.bf16.msra.mxu0 %v3681
        %3716 = vmatprep.subr.bf16.mxu0 0
        %3717 = vmatpush1.bf16.msra.mxu0 %v3682
        %3718 = vmatprep.subr.bf16.mxu0 0
        %3719 = vmatpush1.bf16.msra.mxu0 %v3683
        %3720 = vmatprep.subr.bf16.mxu0 0
        %3721 = vmatpush1.bf16.msra.mxu0 %v3684
        %3722 = vmatprep.subr.bf16.mxu0 0
        %3723 = vmatpush1.bf16.msra.mxu0 %v3685
        %3724 = vmatprep.subr.bf16.mxu0 0
        %3725 = vmatpush1.bf16.msra.mxu0 %v3686
        %3726 = vmatprep.subr.bf16.mxu0 0
        %3727 = vmatpush1.bf16.msra.mxu0 %v3687
        %3728 = vmatprep.subr.bf16.mxu0 0
        %3729 = vmatpush1.bf16.msra.mxu0 %v3688
        %3730 = vmatprep.subr.bf16.mxu0 0
        %3731 = vmatpush1.bf16.msra.mxu0 %v3689
        %3732 = vmatprep.subr.bf16.mxu0 0
        %3733 = vmatpush1.bf16.msra.mxu0 %v3690
        %3734 = vmatprep.subr.bf16.mxu0 0
        %3735 = vmatpush1.bf16.msra.mxu0 %v3691
        %3736 = vmatprep.subr.bf16.mxu0 0
        %3737 = vmatpush1.bf16.msra.mxu0 %v3692
        %3738 = vmatprep.subr.bf16.mxu0 0
        %3739 = vmatpush1.bf16.msra.mxu0 %v3693
        %3740 = vmatprep.subr.bf16.mxu0 0
        %3741 = vmatpush1.bf16.msra.mxu0 %v3694
        %3742 = vmatprep.subr.bf16.mxu0 0
        %3743 = vmatpush1.bf16.msra.mxu0 %v3695
        %3744 = vmatprep.mubr.bf16.mxu0 %v1263
        %3745 = vmatmul.mubr.bf16.gmra.mrb[0].mxu0 %v1262
        %v3746 = vpop.f32.mrb[0].mxu0
        %v3747 = vadd.f32 0.0, %v3746
        %v3748 = vpop.f32.mrb[0].mxu0
        %v3749 = vpop.f32.mrb[0].mxu0
        %v3750 = vadd.f32 0.0, %v3749
        %v3751 = vpop.f32.mrb[0].mxu0
        %3752 = vmatprep.mubr.bf16.mxu0 %v1265
        %3753 = vmatmul.mubr.bf16.gmra.mrb[0].mxu0 %v1264
        %v3754 = vpop.f32.mrb[0].mxu0
        %v3755 = vadd.f32 0.0, %v3754
        %v3756 = vpop.f32.mrb[0].mxu0
        %v3757 = vpop.f32.mrb[0].mxu0
        %v3758 = vadd.f32 0.0, %v3757
        %v3759 = vpop.f32.mrb[0].mxu0
        %3760 = vmatprep.mubr.bf16.mxu0 %v1267
        %3761 = vmatmul.mubr.bf16.gmra.mrb[0].mxu0 %v1266
        %v3762 = vpop.f32.mrb[0].mxu0
        %v3763 = vadd.f32 0.0, %v3762
        %v3764 = vpop.f32.mrb[0].mxu0
        %v3765 = vpop.f32.mrb[0].mxu0
        %v3766 = vadd.f32 0.0, %v3765
        %v3767 = vpop.f32.mrb[0].mxu0
        %3768 = vmatprep.mubr.bf16.mxu0 %v3613
        %3769 = vmatmul.mubr.bf16.gmra.mrb[0].mxu0 %v3612
        %v3770 = vpop.f32.mrb[0].mxu0
        %v3771 = vadd.f32 0.0, %v3770
        %v3772 = vpop.f32.mrb[0].mxu0
        %v3773 = vpop.f32.mrb[0].mxu0
        %v3774 = vadd.f32 0.0, %v3773
        %v3775 = vpop.f32.mrb[0].mxu0
        %3776 = vdwg.mxu0
        %v3777 = vadd.f32 %v3569, %v3747
        %v3778 = vadd.f32 %v3570, %v3750
        %v3779 = vadd.f32 %v3571, %v3755
        %v3780 = vadd.f32 %v3572, %v3758
        %v3781 = vadd.f32 %v3573, %v3763
        %v3782 = vadd.f32 %v3574, %v3766
        %v3783 = vadd.f32 %v3575, %v3771
        %v3784 = vadd.f32 %v3576, %v3774
        %v3786 = vrot.slane %v422, 5
        %v3787 = vrot.slane %v3786, 4
        %v3788 = vrot.slane %v423, 5
        %v3789 = vsel %vm1455, %v3787, %v3788
        %v3791 = vrot.slane %v442, 5
        %v3792 = vrot.slane %v3791, 4
        %v3793 = vrot.slane %v443, 5
        %v3794 = vsel %vm1455, %v3792, %v3793
        %s3795 = scalar_lea.vmem %s331, 512 [#allocation5]
        %v3796 = vld [vmem:[%s3795] sm:$0xf]
        %v3797 = vld [vmem:[%s3795 + $0x4] sm:$0xf]
        %v3798 = vld [vmem:[%s3795 + $0x8] sm:$0xf]
        %v3799 = vld [vmem:[%s3795 + $0xc] sm:$0xf]
        %v3800 = vld [vmem:[%s3795 + $0x10] sm:$0xf]
        %v3801 = vld [vmem:[%s3795 + $0x14] sm:$0xf]
        %v3802 = vld [vmem:[%s3795 + $0x18] sm:$0xf]
        %v3803 = vld [vmem:[%s3795 + $0x1c] sm:$0xf]
        %v3804 = vld [vmem:[%s3795 + $0x20] sm:$0xf]
        %v3805 = vld [vmem:[%s3795 + $0x24] sm:$0xf]
        %v3806 = vld [vmem:[%s3795 + $0x28] sm:$0xf]
        %v3807 = vld [vmem:[%s3795 + $0x2c] sm:$0xf]
        %v3808 = vld [vmem:[%s3795 + $0x30] sm:$0xf]
        %v3809 = vld [vmem:[%s3795 + $0x34] sm:$0xf]
        %v3810 = vld [vmem:[%s3795 + $0x38] sm:$0xf]
        %v3811 = vld [vmem:[%s3795 + $0x3c] sm:$0xf]
        %v3812 = vunpack.c.l.b16 %v3789
        %v3813 = vpack.c.b16 %v3812, %v2707
        %v3831 = vunpack.c.l.b16 %v3796
        %v3832 = vunpack.c.l.b16 %v3797
        %v3833 = vunpack.c.l.b16 %v3798
        %v3834 = vunpack.c.l.b16 %v3799
        %v3835 = vunpack.c.l.b16 %v3800
        %v3836 = vunpack.c.l.b16 %v3801
        %v3837 = vunpack.c.l.b16 %v3802
        %v3838 = vunpack.c.l.b16 %v3803
        %v3839 = vunpack.c.l.b16 %v3804
        %v3840 = vunpack.c.l.b16 %v3805
        %v3841 = vunpack.c.l.b16 %v3806
        %v3842 = vunpack.c.l.b16 %v3807
        %v3843 = vunpack.c.l.b16 %v3808
        %v3844 = vunpack.c.l.b16 %v3809
        %v3845 = vunpack.c.l.b16 %v3810
        %v3846 = vunpack.c.l.b16 %v3811
        %v3847 = vpack.c.b16 %v3832, %v3831
        %v3848 = vpack.c.b16 %v3834, %v3833
        %v3849 = vpack.c.b16 %v3836, %v3835
        %v3850 = vpack.c.b16 %v3838, %v3837
        %v3851 = vpack.c.b16 %v3840, %v3839
        %v3852 = vpack.c.b16 %v3842, %v3841
        %v3853 = vpack.c.b16 %v3844, %v3843
        %v3854 = vpack.c.b16 %v3846, %v3845
        %3863 = vmatprep.subr.bf16.mxu0 0
        %3864 = vmatpush1.bf16.msra.mxu0 %v3847
        %3865 = vmatprep.subr.bf16.mxu0 0
        %3866 = vmatpush1.bf16.msra.mxu0 %v3848
        %3867 = vmatprep.subr.bf16.mxu0 0
        %3868 = vmatpush1.bf16.msra.mxu0 %v3849
        %3869 = vmatprep.subr.bf16.mxu0 0
        %3870 = vmatpush1.bf16.msra.mxu0 %v3850
        %3871 = vmatprep.subr.bf16.mxu0 0
        %3872 = vmatpush1.bf16.msra.mxu0 %v3851
        %3873 = vmatprep.subr.bf16.mxu0 0
        %3874 = vmatpush1.bf16.msra.mxu0 %v3852
        %3875 = vmatprep.subr.bf16.mxu0 0
        %3876 = vmatpush1.bf16.msra.mxu0 %v3853
        %3877 = vmatprep.subr.bf16.mxu0 0
        %3878 = vmatpush1.bf16.msra.mxu0 %v3854
        %3879 = vmatprep.subr.bf16.mxu0 0
        %3880 = vmatpush1.bf16.msra.mxu0 0
        %3881 = vmatprep.subr.bf16.mxu0 0
        %3882 = vmatpush1.bf16.msra.mxu0 0
        %3883 = vmatprep.subr.bf16.mxu0 0
        %3884 = vmatpush1.bf16.msra.mxu0 0
        %3885 = vmatprep.subr.bf16.mxu0 0
        %3886 = vmatpush1.bf16.msra.mxu0 0
        %3887 = vmatprep.subr.bf16.mxu0 0
        %3888 = vmatpush1.bf16.msra.mxu0 0
        %3889 = vmatprep.subr.bf16.mxu0 0
        %3890 = vmatpush1.bf16.msra.mxu0 0
        %3891 = vmatprep.subr.bf16.mxu0 0
        %3892 = vmatpush1.bf16.msra.mxu0 0
        %3893 = vmatprep.subr.bf16.mxu0 0
        %3894 = vmatpush1.bf16.msra.mxu0 0
        %3895 = vmatprep.mubr.bf16.mxu0 0
        %3896 = vmatmul.mubr.bf16.gmra.mrb[0].mxu0 %v1554
        %v3897 = vpop.f32.mrb[0].mxu0
        %v3898 = vadd.f32 0.0, %v3897
        %v3899 = vpop.f32.mrb[0].mxu0
        %v3900 = vpop.f32.mrb[0].mxu0
        %v3901 = vadd.f32 0.0, %v3900
        %v3902 = vpop.f32.mrb[0].mxu0
        %3903 = vmatprep.mubr.bf16.mxu0 0
        %3904 = vmatmul.mubr.bf16.gmra.mrb[0].mxu0 %v1555
        %v3905 = vpop.f32.mrb[0].mxu0
        %v3906 = vadd.f32 0.0, %v3905
        %v3907 = vpop.f32.mrb[0].mxu0
        %v3908 = vpop.f32.mrb[0].mxu0
        %v3909 = vadd.f32 0.0, %v3908
        %v3910 = vpop.f32.mrb[0].mxu0
        %3911 = vmatprep.mubr.bf16.mxu0 0
        %3912 = vmatmul.mubr.bf16.gmra.mrb[0].mxu0 %v1556
        %v3913 = vpop.f32.mrb[0].mxu0
        %v3914 = vadd.f32 0.0, %v3913
        %v3915 = vpop.f32.mrb[0].mxu0
        %v3916 = vpop.f32.mrb[0].mxu0
        %v3917 = vadd.f32 0.0, %v3916
        %v3918 = vpop.f32.mrb[0].mxu0
        %3919 = vmatprep.mubr.bf16.mxu0 0
        %3920 = vmatmul.mubr.bf16.gmra.mrb[0].mxu0 %v3813
        %v3921 = vpop.f32.mrb[0].mxu0
        %v3922 = vadd.f32 0.0, %v3921
        %v3923 = vpop.f32.mrb[0].mxu0
        %v3924 = vpop.f32.mrb[0].mxu0
        %v3925 = vadd.f32 0.0, %v3924
        %v3926 = vpop.f32.mrb[0].mxu0
        %3927 = vdwg.mxu0
        %v3928 = vadd.f32 %v3777, %v3898
        %v3929 = vadd.f32 %v3778, %v3901
        %v3930 = vadd.f32 %v3779, %v3906
        %v3931 = vadd.f32 %v3780, %v3909
        %v3932 = vadd.f32 %v3781, %v3914
        %v3933 = vadd.f32 %v3782, %v3917
        %v3934 = vadd.f32 %v3783, %v3922
        %v3935 = vadd.f32 %v3784, %v3925
        %s3936 = scalar_lea.vmem %s349, 1024 [#allocation8]
        %v3937 = vld [vmem:[%s3936] sm:$0xf]
        %v3938 = vld [vmem:[%s3936 + $0x4] sm:$0xf]
        %v3939 = vld [vmem:[%s3936 + $0x8] sm:$0xf]
        %v3940 = vld [vmem:[%s3936 + $0xc] sm:$0xf]
        %v3941 = vld [vmem:[%s3936 + $0x10] sm:$0xf]
        %v3942 = vld [vmem:[%s3936 + $0x14] sm:$0xf]
        %v3943 = vld [vmem:[%s3936 + $0x18] sm:$0xf]
        %v3944 = vld [vmem:[%s3936 + $0x1c] sm:$0xf]
        %v3945 = vld [vmem:[%s3936 + $0x20] sm:$0xf]
        %v3946 = vld [vmem:[%s3936 + $0x24] sm:$0xf]
        %v3947 = vld [vmem:[%s3936 + $0x28] sm:$0xf]
        %v3948 = vld [vmem:[%s3936 + $0x2c] sm:$0xf]
        %v3949 = vld [vmem:[%s3936 + $0x30] sm:$0xf]
        %v3950 = vld [vmem:[%s3936 + $0x34] sm:$0xf]
        %v3951 = vld [vmem:[%s3936 + $0x38] sm:$0xf]
        %v3952 = vld [vmem:[%s3936 + $0x3c] sm:$0xf]
        %v3953 = vld [vmem:[%s3936 + $0x40] sm:$0xf]
        %v3954 = vld [vmem:[%s3936 + $0x44] sm:$0xf]
        %v3955 = vld [vmem:[%s3936 + $0x48] sm:$0xf]
        %v3956 = vld [vmem:[%s3936 + $0x4c] sm:$0xf]
        %v3957 = vld [vmem:[%s3936 + $0x50] sm:$0xf]
        %v3958 = vld [vmem:[%s3936 + $0x54] sm:$0xf]
        %v3959 = vld [vmem:[%s3936 + $0x58] sm:$0xf]
        %v3960 = vld [vmem:[%s3936 + $0x5c] sm:$0xf]
        %v3961 = vld [vmem:[%s3936 + $0x60] sm:$0xf]
        %v3962 = vld [vmem:[%s3936 + $0x64] sm:$0xf]
        %v3963 = vld [vmem:[%s3936 + $0x68] sm:$0xf]
        %v3964 = vld [vmem:[%s3936 + $0x6c] sm:$0xf]
        %v3965 = vld [vmem:[%s3936 + $0x70] sm:$0xf]
        %v3966 = vld [vmem:[%s3936 + $0x74] sm:$0xf]
        %v3967 = vld [vmem:[%s3936 + $0x78] sm:$0xf]
        %v3968 = vld [vmem:[%s3936 + $0x7c] sm:$0xf]
        %v3969 = vunpack.c.l.b16 %v3794
        %v3970 = vunpack.c.h.b16 %v3794
        %v3971 = vpack.c.b16 %v3969, %v2870
        %v3972 = vpack.c.b16 %v3970, %v2871
        %v4007 = vunpack.c.l.b16 %v3937
        %v4008 = vunpack.c.l.b16 %v3938
        %v4009 = vunpack.c.l.b16 %v3939
        %v4010 = vunpack.c.l.b16 %v3940
        %v4011 = vunpack.c.l.b16 %v3941
        %v4012 = vunpack.c.l.b16 %v3942
        %v4013 = vunpack.c.l.b16 %v3943
        %v4014 = vunpack.c.l.b16 %v3944
        %v4015 = vunpack.c.l.b16 %v3945
        %v4016 = vunpack.c.l.b16 %v3946
        %v4017 = vunpack.c.l.b16 %v3947
        %v4018 = vunpack.c.l.b16 %v3948
        %v4019 = vunpack.c.l.b16 %v3949
        %v4020 = vunpack.c.l.b16 %v3950
        %v4021 = vunpack.c.l.b16 %v3951
        %v4022 = vunpack.c.l.b16 %v3952
        %v4023 = vunpack.c.l.b16 %v3953
        %v4024 = vunpack.c.l.b16 %v3954
        %v4025 = vunpack.c.l.b16 %v3955
        %v4026 = vunpack.c.l.b16 %v3956
        %v4027 = vunpack.c.l.b16 %v3957
        %v4028 = vunpack.c.l.b16 %v3958
        %v4029 = vunpack.c.l.b16 %v3959
        %v4030 = vunpack.c.l.b16 %v3960
        %v4031 = vunpack.c.l.b16 %v3961
        %v4032 = vunpack.c.l.b16 %v3962
        %v4033 = vunpack.c.l.b16 %v3963
        %v4034 = vunpack.c.l.b16 %v3964
        %v4035 = vunpack.c.l.b16 %v3965
        %v4036 = vunpack.c.l.b16 %v3966
        %v4037 = vunpack.c.l.b16 %v3967
        %v4038 = vunpack.c.l.b16 %v3968
        %v4039 = vpack.c.b16 %v4008, %v4007
        %v4040 = vpack.c.b16 %v4010, %v4009
        %v4041 = vpack.c.b16 %v4012, %v4011
        %v4042 = vpack.c.b16 %v4014, %v4013
        %v4043 = vpack.c.b16 %v4016, %v4015
        %v4044 = vpack.c.b16 %v4018, %v4017
        %v4045 = vpack.c.b16 %v4020, %v4019
        %v4046 = vpack.c.b16 %v4022, %v4021
        %v4047 = vpack.c.b16 %v4024, %v4023
        %v4048 = vpack.c.b16 %v4026, %v4025
        %v4049 = vpack.c.b16 %v4028, %v4027
        %v4050 = vpack.c.b16 %v4030, %v4029
        %v4051 = vpack.c.b16 %v4032, %v4031
        %v4052 = vpack.c.b16 %v4034, %v4033
        %v4053 = vpack.c.b16 %v4036, %v4035
        %v4054 = vpack.c.b16 %v4038, %v4037
        %4071 = vmatprep.subr.bf16.mxu0 0
        %4072 = vmatpush1.bf16.msra.mxu0 %v4039
        %4073 = vmatprep.subr.bf16.mxu0 0
        %4074 = vmatpush1.bf16.msra.mxu0 %v4040
        %4075 = vmatprep.subr.bf16.mxu0 0
        %4076 = vmatpush1.bf16.msra.mxu0 %v4041
        %4077 = vmatprep.subr.bf16.mxu0 0
        %4078 = vmatpush1.bf16.msra.mxu0 %v4042
        %4079 = vmatprep.subr.bf16.mxu0 0
        %4080 = vmatpush1.bf16.msra.mxu0 %v4043
        %4081 = vmatprep.subr.bf16.mxu0 0
        %4082 = vmatpush1.bf16.msra.mxu0 %v4044
        %4083 = vmatprep.subr.bf16.mxu0 0
        %4084 = vmatpush1.bf16.msra.mxu0 %v4045
        %4085 = vmatprep.subr.bf16.mxu0 0
        %4086 = vmatpush1.bf16.msra.mxu0 %v4046
        %4087 = vmatprep.subr.bf16.mxu0 0
        %4088 = vmatpush1.bf16.msra.mxu0 %v4047
        %4089 = vmatprep.subr.bf16.mxu0 0
        %4090 = vmatpush1.bf16.msra.mxu0 %v4048
        %4091 = vmatprep.subr.bf16.mxu0 0
        %4092 = vmatpush1.bf16.msra.mxu0 %v4049
        %4093 = vmatprep.subr.bf16.mxu0 0
        %4094 = vmatpush1.bf16.msra.mxu0 %v4050
        %4095 = vmatprep.subr.bf16.mxu0 0
        %4096 = vmatpush1.bf16.msra.mxu0 %v4051
        %4097 = vmatprep.subr.bf16.mxu0 0
        %4098 = vmatpush1.bf16.msra.mxu0 %v4052
        %4099 = vmatprep.subr.bf16.mxu0 0
        %4100 = vmatpush1.bf16.msra.mxu0 %v4053
        %4101 = vmatprep.subr.bf16.mxu0 0
        %4102 = vmatpush1.bf16.msra.mxu0 %v4054
        %4103 = vmatprep.mubr.bf16.mxu0 %v1734
        %4104 = vmatmul.mubr.bf16.gmra.mrb[0].mxu0 %v1733
        %v4105 = vpop.f32.mrb[0].mxu0
        %v4106 = vadd.f32 0.0, %v4105
        %v4107 = vpop.f32.mrb[0].mxu0
        %v4108 = vpop.f32.mrb[0].mxu0
        %v4109 = vadd.f32 0.0, %v4108
        %v4110 = vpop.f32.mrb[0].mxu0
        %4111 = vmatprep.mubr.bf16.mxu0 %v1736
        %4112 = vmatmul.mubr.bf16.gmra.mrb[0].mxu0 %v1735
        %v4113 = vpop.f32.mrb[0].mxu0
        %v4114 = vadd.f32 0.0, %v4113
        %v4115 = vpop.f32.mrb[0].mxu0
        %v4116 = vpop.f32.mrb[0].mxu0
        %v4117 = vadd.f32 0.0, %v4116
        %v4118 = vpop.f32.mrb[0].mxu0
        %4119 = vmatprep.mubr.bf16.mxu0 %v1738
        %4120 = vmatmul.mubr.bf16.gmra.mrb[0].mxu0 %v1737
        %v4121 = vpop.f32.mrb[0].mxu0
        %v4122 = vadd.f32 0.0, %v4121
        %v4123 = vpop.f32.mrb[0].mxu0
        %v4124 = vpop.f32.mrb[0].mxu0
        %v4125 = vadd.f32 0.0, %v4124
        %v4126 = vpop.f32.mrb[0].mxu0
        %4127 = vmatprep.mubr.bf16.mxu0 %v3972
        %4128 = vmatmul.mubr.bf16.gmra.mrb[0].mxu0 %v3971
        %v4129 = vpop.f32.mrb[0].mxu0
        %v4130 = vadd.f32 0.0, %v4129
        %v4131 = vpop.f32.mrb[0].mxu0
        %v4132 = vpop.f32.mrb[0].mxu0
        %v4133 = vadd.f32 0.0, %v4132
        %v4134 = vpop.f32.mrb[0].mxu0
        %4135 = vdwg.mxu0
        %v4136 = vadd.f32 %v3928, %v4106
        %v4137 = vadd.f32 %v3929, %v4109
        %v4138 = vadd.f32 %v3930, %v4114
        %v4139 = vadd.f32 %v3931, %v4117
        %v4140 = vadd.f32 %v3932, %v4122
        %v4141 = vadd.f32 %v3933, %v4125
        %v4142 = vadd.f32 %v3934, %v4130
        %v4143 = vadd.f32 %v3935, %v4133
        %v4144 = vld [vmem:[%s357] sm:$0x1]
        %v4146 = vlaneseq
        %v4147 = vshrl.u32 %v4146, 7
        %v4148 = vsub.s32 0, %v4147
        %v4149 = vrot.slane %v4144, %v4148
        %v4151 = vadd.f32 %v4136, %v4149
        %v4152 = vadd.f32 %v4137, %v4149
        %v4153 = vadd.f32 %v4138, %v4149
        %v4154 = vadd.f32 %v4139, %v4149
        %v4155 = vadd.f32 %v4140, %v4149
        %v4156 = vadd.f32 %v4141, %v4149
        %v4157 = vadd.f32 %v4142, %v4149
        %v4158 = vadd.f32 %v4143, %v4149
        %v4159 = vadd.f32 %v4151, %v4152
        %v4160 = vadd.f32 %v4159, %v4153
        %v4161 = vadd.f32 %v4160, %v4154
        %v4162 = vadd.f32 %v4161, %v4155
        %v4163 = vadd.f32 %v4162, %v4156
        %v4164 = vadd.f32 %v4163, %v4157
        %v4165 = vadd.f32 %v4164, %v4158
        %v4166 = vrot.slane %v4165, 4
        %v4167 = vadd.f32 %v4165, %v4166
        %v4168 = vrot.slane %v4167, 2
        %v4169 = vadd.f32 %v4167, %v4168
        %v4170 = vrot.slane %v4169, 1
        %v4171 = vadd.f32 %v4169, %v4170
        %v4172 = vrcp.pop 64.0
        %v4173 = vmul.f32 %v4171, %v4172
        %v4174 = vsub.f32 %v4151, %v4173
        %v4175 = vsub.f32 %v4152, %v4173
        %v4176 = vsub.f32 %v4153, %v4173
        %v4177 = vsub.f32 %v4154, %v4173
        %v4178 = vsub.f32 %v4155, %v4173
        %v4179 = vsub.f32 %v4156, %v4173
        %v4180 = vsub.f32 %v4157, %v4173
        %v4181 = vsub.f32 %v4158, %v4173
        %v4182 = vmul.f32 %v4174, %v4174
        %v4183 = vmul.f32 %v4175, %v4175
        %v4184 = vmul.f32 %v4176, %v4176
        %v4185 = vmul.f32 %v4177, %v4177
        %v4186 = vmul.f32 %v4178, %v4178
        %v4187 = vmul.f32 %v4179, %v4179
        %v4188 = vmul.f32 %v4180, %v4180
        %v4189 = vmul.f32 %v4181, %v4181
        %v4190 = vadd.f32 %v4182, %v4183
        %v4191 = vadd.f32 %v4190, %v4184
        %v4192 = vadd.f32 %v4191, %v4185
        %v4193 = vadd.f32 %v4192, %v4186
        %v4194 = vadd.f32 %v4193, %v4187
        %v4195 = vadd.f32 %v4194, %v4188
        %v4196 = vadd.f32 %v4195, %v4189
        %v4197 = vrot.slane %v4196, 4
        %v4198 = vadd.f32 %v4196, %v4197
        %v4199 = vrot.slane %v4198, 2
        %v4200 = vadd.f32 %v4198, %v4199
        %v4201 = vrot.slane %v4200, 1
        %v4202 = vadd.f32 %v4200, %v4201
        %v4203 = vmul.f32 %v4202, %v4172
        %v4204 = vadd.f32 %v4203, 1e-05
        %v4205 = vrsqrt.pop %v4204
        %v4206 = vmul.f32 %v4174, %v4205
        %v4207 = vmul.f32 %v4175, %v4205
        %v4208 = vmul.f32 %v4176, %v4205
        %v4209 = vmul.f32 %v4177, %v4205
        %v4210 = vmul.f32 %v4178, %v4205
        %v4211 = vmul.f32 %v4179, %v4205
        %v4212 = vmul.f32 %v4180, %v4205
        %v4213 = vmul.f32 %v4181, %v4205
        %vm4214 = vcmp.ge.f32.partialorder %v4206, 0.0
        %vm4215 = vcmp.ge.f32.partialorder %v4207, 0.0
        %vm4216 = vcmp.ge.f32.partialorder %v4208, 0.0
        %vm4217 = vcmp.ge.f32.partialorder %v4209, 0.0
        %vm4218 = vcmp.ge.f32.partialorder %v4210, 0.0
        %vm4219 = vcmp.ge.f32.partialorder %v4211, 0.0
        %vm4220 = vcmp.ge.f32.partialorder %v4212, 0.0
        %vm4221 = vcmp.ge.f32.partialorder %v4213, 0.0
        %v4222 = vmul.f32 %v4206, 0.01
        %v4223 = vmul.f32 %v4207, 0.01
        %v4224 = vmul.f32 %v4208, 0.01
        %v4225 = vmul.f32 %v4209, 0.01
        %v4226 = vmul.f32 %v4210, 0.01
        %v4227 = vmul.f32 %v4211, 0.01
        %v4228 = vmul.f32 %v4212, 0.01
        %v4229 = vmul.f32 %v4213, 0.01
        %v4230 = vsel %vm4214, %v4206, %v4222
        %v4231 = vsel %vm4215, %v4207, %v4223
        %v4232 = vsel %vm4216, %v4208, %v4224
        %v4233 = vsel %vm4217, %v4209, %v4225
        %v4234 = vsel %vm4218, %v4210, %v4226
        %v4235 = vsel %vm4219, %v4211, %v4227
        %v4236 = vsel %vm4220, %v4212, %v4228
        %v4237 = vsel %vm4221, %v4213, %v4229
        %v4238 = vpack.c.bf16 %v4230, %v4230
        %v4239 = vpack.c.bf16 %v4231, %v4231
        %v4240 = vpack.c.bf16 %v4232, %v4232
        %v4241 = vpack.c.bf16 %v4233, %v4233
        %v4242 = vpack.c.bf16 %v4234, %v4234
        %v4243 = vpack.c.bf16 %v4235, %v4235
        %v4244 = vpack.c.bf16 %v4236, %v4236
        %v4245 = vpack.c.bf16 %v4237, %v4237
        %4246 = vst [vmem:[%s402] sm:$0xf] %v4238
        %4247 = vst [vmem:[%s402 + $0x4] sm:$0xf] %v4239
        %4248 = vst [vmem:[%s402 + $0x8] sm:$0xf] %v4240
        %4249 = vst [vmem:[%s402 + $0xc] sm:$0xf] %v4241
        %4250 = vst [vmem:[%s402 + $0x10] sm:$0xf] %v4242
        %4251 = vst [vmem:[%s402 + $0x14] sm:$0xf] %v4243
        %4252 = vst [vmem:[%s402 + $0x18] sm:$0xf] %v4244
        %4253 = vst [vmem:[%s402 + $0x1c] sm:$0xf] %v4245
        %s4254 = sand.u32 %s180, 1
        %s4255 = scalar_lea.sflag [#allocation4], %s4254
        %s4256 = sand.u32 %s180, 1
        %s4257 = smul.addr %s4256, 32
        %s4258 = scalar_lea.vmem [#allocation11], %s4257
        // Predicated region
        $region61: #{difference_integrated_hg_filter_forward.6} parent=39 // pred_check
          %p4259 = pneg %p190
        $region62: #{difference_integrated_hg_filter_forward.6} parent=39 // pred_check_branch
          %4261 = sbr.rel (%p4259) target = $region64
        $region63: #{difference_integrated_hg_filter_forward.6} parent=39 // pred_region
          %s4263 = ssub.s32 512, 512
          %4264 = vsyncadd %s4255, %s4263
          %s4265 = smul.addr %s32, 24
          %s4266 = sadd.s32 %s33, %s4265
          %s4267 = smul.addr %s4266, 64
          %s4268 = scalar_lea.hbm %s5, %s4267
          %s4269 = sshll.u32 %s4258, 4
          %s4270 = int_to_ptr.vmem [resolvable:$true] %s4269
          %4275 = dma.vmem_to_hbm [thread:$0]  %s4270, 512, %s4268, %s4255, 64, 192, 4
        $region64: #{difference_integrated_hg_filter_forward.6} parent=39 // pred_fallthru
          _
      $region40: #{difference_integrated_hg_filter_forward.6} parent=5 // pred_fallthru
        _
      %p4276 = scmp.le.s32.totalorder 2, %s23
      // Predicated region
      $region65: #{difference_integrated_hg_filter_forward.6} parent=5 // pred_check
        %p4277 = pneg %p4276
      $region66: #{difference_integrated_hg_filter_forward.6} parent=5 // pred_check_branch
        %4279 = sbr.rel (%p4277) target = $region68
      $region67: #{difference_integrated_hg_filter_forward.6} parent=5 // pred_region
        %s4280 = ssub.s32 %s23, 2
        // Predicated region
        $region69: #{difference_integrated_hg_filter_forward.6} parent=67 // pred_check
          %p4281 = pneg %p196
        $region70: #{difference_integrated_hg_filter_forward.6} parent=67 // pred_check_branch
          %4283 = sbr.rel (%p4281) target = $region72
        $region71: #{difference_integrated_hg_filter_forward.6} parent=67 // pred_region
          %s4284 = sand.u32 %s181, 1
          %s4285 = scalar_lea.sflag [#allocation4], %s4284
          %s4286 = sand.u32 %s181, 1
          %s4287 = smul.addr %s4286, 32
          %s4288 = scalar_lea.vmem [#allocation11], %s4287
          %4289 = dma.done %s4285, 512
        $region72: #{difference_integrated_hg_filter_forward.6} parent=67 // pred_fallthru
          _
      $region68: #{difference_integrated_hg_filter_forward.6} parent=5 // pred_fallthru
        _
    $region6: #{difference_integrated_hg_filter_forward.6} parent=1 // loop_footer
      %s27 = sadd.s32 1, %s23
    $region7: #{difference_integrated_hg_filter_forward.6} parent=1 // loop_footer_branch
      %22 = sbr.rel target = $region3
    $region8: #{difference_integrated_hg_filter_forward.6} parent=1 // loop_exit
      _
    %4290 = vsyncpa [#allocation3], 1
    %s4291 = scalar_lea.sflag [#allocation3], 1
    %4292 = vsyncpa %s4291, 1
    %4293 = vsyncpa [#allocation6], 1
    %s4294 = scalar_lea.sflag [#allocation6], 1
    %4295 = vsyncpa %s4294, 1
    %4296 = vsyncpa [#allocation9], 1
    %s4297 = scalar_lea.sflag [#allocation9], 1
    %4298 = vsyncpa %s4297, 1
    %4299 = vsyncpa [#allocation4], 1
    %s4300 = scalar_lea.sflag [#allocation4], 1
    %4301 = vsyncpa %s4300, 1

</llo_original>
